<compile_context>
chip_gen: v7x
topology: tpu7x:2x2x1
jax: 0.10.0
libtpu: 0.0.40
codegen_flags: <defaults>
</compile_context>

<pallas_src>
import functools

import jax
import jax.numpy as jnp
from jax.experimental import pallas as pl
from jax.experimental.pallas import tpu as pltpu

ALPHA = 0.2  # LeakyReLU negative slope


# --------------------------------------------------------------------------- #
# Helpers
# --------------------------------------------------------------------------- #
def _leaky_relu(x, alpha):
    return jnp.where(x >= 0.0, x, alpha * x)


def _cout_tile(cout):
    """Output-channel tile: 256 (v6e/v7x MXU width) when it divides Cout,
    else 128 (v5e-friendly), else the whole thing (small / odd Cout)."""
    if cout <= 256:
        return cout
    if cout % 256 == 0:
        return 256
    if cout % 128 == 0:
        return 128
    # TODO(synk): pad Cout to a lane multiple instead of one oversized tile.
    return cout


def _batch_tile(n, hw, cout_tiles):
    """Images folded into the matmul M axis (target M ~ 256 rows) while keeping
    >= 2 grid blocks so both v7x TensorCores get work."""
    nb = max(1, min(n, 256 // max(hw, 1)))
    while n % nb:
        nb -= 1
    if cout_tiles * (n // nb) < 2 and n > 1:
        nb = max(1, nb // 2)
        while n % nb:
            nb -= 1
    return nb


def _mosaic_params(n_grid_axes, block_bytes):
    # Bounded VMEM budget from the per-step block footprint (x4: double
    # buffering + in-kernel temporaries), capped at v7x's 64 MiB physical VMEM.
    # TODO(synk): for non-innermost (large-spatial) levels add an H grid axis
    # with a 1-row halo instead of full-spatial blocks.
    limit = int(min(max(4 * block_bytes, 32 * 1024 * 1024), 64 * 1024 * 1024))
    return pltpu.CompilerParams(
        dimension_semantics=("parallel",) * n_grid_axes,
        vmem_limit_bytes=limit)


# --------------------------------------------------------------------------- #
# Kernel 1: 4x4 / stride-2 / pad-1 conv + bias + LeakyReLU (downconv)
# --------------------------------------------------------------------------- #
def _down_conv_kernel(p00, p01, p10, p11, w_ref, b_ref, o_ref, *,
                      taps, Ho, Wo, nb, upcast, alpha):
    """One (Cout tile, batch block) step.

    p??  : (nb, Ho+1, Wo+1, Cin) bf16   stride-2 phase views of the padded input
    w_ref: (16, Cin, TN)         bf16   per-tap weight matrices (tap = 4*i + j)
    b_ref: (1, TN)               f32
    o_ref: (nb, Ho, Wo, TN)      bf16
    """
    tn = o_ref.shape[-1]
    cin = p00.shape[-1]
    hw = Ho * Wo
    cdt = jnp.float32 if upcast else p00.dtype
    srcs = (p00, p01, p10, p11)
    # Per-image shifted windows, one per filter tap.
    win = [[srcs[s][n, a:a + Ho, b:b + Wo, :].astype(cdt) for (s, a, b) in taps]
           for n in range(nb)]

    def cat_m(parts):            # fold the batch block into the matmul M axis
        return parts[0] if nb == 1 else jnp.concatenate(parts, axis=0)

    if not upcast:
        # Production path: fold all 16 taps along K, one bf16 MXU matmul.
        lhs = cat_m([jnp.concatenate(win[n], axis=-1).reshape(hw, 16 * cin)
                     for n in range(nb)])
        acc = jnp.dot(lhs, w_ref[...].reshape(16 * cin, tn),
                      preferred_element_type=jnp.float32)
    else:
        # Fallback for narrow rows (Wo % 16 != 0, e.g. the toy shapes): per-tap
        # f32 matmuls keep every reshape on a clean (8,128) layout.
        acc = jnp.zeros((nb * hw, tn), jnp.float32)
        for t in range(16):
            lhs_t = cat_m([win[n][t].reshape(hw, cin) for n in range(nb)])
            acc = acc + jnp.dot(lhs_t, w_ref[t].astype(jnp.float32),
                                preferred_element_type=jnp.float32)
    acc = _leaky_relu(acc + b_ref[...], alpha)
    o_ref[...] = acc.reshape(nb, Ho, Wo, tn).astype(o_ref.dtype)


# --------------------------------------------------------------------------- #
# Kernel 2: fused nearest-x2 upsample + 3x3/s1/p1 conv + bias + LeakyReLU
# --------------------------------------------------------------------------- #
def _up_conv_kernel(hp_ref, w_ref, b_ref, o_ref, *, Hd, Wd, nb, upcast, alpha):
    """Output (2*yo+py, 2*xo+px) is a 2x2 conv over the padded downconv output
    with per-parity effective filters; the four parities are interleaved
    in-register so the block is stored directly in (N, Hd, 2, Wd, 2*Cout)
    layout (the wrapper's final reshape to NHWC is free).

    hp_ref: (nb, Hd+2, Wd+2, Ci)    bf16
    w_ref : (2, 2, 4, Ci, Cout)     bf16   effective 2x2 filters per parity
    b_ref : (1, Cout)               f32
    o_ref : (nb, Hd, 2, Wd, 2*Cout) bf16
    """
    ci = hp_ref.shape[-1]
    cout = w_ref.shape[-1]
    hw = Hd * Wd
    cdt = jnp.float32 if upcast else hp_ref.dtype
    # 9 distinct shifted windows per image, shared by the 4 output parities.
    win = [[[hp_ref[n, a:a + Hd, b:b + Wd, :].astype(cdt) for b in range(3)]
            for a in range(3)] for n in range(nb)]

    def cat_m(parts):
        return parts[0] if nb == 1 else jnp.concatenate(parts, axis=0)

    offs = ((0, 0), (0, 1), (1, 0), (1, 1))
    acc = {}
    for py in range(2):
        for px in range(2):
            if not upcast:
                lhs = cat_m([jnp.concatenate(
                    [win[n][py + da][px + db] for (da, db) in offs],
                    axis=-1).reshape(hw, 4 * ci) for n in range(nb)])
                a_p = jnp.dot(lhs, w_ref[py, px].reshape(4 * ci, cout),
                              preferred_element_type=jnp.float32)
            else:
                a_p = jnp.zeros((nb * hw, cout), jnp.float32)
                for t, (da, db) in enumerate(offs):
                    lhs_t = cat_m([win[n][py + da][px + db].reshape(hw, ci)
                                   for n in range(nb)])
                    a_p = a_p + jnp.dot(lhs_t,
                                        w_ref[py, px, t].astype(jnp.float32),
                                        preferred_element_type=jnp.float32)
            acc[(py, px)] = _leaky_relu(a_p + b_ref[...], alpha)  # (nb*hw, Cout)

    # In-register parity interleave -> (nb, Hd, 2, Wd, 2*Cout), single store.
    per_n = []
    for n in range(nb):
        lo, hi = n * hw, (n + 1) * hw
        per_py = []
        for py in range(2):
            c_py = jnp.concatenate([acc[(py, 0)][lo:hi], acc[(py, 1)][lo:hi]],
                                   axis=-1)                      # (hw, 2*Cout)
            per_py.append(c_py.reshape(Hd, 1, Wd, 2 * cout))
        per_n.append(jnp.concatenate(per_py, axis=1)             # (Hd,2,Wd,2*Cout)
                     .reshape(1, Hd, 2, Wd, 2 * cout))
    full = per_n[0] if nb == 1 else jnp.concatenate(per_n, axis=0)
    o_ref[...] = full.astype(o_ref.dtype)


# --------------------------------------------------------------------------- #
# Wrappers
# --------------------------------------------------------------------------- #
def downconv4x4s2_lrelu(x_nhwc, w_oihw, bias, alpha=ALPHA):
    """conv_block: Conv2d(Cin, Cout, 4, stride=2, pad=1) + LeakyReLU(alpha)."""
    N, H, W, Cin = x_nhwc.shape
    Cout = w_oihw.shape[0]
    assert H % 2 == 0 and W % 2 == 0
    Ho, Wo = H // 2, W // 2
    tn = _cout_tile(Cout)
    cout_tiles = Cout // tn
    nb = _batch_tile(N, Ho * Wo, cout_tiles)
    upcast = (Wo % 16 != 0)          # bf16 sublane packing is 16 rows

    # One pass over the input: pad by 1, cast bf16, split into 4 stride-2 phases.
    # TODO(synk): at large-spatial outer UNet levels extract the phases
    # in-kernel (strided pl.ds) to save this extra HBM read+write of the input.
    xp = jnp.pad(x_nhwc.astype(jnp.bfloat16), ((0, 0), (1, 1), (1, 1), (0, 0)))
    phases = [xp[:, pr::2, pc::2, :] for pr in (0, 1) for pc in (0, 1)]
    Hp, Wp = Ho + 1, Wo + 1

    # Tap (i, j) of the 4x4 filter reads phase (i % 2, j % 2) at static window
    # offset (i // 2, j // 2).
    taps = tuple(((i % 2) * 2 + (j % 2), i // 2, j // 2)
                 for i in range(4) for j in range(4))
    w_taps = (jnp.transpose(w_oihw, (2, 3, 1, 0))
              .reshape(16, Cin, Cout).astype(jnp.bfloat16))
    b2 = bias.reshape(1, Cout).astype(jnp.float32)

    kernel = functools.partial(_down_conv_kernel, taps=taps, Ho=Ho, Wo=Wo,
                               nb=nb, upcast=upcast, alpha=alpha)
    phase_spec = pl.BlockSpec((nb, Hp, Wp, Cin), lambda j, n: (n, 0, 0, 0))
    cost = pl.CostEstimate(
        flops=2 * N * Ho * Wo * 16 * Cin * Cout,
        transcendentals=0,
        bytes_accessed=(4 * N * Hp * Wp * Cin * 2 + 16 * Cin * Cout * 2
                        + Cout * 4 + N * Ho * Wo * Cout * 2))
    block_bytes = (4 * nb * Hp * Wp * Cin * 2 + 16 * Cin * tn * 2
                   + tn * 4 + nb * Ho * Wo * tn * 2)

    # Grid: Cout tiles outer, batch blocks inner -> the weight tile's block
    # index is constant across the batch sweep and stays VMEM-resident.
    return pl.pallas_call(
        kernel,
        out_shape=jax.ShapeDtypeStruct((N, Ho, Wo, Cout), jnp.bfloat16),
        grid_spec=pltpu.PrefetchScalarGridSpec(
            num_scalar_prefetch=0,
            grid=(cout_tiles, N // nb),
            in_specs=[phase_spec, phase_spec, phase_spec, phase_spec,
                      pl.BlockSpec((16, Cin, tn), lambda j, n: (0, 0, j)),
                      pl.BlockSpec((1, tn), lambda j, n: (0, j))],
            out_specs=pl.BlockSpec((nb, Ho, Wo, tn), lambda j, n: (n, 0, 0, j))),
        compiler_params=_mosaic_params(2, block_bytes),
        cost_estimate=cost,
    )(*phases, w_taps, b2)


_SETS = (((0,), (1, 2)), ((0, 1), (2,)))   # [parity][offset] -> 3x3 filter rows/cols


def _effective_up_weights(w_oihw):
    """Fold nearest-x2 upsample into the 3x3 filter: per output parity the conv
    over the upsampled tensor collapses to a 2x2 filter over the downconv
    output.  Taps are bf16-rounded first (matching a plain bf16 conv), summed
    exactly in f32, and the result stored bf16 (halves weight DMA bytes)."""
    w = (jnp.transpose(w_oihw, (2, 3, 1, 0))            # (3, 3, Ci, Co)
         .astype(jnp.bfloat16).astype(jnp.float32))
    Ci, Co = w.shape[2], w.shape[3]
    blocks = []
    for py in range(2):
        for px in range(2):
            for da in range(2):
                for db in range(2):
                    acc = jnp.zeros((Ci, Co), jnp.float32)
                    for i in _SETS[py][da]:
                        for j in _SETS[px][db]:
                            acc = acc + w[i, j]
                    blocks.append(acc)
    return (jnp.stack(blocks, axis=0).reshape(2, 2, 4, Ci, Co)
            .astype(jnp.bfloat16))


def upsample_conv3x3_lrelu(h_bf16, w_oihw, bias, alpha=ALPHA):
    """upsample_layer + uprelu: nearest x2 + Conv2d(Ci, Co, 3, 1, 1) + LeakyReLU,
    with the upsample fused into the conv indexing and the x2 interleave done
    in-register (no upsampled tensor and no HBM transpose pass)."""
    N, Hd, Wd, Ci = h_bf16.shape
    Cout = w_oihw.shape[0]
    nb = _batch_tile(N, Hd * Wd, 1)
    upcast = (Wd % 16 != 0)

    # TODO(synk): Cout is kept untiled here (fine for innermost-sized blocks);
    # tile it (and the interleaved lane axis) for very wide decoder levels.
    hp = jnp.pad(h_bf16, ((0, 0), (1, 1), (1, 1), (0, 0)))
    w_eff = _effective_up_weights(w_oihw)               # (2, 2, 4, Ci, Cout) bf16
    b2 = bias.reshape(1, Cout).astype(jnp.float32)

    kernel = functools.partial(_up_conv_kernel, Hd=Hd, Wd=Wd, nb=nb,
                               upcast=upcast, alpha=alpha)
    cost = pl.CostEstimate(
        flops=2 * N * 4 * Hd * Wd * 4 * Ci * Cout,
        transcendentals=0,
        bytes_accessed=(N * (Hd + 2) * (Wd + 2) * Ci * 2 + 16 * Ci * Cout * 2
                        + Cout * 4 + 4 * N * Hd * Wd * Cout * 2))
    block_bytes = (nb * (Hd + 2) * (Wd + 2) * Ci * 2 + 16 * Ci * Cout * 2
                   + Cout * 4 + nb * Hd * Wd * 4 * Cout * 2)

    y = pl.pallas_call(
        kernel,
        out_shape=jax.ShapeDtypeStruct((N, Hd, 2, Wd, 2 * Cout), jnp.bfloat16),
        grid_spec=pltpu.PrefetchScalarGridSpec(
            num_scalar_prefetch=0,
            grid=(N // nb,),
            in_specs=[
                pl.BlockSpec((nb, Hd + 2, Wd + 2, Ci), lambda n: (n, 0, 0, 0)),
                pl.BlockSpec((2, 2, 4, Ci, Cout), lambda n: (0, 0, 0, 0, 0)),
                pl.BlockSpec((1, Cout), lambda n: (0, 0)),
            ],
            out_specs=pl.BlockSpec((nb, Hd, 2, Wd, 2 * Cout),
                                   lambda n: (n, 0, 0, 0, 0))),
        compiler_params=_mosaic_params(1, block_bytes),
        cost_estimate=cost,
    )(hp, w_eff, b2)

    # (N, Hd, 2, Wd, 2*Cout) -> (N, 2*Hd, 2*Wd, Cout): pure row-major reshape.
    return y.reshape(N, 2 * Hd, 2 * Wd, Cout)


def unet_block_innermost(x_nchw, params):
    x = jnp.transpose(x_nchw, (0, 2, 3, 1))               # NCHW -> NHWC (C on lanes)
    h = downconv4x4s2_lrelu(x, params["w_down"], params["b_down"])   # (N,H/2,W/2,inner) bf16
    y = upsample_conv3x3_lrelu(h, params["w_up"], params["b_up"])    # (N,H,W,outer) bf16
    out = jnp.concatenate([x, y.astype(x.dtype)], axis=-1)  # torch.cat([x, model(x)], 1)
    return jnp.transpose(out, (0, 3, 1, 2))                 # back to NCHW


# --------------------------------------------------------------------------- #
# Pure-JAX reference (mirrors the bf16 storage choices of the kernel path)
# --------------------------------------------------------------------------- #
def unet_block_innermost_ref(x_nchw, params):
    x = jnp.transpose(x_nchw, (0, 2, 3, 1))
    xb = x.astype(jnp.bfloat16)
    wd = jnp.transpose(params["w_down"], (2, 3, 1, 0)).astype(jnp.bfloat16)
    h = jax.lax.conv_general_dilated(
        xb, wd, (2, 2), [(1, 1), (1, 1)],
        dimension_numbers=("NHWC", "HWIO", "NHWC"),
        preferred_element_type=jnp.float32)
    h = h + params["b_down"]
    h = jnp.where(h >= 0.0, h, ALPHA * h).astype(jnp.bfloat16)

    u = jnp.repeat(jnp.repeat(h, 2, axis=1), 2, axis=2)
    wu = jnp.transpose(params["w_up"], (2, 3, 1, 0)).astype(jnp.bfloat16)
    y = jax.lax.conv_general_dilated(
        u, wu, (1, 1), [(1, 1), (1, 1)],
        dimension_numbers=("NHWC", "HWIO", "NHWC"),
        preferred_element_type=jnp.float32)
    y = y + params["b_up"]
    y = jnp.where(y >= 0.0, y, ALPHA * y)
    y = y.astype(jnp.bfloat16).astype(jnp.float32)

    out = jnp.concatenate([x, y], axis=-1)
    return jnp.transpose(out, (0, 3, 1, 2))


# --------------------------------------------------------------------------- #
if __name__ == "__main__":
    key = jax.random.PRNGKey(0)
    k_x, k_wd, k_bd, k_wu, k_bu = jax.random.split(key, 5)

    N, outer_nc, inner_nc, H, W = 2, 4, 8, 16, 16
    input_nc = outer_nc  # input_nc=None -> input_nc = outer_nc

    x = jax.random.normal(k_x, (N, input_nc, H, W), dtype=jnp.float32)
    params = {
        # downconv: Conv2d(input_nc, inner_nc, 4, 2, 1)   (PyTorch OIHW layout)
        "w_down": 0.1 * jax.random.normal(k_wd, (inner_nc, input_nc, 4, 4), jnp.float32),
        "b_down": 0.1 * jax.random.normal(k_bd, (inner_nc,), jnp.float32),
        # upsample_layer conv: Conv2d(inner_nc, outer_nc, 3, 1, 1)
        "w_up": 0.1 * jax.random.normal(k_wu, (outer_nc, inner_nc, 3, 3), jnp.float32),
        "b_up": 0.1 * jax.random.normal(k_bu, (outer_nc,), jnp.float32),
    }

    out = jax.jit(unet_block_innermost)(x, params)
    out = jax.block_until_ready(out)
    assert out.shape == (N, input_nc + outer_nc, H, W), out.shape

    ref = unet_block_innermost_ref(x, params)
    err = float(jnp.max(jnp.abs(out - ref)))
    # Tolerance covers the bf16 rounding of the folded (upsample+3x3) weights.
    assert jnp.allclose(out, ref, atol=2e-2, rtol=2e-2), f"max abs err {err}"

    print("KERNEL_OK")
</pallas_src>

<mosaic_0001>
module attributes {stable_mosaic.version = 11 : i64} {
  func.func @_down_conv_kernel(%arg0: i32, %arg1: i32, %arg2: memref<1x9x9x4xbf16, #tpu.memory_space<vmem>>, %arg3: memref<1x9x9x4xbf16, #tpu.memory_space<vmem>>, %arg4: memref<1x9x9x4xbf16, #tpu.memory_space<vmem>>, %arg5: memref<1x9x9x4xbf16, #tpu.memory_space<vmem>>, %arg6: memref<16x4x8xbf16, #tpu.memory_space<vmem>>, %arg7: memref<1x8xf32, #tpu.memory_space<vmem>>, %arg8: memref<1x8x8x8xbf16, #tpu.memory_space<vmem>>) attributes {dimension_semantics = [#tpu.dimension_semantics<parallel>, #tpu.dimension_semantics<parallel>], iteration_bounds = array<i64: 1, 2>, scalar_prefetch = 0 : i64, scratch_operands = 0 : i64, tpu.core_type = #tpu.core_type<tc>, window_params = [{transform_indices = @transform_0, window_bounds = array<i64: 1, 9, 9, 4>}, {transform_indices = @transform_1, window_bounds = array<i64: 1, 9, 9, 4>}, {transform_indices = @transform_2, window_bounds = array<i64: 1, 9, 9, 4>}, {transform_indices = @transform_3, window_bounds = array<i64: 1, 9, 9, 4>}, {transform_indices = @transform_4, window_bounds = array<i64: 16, 4, 8>}, {transform_indices = @transform_5, window_bounds = array<i64: 1, 8>}, {transform_indices = @transform_6, window_bounds = array<i64: 1, 8, 8, 8>}]} {
    %c0 = arith.constant 0 : index
    %c0_0 = arith.constant 0 : index
    %c0_1 = arith.constant 0 : index
    %c0_2 = arith.constant 0 : index
    %0 = vector.load %arg2[%c0, %c0_0, %c0_1, %c0_2] : memref<1x9x9x4xbf16, #tpu.memory_space<vmem>>, vector<1x8x8x4xbf16>
    %1 = vector.shape_cast %0 : vector<1x8x8x4xbf16> to vector<8x8x4xbf16>
    %2 = arith.extf %1 : vector<8x8x4xbf16> to vector<8x8x4xf32>
    %c0_3 = arith.constant 0 : index
    %c0_4 = arith.constant 0 : index
    %c0_5 = arith.constant 0 : index
    %c0_6 = arith.constant 0 : index
    %3 = vector.load %arg3[%c0_3, %c0_4, %c0_5, %c0_6] : memref<1x9x9x4xbf16, #tpu.memory_space<vmem>>, vector<1x8x8x4xbf16>
    %4 = vector.shape_cast %3 : vector<1x8x8x4xbf16> to vector<8x8x4xbf16>
    %5 = arith.extf %4 : vector<8x8x4xbf16> to vector<8x8x4xf32>
    %c0_7 = arith.constant 0 : index
    %c0_8 = arith.constant 0 : index
    %c1 = arith.constant 1 : index
    %c0_9 = arith.constant 0 : index
    %6 = vector.load %arg2[%c0_7, %c0_8, %c1, %c0_9] : memref<1x9x9x4xbf16, #tpu.memory_space<vmem>>, vector<1x8x8x4xbf16>
    %7 = vector.shape_cast %6 : vector<1x8x8x4xbf16> to vector<8x8x4xbf16>
    %8 = arith.extf %7 : vector<8x8x4xbf16> to vector<8x8x4xf32>
    %c0_10 = arith.constant 0 : index
    %c0_11 = arith.constant 0 : index
    %c1_12 = arith.constant 1 : index
    %c0_13 = arith.constant 0 : index
    %9 = vector.load %arg3[%c0_10, %c0_11, %c1_12, %c0_13] : memref<1x9x9x4xbf16, #tpu.memory_space<vmem>>, vector<1x8x8x4xbf16>
    %10 = vector.shape_cast %9 : vector<1x8x8x4xbf16> to vector<8x8x4xbf16>
    %11 = arith.extf %10 : vector<8x8x4xbf16> to vector<8x8x4xf32>
    %c0_14 = arith.constant 0 : index
    %c0_15 = arith.constant 0 : index
    %c0_16 = arith.constant 0 : index
    %c0_17 = arith.constant 0 : index
    %12 = vector.load %arg4[%c0_14, %c0_15, %c0_16, %c0_17] : memref<1x9x9x4xbf16, #tpu.memory_space<vmem>>, vector<1x8x8x4xbf16>
    %13 = vector.shape_cast %12 : vector<1x8x8x4xbf16> to vector<8x8x4xbf16>
    %14 = arith.extf %13 : vector<8x8x4xbf16> to vector<8x8x4xf32>
    %c0_18 = arith.constant 0 : index
    %c0_19 = arith.constant 0 : index
    %c0_20 = arith.constant 0 : index
    %c0_21 = arith.constant 0 : index
    %15 = vector.load %arg5[%c0_18, %c0_19, %c0_20, %c0_21] : memref<1x9x9x4xbf16, #tpu.memory_space<vmem>>, vector<1x8x8x4xbf16>
    %16 = vector.shape_cast %15 : vector<1x8x8x4xbf16> to vector<8x8x4xbf16>
    %17 = arith.extf %16 : vector<8x8x4xbf16> to vector<8x8x4xf32>
    %c0_22 = arith.constant 0 : index
    %c0_23 = arith.constant 0 : index
    %c1_24 = arith.constant 1 : index
    %c0_25 = arith.constant 0 : index
    %18 = vector.load %arg4[%c0_22, %c0_23, %c1_24, %c0_25] : memref<1x9x9x4xbf16, #tpu.memory_space<vmem>>, vector<1x8x8x4xbf16>
    %19 = vector.shape_cast %18 : vector<1x8x8x4xbf16> to vector<8x8x4xbf16>
    %20 = arith.extf %19 : vector<8x8x4xbf16> to vector<8x8x4xf32>
    %c0_26 = arith.constant 0 : index
    %c0_27 = arith.constant 0 : index
    %c1_28 = arith.constant 1 : index
    %c0_29 = arith.constant 0 : index
    %21 = vector.load %arg5[%c0_26, %c0_27, %c1_28, %c0_29] : memref<1x9x9x4xbf16, #tpu.memory_space<vmem>>, vector<1x8x8x4xbf16>
    %22 = vector.shape_cast %21 : vector<1x8x8x4xbf16> to vector<8x8x4xbf16>
    %23 = arith.extf %22 : vector<8x8x4xbf16> to vector<8x8x4xf32>
    %c0_30 = arith.constant 0 : index
    %c1_31 = arith.constant 1 : index
    %c0_32 = arith.constant 0 : index
    %c0_33 = arith.constant 0 : index
    %24 = vector.load %arg2[%c0_30, %c1_31, %c0_32, %c0_33] : memref<1x9x9x4xbf16, #tpu.memory_space<vmem>>, vector<1x8x8x4xbf16>
    %25 = vector.shape_cast %24 : vector<1x8x8x4xbf16> to vector<8x8x4xbf16>
    %26 = arith.extf %25 : vector<8x8x4xbf16> to vector<8x8x4xf32>
    %c0_34 = arith.constant 0 : index
    %c1_35 = arith.constant 1 : index
    %c0_36 = arith.constant 0 : index
    %c0_37 = arith.constant 0 : index
    %27 = vector.load %arg3[%c0_34, %c1_35, %c0_36, %c0_37] : memref<1x9x9x4xbf16, #tpu.memory_space<vmem>>, vector<1x8x8x4xbf16>
    %28 = vector.shape_cast %27 : vector<1x8x8x4xbf16> to vector<8x8x4xbf16>
    %29 = arith.extf %28 : vector<8x8x4xbf16> to vector<8x8x4xf32>
    %c0_38 = arith.constant 0 : index
    %c1_39 = arith.constant 1 : index
    %c1_40 = arith.constant 1 : index
    %c0_41 = arith.constant 0 : index
    %30 = vector.load %arg2[%c0_38, %c1_39, %c1_40, %c0_41] : memref<1x9x9x4xbf16, #tpu.memory_space<vmem>>, vector<1x8x8x4xbf16>
    %31 = vector.shape_cast %30 : vector<1x8x8x4xbf16> to vector<8x8x4xbf16>
    %32 = arith.extf %31 : vector<8x8x4xbf16> to vector<8x8x4xf32>
    %c0_42 = arith.constant 0 : index
    %c1_43 = arith.constant 1 : index
    %c1_44 = arith.constant 1 : index
    %c0_45 = arith.constant 0 : index
    %33 = vector.load %arg3[%c0_42, %c1_43, %c1_44, %c0_45] : memref<1x9x9x4xbf16, #tpu.memory_space<vmem>>, vector<1x8x8x4xbf16>
    %34 = vector.shape_cast %33 : vector<1x8x8x4xbf16> to vector<8x8x4xbf16>
    %35 = arith.extf %34 : vector<8x8x4xbf16> to vector<8x8x4xf32>
    %c0_46 = arith.constant 0 : index
    %c1_47 = arith.constant 1 : index
    %c0_48 = arith.constant 0 : index
    %c0_49 = arith.constant 0 : index
    %36 = vector.load %arg4[%c0_46, %c1_47, %c0_48, %c0_49] : memref<1x9x9x4xbf16, #tpu.memory_space<vmem>>, vector<1x8x8x4xbf16>
    %37 = vector.shape_cast %36 : vector<1x8x8x4xbf16> to vector<8x8x4xbf16>
    %38 = arith.extf %37 : vector<8x8x4xbf16> to vector<8x8x4xf32>
    %c0_50 = arith.constant 0 : index
    %c1_51 = arith.constant 1 : index
    %c0_52 = arith.constant 0 : index
    %c0_53 = arith.constant 0 : index
    %39 = vector.load %arg5[%c0_50, %c1_51, %c0_52, %c0_53] : memref<1x9x9x4xbf16, #tpu.memory_space<vmem>>, vector<1x8x8x4xbf16>
    %40 = vector.shape_cast %39 : vector<1x8x8x4xbf16> to vector<8x8x4xbf16>
    %41 = arith.extf %40 : vector<8x8x4xbf16> to vector<8x8x4xf32>
    %c0_54 = arith.constant 0 : index
    %c1_55 = arith.constant 1 : index
    %c1_56 = arith.constant 1 : index
    %c0_57 = arith.constant 0 : index
    %42 = vector.load %arg4[%c0_54, %c1_55, %c1_56, %c0_57] : memref<1x9x9x4xbf16, #tpu.memory_space<vmem>>, vector<1x8x8x4xbf16>
    %43 = vector.shape_cast %42 : vector<1x8x8x4xbf16> to vector<8x8x4xbf16>
    %44 = arith.extf %43 : vector<8x8x4xbf16> to vector<8x8x4xf32>
    %c0_58 = arith.constant 0 : index
    %c1_59 = arith.constant 1 : index
    %c1_60 = arith.constant 1 : index
    %c0_61 = arith.constant 0 : index
    %45 = vector.load %arg5[%c0_58, %c1_59, %c1_60, %c0_61] : memref<1x9x9x4xbf16, #tpu.memory_space<vmem>>, vector<1x8x8x4xbf16>
    %46 = vector.shape_cast %45 : vector<1x8x8x4xbf16> to vector<8x8x4xbf16>
    %47 = arith.extf %46 : vector<8x8x4xbf16> to vector<8x8x4xf32>
    %cst = arith.constant 0.000000e+00 : f32
    %48 = vector.broadcast %cst : f32 to vector<64x8xf32>
    %49 = vector.shape_cast %2 : vector<8x8x4xf32> to vector<64x4xf32>
    %c0_62 = arith.constant 0 : index
    %c0_63 = arith.constant 0 : index
    %c0_64 = arith.constant 0 : index
    %50 = vector.load %arg6[%c0_62, %c0_63, %c0_64] : memref<16x4x8xbf16, #tpu.memory_space<vmem>>, vector<1x4x8xbf16>
    %51 = vector.shape_cast %50 : vector<1x4x8xbf16> to vector<4x8xbf16>
    %52 = arith.extf %51 : vector<4x8xbf16> to vector<4x8xf32>
    %cst_65 = arith.constant dense<0.000000e+00> : vector<64x8xf32>
    %53 = tpu.matmul %49, %52, %cst_65 {dimension_numbers = #tpu.dot_dimension_numbers<[1], [0], [0], [1], [0, 0, 1, 1], [], []>} : vector<64x4xf32>, vector<4x8xf32>, vector<64x8xf32> -> vector<64x8xf32>
    %54 = arith.addf %48, %53 : vector<64x8xf32>
    %55 = vector.shape_cast %5 : vector<8x8x4xf32> to vector<64x4xf32>
    %c1_66 = arith.constant 1 : index
    %c0_67 = arith.constant 0 : index
    %c0_68 = arith.constant 0 : index
    %56 = vector.load %arg6[%c1_66, %c0_67, %c0_68] : memref<16x4x8xbf16, #tpu.memory_space<vmem>>, vector<1x4x8xbf16>
    %57 = vector.shape_cast %56 : vector<1x4x8xbf16> to vector<4x8xbf16>
    %58 = arith.extf %57 : vector<4x8xbf16> to vector<4x8xf32>
    %cst_69 = arith.constant dense<0.000000e+00> : vector<64x8xf32>
    %59 = tpu.matmul %55, %58, %cst_69 {dimension_numbers = #tpu.dot_dimension_numbers<[1], [0], [0], [1], [0, 0, 1, 1], [], []>} : vector<64x4xf32>, vector<4x8xf32>, vector<64x8xf32> -> vector<64x8xf32>
    %60 = arith.addf %54, %59 : vector<64x8xf32>
    %61 = vector.shape_cast %8 : vector<8x8x4xf32> to vector<64x4xf32>
    %c2 = arith.constant 2 : index
    %c0_70 = arith.constant 0 : index
    %c0_71 = arith.constant 0 : index
    %62 = vector.load %arg6[%c2, %c0_70, %c0_71] : memref<16x4x8xbf16, #tpu.memory_space<vmem>>, vector<1x4x8xbf16>
    %63 = vector.shape_cast %62 : vector<1x4x8xbf16> to vector<4x8xbf16>
    %64 = arith.extf %63 : vector<4x8xbf16> to vector<4x8xf32>
    %cst_72 = arith.constant dense<0.000000e+00> : vector<64x8xf32>
    %65 = tpu.matmul %61, %64, %cst_72 {dimension_numbers = #tpu.dot_dimension_numbers<[1], [0], [0], [1], [0, 0, 1, 1], [], []>} : vector<64x4xf32>, vector<4x8xf32>, vector<64x8xf32> -> vector<64x8xf32>
    %66 = arith.addf %60, %65 : vector<64x8xf32>
    %67 = vector.shape_cast %11 : vector<8x8x4xf32> to vector<64x4xf32>
    %c3 = arith.constant 3 : index
    %c0_73 = arith.constant 0 : index
    %c0_74 = arith.constant 0 : index
    %68 = vector.load %arg6[%c3, %c0_73, %c0_74] : memref<16x4x8xbf16, #tpu.memory_space<vmem>>, vector<1x4x8xbf16>
    %69 = vector.shape_cast %68 : vector<1x4x8xbf16> to vector<4x8xbf16>
    %70 = arith.extf %69 : vector<4x8xbf16> to vector<4x8xf32>
    %cst_75 = arith.constant dense<0.000000e+00> : vector<64x8xf32>
    %71 = tpu.matmul %67, %70, %cst_75 {dimension_numbers = #tpu.dot_dimension_numbers<[1], [0], [0], [1], [0, 0, 1, 1], [], []>} : vector<64x4xf32>, vector<4x8xf32>, vector<64x8xf32> -> vector<64x8xf32>
    %72 = arith.addf %66, %71 : vector<64x8xf32>
    %73 = vector.shape_cast %14 : vector<8x8x4xf32> to vector<64x4xf32>
    %c4 = arith.constant 4 : index
    %c0_76 = arith.constant 0 : index
    %c0_77 = arith.constant 0 : index
    %74 = vector.load %arg6[%c4, %c0_76, %c0_77] : memref<16x4x8xbf16, #tpu.memory_space<vmem>>, vector<1x4x8xbf16>
    %75 = vector.shape_cast %74 : vector<1x4x8xbf16> to vector<4x8xbf16>
    %76 = arith.extf %75 : vector<4x8xbf16> to vector<4x8xf32>
    %cst_78 = arith.constant dense<0.000000e+00> : vector<64x8xf32>
    %77 = tpu.matmul %73, %76, %cst_78 {dimension_numbers = #tpu.dot_dimension_numbers<[1], [0], [0], [1], [0, 0, 1, 1], [], []>} : vector<64x4xf32>, vector<4x8xf32>, vector<64x8xf32> -> vector<64x8xf32>
    %78 = arith.addf %72, %77 : vector<64x8xf32>
    %79 = vector.shape_cast %17 : vector<8x8x4xf32> to vector<64x4xf32>
    %c5 = arith.constant 5 : index
    %c0_79 = arith.constant 0 : index
    %c0_80 = arith.constant 0 : index
    %80 = vector.load %arg6[%c5, %c0_79, %c0_80] : memref<16x4x8xbf16, #tpu.memory_space<vmem>>, vector<1x4x8xbf16>
    %81 = vector.shape_cast %80 : vector<1x4x8xbf16> to vector<4x8xbf16>
    %82 = arith.extf %81 : vector<4x8xbf16> to vector<4x8xf32>
    %cst_81 = arith.constant dense<0.000000e+00> : vector<64x8xf32>
    %83 = tpu.matmul %79, %82, %cst_81 {dimension_numbers = #tpu.dot_dimension_numbers<[1], [0], [0], [1], [0, 0, 1, 1], [], []>} : vector<64x4xf32>, vector<4x8xf32>, vector<64x8xf32> -> vector<64x8xf32>
    %84 = arith.addf %78, %83 : vector<64x8xf32>
    %85 = vector.shape_cast %20 : vector<8x8x4xf32> to vector<64x4xf32>
    %c6 = arith.constant 6 : index
    %c0_82 = arith.constant 0 : index
    %c0_83 = arith.constant 0 : index
    %86 = vector.load %arg6[%c6, %c0_82, %c0_83] : memref<16x4x8xbf16, #tpu.memory_space<vmem>>, vector<1x4x8xbf16>
    %87 = vector.shape_cast %86 : vector<1x4x8xbf16> to vector<4x8xbf16>
    %88 = arith.extf %87 : vector<4x8xbf16> to vector<4x8xf32>
    %cst_84 = arith.constant dense<0.000000e+00> : vector<64x8xf32>
    %89 = tpu.matmul %85, %88, %cst_84 {dimension_numbers = #tpu.dot_dimension_numbers<[1], [0], [0], [1], [0, 0, 1, 1], [], []>} : vector<64x4xf32>, vector<4x8xf32>, vector<64x8xf32> -> vector<64x8xf32>
    %90 = arith.addf %84, %89 : vector<64x8xf32>
    %91 = vector.shape_cast %23 : vector<8x8x4xf32> to vector<64x4xf32>
    %c7 = arith.constant 7 : index
    %c0_85 = arith.constant 0 : index
    %c0_86 = arith.constant 0 : index
    %92 = vector.load %arg6[%c7, %c0_85, %c0_86] : memref<16x4x8xbf16, #tpu.memory_space<vmem>>, vector<1x4x8xbf16>
    %93 = vector.shape_cast %92 : vector<1x4x8xbf16> to vector<4x8xbf16>
    %94 = arith.extf %93 : vector<4x8xbf16> to vector<4x8xf32>
    %cst_87 = arith.constant dense<0.000000e+00> : vector<64x8xf32>
    %95 = tpu.matmul %91, %94, %cst_87 {dimension_numbers = #tpu.dot_dimension_numbers<[1], [0], [0], [1], [0, 0, 1, 1], [], []>} : vector<64x4xf32>, vector<4x8xf32>, vector<64x8xf32> -> vector<64x8xf32>
    %96 = arith.addf %90, %95 : vector<64x8xf32>
    %97 = vector.shape_cast %26 : vector<8x8x4xf32> to vector<64x4xf32>
    %c8 = arith.constant 8 : index
    %c0_88 = arith.constant 0 : index
    %c0_89 = arith.constant 0 : index
    %98 = vector.load %arg6[%c8, %c0_88, %c0_89] : memref<16x4x8xbf16, #tpu.memory_space<vmem>>, vector<1x4x8xbf16>
    %99 = vector.shape_cast %98 : vector<1x4x8xbf16> to vector<4x8xbf16>
    %100 = arith.extf %99 : vector<4x8xbf16> to vector<4x8xf32>
    %cst_90 = arith.constant dense<0.000000e+00> : vector<64x8xf32>
    %101 = tpu.matmul %97, %100, %cst_90 {dimension_numbers = #tpu.dot_dimension_numbers<[1], [0], [0], [1], [0, 0, 1, 1], [], []>} : vector<64x4xf32>, vector<4x8xf32>, vector<64x8xf32> -> vector<64x8xf32>
    %102 = arith.addf %96, %101 : vector<64x8xf32>
    %103 = vector.shape_cast %29 : vector<8x8x4xf32> to vector<64x4xf32>
    %c9 = arith.constant 9 : index
    %c0_91 = arith.constant 0 : index
    %c0_92 = arith.constant 0 : index
    %104 = vector.load %arg6[%c9, %c0_91, %c0_92] : memref<16x4x8xbf16, #tpu.memory_space<vmem>>, vector<1x4x8xbf16>
    %105 = vector.shape_cast %104 : vector<1x4x8xbf16> to vector<4x8xbf16>
    %106 = arith.extf %105 : vector<4x8xbf16> to vector<4x8xf32>
    %cst_93 = arith.constant dense<0.000000e+00> : vector<64x8xf32>
    %107 = tpu.matmul %103, %106, %cst_93 {dimension_numbers = #tpu.dot_dimension_numbers<[1], [0], [0], [1], [0, 0, 1, 1], [], []>} : vector<64x4xf32>, vector<4x8xf32>, vector<64x8xf32> -> vector<64x8xf32>
    %108 = arith.addf %102, %107 : vector<64x8xf32>
    %109 = vector.shape_cast %32 : vector<8x8x4xf32> to vector<64x4xf32>
    %c10 = arith.constant 10 : index
    %c0_94 = arith.constant 0 : index
    %c0_95 = arith.constant 0 : index
    %110 = vector.load %arg6[%c10, %c0_94, %c0_95] : memref<16x4x8xbf16, #tpu.memory_space<vmem>>, vector<1x4x8xbf16>
    %111 = vector.shape_cast %110 : vector<1x4x8xbf16> to vector<4x8xbf16>
    %112 = arith.extf %111 : vector<4x8xbf16> to vector<4x8xf32>
    %cst_96 = arith.constant dense<0.000000e+00> : vector<64x8xf32>
    %113 = tpu.matmul %109, %112, %cst_96 {dimension_numbers = #tpu.dot_dimension_numbers<[1], [0], [0], [1], [0, 0, 1, 1], [], []>} : vector<64x4xf32>, vector<4x8xf32>, vector<64x8xf32> -> vector<64x8xf32>
    %114 = arith.addf %108, %113 : vector<64x8xf32>
    %115 = vector.shape_cast %35 : vector<8x8x4xf32> to vector<64x4xf32>
    %c11 = arith.constant 11 : index
    %c0_97 = arith.constant 0 : index
    %c0_98 = arith.constant 0 : index
    %116 = vector.load %arg6[%c11, %c0_97, %c0_98] : memref<16x4x8xbf16, #tpu.memory_space<vmem>>, vector<1x4x8xbf16>
    %117 = vector.shape_cast %116 : vector<1x4x8xbf16> to vector<4x8xbf16>
    %118 = arith.extf %117 : vector<4x8xbf16> to vector<4x8xf32>
    %cst_99 = arith.constant dense<0.000000e+00> : vector<64x8xf32>
    %119 = tpu.matmul %115, %118, %cst_99 {dimension_numbers = #tpu.dot_dimension_numbers<[1], [0], [0], [1], [0, 0, 1, 1], [], []>} : vector<64x4xf32>, vector<4x8xf32>, vector<64x8xf32> -> vector<64x8xf32>
    %120 = arith.addf %114, %119 : vector<64x8xf32>
    %121 = vector.shape_cast %38 : vector<8x8x4xf32> to vector<64x4xf32>
    %c12 = arith.constant 12 : index
    %c0_100 = arith.constant 0 : index
    %c0_101 = arith.constant 0 : index
    %122 = vector.load %arg6[%c12, %c0_100, %c0_101] : memref<16x4x8xbf16, #tpu.memory_space<vmem>>, vector<1x4x8xbf16>
    %123 = vector.shape_cast %122 : vector<1x4x8xbf16> to vector<4x8xbf16>
    %124 = arith.extf %123 : vector<4x8xbf16> to vector<4x8xf32>
    %cst_102 = arith.constant dense<0.000000e+00> : vector<64x8xf32>
    %125 = tpu.matmul %121, %124, %cst_102 {dimension_numbers = #tpu.dot_dimension_numbers<[1], [0], [0], [1], [0, 0, 1, 1], [], []>} : vector<64x4xf32>, vector<4x8xf32>, vector<64x8xf32> -> vector<64x8xf32>
    %126 = arith.addf %120, %125 : vector<64x8xf32>
    %127 = vector.shape_cast %41 : vector<8x8x4xf32> to vector<64x4xf32>
    %c13 = arith.constant 13 : index
    %c0_103 = arith.constant 0 : index
    %c0_104 = arith.constant 0 : index
    %128 = vector.load %arg6[%c13, %c0_103, %c0_104] : memref<16x4x8xbf16, #tpu.memory_space<vmem>>, vector<1x4x8xbf16>
    %129 = vector.shape_cast %128 : vector<1x4x8xbf16> to vector<4x8xbf16>
    %130 = arith.extf %129 : vector<4x8xbf16> to vector<4x8xf32>
    %cst_105 = arith.constant dense<0.000000e+00> : vector<64x8xf32>
    %131 = tpu.matmul %127, %130, %cst_105 {dimension_numbers = #tpu.dot_dimension_numbers<[1], [0], [0], [1], [0, 0, 1, 1], [], []>} : vector<64x4xf32>, vector<4x8xf32>, vector<64x8xf32> -> vector<64x8xf32>
    %132 = arith.addf %126, %131 : vector<64x8xf32>
    %133 = vector.shape_cast %44 : vector<8x8x4xf32> to vector<64x4xf32>
    %c14 = arith.constant 14 : index
    %c0_106 = arith.constant 0 : index
    %c0_107 = arith.constant 0 : index
    %134 = vector.load %arg6[%c14, %c0_106, %c0_107] : memref<16x4x8xbf16, #tpu.memory_space<vmem>>, vector<1x4x8xbf16>
    %135 = vector.shape_cast %134 : vector<1x4x8xbf16> to vector<4x8xbf16>
    %136 = arith.extf %135 : vector<4x8xbf16> to vector<4x8xf32>
    %cst_108 = arith.constant dense<0.000000e+00> : vector<64x8xf32>
    %137 = tpu.matmul %133, %136, %cst_108 {dimension_numbers = #tpu.dot_dimension_numbers<[1], [0], [0], [1], [0, 0, 1, 1], [], []>} : vector<64x4xf32>, vector<4x8xf32>, vector<64x8xf32> -> vector<64x8xf32>
    %138 = arith.addf %132, %137 : vector<64x8xf32>
    %139 = vector.shape_cast %47 : vector<8x8x4xf32> to vector<64x4xf32>
    %c15 = arith.constant 15 : index
    %c0_109 = arith.constant 0 : index
    %c0_110 = arith.constant 0 : index
    %140 = vector.load %arg6[%c15, %c0_109, %c0_110] : memref<16x4x8xbf16, #tpu.memory_space<vmem>>, vector<1x4x8xbf16>
    %141 = vector.shape_cast %140 : vector<1x4x8xbf16> to vector<4x8xbf16>
    %142 = arith.extf %141 : vector<4x8xbf16> to vector<4x8xf32>
    %cst_111 = arith.constant dense<0.000000e+00> : vector<64x8xf32>
    %143 = tpu.matmul %139, %142, %cst_111 {dimension_numbers = #tpu.dot_dimension_numbers<[1], [0], [0], [1], [0, 0, 1, 1], [], []>} : vector<64x4xf32>, vector<4x8xf32>, vector<64x8xf32> -> vector<64x8xf32>
    %144 = arith.addf %138, %143 : vector<64x8xf32>
    %c0_112 = arith.constant 0 : index
    %c0_113 = arith.constant 0 : index
    %145 = vector.load %arg7[%c0_112, %c0_113] : memref<1x8xf32, #tpu.memory_space<vmem>>, vector<1x8xf32>
    %146 = vector.broadcast %145 : vector<1x8xf32> to vector<64x8xf32>
    %147 = arith.addf %144, %146 : vector<64x8xf32>
    %cst_114 = arith.constant 0.000000e+00 : f32
    %148 = vector.broadcast %cst_114 : f32 to vector<64x8xf32>
    %149 = arith.cmpf oge, %147, %148 : vector<64x8xf32>
    %cst_115 = arith.constant 2.000000e-01 : f32
    %150 = vector.broadcast %cst_115 : f32 to vector<64x8xf32>
    %151 = arith.mulf %150, %147 : vector<64x8xf32>
    %152 = arith.select %149, %147, %151 : vector<64x8xi1>, vector<64x8xf32>
    %153 = vector.shape_cast %152 : vector<64x8xf32> to vector<1x8x8x8xf32>
    %154 = arith.truncf %153 : vector<1x8x8x8xf32> to vector<1x8x8x8xbf16>
    %c0_116 = arith.constant 0 : index
    %c0_117 = arith.constant 0 : index
    %c0_118 = arith.constant 0 : index
    %c0_119 = arith.constant 0 : index
    %155 = vector.load %arg8[%c0_116, %c0_117, %c0_118, %c0_119] : memref<1x8x8x8xbf16, #tpu.memory_space<vmem>>, vector<1x8x8x8xbf16>
    tpu.vector_store %arg8[%c0_116, %c0_117, %c0_118, %c0_119], %154 {strides = array<i32>} : memref<1x8x8x8xbf16, #tpu.memory_space<vmem>>, vector<1x8x8x8xbf16>,
    return
  }
  func.func @transform_0(%arg0: i32, %arg1: i32) -> (i32, i32, i32, i32) {
    %c0_i32 = arith.constant 0 : i32
    %c0_i32_0 = arith.constant 0 : i32
    %c0_i32_1 = arith.constant 0 : i32
    %c0_i32_2 = arith.constant 0 : i32
    return %arg1, %c0_i32, %c0_i32_0, %c0_i32_1 : i32, i32, i32, i32
  }
  func.func @transform_1(%arg0: i32, %arg1: i32) -> (i32, i32, i32, i32) {
    %c0_i32 = arith.constant 0 : i32
    %c0_i32_0 = arith.constant 0 : i32
    %c0_i32_1 = arith.constant 0 : i32
    %c0_i32_2 = arith.constant 0 : i32
    return %arg1, %c0_i32, %c0_i32_0, %c0_i32_1 : i32, i32, i32, i32
  }
  func.func @transform_2(%arg0: i32, %arg1: i32) -> (i32, i32, i32, i32) {
    %c0_i32 = arith.constant 0 : i32
    %c0_i32_0 = arith.constant 0 : i32
    %c0_i32_1 = arith.constant 0 : i32
    %c0_i32_2 = arith.constant 0 : i32
    return %arg1, %c0_i32, %c0_i32_0, %c0_i32_1 : i32, i32, i32, i32
  }
  func.func @transform_3(%arg0: i32, %arg1: i32) -> (i32, i32, i32, i32) {
    %c0_i32 = arith.constant 0 : i32
    %c0_i32_0 = arith.constant 0 : i32
    %c0_i32_1 = arith.constant 0 : i32
    %c0_i32_2 = arith.constant 0 : i32
    return %arg1, %c0_i32, %c0_i32_0, %c0_i32_1 : i32, i32, i32, i32
  }
  func.func @transform_4(%arg0: i32, %arg1: i32) -> (i32, i32, i32) {
    %c0_i32 = arith.constant 0 : i32
    %c0_i32_0 = arith.constant 0 : i32
    %c0_i32_1 = arith.constant 0 : i32
    return %c0_i32, %c0_i32_0, %arg0 : i32, i32, i32
  }
  func.func @transform_5(%arg0: i32, %arg1: i32) -> (i32, i32) {
    %c0_i32 = arith.constant 0 : i32
    %c0_i32_0 = arith.constant 0 : i32
    return %c0_i32, %arg0 : i32, i32
  }
  func.func @transform_6(%arg0: i32, %arg1: i32) -> (i32, i32, i32, i32) {
    %c0_i32 = arith.constant 0 : i32
    %c0_i32_0 = arith.constant 0 : i32
    %c0_i32_1 = arith.constant 0 : i32
    return %arg1, %c0_i32, %c0_i32_0, %arg0 : i32, i32, i32, i32
  }
}

module attributes {stable_mosaic.version = 11 : i64} {
  func.func @_up_conv_kernel(%arg0: i32, %arg1: memref<1x10x10x8xbf16, #tpu.memory_space<vmem>>, %arg2: memref<2x2x4x8x4xbf16, #tpu.memory_space<vmem>>, %arg3: memref<1x4xf32, #tpu.memory_space<vmem>>, %arg4: memref<1x8x2x8x8xbf16, #tpu.memory_space<vmem>>) attributes {dimension_semantics = [#tpu.dimension_semantics<parallel>], iteration_bounds = array<i64: 2>, scalar_prefetch = 0 : i64, scratch_operands = 0 : i64, tpu.core_type = #tpu.core_type<tc>, window_params = [{transform_indices = @transform_0, window_bounds = array<i64: 1, 10, 10, 8>}, {pipeline_mode = #tpu.pipeline_mode<synchronous>, transform_indices = @transform_1, window_bounds = array<i64: 2, 2, 4, 8, 4>}, {pipeline_mode = #tpu.pipeline_mode<synchronous>, transform_indices = @transform_2, window_bounds = array<i64: 1, 4>}, {transform_indices = @transform_3, window_bounds = array<i64: 1, 8, 2, 8, 8>}]} {
    %c0 = arith.constant 0 : index
    %c0_0 = arith.constant 0 : index
    %c0_1 = arith.constant 0 : index
    %c0_2 = arith.constant 0 : index
    %0 = vector.load %arg1[%c0, %c0_0, %c0_1, %c0_2] : memref<1x10x10x8xbf16, #tpu.memory_space<vmem>>, vector<1x8x8x8xbf16>
    %1 = vector.shape_cast %0 : vector<1x8x8x8xbf16> to vector<8x8x8xbf16>
    %2 = arith.extf %1 : vector<8x8x8xbf16> to vector<8x8x8xf32>
    %c0_3 = arith.constant 0 : index
    %c0_4 = arith.constant 0 : index
    %c1 = arith.constant 1 : index
    %c0_5 = arith.constant 0 : index
    %3 = vector.load %arg1[%c0_3, %c0_4, %c1, %c0_5] : memref<1x10x10x8xbf16, #tpu.memory_space<vmem>>, vector<1x8x8x8xbf16>
    %4 = vector.shape_cast %3 : vector<1x8x8x8xbf16> to vector<8x8x8xbf16>
    %5 = arith.extf %4 : vector<8x8x8xbf16> to vector<8x8x8xf32>
    %c0_6 = arith.constant 0 : index
    %c0_7 = arith.constant 0 : index
    %c2 = arith.constant 2 : index
    %c0_8 = arith.constant 0 : index
    %6 = vector.load %arg1[%c0_6, %c0_7, %c2, %c0_8] : memref<1x10x10x8xbf16, #tpu.memory_space<vmem>>, vector<1x8x8x8xbf16>
    %7 = vector.shape_cast %6 : vector<1x8x8x8xbf16> to vector<8x8x8xbf16>
    %8 = arith.extf %7 : vector<8x8x8xbf16> to vector<8x8x8xf32>
    %c0_9 = arith.constant 0 : index
    %c1_10 = arith.constant 1 : index
    %c0_11 = arith.constant 0 : index
    %c0_12 = arith.constant 0 : index
    %9 = vector.load %arg1[%c0_9, %c1_10, %c0_11, %c0_12] : memref<1x10x10x8xbf16, #tpu.memory_space<vmem>>, vector<1x8x8x8xbf16>
    %10 = vector.shape_cast %9 : vector<1x8x8x8xbf16> to vector<8x8x8xbf16>
    %11 = arith.extf %10 : vector<8x8x8xbf16> to vector<8x8x8xf32>
    %c0_13 = arith.constant 0 : index
    %c1_14 = arith.constant 1 : index
    %c1_15 = arith.constant 1 : index
    %c0_16 = arith.constant 0 : index
    %12 = vector.load %arg1[%c0_13, %c1_14, %c1_15, %c0_16] : memref<1x10x10x8xbf16, #tpu.memory_space<vmem>>, vector<1x8x8x8xbf16>
    %13 = vector.shape_cast %12 : vector<1x8x8x8xbf16> to vector<8x8x8xbf16>
    %14 = arith.extf %13 : vector<8x8x8xbf16> to vector<8x8x8xf32>
    %c0_17 = arith.constant 0 : index
    %c1_18 = arith.constant 1 : index
    %c2_19 = arith.constant 2 : index
    %c0_20 = arith.constant 0 : index
    %15 = vector.load %arg1[%c0_17, %c1_18, %c2_19, %c0_20] : memref<1x10x10x8xbf16, #tpu.memory_space<vmem>>, vector<1x8x8x8xbf16>
    %16 = vector.shape_cast %15 : vector<1x8x8x8xbf16> to vector<8x8x8xbf16>
    %17 = arith.extf %16 : vector<8x8x8xbf16> to vector<8x8x8xf32>
    %c0_21 = arith.constant 0 : index
    %c2_22 = arith.constant 2 : index
    %c0_23 = arith.constant 0 : index
    %c0_24 = arith.constant 0 : index
    %18 = vector.load %arg1[%c0_21, %c2_22, %c0_23, %c0_24] : memref<1x10x10x8xbf16, #tpu.memory_space<vmem>>, vector<1x8x8x8xbf16>
    %19 = vector.shape_cast %18 : vector<1x8x8x8xbf16> to vector<8x8x8xbf16>
    %20 = arith.extf %19 : vector<8x8x8xbf16> to vector<8x8x8xf32>
    %c0_25 = arith.constant 0 : index
    %c2_26 = arith.constant 2 : index
    %c1_27 = arith.constant 1 : index
    %c0_28 = arith.constant 0 : index
    %21 = vector.load %arg1[%c0_25, %c2_26, %c1_27, %c0_28] : memref<1x10x10x8xbf16, #tpu.memory_space<vmem>>, vector<1x8x8x8xbf16>
    %22 = vector.shape_cast %21 : vector<1x8x8x8xbf16> to vector<8x8x8xbf16>
    %23 = arith.extf %22 : vector<8x8x8xbf16> to vector<8x8x8xf32>
    %c0_29 = arith.constant 0 : index
    %c2_30 = arith.constant 2 : index
    %c2_31 = arith.constant 2 : index
    %c0_32 = arith.constant 0 : index
    %24 = vector.load %arg1[%c0_29, %c2_30, %c2_31, %c0_32] : memref<1x10x10x8xbf16, #tpu.memory_space<vmem>>, vector<1x8x8x8xbf16>
    %25 = vector.shape_cast %24 : vector<1x8x8x8xbf16> to vector<8x8x8xbf16>
    %26 = arith.extf %25 : vector<8x8x8xbf16> to vector<8x8x8xf32>
    %cst = arith.constant 0.000000e+00 : f32
    %27 = vector.broadcast %cst : f32 to vector<64x4xf32>
    %28 = vector.shape_cast %2 : vector<8x8x8xf32> to vector<64x8xf32>
    %c0_33 = arith.constant 0 : index
    %c0_34 = arith.constant 0 : index
    %c0_35 = arith.constant 0 : index
    %c0_36 = arith.constant 0 : index
    %c0_37 = arith.constant 0 : index
    %29 = vector.load %arg2[%c0_33, %c0_34, %c0_35, %c0_36, %c0_37] : memref<2x2x4x8x4xbf16, #tpu.memory_space<vmem>>, vector<1x1x1x8x4xbf16>
    %30 = vector.shape_cast %29 : vector<1x1x1x8x4xbf16> to vector<8x4xbf16>
    %31 = arith.extf %30 : vector<8x4xbf16> to vector<8x4xf32>
    %cst_38 = arith.constant dense<0.000000e+00> : vector<64x4xf32>
    %32 = tpu.matmul %28, %31, %cst_38 {dimension_numbers = #tpu.dot_dimension_numbers<[1], [0], [0], [1], [0, 0, 1, 1], [], []>} : vector<64x8xf32>, vector<8x4xf32>, vector<64x4xf32> -> vector<64x4xf32>
    %33 = arith.addf %27, %32 : vector<64x4xf32>
    %34 = vector.shape_cast %5 : vector<8x8x8xf32> to vector<64x8xf32>
    %c0_39 = arith.constant 0 : index
    %c0_40 = arith.constant 0 : index
    %c1_41 = arith.constant 1 : index
    %c0_42 = arith.constant 0 : index
    %c0_43 = arith.constant 0 : index
    %35 = vector.load %arg2[%c0_39, %c0_40, %c1_41, %c0_42, %c0_43] : memref<2x2x4x8x4xbf16, #tpu.memory_space<vmem>>, vector<1x1x1x8x4xbf16>
    %36 = vector.shape_cast %35 : vector<1x1x1x8x4xbf16> to vector<8x4xbf16>
    %37 = arith.extf %36 : vector<8x4xbf16> to vector<8x4xf32>
    %cst_44 = arith.constant dense<0.000000e+00> : vector<64x4xf32>
    %38 = tpu.matmul %34, %37, %cst_44 {dimension_numbers = #tpu.dot_dimension_numbers<[1], [0], [0], [1], [0, 0, 1, 1], [], []>} : vector<64x8xf32>, vector<8x4xf32>, vector<64x4xf32> -> vector<64x4xf32>
    %39 = arith.addf %33, %38 : vector<64x4xf32>
    %40 = vector.shape_cast %11 : vector<8x8x8xf32> to vector<64x8xf32>
    %c0_45 = arith.constant 0 : index
    %c0_46 = arith.constant 0 : index
    %c2_47 = arith.constant 2 : index
    %c0_48 = arith.constant 0 : index
    %c0_49 = arith.constant 0 : index
    %41 = vector.load %arg2[%c0_45, %c0_46, %c2_47, %c0_48, %c0_49] : memref<2x2x4x8x4xbf16, #tpu.memory_space<vmem>>, vector<1x1x1x8x4xbf16>
    %42 = vector.shape_cast %41 : vector<1x1x1x8x4xbf16> to vector<8x4xbf16>
    %43 = arith.extf %42 : vector<8x4xbf16> to vector<8x4xf32>
    %cst_50 = arith.constant dense<0.000000e+00> : vector<64x4xf32>
    %44 = tpu.matmul %40, %43, %cst_50 {dimension_numbers = #tpu.dot_dimension_numbers<[1], [0], [0], [1], [0, 0, 1, 1], [], []>} : vector<64x8xf32>, vector<8x4xf32>, vector<64x4xf32> -> vector<64x4xf32>
    %45 = arith.addf %39, %44 : vector<64x4xf32>
    %46 = vector.shape_cast %14 : vector<8x8x8xf32> to vector<64x8xf32>
    %c0_51 = arith.constant 0 : index
    %c0_52 = arith.constant 0 : index
    %c3 = arith.constant 3 : index
    %c0_53 = arith.constant 0 : index
    %c0_54 = arith.constant 0 : index
    %47 = vector.load %arg2[%c0_51, %c0_52, %c3, %c0_53, %c0_54] : memref<2x2x4x8x4xbf16, #tpu.memory_space<vmem>>, vector<1x1x1x8x4xbf16>
    %48 = vector.shape_cast %47 : vector<1x1x1x8x4xbf16> to vector<8x4xbf16>
    %49 = arith.extf %48 : vector<8x4xbf16> to vector<8x4xf32>
    %cst_55 = arith.constant dense<0.000000e+00> : vector<64x4xf32>
    %50 = tpu.matmul %46, %49, %cst_55 {dimension_numbers = #tpu.dot_dimension_numbers<[1], [0], [0], [1], [0, 0, 1, 1], [], []>} : vector<64x8xf32>, vector<8x4xf32>, vector<64x4xf32> -> vector<64x4xf32>
    %51 = arith.addf %45, %50 : vector<64x4xf32>
    %c0_56 = arith.constant 0 : index
    %c0_57 = arith.constant 0 : index
    %52 = vector.load %arg3[%c0_56, %c0_57] : memref<1x4xf32, #tpu.memory_space<vmem>>, vector<1x4xf32>
    %53 = vector.broadcast %52 : vector<1x4xf32> to vector<64x4xf32>
    %54 = arith.addf %51, %53 : vector<64x4xf32>
    %cst_58 = arith.constant 0.000000e+00 : f32
    %55 = vector.broadcast %cst_58 : f32 to vector<64x4xf32>
    %56 = arith.cmpf oge, %54, %55 : vector<64x4xf32>
    %cst_59 = arith.constant 2.000000e-01 : f32
    %57 = vector.broadcast %cst_59 : f32 to vector<64x4xf32>
    %58 = arith.mulf %57, %54 : vector<64x4xf32>
    %59 = arith.select %56, %54, %58 : vector<64x4xi1>, vector<64x4xf32>
    %cst_60 = arith.constant 0.000000e+00 : f32
    %60 = vector.broadcast %cst_60 : f32 to vector<64x4xf32>
    %61 = vector.shape_cast %5 : vector<8x8x8xf32> to vector<64x8xf32>
    %c0_61 = arith.constant 0 : index
    %c1_62 = arith.constant 1 : index
    %c0_63 = arith.constant 0 : index
    %c0_64 = arith.constant 0 : index
    %c0_65 = arith.constant 0 : index
    %62 = vector.load %arg2[%c0_61, %c1_62, %c0_63, %c0_64, %c0_65] : memref<2x2x4x8x4xbf16, #tpu.memory_space<vmem>>, vector<1x1x1x8x4xbf16>
    %63 = vector.shape_cast %62 : vector<1x1x1x8x4xbf16> to vector<8x4xbf16>
    %64 = arith.extf %63 : vector<8x4xbf16> to vector<8x4xf32>
    %cst_66 = arith.constant dense<0.000000e+00> : vector<64x4xf32>
    %65 = tpu.matmul %61, %64, %cst_66 {dimension_numbers = #tpu.dot_dimension_numbers<[1], [0], [0], [1], [0, 0, 1, 1], [], []>} : vector<64x8xf32>, vector<8x4xf32>, vector<64x4xf32> -> vector<64x4xf32>
    %66 = arith.addf %60, %65 : vector<64x4xf32>
    %67 = vector.shape_cast %8 : vector<8x8x8xf32> to vector<64x8xf32>
    %c0_67 = arith.constant 0 : index
    %c1_68 = arith.constant 1 : index
    %c1_69 = arith.constant 1 : index
    %c0_70 = arith.constant 0 : index
    %c0_71 = arith.constant 0 : index
    %68 = vector.load %arg2[%c0_67, %c1_68, %c1_69, %c0_70, %c0_71] : memref<2x2x4x8x4xbf16, #tpu.memory_space<vmem>>, vector<1x1x1x8x4xbf16>
    %69 = vector.shape_cast %68 : vector<1x1x1x8x4xbf16> to vector<8x4xbf16>
    %70 = arith.extf %69 : vector<8x4xbf16> to vector<8x4xf32>
    %cst_72 = arith.constant dense<0.000000e+00> : vector<64x4xf32>
    %71 = tpu.matmul %67, %70, %cst_72 {dimension_numbers = #tpu.dot_dimension_numbers<[1], [0], [0], [1], [0, 0, 1, 1], [], []>} : vector<64x8xf32>, vector<8x4xf32>, vector<64x4xf32> -> vector<64x4xf32>
    %72 = arith.addf %66, %71 : vector<64x4xf32>
    %73 = vector.shape_cast %14 : vector<8x8x8xf32> to vector<64x8xf32>
    %c0_73 = arith.constant 0 : index
    %c1_74 = arith.constant 1 : index
    %c2_75 = arith.constant 2 : index
    %c0_76 = arith.constant 0 : index
    %c0_77 = arith.constant 0 : index
    %74 = vector.load %arg2[%c0_73, %c1_74, %c2_75, %c0_76, %c0_77] : memref<2x2x4x8x4xbf16, #tpu.memory_space<vmem>>, vector<1x1x1x8x4xbf16>
    %75 = vector.shape_cast %74 : vector<1x1x1x8x4xbf16> to vector<8x4xbf16>
    %76 = arith.extf %75 : vector<8x4xbf16> to vector<8x4xf32>
    %cst_78 = arith.constant dense<0.000000e+00> : vector<64x4xf32>
    %77 = tpu.matmul %73, %76, %cst_78 {dimension_numbers = #tpu.dot_dimension_numbers<[1], [0], [0], [1], [0, 0, 1, 1], [], []>} : vector<64x8xf32>, vector<8x4xf32>, vector<64x4xf32> -> vector<64x4xf32>
    %78 = arith.addf %72, %77 : vector<64x4xf32>
    %79 = vector.shape_cast %17 : vector<8x8x8xf32> to vector<64x8xf32>
    %c0_79 = arith.constant 0 : index
    %c1_80 = arith.constant 1 : index
    %c3_81 = arith.constant 3 : index
    %c0_82 = arith.constant 0 : index
    %c0_83 = arith.constant 0 : index
    %80 = vector.load %arg2[%c0_79, %c1_80, %c3_81, %c0_82, %c0_83] : memref<2x2x4x8x4xbf16, #tpu.memory_space<vmem>>, vector<1x1x1x8x4xbf16>
    %81 = vector.shape_cast %80 : vector<1x1x1x8x4xbf16> to vector<8x4xbf16>
    %82 = arith.extf %81 : vector<8x4xbf16> to vector<8x4xf32>
    %cst_84 = arith.constant dense<0.000000e+00> : vector<64x4xf32>
    %83 = tpu.matmul %79, %82, %cst_84 {dimension_numbers = #tpu.dot_dimension_numbers<[1], [0], [0], [1], [0, 0, 1, 1], [], []>} : vector<64x8xf32>, vector<8x4xf32>, vector<64x4xf32> -> vector<64x4xf32>
    %84 = arith.addf %78, %83 : vector<64x4xf32>
    %c0_85 = arith.constant 0 : index
    %c0_86 = arith.constant 0 : index
    %85 = vector.load %arg3[%c0_85, %c0_86] : memref<1x4xf32, #tpu.memory_space<vmem>>, vector<1x4xf32>
    %86 = vector.broadcast %85 : vector<1x4xf32> to vector<64x4xf32>
    %87 = arith.addf %84, %86 : vector<64x4xf32>
    %cst_87 = arith.constant 0.000000e+00 : f32
    %88 = vector.broadcast %cst_87 : f32 to vector<64x4xf32>
    %89 = arith.cmpf oge, %87, %88 : vector<64x4xf32>
    %cst_88 = arith.constant 2.000000e-01 : f32
    %90 = vector.broadcast %cst_88 : f32 to vector<64x4xf32>
    %91 = arith.mulf %90, %87 : vector<64x4xf32>
    %92 = arith.select %89, %87, %91 : vector<64x4xi1>, vector<64x4xf32>
    %cst_89 = arith.constant 0.000000e+00 : f32
    %93 = vector.broadcast %cst_89 : f32 to vector<64x4xf32>
    %94 = vector.shape_cast %11 : vector<8x8x8xf32> to vector<64x8xf32>
    %c1_90 = arith.constant 1 : index
    %c0_91 = arith.constant 0 : index
    %c0_92 = arith.constant 0 : index
    %c0_93 = arith.constant 0 : index
    %c0_94 = arith.constant 0 : index
    %95 = vector.load %arg2[%c1_90, %c0_91, %c0_92, %c0_93, %c0_94] : memref<2x2x4x8x4xbf16, #tpu.memory_space<vmem>>, vector<1x1x1x8x4xbf16>
    %96 = vector.shape_cast %95 : vector<1x1x1x8x4xbf16> to vector<8x4xbf16>
    %97 = arith.extf %96 : vector<8x4xbf16> to vector<8x4xf32>
    %cst_95 = arith.constant dense<0.000000e+00> : vector<64x4xf32>
    %98 = tpu.matmul %94, %97, %cst_95 {dimension_numbers = #tpu.dot_dimension_numbers<[1], [0], [0], [1], [0, 0, 1, 1], [], []>} : vector<64x8xf32>, vector<8x4xf32>, vector<64x4xf32> -> vector<64x4xf32>
    %99 = arith.addf %93, %98 : vector<64x4xf32>
    %100 = vector.shape_cast %14 : vector<8x8x8xf32> to vector<64x8xf32>
    %c1_96 = arith.constant 1 : index
    %c0_97 = arith.constant 0 : index
    %c1_98 = arith.constant 1 : index
    %c0_99 = arith.constant 0 : index
    %c0_100 = arith.constant 0 : index
    %101 = vector.load %arg2[%c1_96, %c0_97, %c1_98, %c0_99, %c0_100] : memref<2x2x4x8x4xbf16, #tpu.memory_space<vmem>>, vector<1x1x1x8x4xbf16>
    %102 = vector.shape_cast %101 : vector<1x1x1x8x4xbf16> to vector<8x4xbf16>
    %103 = arith.extf %102 : vector<8x4xbf16> to vector<8x4xf32>
    %cst_101 = arith.constant dense<0.000000e+00> : vector<64x4xf32>
    %104 = tpu.matmul %100, %103, %cst_101 {dimension_numbers = #tpu.dot_dimension_numbers<[1], [0], [0], [1], [0, 0, 1, 1], [], []>} : vector<64x8xf32>, vector<8x4xf32>, vector<64x4xf32> -> vector<64x4xf32>
    %105 = arith.addf %99, %104 : vector<64x4xf32>
    %106 = vector.shape_cast %20 : vector<8x8x8xf32> to vector<64x8xf32>
    %c1_102 = arith.constant 1 : index
    %c0_103 = arith.constant 0 : index
    %c2_104 = arith.constant 2 : index
    %c0_105 = arith.constant 0 : index
    %c0_106 = arith.constant 0 : index
    %107 = vector.load %arg2[%c1_102, %c0_103, %c2_104, %c0_105, %c0_106] : memref<2x2x4x8x4xbf16, #tpu.memory_space<vmem>>, vector<1x1x1x8x4xbf16>
    %108 = vector.shape_cast %107 : vector<1x1x1x8x4xbf16> to vector<8x4xbf16>
    %109 = arith.extf %108 : vector<8x4xbf16> to vector<8x4xf32>
    %cst_107 = arith.constant dense<0.000000e+00> : vector<64x4xf32>
    %110 = tpu.matmul %106, %109, %cst_107 {dimension_numbers = #tpu.dot_dimension_numbers<[1], [0], [0], [1], [0, 0, 1, 1], [], []>} : vector<64x8xf32>, vector<8x4xf32>, vector<64x4xf32> -> vector<64x4xf32>
    %111 = arith.addf %105, %110 : vector<64x4xf32>
    %112 = vector.shape_cast %23 : vector<8x8x8xf32> to vector<64x8xf32>
    %c1_108 = arith.constant 1 : index
    %c0_109 = arith.constant 0 : index
    %c3_110 = arith.constant 3 : index
    %c0_111 = arith.constant 0 : index
    %c0_112 = arith.constant 0 : index
    %113 = vector.load %arg2[%c1_108, %c0_109, %c3_110, %c0_111, %c0_112] : memref<2x2x4x8x4xbf16, #tpu.memory_space<vmem>>, vector<1x1x1x8x4xbf16>
    %114 = vector.shape_cast %113 : vector<1x1x1x8x4xbf16> to vector<8x4xbf16>
    %115 = arith.extf %114 : vector<8x4xbf16> to vector<8x4xf32>
    %cst_113 = arith.constant dense<0.000000e+00> : vector<64x4xf32>
    %116 = tpu.matmul %112, %115, %cst_113 {dimension_numbers = #tpu.dot_dimension_numbers<[1], [0], [0], [1], [0, 0, 1, 1], [], []>} : vector<64x8xf32>, vector<8x4xf32>, vector<64x4xf32> -> vector<64x4xf32>
    %117 = arith.addf %111, %116 : vector<64x4xf32>
    %c0_114 = arith.constant 0 : index
    %c0_115 = arith.constant 0 : index
    %118 = vector.load %arg3[%c0_114, %c0_115] : memref<1x4xf32, #tpu.memory_space<vmem>>, vector<1x4xf32>
    %119 = vector.broadcast %118 : vector<1x4xf32> to vector<64x4xf32>
    %120 = arith.addf %117, %119 : vector<64x4xf32>
    %cst_116 = arith.constant 0.000000e+00 : f32
    %121 = vector.broadcast %cst_116 : f32 to vector<64x4xf32>
    %122 = arith.cmpf oge, %120, %121 : vector<64x4xf32>
    %cst_117 = arith.constant 2.000000e-01 : f32
    %123 = vector.broadcast %cst_117 : f32 to vector<64x4xf32>
    %124 = arith.mulf %123, %120 : vector<64x4xf32>
    %125 = arith.select %122, %120, %124 : vector<64x4xi1>, vector<64x4xf32>
    %cst_118 = arith.constant 0.000000e+00 : f32
    %126 = vector.broadcast %cst_118 : f32 to vector<64x4xf32>
    %127 = vector.shape_cast %14 : vector<8x8x8xf32> to vector<64x8xf32>
    %c1_119 = arith.constant 1 : index
    %c1_120 = arith.constant 1 : index
    %c0_121 = arith.constant 0 : index
    %c0_122 = arith.constant 0 : index
    %c0_123 = arith.constant 0 : index
    %128 = vector.load %arg2[%c1_119, %c1_120, %c0_121, %c0_122, %c0_123] : memref<2x2x4x8x4xbf16, #tpu.memory_space<vmem>>, vector<1x1x1x8x4xbf16>
    %129 = vector.shape_cast %128 : vector<1x1x1x8x4xbf16> to vector<8x4xbf16>
    %130 = arith.extf %129 : vector<8x4xbf16> to vector<8x4xf32>
    %cst_124 = arith.constant dense<0.000000e+00> : vector<64x4xf32>
    %131 = tpu.matmul %127, %130, %cst_124 {dimension_numbers = #tpu.dot_dimension_numbers<[1], [0], [0], [1], [0, 0, 1, 1], [], []>} : vector<64x8xf32>, vector<8x4xf32>, vector<64x4xf32> -> vector<64x4xf32>
    %132 = arith.addf %126, %131 : vector<64x4xf32>
    %133 = vector.shape_cast %17 : vector<8x8x8xf32> to vector<64x8xf32>
    %c1_125 = arith.constant 1 : index
    %c1_126 = arith.constant 1 : index
    %c1_127 = arith.constant 1 : index
    %c0_128 = arith.constant 0 : index
    %c0_129 = arith.constant 0 : index
    %134 = vector.load %arg2[%c1_125, %c1_126, %c1_127, %c0_128, %c0_129] : memref<2x2x4x8x4xbf16, #tpu.memory_space<vmem>>, vector<1x1x1x8x4xbf16>
    %135 = vector.shape_cast %134 : vector<1x1x1x8x4xbf16> to vector<8x4xbf16>
    %136 = arith.extf %135 : vector<8x4xbf16> to vector<8x4xf32>
    %cst_130 = arith.constant dense<0.000000e+00> : vector<64x4xf32>
    %137 = tpu.matmul %133, %136, %cst_130 {dimension_numbers = #tpu.dot_dimension_numbers<[1], [0], [0], [1], [0, 0, 1, 1], [], []>} : vector<64x8xf32>, vector<8x4xf32>, vector<64x4xf32> -> vector<64x4xf32>
    %138 = arith.addf %132, %137 : vector<64x4xf32>
    %139 = vector.shape_cast %23 : vector<8x8x8xf32> to vector<64x8xf32>
    %c1_131 = arith.constant 1 : index
    %c1_132 = arith.constant 1 : index
    %c2_133 = arith.constant 2 : index
    %c0_134 = arith.constant 0 : index
    %c0_135 = arith.constant 0 : index
    %140 = vector.load %arg2[%c1_131, %c1_132, %c2_133, %c0_134, %c0_135] : memref<2x2x4x8x4xbf16, #tpu.memory_space<vmem>>, vector<1x1x1x8x4xbf16>
    %141 = vector.shape_cast %140 : vector<1x1x1x8x4xbf16> to vector<8x4xbf16>
    %142 = arith.extf %141 : vector<8x4xbf16> to vector<8x4xf32>
    %cst_136 = arith.constant dense<0.000000e+00> : vector<64x4xf32>
    %143 = tpu.matmul %139, %142, %cst_136 {dimension_numbers = #tpu.dot_dimension_numbers<[1], [0], [0], [1], [0, 0, 1, 1], [], []>} : vector<64x8xf32>, vector<8x4xf32>, vector<64x4xf32> -> vector<64x4xf32>
    %144 = arith.addf %138, %143 : vector<64x4xf32>
    %145 = vector.shape_cast %26 : vector<8x8x8xf32> to vector<64x8xf32>
    %c1_137 = arith.constant 1 : index
    %c1_138 = arith.constant 1 : index
    %c3_139 = arith.constant 3 : index
    %c0_140 = arith.constant 0 : index
    %c0_141 = arith.constant 0 : index
    %146 = vector.load %arg2[%c1_137, %c1_138, %c3_139, %c0_140, %c0_141] : memref<2x2x4x8x4xbf16, #tpu.memory_space<vmem>>, vector<1x1x1x8x4xbf16>
    %147 = vector.shape_cast %146 : vector<1x1x1x8x4xbf16> to vector<8x4xbf16>
    %148 = arith.extf %147 : vector<8x4xbf16> to vector<8x4xf32>
    %cst_142 = arith.constant dense<0.000000e+00> : vector<64x4xf32>
    %149 = tpu.matmul %145, %148, %cst_142 {dimension_numbers = #tpu.dot_dimension_numbers<[1], [0], [0], [1], [0, 0, 1, 1], [], []>} : vector<64x8xf32>, vector<8x4xf32>, vector<64x4xf32> -> vector<64x4xf32>
    %150 = arith.addf %144, %149 : vector<64x4xf32>
    %c0_143 = arith.constant 0 : index
    %c0_144 = arith.constant 0 : index
    %151 = vector.load %arg3[%c0_143, %c0_144] : memref<1x4xf32, #tpu.memory_space<vmem>>, vector<1x4xf32>
    %152 = vector.broadcast %151 : vector<1x4xf32> to vector<64x4xf32>
    %153 = arith.addf %150, %152 : vector<64x4xf32>
    %cst_145 = arith.constant 0.000000e+00 : f32
    %154 = vector.broadcast %cst_145 : f32 to vector<64x4xf32>
    %155 = arith.cmpf oge, %153, %154 : vector<64x4xf32>
    %cst_146 = arith.constant 2.000000e-01 : f32
    %156 = vector.broadcast %cst_146 : f32 to vector<64x4xf32>
    %157 = arith.mulf %156, %153 : vector<64x4xf32>
    %158 = arith.select %155, %153, %157 : vector<64x4xi1>, vector<64x4xf32>
    %159 = tpu.concatenate %59, %92 in 1 : vector<64x4xf32>, vector<64x4xf32> -> vector<64x8xf32>
    %160 = vector.shape_cast %159 : vector<64x8xf32> to vector<8x1x8x8xf32>
    %161 = tpu.concatenate %125, %158 in 1 : vector<64x4xf32>, vector<64x4xf32> -> vector<64x8xf32>
    %162 = vector.shape_cast %161 : vector<64x8xf32> to vector<8x1x8x8xf32>
    %163 = tpu.concatenate %160, %162 in 1 : vector<8x1x8x8xf32>, vector<8x1x8x8xf32> -> vector<8x2x8x8xf32>
    %164 = vector.shape_cast %163 : vector<8x2x8x8xf32> to vector<1x8x2x8x8xf32>
    %165 = arith.truncf %164 : vector<1x8x2x8x8xf32> to vector<1x8x2x8x8xbf16>
    %c0_147 = arith.constant 0 : index
    %c0_148 = arith.constant 0 : index
    %c0_149 = arith.constant 0 : index
    %c0_150 = arith.constant 0 : index
    %c0_151 = arith.constant 0 : index
    %166 = vector.load %arg4[%c0_147, %c0_148, %c0_149, %c0_150, %c0_151] : memref<1x8x2x8x8xbf16, #tpu.memory_space<vmem>>, vector<1x8x2x8x8xbf16>
    tpu.vector_store %arg4[%c0_147, %c0_148, %c0_149, %c0_150, %c0_151], %165 {strides = array<i32>} : memref<1x8x2x8x8xbf16, #tpu.memory_space<vmem>>, vector<1x8x2x8x8xbf16>,
    return
  }
  func.func @transform_0(%arg0: i32) -> (i32, i32, i32, i32) {
    %c0_i32 = arith.constant 0 : i32
    %c0_i32_0 = arith.constant 0 : i32
    %c0_i32_1 = arith.constant 0 : i32
    %c0_i32_2 = arith.constant 0 : i32
    return %arg0, %c0_i32, %c0_i32_0, %c0_i32_1 : i32, i32, i32, i32
  }
  func.func @transform_1(%arg0: i32) -> (i32, i32, i32, i32, i32) {
    %c0_i32 = arith.constant 0 : i32
    %c0_i32_0 = arith.constant 0 : i32
    %c0_i32_1 = arith.constant 0 : i32
    %c0_i32_2 = arith.constant 0 : i32
    %c0_i32_3 = arith.constant 0 : i32
    %c0_i32_4 = arith.constant 0 : i32
    return %c0_i32, %c0_i32_0, %c0_i32_1, %c0_i32_2, %c0_i32_3 : i32, i32, i32, i32, i32
  }
  func.func @transform_2(%arg0: i32) -> (i32, i32) {
    %c0_i32 = arith.constant 0 : i32
    %c0_i32_0 = arith.constant 0 : i32
    %c0_i32_1 = arith.constant 0 : i32
    return %c0_i32, %c0_i32_0 : i32, i32
  }
  func.func @transform_3(%arg0: i32) -> (i32, i32, i32, i32, i32) {
    %c0_i32 = arith.constant 0 : i32
    %c0_i32_0 = arith.constant 0 : i32
    %c0_i32_1 = arith.constant 0 : i32
    %c0_i32_2 = arith.constant 0 : i32
    %c0_i32_3 = arith.constant 0 : i32
    return %arg0, %c0_i32, %c0_i32_0, %c0_i32_1, %c0_i32_2 : i32, i32, i32, i32, i32
  }
}

</mosaic_0001>

<llo_original>
// kernel: unet_block_innermost.3
$region0: #{unet_block_innermost.3}
  #allocation0 [shape = 'u32[]', space=smem, size = 0x4, offset = 0x4, fixed_abs, tag = 'smem constant byte address 0x4 - core index']
  #allocation1 [shape = 'u32[144,128]{1,0:T(1,128)}', space=vmem, size = 0x12000, scoped, tag = 'internal scratch']
  %s0 = inlined_call_operand.vmem [shape: bf16[2,10,10,8], index: 0, kind: input, shape index: {}]
  %s1 = inlined_call_operand.vmem [shape: bf16[2,2,4,8,4], index: 1, kind: input, shape index: {}]
  %s2 = inlined_call_operand.vmem [shape: f32[1,4], index: 2, kind: input, shape index: {}]
  %s3 = inlined_call_operand.vmem [shape: bf16[2,8,2,8,8], index: 3, kind: output, shape index: {}]
  %s4 = sld [smem:[#allocation0]]
  $region45: #{unet_block_innermost.3} parent=0
    _
  %s6 = ssub.s32 1, %s4
  %s7 = scalar_select 0, %s6, %s4
  loop: start=0, step=1, limit=4
  $region2: #{unet_block_innermost.3} parent=0 // loop_pre_header
    _
  $region3: #{unet_block_innermost.3} parent=0 // loop_header
    %s9 = sphi 0, %s13
    %p10 = scmp.ge.s32.totalorder %s9, 4
    %s19 = sphi 0, %s21
    %s22 = sphi 0, %s19
    %s23 = sphi 0, %s22
    %s39 = sphi 0, %s23
    %s43 = sphi 0, %s43
    %s45 = sphi 0, %s43
    %s46 = sphi 0, %s45
    %s60 = sphi 0, %s46
    %s64 = sphi 0, %s64
    %s66 = sphi 0, %s64
    %s67 = sphi 0, %s66
    %s81 = sphi 0, %s67
    %s87 = sphi 0, %s89
    %s90 = sphi 0, %s87
    %s91 = sphi 0, %s90
    %s107 = sphi 0, %s91
  $region4: #{unet_block_innermost.3} parent=0 // loop_header_branch
    %12 = sbr.rel (%p10) target = $region8
  $region5: #{unet_block_innermost.3} parent=0 // loop_body
    %s14 = ssub.s32 %s9, 1
    %s15 = ssub.s32 %s9, 2
    %s16 = sadd.s32 %s9, 1
    %s17 = ssub.s32 %s9, %s16
    %p18 = scmp.eq.s32.totalorder %s17, 0
    %s20 = sadd.s32 %s19, 1
    %s21 = scalar_select %p18, %s19, %s20
    %p24 = pneg %p18
    %p25 = scmp.eq.s32.totalorder %s9, 1
    %p26 = por %p24, %p25
    %p27 = scmp.ne.s32.totalorder %s19, %s22
    %p28 = scmp.eq.s32.totalorder %s9, 0
    %p29 = por %p27, %p28
    %p30 = scmp.ne.s32.totalorder %s19, %s22
    %p31 = scmp.eq.s32.totalorder %s14, 1
    %p32 = por %p30, %p31
    %p33 = scmp.ne.s32.totalorder %s22, %s23
    %p34 = scmp.eq.s32.totalorder %s14, 0
    %p35 = por %p33, %p34
    %p36 = scmp.ne.s32.totalorder %s22, %s23
    %p37 = scmp.eq.s32.totalorder %s15, 1
    %p38 = por %p36, %p37
    %p40 = scmp.ne.s32.totalorder %s23, %s39
    %p41 = scmp.eq.s32.totalorder %s15, 0
    %p42 = por %p40, %p41
    %s44 = sadd.s32 %s43, 1
    %p47 = scmp.eq.s32.totalorder %s9, 1
    %p48 = scmp.ne.s32.totalorder %s43, %s45
    %p49 = scmp.eq.s32.totalorder %s9, 0
    %p50 = por %p48, %p49
    %p51 = scmp.ne.s32.totalorder %s43, %s45
    %p52 = scmp.eq.s32.totalorder %s14, 1
    %p53 = por %p51, %p52
    %p54 = scmp.ne.s32.totalorder %s45, %s46
    %p55 = scmp.eq.s32.totalorder %s14, 0
    %p56 = por %p54, %p55
    %p57 = scmp.ne.s32.totalorder %s45, %s46
    %p58 = scmp.eq.s32.totalorder %s15, 1
    %p59 = por %p57, %p58
    %p61 = scmp.ne.s32.totalorder %s46, %s60
    %p62 = scmp.eq.s32.totalorder %s15, 0
    %p63 = por %p61, %p62
    %s65 = sadd.s32 %s64, 1
    %p68 = scmp.eq.s32.totalorder %s9, 1
    %p69 = scmp.ne.s32.totalorder %s64, %s66
    %p70 = scmp.eq.s32.totalorder %s9, 0
    %p71 = por %p69, %p70
    %p72 = scmp.ne.s32.totalorder %s64, %s66
    %p73 = scmp.eq.s32.totalorder %s14, 1
    %p74 = por %p72, %p73
    %p75 = scmp.ne.s32.totalorder %s66, %s67
    %p76 = scmp.eq.s32.totalorder %s14, 0
    %p77 = por %p75, %p76
    %p78 = scmp.ne.s32.totalorder %s66, %s67
    %p79 = scmp.eq.s32.totalorder %s15, 1
    %p80 = por %p78, %p79
    %p82 = scmp.ne.s32.totalorder %s67, %s81
    %p83 = scmp.eq.s32.totalorder %s15, 0
    %p84 = por %p82, %p83
    %s85 = ssub.s32 %s9, %s16
    %p86 = scmp.eq.s32.totalorder %s85, 0
    %s88 = sadd.s32 %s87, 1
    %s89 = scalar_select %p86, %s87, %s88
    %p92 = pneg %p86
    %p93 = scmp.eq.s32.totalorder %s9, 1
    %p94 = por %p92, %p93
    %p95 = scmp.ne.s32.totalorder %s87, %s90
    %p96 = scmp.eq.s32.totalorder %s9, 0
    %p97 = por %p95, %p96
    %p98 = scmp.ne.s32.totalorder %s87, %s90
    %p99 = scmp.eq.s32.totalorder %s14, 1
    %p100 = por %p98, %p99
    %p101 = scmp.ne.s32.totalorder %s90, %s91
    %p102 = scmp.eq.s32.totalorder %s14, 0
    %p103 = por %p101, %p102
    %p104 = scmp.ne.s32.totalorder %s90, %s91
    %p105 = scmp.eq.s32.totalorder %s15, 1
    %p106 = por %p104, %p105
    %p108 = scmp.ne.s32.totalorder %s91, %s107
    %p109 = scmp.eq.s32.totalorder %s15, 0
    %p110 = por %p108, %p109
    %p111 = scmp.le.s32.totalorder 1, %s9
    %p112 = scmp.lt.s32.totalorder %s9, 3
    %p113 = pnand %p111, %p112
    %p114 = pneg %p113
    // Predicated region
    $region9: #{unet_block_innermost.3} parent=5 // pred_check
      _
    $region10: #{unet_block_innermost.3} parent=5 // pred_check_branch
      %116 = sbr.rel (%p113) target = $region12
    $region11: #{unet_block_innermost.3} parent=5 // pred_region
      %s117 = ssub.s32 %s9, 1
      // Predicated region
      $region13: #{unet_block_innermost.3} parent=11 // pred_check
        %p118 = pneg %p56
      $region14: #{unet_block_innermost.3} parent=11 // pred_check_branch
        %120 = sbr.rel (%p118) target = $region16
      $region15: #{unet_block_innermost.3} parent=11 // pred_region
        _
      $region16: #{unet_block_innermost.3} parent=11 // pred_fallthru
        _
      // Predicated region
      $region17: #{unet_block_innermost.3} parent=11 // pred_check
        %p121 = pneg %p77
      $region18: #{unet_block_innermost.3} parent=11 // pred_check_branch
        %123 = sbr.rel (%p121) target = $region20
      $region19: #{unet_block_innermost.3} parent=11 // pred_region
        _
      $region20: #{unet_block_innermost.3} parent=11 // pred_fallthru
        _
    $region12: #{unet_block_innermost.3} parent=5 // pred_fallthru
      _
    %p124 = scmp.lt.s32.totalorder %s9, 2
    // Predicated region
    $region21: #{unet_block_innermost.3} parent=5 // pred_check
      %p125 = pneg %p124
    $region22: #{unet_block_innermost.3} parent=5 // pred_check_branch
      %127 = sbr.rel (%p125) target = $region24
    $region23: #{unet_block_innermost.3} parent=5 // pred_region
      // Predicated region
      $region25: #{unet_block_innermost.3} parent=23 // pred_check
        %p128 = pneg %p29
      $region26: #{unet_block_innermost.3} parent=23 // pred_check_branch
        %130 = sbr.rel (%p128) target = $region28
      $region27: #{unet_block_innermost.3} parent=23 // pred_region
        %p131 = scmp.lt.s32.totalorder %s9, 1
        %s132 = scalar_select %p131, %s9, 1
        %s133 = smul.addr %s132, 20
        %s134 = smul.addr %s133, 4
        %s135 = scalar_lea.vmem %s0, %s134
      $region28: #{unet_block_innermost.3} parent=23 // pred_fallthru
        _
    $region24: #{unet_block_innermost.3} parent=5 // pred_fallthru
      _
    %p136 = scmp.le.s32.totalorder 1, %s9
    %p137 = scmp.lt.s32.totalorder %s9, 3
    %p138 = pnand %p136, %p137
    %p139 = pneg %p138
    // Predicated region
    $region29: #{unet_block_innermost.3} parent=5 // pred_check
      _
    $region30: #{unet_block_innermost.3} parent=5 // pred_check_branch
      %141 = sbr.rel (%p138) target = $region32
    $region31: #{unet_block_innermost.3} parent=5 // pred_region
      %s142 = ssub.s32 %s9, 1
      %p143 = scmp.lt.s32.totalorder %s14, 1
      %s144 = scalar_select %p143, %s14, 1
      %s145 = smul.addr %s144, 20
      %s146 = smul.addr %s145, 4
      %s147 = scalar_lea.vmem %s0, %s146
      %p148 = pneg %p35
      %p149 = pneg %p32
      %p150 = pneg %p56
      %p151 = pneg %p53
      %p152 = pneg %p77
      %p153 = pneg %p74
      %p154 = pneg %p103
      %p155 = pneg %p100
      %p156 = scmp.lt.s32.totalorder %s14, 1
      %s157 = scalar_select %p156, %s14, 1
      %s158 = smul.addr %s157, 16
      %s159 = smul.addr %s158, 4
      %s160 = scalar_lea.vmem %s3, %s159
      %p161 = scmp.lt.s32.totalorder %s14, 1
      %s162 = scalar_select %p161, %s14, 1
      %s163 = smul.addr %s162, 20
      %s164 = smul.addr %s163, 4
      %s165 = scalar_lea.vmem %s0, %s164
      %p166 = scmp.lt.s32.totalorder %s14, 1
      %s167 = scalar_select %p166, %s14, 1
      %s168 = smul.addr %s167, 16
      %s169 = smul.addr %s168, 4
      %s170 = scalar_lea.vmem %s3, %s169
      %v171 = vld [vmem:[%s165] sm:$0xf]
      %v172 = vld [vmem:[%s165 + $0x8] sm:$0xf]
      %v173 = vld [vmem:[%s165 + $0x10] sm:$0xf]
      %v174 = vld [vmem:[%s165 + $0x18] sm:$0xf]
      %v175 = vld [vmem:[%s165 + $0x20] sm:$0xf]
      %v176 = vld [vmem:[%s165 + $0x28] sm:$0xf]
      %v177 = vld [vmem:[%s165 + $0x30] sm:$0xf]
      %v178 = vld [vmem:[%s165 + $0x38] sm:$0xf]
      %v179 = vunpack.c.l.bf16 %v171
      %v180 = vunpack.c.l.bf16 %v172
      %v181 = vunpack.c.l.bf16 %v173
      %v182 = vunpack.c.l.bf16 %v174
      %v183 = vunpack.c.l.bf16 %v175
      %v184 = vunpack.c.l.bf16 %v176
      %v185 = vunpack.c.l.bf16 %v177
      %v186 = vunpack.c.l.bf16 %v178
      %v187 = vld [vmem:[%s165 + $0x4] sm:$0x1]
      %v188 = vld [vmem:[%s165 + $0xc] sm:$0x1]
      %v189 = vld [vmem:[%s165 + $0x14] sm:$0x1]
      %v190 = vld [vmem:[%s165 + $0x1c] sm:$0x1]
      %v191 = vld [vmem:[%s165 + $0x24] sm:$0x1]
      %v192 = vld [vmem:[%s165 + $0x2c] sm:$0x1]
      %v193 = vld [vmem:[%s165 + $0x34] sm:$0x1]
      %v194 = vld [vmem:[%s165 + $0x3c] sm:$0x1]
      %v195 = vunpack.c.l.bf16 %v187
      %v196 = vunpack.c.l.bf16 %v188
      %v197 = vunpack.c.l.bf16 %v189
      %v198 = vunpack.c.l.bf16 %v190
      %v199 = vunpack.c.l.bf16 %v191
      %v200 = vunpack.c.l.bf16 %v192
      %v201 = vunpack.c.l.bf16 %v193
      %v202 = vunpack.c.l.bf16 %v194
      %v203 = vld [vmem:[%s165] sm:$0xe]
      %v204 = vld [vmem:[%s165 + $0x8] sm:$0xe]
      %v205 = vld [vmem:[%s165 + $0x10] sm:$0xe]
      %v206 = vld [vmem:[%s165 + $0x18] sm:$0xe]
      %v207 = vld [vmem:[%s165 + $0x20] sm:$0xe]
      %v208 = vld [vmem:[%s165 + $0x28] sm:$0xe]
      %v209 = vld [vmem:[%s165 + $0x30] sm:$0xe]
      %v210 = vld [vmem:[%s165 + $0x38] sm:$0xe]
      %v211 = vunpack.c.l.bf16 %v203
      %v212 = vunpack.c.l.bf16 %v204
      %v213 = vunpack.c.l.bf16 %v205
      %v214 = vunpack.c.l.bf16 %v206
      %v215 = vunpack.c.l.bf16 %v207
      %v216 = vunpack.c.l.bf16 %v208
      %v217 = vunpack.c.l.bf16 %v209
      %v218 = vunpack.c.l.bf16 %v210
      %s219 = scalar_lea.vmem %s165, 8
      %v220 = vld [vmem:[%s219] sm:$0xf]
      %v221 = vld [vmem:[%s219 + $0x8] sm:$0xf]
      %v222 = vld [vmem:[%s219 + $0x10] sm:$0xf]
      %v223 = vld [vmem:[%s219 + $0x18] sm:$0xf]
      %v224 = vld [vmem:[%s219 + $0x20] sm:$0xf]
      %v225 = vld [vmem:[%s219 + $0x28] sm:$0xf]
      %v226 = vld [vmem:[%s219 + $0x30] sm:$0xf]
      %v227 = vld [vmem:[%s219 + $0x38] sm:$0xf]
      %v228 = vunpack.c.l.bf16 %v220
      %v229 = vunpack.c.l.bf16 %v221
      %v230 = vunpack.c.l.bf16 %v222
      %v231 = vunpack.c.l.bf16 %v223
      %v232 = vunpack.c.l.bf16 %v224
      %v233 = vunpack.c.l.bf16 %v225
      %v234 = vunpack.c.l.bf16 %v226
      %v235 = vunpack.c.l.bf16 %v227
      %v236 = vld [vmem:[%s219 + $0x4] sm:$0x1]
      %v237 = vld [vmem:[%s219 + $0xc] sm:$0x1]
      %v238 = vld [vmem:[%s219 + $0x14] sm:$0x1]
      %v239 = vld [vmem:[%s219 + $0x1c] sm:$0x1]
      %v240 = vld [vmem:[%s219 + $0x24] sm:$0x1]
      %v241 = vld [vmem:[%s219 + $0x2c] sm:$0x1]
      %v242 = vld [vmem:[%s219 + $0x34] sm:$0x1]
      %v243 = vld [vmem:[%s219 + $0x3c] sm:$0x1]
      %v244 = vunpack.c.l.bf16 %v236
      %v245 = vunpack.c.l.bf16 %v237
      %v246 = vunpack.c.l.bf16 %v238
      %v247 = vunpack.c.l.bf16 %v239
      %v248 = vunpack.c.l.bf16 %v240
      %v249 = vunpack.c.l.bf16 %v241
      %v250 = vunpack.c.l.bf16 %v242
      %v251 = vunpack.c.l.bf16 %v243
      %v252 = vld [vmem:[%s219] sm:$0xe]
      %v253 = vld [vmem:[%s219 + $0x8] sm:$0xe]
      %v254 = vld [vmem:[%s219 + $0x10] sm:$0xe]
      %v255 = vld [vmem:[%s219 + $0x18] sm:$0xe]
      %v256 = vld [vmem:[%s219 + $0x20] sm:$0xe]
      %v257 = vld [vmem:[%s219 + $0x28] sm:$0xe]
      %v258 = vld [vmem:[%s219 + $0x30] sm:$0xe]
      %v259 = vld [vmem:[%s219 + $0x38] sm:$0xe]
      %v260 = vunpack.c.l.bf16 %v252
      %v261 = vunpack.c.l.bf16 %v253
      %v262 = vunpack.c.l.bf16 %v254
      %v263 = vunpack.c.l.bf16 %v255
      %v264 = vunpack.c.l.bf16 %v256
      %v265 = vunpack.c.l.bf16 %v257
      %v266 = vunpack.c.l.bf16 %v258
      %v267 = vunpack.c.l.bf16 %v259
      %s268 = scalar_lea.vmem %s165, 16
      %v269 = vld [vmem:[%s268] sm:$0xf]
      %v270 = vld [vmem:[%s268 + $0x8] sm:$0xf]
      %v271 = vld [vmem:[%s268 + $0x10] sm:$0xf]
      %v272 = vld [vmem:[%s268 + $0x18] sm:$0xf]
      %v273 = vld [vmem:[%s268 + $0x20] sm:$0xf]
      %v274 = vld [vmem:[%s268 + $0x28] sm:$0xf]
      %v275 = vld [vmem:[%s268 + $0x30] sm:$0xf]
      %v276 = vld [vmem:[%s268 + $0x38] sm:$0xf]
      %v277 = vunpack.c.l.bf16 %v269
      %v278 = vunpack.c.l.bf16 %v270
      %v279 = vunpack.c.l.bf16 %v271
      %v280 = vunpack.c.l.bf16 %v272
      %v281 = vunpack.c.l.bf16 %v273
      %v282 = vunpack.c.l.bf16 %v274
      %v283 = vunpack.c.l.bf16 %v275
      %v284 = vunpack.c.l.bf16 %v276
      %v285 = vld [vmem:[%s268 + $0x4] sm:$0x1]
      %v286 = vld [vmem:[%s268 + $0xc] sm:$0x1]
      %v287 = vld [vmem:[%s268 + $0x14] sm:$0x1]
      %v288 = vld [vmem:[%s268 + $0x1c] sm:$0x1]
      %v289 = vld [vmem:[%s268 + $0x24] sm:$0x1]
      %v290 = vld [vmem:[%s268 + $0x2c] sm:$0x1]
      %v291 = vld [vmem:[%s268 + $0x34] sm:$0x1]
      %v292 = vld [vmem:[%s268 + $0x3c] sm:$0x1]
      %v293 = vunpack.c.l.bf16 %v285
      %v294 = vunpack.c.l.bf16 %v286
      %v295 = vunpack.c.l.bf16 %v287
      %v296 = vunpack.c.l.bf16 %v288
      %v297 = vunpack.c.l.bf16 %v289
      %v298 = vunpack.c.l.bf16 %v290
      %v299 = vunpack.c.l.bf16 %v291
      %v300 = vunpack.c.l.bf16 %v292
      %v301 = vld [vmem:[%s268] sm:$0xe]
      %v302 = vld [vmem:[%s268 + $0x8] sm:$0xe]
      %v303 = vld [vmem:[%s268 + $0x10] sm:$0xe]
      %v304 = vld [vmem:[%s268 + $0x18] sm:$0xe]
      %v305 = vld [vmem:[%s268 + $0x20] sm:$0xe]
      %v306 = vld [vmem:[%s268 + $0x28] sm:$0xe]
      %v307 = vld [vmem:[%s268 + $0x30] sm:$0xe]
      %v308 = vld [vmem:[%s268 + $0x38] sm:$0xe]
      %v309 = vunpack.c.l.bf16 %v301
      %v310 = vunpack.c.l.bf16 %v302
      %v311 = vunpack.c.l.bf16 %v303
      %v312 = vunpack.c.l.bf16 %v304
      %v313 = vunpack.c.l.bf16 %v305
      %v314 = vunpack.c.l.bf16 %v306
      %v315 = vunpack.c.l.bf16 %v307
      %v316 = vunpack.c.l.bf16 %v308
      %v317 = vld [vmem:[%s1] sm:$0xf]
      %v318 = vunpack.c.l.bf16 %v317
      %vm335 = vcmask 1046528
      %v336 = vrot.slane %v179, 1
      %v337 = vrot.slane %v195, 1
      %v338 = vsel %vm335, %v336, %v337
      %v339 = vrot.slane %v180, 1
      %v340 = vrot.slane %v196, 1
      %v341 = vsel %vm335, %v339, %v340
      %v342 = vrot.slane %v181, 1
      %v343 = vrot.slane %v197, 1
      %v344 = vsel %vm335, %v342, %v343
      %v345 = vrot.slane %v182, 1
      %v346 = vrot.slane %v198, 1
      %v347 = vsel %vm335, %v345, %v346
      %v348 = vrot.slane %v183, 1
      %v349 = vrot.slane %v199, 1
      %v350 = vsel %vm335, %v348, %v349
      %v351 = vrot.slane %v184, 1
      %v352 = vrot.slane %v200, 1
      %v353 = vsel %vm335, %v351, %v352
      %v354 = vrot.slane %v185, 1
      %v355 = vrot.slane %v201, 1
      %v356 = vsel %vm335, %v354, %v355
      %v357 = vrot.slane %v186, 1
      %v358 = vrot.slane %v202, 1
      %v359 = vsel %vm335, %v357, %v358
      %s360 = scalar_lea.vmem %s1, 4
      %v361 = vld [vmem:[%s360] sm:$0xf]
      %v362 = vunpack.c.l.bf16 %v361
      %vm363 = vcmask 64512
      %v364 = vsel %vm363, %v338, 0
      %v366 = vsel %vm363, %v341, 0
      %v368 = vsel %vm363, %v344, 0
      %v370 = vsel %vm363, %v347, 0
      %v372 = vsel %vm363, %v350, 0
      %v374 = vsel %vm363, %v353, 0
      %v376 = vsel %vm363, %v356, 0
      %v378 = vsel %vm363, %v359, 0
      %380 = vmatprep.subr.mxu0 0.0
      %381 = vmatpush1.msra.mxu0 %v362
      %382 = vmatprep.subr.mxu0 0.0
      %383 = vmatpush1.msra.mxu0 0.0
      %384 = vmatprep.subr.mxu0 0.0
      %385 = vmatpush1.msra.mxu0 0.0
      %386 = vmatprep.subr.mxu0 0.0
      %387 = vmatpush1.msra.mxu0 0.0
      %388 = vmatprep.subr.mxu0 0.0
      %389 = vmatpush1.msra.mxu0 0.0
      %390 = vmatprep.subr.mxu0 0.0
      %391 = vmatpush1.msra.mxu0 0.0
      %392 = vmatprep.subr.mxu0 0.0
      %393 = vmatpush1.msra.mxu0 0.0
      %394 = vmatprep.subr.mxu0 0.0
      %395 = vmatpush1.msra.mxu0 0.0
      %396 = vmatprep.subr.mxu0 0.0
      %397 = vmatpush1.msra.mxu0 0.0
      %398 = vmatprep.subr.mxu0 0.0
      %399 = vmatpush1.msra.mxu0 0.0
      %400 = vmatprep.subr.mxu0 0.0
      %401 = vmatpush1.msra.mxu0 0.0
      %402 = vmatprep.subr.mxu0 0.0
      %403 = vmatpush1.msra.mxu0 0.0
      %404 = vmatprep.subr.mxu0 0.0
      %405 = vmatpush1.msra.mxu0 0.0
      %406 = vmatprep.subr.mxu0 0.0
      %407 = vmatpush1.msra.mxu0 0.0
      %408 = vmatprep.subr.mxu0 0.0
      %409 = vmatpush1.msra.mxu0 0.0
      %410 = vmatprep.subr.mxu0 0.0
      %411 = vmatpush1.msra.mxu0 0.0
      %412 = vmatprep.subr.mxu0 0.0
      %413 = vmatpush1.msra.mxu0 0.0
      %414 = vmatprep.subr.mxu0 0.0
      %415 = vmatpush1.msra.mxu0 0.0
      %416 = vmatprep.subr.mxu0 0.0
      %417 = vmatpush1.msra.mxu0 0.0
      %418 = vmatprep.subr.mxu0 0.0
      %419 = vmatpush1.msra.mxu0 0.0
      %420 = vmatprep.subr.mxu0 0.0
      %421 = vmatpush1.msra.mxu0 0.0
      %422 = vmatprep.subr.mxu0 0.0
      %423 = vmatpush1.msra.mxu0 0.0
      %424 = vmatprep.subr.mxu0 0.0
      %425 = vmatpush1.msra.mxu0 0.0
      %426 = vmatprep.subr.mxu0 0.0
      %427 = vmatpush1.msra.mxu0 0.0
      %428 = vmatprep.subr.mxu0 0.0
      %429 = vmatpush1.msra.mxu0 0.0
      %430 = vmatprep.subr.mxu0 0.0
      %431 = vmatpush1.msra.mxu0 0.0
      %432 = vmatprep.subr.mxu0 0.0
      %433 = vmatpush1.msra.mxu0 0.0
      %434 = vmatprep.subr.mxu0 0.0
      %435 = vmatpush1.msra.mxu0 0.0
      %436 = vmatprep.subr.mxu0 0.0
      %437 = vmatpush1.msra.mxu0 0.0
      %438 = vmatprep.subr.mxu0 0.0
      %439 = vmatpush1.msra.mxu0 0.0
      %440 = vmatprep.subr.mxu0 0.0
      %441 = vmatpush1.msra.mxu0 0.0
      %442 = vmatprep.subr.mxu0 0.0
      %443 = vmatpush1.msra.mxu0 0.0
      %444 = vmatprep.mubr.f32.mxu0 0.0
      %445 = vmatmul.mubr.f32.gmra.mrb[0].mxu0 %v364
      %v446 = vpop.f32.mrb[0].mxu0
      %v447 = vadd.f32 0.0, %v446
      %v448 = vpop.f32.mrb[0].mxu0
      %449 = vmatprep.mubr.f32.mxu0 0.0
      %450 = vmatmul.mubr.f32.gmra.mrb[0].mxu0 %v366
      %v451 = vpop.f32.mrb[0].mxu0
      %v452 = vadd.f32 0.0, %v451
      %v453 = vpop.f32.mrb[0].mxu0
      %454 = vmatprep.mubr.f32.mxu0 0.0
      %455 = vmatmul.mubr.f32.gmra.mrb[0].mxu0 %v368
      %v456 = vpop.f32.mrb[0].mxu0
      %v457 = vadd.f32 0.0, %v456
      %v458 = vpop.f32.mrb[0].mxu0
      %459 = vmatprep.mubr.f32.mxu0 0.0
      %460 = vmatmul.mubr.f32.gmra.mrb[0].mxu0 %v370
      %v461 = vpop.f32.mrb[0].mxu0
      %v462 = vadd.f32 0.0, %v461
      %v463 = vpop.f32.mrb[0].mxu0
      %464 = vmatprep.mubr.f32.mxu0 0.0
      %465 = vmatmul.mubr.f32.gmra.mrb[0].mxu0 %v372
      %v466 = vpop.f32.mrb[0].mxu0
      %v467 = vadd.f32 0.0, %v466
      %v468 = vpop.f32.mrb[0].mxu0
      %469 = vmatprep.mubr.f32.mxu0 0.0
      %470 = vmatmul.mubr.f32.gmra.mrb[0].mxu0 %v374
      %v471 = vpop.f32.mrb[0].mxu0
      %v472 = vadd.f32 0.0, %v471
      %v473 = vpop.f32.mrb[0].mxu0
      %474 = vmatprep.mubr.f32.mxu0 0.0
      %475 = vmatmul.mubr.f32.gmra.mrb[0].mxu0 %v376
      %v476 = vpop.f32.mrb[0].mxu0
      %v477 = vadd.f32 0.0, %v476
      %v478 = vpop.f32.mrb[0].mxu0
      %479 = vmatprep.mubr.f32.mxu0 0.0
      %480 = vmatmul.mubr.f32.gmra.mrb[0].mxu0 %v378
      %v481 = vpop.f32.mrb[0].mxu0
      %v482 = vadd.f32 0.0, %v481
      %v483 = vpop.f32.mrb[0].mxu0
      %484 = vdwg.mxu0
      %v485 = vsel %vm363, %v179, 0
      %v487 = vsel %vm363, %v180, 0
      %v489 = vsel %vm363, %v181, 0
      %v491 = vsel %vm363, %v182, 0
      %v493 = vsel %vm363, %v183, 0
      %v495 = vsel %vm363, %v184, 0
      %v497 = vsel %vm363, %v185, 0
      %v499 = vsel %vm363, %v186, 0
      %501 = vmatprep.subr.mxu0 0.0
      %502 = vmatpush1.msra.mxu0 %v318
      %503 = vmatprep.subr.mxu0 0.0
      %504 = vmatpush1.msra.mxu0 0.0
      %505 = vmatprep.subr.mxu0 0.0
      %506 = vmatpush1.msra.mxu0 0.0
      %507 = vmatprep.subr.mxu0 0.0
      %508 = vmatpush1.msra.mxu0 0.0
      %509 = vmatprep.subr.mxu0 0.0
      %510 = vmatpush1.msra.mxu0 0.0
      %511 = vmatprep.subr.mxu0 0.0
      %512 = vmatpush1.msra.mxu0 0.0
      %513 = vmatprep.subr.mxu0 0.0
      %514 = vmatpush1.msra.mxu0 0.0
      %515 = vmatprep.subr.mxu0 0.0
      %516 = vmatpush1.msra.mxu0 0.0
      %517 = vmatprep.subr.mxu0 0.0
      %518 = vmatpush1.msra.mxu0 0.0
      %519 = vmatprep.subr.mxu0 0.0
      %520 = vmatpush1.msra.mxu0 0.0
      %521 = vmatprep.subr.mxu0 0.0
      %522 = vmatpush1.msra.mxu0 0.0
      %523 = vmatprep.subr.mxu0 0.0
      %524 = vmatpush1.msra.mxu0 0.0
      %525 = vmatprep.subr.mxu0 0.0
      %526 = vmatpush1.msra.mxu0 0.0
      %527 = vmatprep.subr.mxu0 0.0
      %528 = vmatpush1.msra.mxu0 0.0
      %529 = vmatprep.subr.mxu0 0.0
      %530 = vmatpush1.msra.mxu0 0.0
      %531 = vmatprep.subr.mxu0 0.0
      %532 = vmatpush1.msra.mxu0 0.0
      %533 = vmatprep.subr.mxu0 0.0
      %534 = vmatpush1.msra.mxu0 0.0
      %535 = vmatprep.subr.mxu0 0.0
      %536 = vmatpush1.msra.mxu0 0.0
      %537 = vmatprep.subr.mxu0 0.0
      %538 = vmatpush1.msra.mxu0 0.0
      %539 = vmatprep.subr.mxu0 0.0
      %540 = vmatpush1.msra.mxu0 0.0
      %541 = vmatprep.subr.mxu0 0.0
      %542 = vmatpush1.msra.mxu0 0.0
      %543 = vmatprep.subr.mxu0 0.0
      %544 = vmatpush1.msra.mxu0 0.0
      %545 = vmatprep.subr.mxu0 0.0
      %546 = vmatpush1.msra.mxu0 0.0
      %547 = vmatprep.subr.mxu0 0.0
      %548 = vmatpush1.msra.mxu0 0.0
      %549 = vmatprep.subr.mxu0 0.0
      %550 = vmatpush1.msra.mxu0 0.0
      %551 = vmatprep.subr.mxu0 0.0
      %552 = vmatpush1.msra.mxu0 0.0
      %553 = vmatprep.subr.mxu0 0.0
      %554 = vmatpush1.msra.mxu0 0.0
      %555 = vmatprep.subr.mxu0 0.0
      %556 = vmatpush1.msra.mxu0 0.0
      %557 = vmatprep.subr.mxu0 0.0
      %558 = vmatpush1.msra.mxu0 0.0
      %559 = vmatprep.subr.mxu0 0.0
      %560 = vmatpush1.msra.mxu0 0.0
      %561 = vmatprep.subr.mxu0 0.0
      %562 = vmatpush1.msra.mxu0 0.0
      %563 = vmatprep.subr.mxu0 0.0
      %564 = vmatpush1.msra.mxu0 0.0
      %565 = vmatprep.mubr.f32.mxu0 0.0
      %566 = vmatmul.mubr.f32.gmra.mrb[0].mxu0 %v485
      %v567 = vpop.f32.mrb[0].mxu0
      %v568 = vadd.f32 %v447, %v567
      %v569 = vpop.f32.mrb[0].mxu0
      %570 = vmatprep.mubr.f32.mxu0 0.0
      %571 = vmatmul.mubr.f32.gmra.mrb[0].mxu0 %v487
      %v572 = vpop.f32.mrb[0].mxu0
      %v573 = vadd.f32 %v452, %v572
      %v574 = vpop.f32.mrb[0].mxu0
      %575 = vmatprep.mubr.f32.mxu0 0.0
      %576 = vmatmul.mubr.f32.gmra.mrb[0].mxu0 %v489
      %v577 = vpop.f32.mrb[0].mxu0
      %v578 = vadd.f32 %v457, %v577
      %v579 = vpop.f32.mrb[0].mxu0
      %580 = vmatprep.mubr.f32.mxu0 0.0
      %581 = vmatmul.mubr.f32.gmra.mrb[0].mxu0 %v491
      %v582 = vpop.f32.mrb[0].mxu0
      %v583 = vadd.f32 %v462, %v582
      %v584 = vpop.f32.mrb[0].mxu0
      %585 = vmatprep.mubr.f32.mxu0 0.0
      %586 = vmatmul.mubr.f32.gmra.mrb[0].mxu0 %v493
      %v587 = vpop.f32.mrb[0].mxu0
      %v588 = vadd.f32 %v467, %v587
      %v589 = vpop.f32.mrb[0].mxu0
      %590 = vmatprep.mubr.f32.mxu0 0.0
      %591 = vmatmul.mubr.f32.gmra.mrb[0].mxu0 %v495
      %v592 = vpop.f32.mrb[0].mxu0
      %v593 = vadd.f32 %v472, %v592
      %v594 = vpop.f32.mrb[0].mxu0
      %595 = vmatprep.mubr.f32.mxu0 0.0
      %596 = vmatmul.mubr.f32.gmra.mrb[0].mxu0 %v497
      %v597 = vpop.f32.mrb[0].mxu0
      %v598 = vadd.f32 %v477, %v597
      %v599 = vpop.f32.mrb[0].mxu0
      %600 = vmatprep.mubr.f32.mxu0 0.0
      %601 = vmatmul.mubr.f32.gmra.mrb[0].mxu0 %v499
      %v602 = vpop.f32.mrb[0].mxu0
      %v603 = vadd.f32 %v482, %v602
      %v604 = vpop.f32.mrb[0].mxu0
      %605 = vdwg.mxu0
      %s606 = scalar_lea.vmem %s1, 8
      %v607 = vld [vmem:[%s606] sm:$0xf]
      %v608 = vunpack.c.l.bf16 %v607
      %v610 = vsel %vm363, %v228, 0
      %v613 = vsel %vm363, %v229, 0
      %v616 = vsel %vm363, %v230, 0
      %v619 = vsel %vm363, %v231, 0
      %v622 = vsel %vm363, %v232, 0
      %v625 = vsel %vm363, %v233, 0
      %v628 = vsel %vm363, %v234, 0
      %v631 = vsel %vm363, %v235, 0
      %633 = vmatprep.subr.mxu0 0.0
      %634 = vmatpush1.msra.mxu0 %v608
      %635 = vmatprep.subr.mxu0 0.0
      %636 = vmatpush1.msra.mxu0 0.0
      %637 = vmatprep.subr.mxu0 0.0
      %638 = vmatpush1.msra.mxu0 0.0
      %639 = vmatprep.subr.mxu0 0.0
      %640 = vmatpush1.msra.mxu0 0.0
      %641 = vmatprep.subr.mxu0 0.0
      %642 = vmatpush1.msra.mxu0 0.0
      %643 = vmatprep.subr.mxu0 0.0
      %644 = vmatpush1.msra.mxu0 0.0
      %645 = vmatprep.subr.mxu0 0.0
      %646 = vmatpush1.msra.mxu0 0.0
      %647 = vmatprep.subr.mxu0 0.0
      %648 = vmatpush1.msra.mxu0 0.0
      %649 = vmatprep.subr.mxu0 0.0
      %650 = vmatpush1.msra.mxu0 0.0
      %651 = vmatprep.subr.mxu0 0.0
      %652 = vmatpush1.msra.mxu0 0.0
      %653 = vmatprep.subr.mxu0 0.0
      %654 = vmatpush1.msra.mxu0 0.0
      %655 = vmatprep.subr.mxu0 0.0
      %656 = vmatpush1.msra.mxu0 0.0
      %657 = vmatprep.subr.mxu0 0.0
      %658 = vmatpush1.msra.mxu0 0.0
      %659 = vmatprep.subr.mxu0 0.0
      %660 = vmatpush1.msra.mxu0 0.0
      %661 = vmatprep.subr.mxu0 0.0
      %662 = vmatpush1.msra.mxu0 0.0
      %663 = vmatprep.subr.mxu0 0.0
      %664 = vmatpush1.msra.mxu0 0.0
      %665 = vmatprep.subr.mxu0 0.0
      %666 = vmatpush1.msra.mxu0 0.0
      %667 = vmatprep.subr.mxu0 0.0
      %668 = vmatpush1.msra.mxu0 0.0
      %669 = vmatprep.subr.mxu0 0.0
      %670 = vmatpush1.msra.mxu0 0.0
      %671 = vmatprep.subr.mxu0 0.0
      %672 = vmatpush1.msra.mxu0 0.0
      %673 = vmatprep.subr.mxu0 0.0
      %674 = vmatpush1.msra.mxu0 0.0
      %675 = vmatprep.subr.mxu0 0.0
      %676 = vmatpush1.msra.mxu0 0.0
      %677 = vmatprep.subr.mxu0 0.0
      %678 = vmatpush1.msra.mxu0 0.0
      %679 = vmatprep.subr.mxu0 0.0
      %680 = vmatpush1.msra.mxu0 0.0
      %681 = vmatprep.subr.mxu0 0.0
      %682 = vmatpush1.msra.mxu0 0.0
      %683 = vmatprep.subr.mxu0 0.0
      %684 = vmatpush1.msra.mxu0 0.0
      %685 = vmatprep.subr.mxu0 0.0
      %686 = vmatpush1.msra.mxu0 0.0
      %687 = vmatprep.subr.mxu0 0.0
      %688 = vmatpush1.msra.mxu0 0.0
      %689 = vmatprep.subr.mxu0 0.0
      %690 = vmatpush1.msra.mxu0 0.0
      %691 = vmatprep.subr.mxu0 0.0
      %692 = vmatpush1.msra.mxu0 0.0
      %693 = vmatprep.subr.mxu0 0.0
      %694 = vmatpush1.msra.mxu0 0.0
      %695 = vmatprep.subr.mxu0 0.0
      %696 = vmatpush1.msra.mxu0 0.0
      %697 = vmatprep.mubr.f32.mxu0 0.0
      %698 = vmatmul.mubr.f32.gmra.mrb[0].mxu0 %v610
      %v699 = vpop.f32.mrb[0].mxu0
      %v700 = vadd.f32 0.0, %v699
      %v701 = vpop.f32.mrb[0].mxu0
      %702 = vmatprep.mubr.f32.mxu0 0.0
      %703 = vmatmul.mubr.f32.gmra.mrb[0].mxu0 %v613
      %v704 = vpop.f32.mrb[0].mxu0
      %v705 = vadd.f32 0.0, %v704
      %v706 = vpop.f32.mrb[0].mxu0
      %707 = vmatprep.mubr.f32.mxu0 0.0
      %708 = vmatmul.mubr.f32.gmra.mrb[0].mxu0 %v616
      %v709 = vpop.f32.mrb[0].mxu0
      %v710 = vadd.f32 0.0, %v709
      %v711 = vpop.f32.mrb[0].mxu0
      %712 = vmatprep.mubr.f32.mxu0 0.0
      %713 = vmatmul.mubr.f32.gmra.mrb[0].mxu0 %v619
      %v714 = vpop.f32.mrb[0].mxu0
      %v715 = vadd.f32 0.0, %v714
      %v716 = vpop.f32.mrb[0].mxu0
      %717 = vmatprep.mubr.f32.mxu0 0.0
      %718 = vmatmul.mubr.f32.gmra.mrb[0].mxu0 %v622
      %v719 = vpop.f32.mrb[0].mxu0
      %v720 = vadd.f32 0.0, %v719
      %v721 = vpop.f32.mrb[0].mxu0
      %722 = vmatprep.mubr.f32.mxu0 0.0
      %723 = vmatmul.mubr.f32.gmra.mrb[0].mxu0 %v625
      %v724 = vpop.f32.mrb[0].mxu0
      %v725 = vadd.f32 0.0, %v724
      %v726 = vpop.f32.mrb[0].mxu0
      %727 = vmatprep.mubr.f32.mxu0 0.0
      %728 = vmatmul.mubr.f32.gmra.mrb[0].mxu0 %v628
      %v729 = vpop.f32.mrb[0].mxu0
      %v730 = vadd.f32 0.0, %v729
      %v731 = vpop.f32.mrb[0].mxu0
      %732 = vmatprep.mubr.f32.mxu0 0.0
      %733 = vmatmul.mubr.f32.gmra.mrb[0].mxu0 %v631
      %v734 = vpop.f32.mrb[0].mxu0
      %v735 = vadd.f32 0.0, %v734
      %v736 = vpop.f32.mrb[0].mxu0
      %737 = vdwg.mxu0
      %v738 = vadd.f32 %v568, %v700
      %v739 = vadd.f32 %v573, %v705
      %v740 = vadd.f32 %v578, %v710
      %v741 = vadd.f32 %v583, %v715
      %v742 = vadd.f32 %v588, %v720
      %v743 = vadd.f32 %v593, %v725
      %v744 = vadd.f32 %v598, %v730
      %v745 = vadd.f32 %v603, %v735
      %v754 = vrot.slane %v228, 1
      %v755 = vrot.slane %v244, 1
      %v756 = vsel %vm335, %v754, %v755
      %v757 = vrot.slane %v229, 1
      %v758 = vrot.slane %v245, 1
      %v759 = vsel %vm335, %v757, %v758
      %v760 = vrot.slane %v230, 1
      %v761 = vrot.slane %v246, 1
      %v762 = vsel %vm335, %v760, %v761
      %v763 = vrot.slane %v231, 1
      %v764 = vrot.slane %v247, 1
      %v765 = vsel %vm335, %v763, %v764
      %v766 = vrot.slane %v232, 1
      %v767 = vrot.slane %v248, 1
      %v768 = vsel %vm335, %v766, %v767
      %v769 = vrot.slane %v233, 1
      %v770 = vrot.slane %v249, 1
      %v771 = vsel %vm335, %v769, %v770
      %v772 = vrot.slane %v234, 1
      %v773 = vrot.slane %v250, 1
      %v774 = vsel %vm335, %v772, %v773
      %v775 = vrot.slane %v235, 1
      %v776 = vrot.slane %v251, 1
      %v777 = vsel %vm335, %v775, %v776
      %s778 = scalar_lea.vmem %s1, 12
      %v779 = vld [vmem:[%s778] sm:$0xf]
      %v780 = vunpack.c.l.bf16 %v779
      %v781 = vsel %vm363, %v756, 0
      %v783 = vsel %vm363, %v759, 0
      %v785 = vsel %vm363, %v762, 0
      %v787 = vsel %vm363, %v765, 0
      %v789 = vsel %vm363, %v768, 0
      %v791 = vsel %vm363, %v771, 0
      %v793 = vsel %vm363, %v774, 0
      %v795 = vsel %vm363, %v777, 0
      %797 = vmatprep.subr.mxu0 0.0
      %798 = vmatpush1.msra.mxu0 %v780
      %799 = vmatprep.subr.mxu0 0.0
      %800 = vmatpush1.msra.mxu0 0.0
      %801 = vmatprep.subr.mxu0 0.0
      %802 = vmatpush1.msra.mxu0 0.0
      %803 = vmatprep.subr.mxu0 0.0
      %804 = vmatpush1.msra.mxu0 0.0
      %805 = vmatprep.subr.mxu0 0.0
      %806 = vmatpush1.msra.mxu0 0.0
      %807 = vmatprep.subr.mxu0 0.0
      %808 = vmatpush1.msra.mxu0 0.0
      %809 = vmatprep.subr.mxu0 0.0
      %810 = vmatpush1.msra.mxu0 0.0
      %811 = vmatprep.subr.mxu0 0.0
      %812 = vmatpush1.msra.mxu0 0.0
      %813 = vmatprep.subr.mxu0 0.0
      %814 = vmatpush1.msra.mxu0 0.0
      %815 = vmatprep.subr.mxu0 0.0
      %816 = vmatpush1.msra.mxu0 0.0
      %817 = vmatprep.subr.mxu0 0.0
      %818 = vmatpush1.msra.mxu0 0.0
      %819 = vmatprep.subr.mxu0 0.0
      %820 = vmatpush1.msra.mxu0 0.0
      %821 = vmatprep.subr.mxu0 0.0
      %822 = vmatpush1.msra.mxu0 0.0
      %823 = vmatprep.subr.mxu0 0.0
      %824 = vmatpush1.msra.mxu0 0.0
      %825 = vmatprep.subr.mxu0 0.0
      %826 = vmatpush1.msra.mxu0 0.0
      %827 = vmatprep.subr.mxu0 0.0
      %828 = vmatpush1.msra.mxu0 0.0
      %829 = vmatprep.subr.mxu0 0.0
      %830 = vmatpush1.msra.mxu0 0.0
      %831 = vmatprep.subr.mxu0 0.0
      %832 = vmatpush1.msra.mxu0 0.0
      %833 = vmatprep.subr.mxu0 0.0
      %834 = vmatpush1.msra.mxu0 0.0
      %835 = vmatprep.subr.mxu0 0.0
      %836 = vmatpush1.msra.mxu0 0.0
      %837 = vmatprep.subr.mxu0 0.0
      %838 = vmatpush1.msra.mxu0 0.0
      %839 = vmatprep.subr.mxu0 0.0
      %840 = vmatpush1.msra.mxu0 0.0
      %841 = vmatprep.subr.mxu0 0.0
      %842 = vmatpush1.msra.mxu0 0.0
      %843 = vmatprep.subr.mxu0 0.0
      %844 = vmatpush1.msra.mxu0 0.0
      %845 = vmatprep.subr.mxu0 0.0
      %846 = vmatpush1.msra.mxu0 0.0
      %847 = vmatprep.subr.mxu0 0.0
      %848 = vmatpush1.msra.mxu0 0.0
      %849 = vmatprep.subr.mxu0 0.0
      %850 = vmatpush1.msra.mxu0 0.0
      %851 = vmatprep.subr.mxu0 0.0
      %852 = vmatpush1.msra.mxu0 0.0
      %853 = vmatprep.subr.mxu0 0.0
      %854 = vmatpush1.msra.mxu0 0.0
      %855 = vmatprep.subr.mxu0 0.0
      %856 = vmatpush1.msra.mxu0 0.0
      %857 = vmatprep.subr.mxu0 0.0
      %858 = vmatpush1.msra.mxu0 0.0
      %859 = vmatprep.subr.mxu0 0.0
      %860 = vmatpush1.msra.mxu0 0.0
      %861 = vmatprep.mubr.f32.mxu0 0.0
      %862 = vmatmul.mubr.f32.gmra.mrb[0].mxu0 %v781
      %v863 = vpop.f32.mrb[0].mxu0
      %v864 = vadd.f32 0.0, %v863
      %v865 = vpop.f32.mrb[0].mxu0
      %866 = vmatprep.mubr.f32.mxu0 0.0
      %867 = vmatmul.mubr.f32.gmra.mrb[0].mxu0 %v783
      %v868 = vpop.f32.mrb[0].mxu0
      %v869 = vadd.f32 0.0, %v868
      %v870 = vpop.f32.mrb[0].mxu0
      %871 = vmatprep.mubr.f32.mxu0 0.0
      %872 = vmatmul.mubr.f32.gmra.mrb[0].mxu0 %v785
      %v873 = vpop.f32.mrb[0].mxu0
      %v874 = vadd.f32 0.0, %v873
      %v875 = vpop.f32.mrb[0].mxu0
      %876 = vmatprep.mubr.f32.mxu0 0.0
      %877 = vmatmul.mubr.f32.gmra.mrb[0].mxu0 %v787
      %v878 = vpop.f32.mrb[0].mxu0
      %v879 = vadd.f32 0.0, %v878
      %v880 = vpop.f32.mrb[0].mxu0
      %881 = vmatprep.mubr.f32.mxu0 0.0
      %882 = vmatmul.mubr.f32.gmra.mrb[0].mxu0 %v789
      %v883 = vpop.f32.mrb[0].mxu0
      %v884 = vadd.f32 0.0, %v883
      %v885 = vpop.f32.mrb[0].mxu0
      %886 = vmatprep.mubr.f32.mxu0 0.0
      %887 = vmatmul.mubr.f32.gmra.mrb[0].mxu0 %v791
      %v888 = vpop.f32.mrb[0].mxu0
      %v889 = vadd.f32 0.0, %v888
      %v890 = vpop.f32.mrb[0].mxu0
      %891 = vmatprep.mubr.f32.mxu0 0.0
      %892 = vmatmul.mubr.f32.gmra.mrb[0].mxu0 %v793
      %v893 = vpop.f32.mrb[0].mxu0
      %v894 = vadd.f32 0.0, %v893
      %v895 = vpop.f32.mrb[0].mxu0
      %896 = vmatprep.mubr.f32.mxu0 0.0
      %897 = vmatmul.mubr.f32.gmra.mrb[0].mxu0 %v795
      %v898 = vpop.f32.mrb[0].mxu0
      %v899 = vadd.f32 0.0, %v898
      %v900 = vpop.f32.mrb[0].mxu0
      %901 = vdwg.mxu0
      %v902 = vadd.f32 %v738, %v864
      %v903 = vadd.f32 %v739, %v869
      %v904 = vadd.f32 %v740, %v874
      %v905 = vadd.f32 %v741, %v879
      %v906 = vadd.f32 %v742, %v884
      %v907 = vadd.f32 %v743, %v889
      %v908 = vadd.f32 %v744, %v894
      %v909 = vadd.f32 %v745, %v899
      %v910 = vld [vmem:[%s2] sm:$0x1]
      %v912 = vlaneseq
      %v913 = vshrl.u32 %v912, 7
      %v914 = vsub.s32 0, %v913
      %v915 = vrot.slane %v910, %v914
      %v917 = vadd.f32 %v902, %v915
      %v918 = vadd.f32 %v903, %v915
      %v919 = vadd.f32 %v904, %v915
      %v920 = vadd.f32 %v905, %v915
      %v921 = vadd.f32 %v906, %v915
      %v922 = vadd.f32 %v907, %v915
      %v923 = vadd.f32 %v908, %v915
      %v924 = vadd.f32 %v909, %v915
      %vm925 = vcmp.ge.f32.partialorder %v917, 0.0
      %vm926 = vcmp.ge.f32.partialorder %v918, 0.0
      %vm927 = vcmp.ge.f32.partialorder %v919, 0.0
      %vm928 = vcmp.ge.f32.partialorder %v920, 0.0
      %vm929 = vcmp.ge.f32.partialorder %v921, 0.0
      %vm930 = vcmp.ge.f32.partialorder %v922, 0.0
      %vm931 = vcmp.ge.f32.partialorder %v923, 0.0
      %vm932 = vcmp.ge.f32.partialorder %v924, 0.0
      %v933 = vmul.f32 %v917, 0.2
      %v934 = vmul.f32 %v918, 0.2
      %v935 = vmul.f32 %v919, 0.2
      %v936 = vmul.f32 %v920, 0.2
      %v937 = vmul.f32 %v921, 0.2
      %v938 = vmul.f32 %v922, 0.2
      %v939 = vmul.f32 %v923, 0.2
      %v940 = vmul.f32 %v924, 0.2
      %v941 = vsel %vm925, %v917, %v933
      %v942 = vsel %vm926, %v918, %v934
      %v943 = vsel %vm927, %v919, %v935
      %v944 = vsel %vm928, %v920, %v936
      %v945 = vsel %vm929, %v921, %v937
      %v946 = vsel %vm930, %v922, %v938
      %v947 = vsel %vm931, %v923, %v939
      %v948 = vsel %vm932, %v924, %v940
      %s949 = scalar_lea.vmem %s1, 16
      %v950 = vld [vmem:[%s949] sm:$0xf]
      %v951 = vunpack.c.l.bf16 %v950
      %vm960 = vcmask 1045504
      %v961 = vrot.slane %v211, 2
      %v962 = vrot.slane %v195, 2
      %v963 = vsel %vm960, %v961, %v962
      %v964 = vrot.slane %v212, 2
      %v965 = vrot.slane %v196, 2
      %v966 = vsel %vm960, %v964, %v965
      %v967 = vrot.slane %v213, 2
      %v968 = vrot.slane %v197, 2
      %v969 = vsel %vm960, %v967, %v968
      %v970 = vrot.slane %v214, 2
      %v971 = vrot.slane %v198, 2
      %v972 = vsel %vm960, %v970, %v971
      %v973 = vrot.slane %v215, 2
      %v974 = vrot.slane %v199, 2
      %v975 = vsel %vm960, %v973, %v974
      %v976 = vrot.slane %v216, 2
      %v977 = vrot.slane %v200, 2
      %v978 = vsel %vm960, %v976, %v977
      %v979 = vrot.slane %v217, 2
      %v980 = vrot.slane %v201, 2
      %v981 = vsel %vm960, %v979, %v980
      %v982 = vrot.slane %v218, 2
      %v983 = vrot.slane %v202, 2
      %v984 = vsel %vm960, %v982, %v983
      %s985 = scalar_lea.vmem %s1, 20
      %v986 = vld [vmem:[%s985] sm:$0xf]
      %v987 = vunpack.c.l.bf16 %v986
      %v988 = vsel %vm363, %v963, 0
      %v990 = vsel %vm363, %v966, 0
      %v992 = vsel %vm363, %v969, 0
      %v994 = vsel %vm363, %v972, 0
      %v996 = vsel %vm363, %v975, 0
      %v998 = vsel %vm363, %v978, 0
      %v1000 = vsel %vm363, %v981, 0
      %v1002 = vsel %vm363, %v984, 0
      %1004 = vmatprep.subr.mxu0 0.0
      %1005 = vmatpush1.msra.mxu0 %v987
      %1006 = vmatprep.subr.mxu0 0.0
      %1007 = vmatpush1.msra.mxu0 0.0
      %1008 = vmatprep.subr.mxu0 0.0
      %1009 = vmatpush1.msra.mxu0 0.0
      %1010 = vmatprep.subr.mxu0 0.0
      %1011 = vmatpush1.msra.mxu0 0.0
      %1012 = vmatprep.subr.mxu0 0.0
      %1013 = vmatpush1.msra.mxu0 0.0
      %1014 = vmatprep.subr.mxu0 0.0
      %1015 = vmatpush1.msra.mxu0 0.0
      %1016 = vmatprep.subr.mxu0 0.0
      %1017 = vmatpush1.msra.mxu0 0.0
      %1018 = vmatprep.subr.mxu0 0.0
      %1019 = vmatpush1.msra.mxu0 0.0
      %1020 = vmatprep.subr.mxu0 0.0
      %1021 = vmatpush1.msra.mxu0 0.0
      %1022 = vmatprep.subr.mxu0 0.0
      %1023 = vmatpush1.msra.mxu0 0.0
      %1024 = vmatprep.subr.mxu0 0.0
      %1025 = vmatpush1.msra.mxu0 0.0
      %1026 = vmatprep.subr.mxu0 0.0
      %1027 = vmatpush1.msra.mxu0 0.0
      %1028 = vmatprep.subr.mxu0 0.0
      %1029 = vmatpush1.msra.mxu0 0.0
      %1030 = vmatprep.subr.mxu0 0.0
      %1031 = vmatpush1.msra.mxu0 0.0
      %1032 = vmatprep.subr.mxu0 0.0
      %1033 = vmatpush1.msra.mxu0 0.0
      %1034 = vmatprep.subr.mxu0 0.0
      %1035 = vmatpush1.msra.mxu0 0.0
      %1036 = vmatprep.subr.mxu0 0.0
      %1037 = vmatpush1.msra.mxu0 0.0
      %1038 = vmatprep.subr.mxu0 0.0
      %1039 = vmatpush1.msra.mxu0 0.0
      %1040 = vmatprep.subr.mxu0 0.0
      %1041 = vmatpush1.msra.mxu0 0.0
      %1042 = vmatprep.subr.mxu0 0.0
      %1043 = vmatpush1.msra.mxu0 0.0
      %1044 = vmatprep.subr.mxu0 0.0
      %1045 = vmatpush1.msra.mxu0 0.0
      %1046 = vmatprep.subr.mxu0 0.0
      %1047 = vmatpush1.msra.mxu0 0.0
      %1048 = vmatprep.subr.mxu0 0.0
      %1049 = vmatpush1.msra.mxu0 0.0
      %1050 = vmatprep.subr.mxu0 0.0
      %1051 = vmatpush1.msra.mxu0 0.0
      %1052 = vmatprep.subr.mxu0 0.0
      %1053 = vmatpush1.msra.mxu0 0.0
      %1054 = vmatprep.subr.mxu0 0.0
      %1055 = vmatpush1.msra.mxu0 0.0
      %1056 = vmatprep.subr.mxu0 0.0
      %1057 = vmatpush1.msra.mxu0 0.0
      %1058 = vmatprep.subr.mxu0 0.0
      %1059 = vmatpush1.msra.mxu0 0.0
      %1060 = vmatprep.subr.mxu0 0.0
      %1061 = vmatpush1.msra.mxu0 0.0
      %1062 = vmatprep.subr.mxu0 0.0
      %1063 = vmatpush1.msra.mxu0 0.0
      %1064 = vmatprep.subr.mxu0 0.0
      %1065 = vmatpush1.msra.mxu0 0.0
      %1066 = vmatprep.subr.mxu0 0.0
      %1067 = vmatpush1.msra.mxu0 0.0
      %1068 = vmatprep.mubr.f32.mxu0 0.0
      %1069 = vmatmul.mubr.f32.gmra.mrb[0].mxu0 %v988
      %v1070 = vpop.f32.mrb[0].mxu0
      %v1071 = vadd.f32 0.0, %v1070
      %v1072 = vpop.f32.mrb[0].mxu0
      %1073 = vmatprep.mubr.f32.mxu0 0.0
      %1074 = vmatmul.mubr.f32.gmra.mrb[0].mxu0 %v990
      %v1075 = vpop.f32.mrb[0].mxu0
      %v1076 = vadd.f32 0.0, %v1075
      %v1077 = vpop.f32.mrb[0].mxu0
      %1078 = vmatprep.mubr.f32.mxu0 0.0
      %1079 = vmatmul.mubr.f32.gmra.mrb[0].mxu0 %v992
      %v1080 = vpop.f32.mrb[0].mxu0
      %v1081 = vadd.f32 0.0, %v1080
      %v1082 = vpop.f32.mrb[0].mxu0
      %1083 = vmatprep.mubr.f32.mxu0 0.0
      %1084 = vmatmul.mubr.f32.gmra.mrb[0].mxu0 %v994
      %v1085 = vpop.f32.mrb[0].mxu0
      %v1086 = vadd.f32 0.0, %v1085
      %v1087 = vpop.f32.mrb[0].mxu0
      %1088 = vmatprep.mubr.f32.mxu0 0.0
      %1089 = vmatmul.mubr.f32.gmra.mrb[0].mxu0 %v996
      %v1090 = vpop.f32.mrb[0].mxu0
      %v1091 = vadd.f32 0.0, %v1090
      %v1092 = vpop.f32.mrb[0].mxu0
      %1093 = vmatprep.mubr.f32.mxu0 0.0
      %1094 = vmatmul.mubr.f32.gmra.mrb[0].mxu0 %v998
      %v1095 = vpop.f32.mrb[0].mxu0
      %v1096 = vadd.f32 0.0, %v1095
      %v1097 = vpop.f32.mrb[0].mxu0
      %1098 = vmatprep.mubr.f32.mxu0 0.0
      %1099 = vmatmul.mubr.f32.gmra.mrb[0].mxu0 %v1000
      %v1100 = vpop.f32.mrb[0].mxu0
      %v1101 = vadd.f32 0.0, %v1100
      %v1102 = vpop.f32.mrb[0].mxu0
      %1103 = vmatprep.mubr.f32.mxu0 0.0
      %1104 = vmatmul.mubr.f32.gmra.mrb[0].mxu0 %v1002
      %v1105 = vpop.f32.mrb[0].mxu0
      %v1106 = vadd.f32 0.0, %v1105
      %v1107 = vpop.f32.mrb[0].mxu0
      %1108 = vdwg.mxu0
      %1109 = vmatprep.subr.mxu0 0.0
      %1110 = vmatpush1.msra.mxu0 %v951
      %1111 = vmatprep.subr.mxu0 0.0
      %1112 = vmatpush1.msra.mxu0 0.0
      %1113 = vmatprep.subr.mxu0 0.0
      %1114 = vmatpush1.msra.mxu0 0.0
      %1115 = vmatprep.subr.mxu0 0.0
      %1116 = vmatpush1.msra.mxu0 0.0
      %1117 = vmatprep.subr.mxu0 0.0
      %1118 = vmatpush1.msra.mxu0 0.0
      %1119 = vmatprep.subr.mxu0 0.0
      %1120 = vmatpush1.msra.mxu0 0.0
      %1121 = vmatprep.subr.mxu0 0.0
      %1122 = vmatpush1.msra.mxu0 0.0
      %1123 = vmatprep.subr.mxu0 0.0
      %1124 = vmatpush1.msra.mxu0 0.0
      %1125 = vmatprep.subr.mxu0 0.0
      %1126 = vmatpush1.msra.mxu0 0.0
      %1127 = vmatprep.subr.mxu0 0.0
      %1128 = vmatpush1.msra.mxu0 0.0
      %1129 = vmatprep.subr.mxu0 0.0
      %1130 = vmatpush1.msra.mxu0 0.0
      %1131 = vmatprep.subr.mxu0 0.0
      %1132 = vmatpush1.msra.mxu0 0.0
      %1133 = vmatprep.subr.mxu0 0.0
      %1134 = vmatpush1.msra.mxu0 0.0
      %1135 = vmatprep.subr.mxu0 0.0
      %1136 = vmatpush1.msra.mxu0 0.0
      %1137 = vmatprep.subr.mxu0 0.0
      %1138 = vmatpush1.msra.mxu0 0.0
      %1139 = vmatprep.subr.mxu0 0.0
      %1140 = vmatpush1.msra.mxu0 0.0
      %1141 = vmatprep.subr.mxu0 0.0
      %1142 = vmatpush1.msra.mxu0 0.0
      %1143 = vmatprep.subr.mxu0 0.0
      %1144 = vmatpush1.msra.mxu0 0.0
      %1145 = vmatprep.subr.mxu0 0.0
      %1146 = vmatpush1.msra.mxu0 0.0
      %1147 = vmatprep.subr.mxu0 0.0
      %1148 = vmatpush1.msra.mxu0 0.0
      %1149 = vmatprep.subr.mxu0 0.0
      %1150 = vmatpush1.msra.mxu0 0.0
      %1151 = vmatprep.subr.mxu0 0.0
      %1152 = vmatpush1.msra.mxu0 0.0
      %1153 = vmatprep.subr.mxu0 0.0
      %1154 = vmatpush1.msra.mxu0 0.0
      %1155 = vmatprep.subr.mxu0 0.0
      %1156 = vmatpush1.msra.mxu0 0.0
      %1157 = vmatprep.subr.mxu0 0.0
      %1158 = vmatpush1.msra.mxu0 0.0
      %1159 = vmatprep.subr.mxu0 0.0
      %1160 = vmatpush1.msra.mxu0 0.0
      %1161 = vmatprep.subr.mxu0 0.0
      %1162 = vmatpush1.msra.mxu0 0.0
      %1163 = vmatprep.subr.mxu0 0.0
      %1164 = vmatpush1.msra.mxu0 0.0
      %1165 = vmatprep.subr.mxu0 0.0
      %1166 = vmatpush1.msra.mxu0 0.0
      %1167 = vmatprep.subr.mxu0 0.0
      %1168 = vmatpush1.msra.mxu0 0.0
      %1169 = vmatprep.subr.mxu0 0.0
      %1170 = vmatpush1.msra.mxu0 0.0
      %1171 = vmatprep.subr.mxu0 0.0
      %1172 = vmatpush1.msra.mxu0 0.0
      %1173 = vmatprep.mubr.f32.mxu0 0.0
      %1174 = vmatmul.mubr.f32.gmra.mrb[0].mxu0 %v364
      %v1175 = vpop.f32.mrb[0].mxu0
      %v1176 = vadd.f32 %v1071, %v1175
      %v1177 = vpop.f32.mrb[0].mxu0
      %1178 = vmatprep.mubr.f32.mxu0 0.0
      %1179 = vmatmul.mubr.f32.gmra.mrb[0].mxu0 %v366
      %v1180 = vpop.f32.mrb[0].mxu0
      %v1181 = vadd.f32 %v1076, %v1180
      %v1182 = vpop.f32.mrb[0].mxu0
      %1183 = vmatprep.mubr.f32.mxu0 0.0
      %1184 = vmatmul.mubr.f32.gmra.mrb[0].mxu0 %v368
      %v1185 = vpop.f32.mrb[0].mxu0
      %v1186 = vadd.f32 %v1081, %v1185
      %v1187 = vpop.f32.mrb[0].mxu0
      %1188 = vmatprep.mubr.f32.mxu0 0.0
      %1189 = vmatmul.mubr.f32.gmra.mrb[0].mxu0 %v370
      %v1190 = vpop.f32.mrb[0].mxu0
      %v1191 = vadd.f32 %v1086, %v1190
      %v1192 = vpop.f32.mrb[0].mxu0
      %1193 = vmatprep.mubr.f32.mxu0 0.0
      %1194 = vmatmul.mubr.f32.gmra.mrb[0].mxu0 %v372
      %v1195 = vpop.f32.mrb[0].mxu0
      %v1196 = vadd.f32 %v1091, %v1195
      %v1197 = vpop.f32.mrb[0].mxu0
      %1198 = vmatprep.mubr.f32.mxu0 0.0
      %1199 = vmatmul.mubr.f32.gmra.mrb[0].mxu0 %v374
      %v1200 = vpop.f32.mrb[0].mxu0
      %v1201 = vadd.f32 %v1096, %v1200
      %v1202 = vpop.f32.mrb[0].mxu0
      %1203 = vmatprep.mubr.f32.mxu0 0.0
      %1204 = vmatmul.mubr.f32.gmra.mrb[0].mxu0 %v376
      %v1205 = vpop.f32.mrb[0].mxu0
      %v1206 = vadd.f32 %v1101, %v1205
      %v1207 = vpop.f32.mrb[0].mxu0
      %1208 = vmatprep.mubr.f32.mxu0 0.0
      %1209 = vmatmul.mubr.f32.gmra.mrb[0].mxu0 %v378
      %v1210 = vpop.f32.mrb[0].mxu0
      %v1211 = vadd.f32 %v1106, %v1210
      %v1212 = vpop.f32.mrb[0].mxu0
      %1213 = vdwg.mxu0
      %s1214 = scalar_lea.vmem %s1, 24
      %v1215 = vld [vmem:[%s1214] sm:$0xf]
      %v1216 = vunpack.c.l.bf16 %v1215
      %1217 = vmatprep.subr.mxu0 0.0
      %1218 = vmatpush1.msra.mxu0 %v1216
      %1219 = vmatprep.subr.mxu0 0.0
      %1220 = vmatpush1.msra.mxu0 0.0
      %1221 = vmatprep.subr.mxu0 0.0
      %1222 = vmatpush1.msra.mxu0 0.0
      %1223 = vmatprep.subr.mxu0 0.0
      %1224 = vmatpush1.msra.mxu0 0.0
      %1225 = vmatprep.subr.mxu0 0.0
      %1226 = vmatpush1.msra.mxu0 0.0
      %1227 = vmatprep.subr.mxu0 0.0
      %1228 = vmatpush1.msra.mxu0 0.0
      %1229 = vmatprep.subr.mxu0 0.0
      %1230 = vmatpush1.msra.mxu0 0.0
      %1231 = vmatprep.subr.mxu0 0.0
      %1232 = vmatpush1.msra.mxu0 0.0
      %1233 = vmatprep.subr.mxu0 0.0
      %1234 = vmatpush1.msra.mxu0 0.0
      %1235 = vmatprep.subr.mxu0 0.0
      %1236 = vmatpush1.msra.mxu0 0.0
      %1237 = vmatprep.subr.mxu0 0.0
      %1238 = vmatpush1.msra.mxu0 0.0
      %1239 = vmatprep.subr.mxu0 0.0
      %1240 = vmatpush1.msra.mxu0 0.0
      %1241 = vmatprep.subr.mxu0 0.0
      %1242 = vmatpush1.msra.mxu0 0.0
      %1243 = vmatprep.subr.mxu0 0.0
      %1244 = vmatpush1.msra.mxu0 0.0
      %1245 = vmatprep.subr.mxu0 0.0
      %1246 = vmatpush1.msra.mxu0 0.0
      %1247 = vmatprep.subr.mxu0 0.0
      %1248 = vmatpush1.msra.mxu0 0.0
      %1249 = vmatprep.subr.mxu0 0.0
      %1250 = vmatpush1.msra.mxu0 0.0
      %1251 = vmatprep.subr.mxu0 0.0
      %1252 = vmatpush1.msra.mxu0 0.0
      %1253 = vmatprep.subr.mxu0 0.0
      %1254 = vmatpush1.msra.mxu0 0.0
      %1255 = vmatprep.subr.mxu0 0.0
      %1256 = vmatpush1.msra.mxu0 0.0
      %1257 = vmatprep.subr.mxu0 0.0
      %1258 = vmatpush1.msra.mxu0 0.0
      %1259 = vmatprep.subr.mxu0 0.0
      %1260 = vmatpush1.msra.mxu0 0.0
      %1261 = vmatprep.subr.mxu0 0.0
      %1262 = vmatpush1.msra.mxu0 0.0
      %1263 = vmatprep.subr.mxu0 0.0
      %1264 = vmatpush1.msra.mxu0 0.0
      %1265 = vmatprep.subr.mxu0 0.0
      %1266 = vmatpush1.msra.mxu0 0.0
      %1267 = vmatprep.subr.mxu0 0.0
      %1268 = vmatpush1.msra.mxu0 0.0
      %1269 = vmatprep.subr.mxu0 0.0
      %1270 = vmatpush1.msra.mxu0 0.0
      %1271 = vmatprep.subr.mxu0 0.0
      %1272 = vmatpush1.msra.mxu0 0.0
      %1273 = vmatprep.subr.mxu0 0.0
      %1274 = vmatpush1.msra.mxu0 0.0
      %1275 = vmatprep.subr.mxu0 0.0
      %1276 = vmatpush1.msra.mxu0 0.0
      %1277 = vmatprep.subr.mxu0 0.0
      %1278 = vmatpush1.msra.mxu0 0.0
      %1279 = vmatprep.subr.mxu0 0.0
      %1280 = vmatpush1.msra.mxu0 0.0
      %1281 = vmatprep.mubr.f32.mxu0 0.0
      %1282 = vmatmul.mubr.f32.gmra.mrb[0].mxu0 %v781
      %v1283 = vpop.f32.mrb[0].mxu0
      %v1284 = vadd.f32 0.0, %v1283
      %v1285 = vpop.f32.mrb[0].mxu0
      %1286 = vmatprep.mubr.f32.mxu0 0.0
      %1287 = vmatmul.mubr.f32.gmra.mrb[0].mxu0 %v783
      %v1288 = vpop.f32.mrb[0].mxu0
      %v1289 = vadd.f32 0.0, %v1288
      %v1290 = vpop.f32.mrb[0].mxu0
      %1291 = vmatprep.mubr.f32.mxu0 0.0
      %1292 = vmatmul.mubr.f32.gmra.mrb[0].mxu0 %v785
      %v1293 = vpop.f32.mrb[0].mxu0
      %v1294 = vadd.f32 0.0, %v1293
      %v1295 = vpop.f32.mrb[0].mxu0
      %1296 = vmatprep.mubr.f32.mxu0 0.0
      %1297 = vmatmul.mubr.f32.gmra.mrb[0].mxu0 %v787
      %v1298 = vpop.f32.mrb[0].mxu0
      %v1299 = vadd.f32 0.0, %v1298
      %v1300 = vpop.f32.mrb[0].mxu0
      %1301 = vmatprep.mubr.f32.mxu0 0.0
      %1302 = vmatmul.mubr.f32.gmra.mrb[0].mxu0 %v789
      %v1303 = vpop.f32.mrb[0].mxu0
      %v1304 = vadd.f32 0.0, %v1303
      %v1305 = vpop.f32.mrb[0].mxu0
      %1306 = vmatprep.mubr.f32.mxu0 0.0
      %1307 = vmatmul.mubr.f32.gmra.mrb[0].mxu0 %v791
      %v1308 = vpop.f32.mrb[0].mxu0
      %v1309 = vadd.f32 0.0, %v1308
      %v1310 = vpop.f32.mrb[0].mxu0
      %1311 = vmatprep.mubr.f32.mxu0 0.0
      %1312 = vmatmul.mubr.f32.gmra.mrb[0].mxu0 %v793
      %v1313 = vpop.f32.mrb[0].mxu0
      %v1314 = vadd.f32 0.0, %v1313
      %v1315 = vpop.f32.mrb[0].mxu0
      %1316 = vmatprep.mubr.f32.mxu0 0.0
      %1317 = vmatmul.mubr.f32.gmra.mrb[0].mxu0 %v795
      %v1318 = vpop.f32.mrb[0].mxu0
      %v1319 = vadd.f32 0.0, %v1318
      %v1320 = vpop.f32.mrb[0].mxu0
      %1321 = vdwg.mxu0
      %v1322 = vadd.f32 %v1176, %v1284
      %v1323 = vadd.f32 %v1181, %v1289
      %v1324 = vadd.f32 %v1186, %v1294
      %v1325 = vadd.f32 %v1191, %v1299
      %v1326 = vadd.f32 %v1196, %v1304
      %v1327 = vadd.f32 %v1201, %v1309
      %v1328 = vadd.f32 %v1206, %v1314
      %v1329 = vadd.f32 %v1211, %v1319
      %v1338 = vrot.slane %v260, 2
      %v1339 = vrot.slane %v244, 2
      %v1340 = vsel %vm960, %v1338, %v1339
      %v1341 = vrot.slane %v261, 2
      %v1342 = vrot.slane %v245, 2
      %v1343 = vsel %vm960, %v1341, %v1342
      %v1344 = vrot.slane %v262, 2
      %v1345 = vrot.slane %v246, 2
      %v1346 = vsel %vm960, %v1344, %v1345
      %v1347 = vrot.slane %v263, 2
      %v1348 = vrot.slane %v247, 2
      %v1349 = vsel %vm960, %v1347, %v1348
      %v1350 = vrot.slane %v264, 2
      %v1351 = vrot.slane %v248, 2
      %v1352 = vsel %vm960, %v1350, %v1351
      %v1353 = vrot.slane %v265, 2
      %v1354 = vrot.slane %v249, 2
      %v1355 = vsel %vm960, %v1353, %v1354
      %v1356 = vrot.slane %v266, 2
      %v1357 = vrot.slane %v250, 2
      %v1358 = vsel %vm960, %v1356, %v1357
      %v1359 = vrot.slane %v267, 2
      %v1360 = vrot.slane %v251, 2
      %v1361 = vsel %vm960, %v1359, %v1360
      %s1362 = scalar_lea.vmem %s1, 28
      %v1363 = vld [vmem:[%s1362] sm:$0xf]
      %v1364 = vunpack.c.l.bf16 %v1363
      %v1365 = vsel %vm363, %v1340, 0
      %v1367 = vsel %vm363, %v1343, 0
      %v1369 = vsel %vm363, %v1346, 0
      %v1371 = vsel %vm363, %v1349, 0
      %v1373 = vsel %vm363, %v1352, 0
      %v1375 = vsel %vm363, %v1355, 0
      %v1377 = vsel %vm363, %v1358, 0
      %v1379 = vsel %vm363, %v1361, 0
      %1381 = vmatprep.subr.mxu0 0.0
      %1382 = vmatpush1.msra.mxu0 %v1364
      %1383 = vmatprep.subr.mxu0 0.0
      %1384 = vmatpush1.msra.mxu0 0.0
      %1385 = vmatprep.subr.mxu0 0.0
      %1386 = vmatpush1.msra.mxu0 0.0
      %1387 = vmatprep.subr.mxu0 0.0
      %1388 = vmatpush1.msra.mxu0 0.0
      %1389 = vmatprep.subr.mxu0 0.0
      %1390 = vmatpush1.msra.mxu0 0.0
      %1391 = vmatprep.subr.mxu0 0.0
      %1392 = vmatpush1.msra.mxu0 0.0
      %1393 = vmatprep.subr.mxu0 0.0
      %1394 = vmatpush1.msra.mxu0 0.0
      %1395 = vmatprep.subr.mxu0 0.0
      %1396 = vmatpush1.msra.mxu0 0.0
      %1397 = vmatprep.subr.mxu0 0.0
      %1398 = vmatpush1.msra.mxu0 0.0
      %1399 = vmatprep.subr.mxu0 0.0
      %1400 = vmatpush1.msra.mxu0 0.0
      %1401 = vmatprep.subr.mxu0 0.0
      %1402 = vmatpush1.msra.mxu0 0.0
      %1403 = vmatprep.subr.mxu0 0.0
      %1404 = vmatpush1.msra.mxu0 0.0
      %1405 = vmatprep.subr.mxu0 0.0
      %1406 = vmatpush1.msra.mxu0 0.0
      %1407 = vmatprep.subr.mxu0 0.0
      %1408 = vmatpush1.msra.mxu0 0.0
      %1409 = vmatprep.subr.mxu0 0.0
      %1410 = vmatpush1.msra.mxu0 0.0
      %1411 = vmatprep.subr.mxu0 0.0
      %1412 = vmatpush1.msra.mxu0 0.0
      %1413 = vmatprep.subr.mxu0 0.0
      %1414 = vmatpush1.msra.mxu0 0.0
      %1415 = vmatprep.subr.mxu0 0.0
      %1416 = vmatpush1.msra.mxu0 0.0
      %1417 = vmatprep.subr.mxu0 0.0
      %1418 = vmatpush1.msra.mxu0 0.0
      %1419 = vmatprep.subr.mxu0 0.0
      %1420 = vmatpush1.msra.mxu0 0.0
      %1421 = vmatprep.subr.mxu0 0.0
      %1422 = vmatpush1.msra.mxu0 0.0
      %1423 = vmatprep.subr.mxu0 0.0
      %1424 = vmatpush1.msra.mxu0 0.0
      %1425 = vmatprep.subr.mxu0 0.0
      %1426 = vmatpush1.msra.mxu0 0.0
      %1427 = vmatprep.subr.mxu0 0.0
      %1428 = vmatpush1.msra.mxu0 0.0
      %1429 = vmatprep.subr.mxu0 0.0
      %1430 = vmatpush1.msra.mxu0 0.0
      %1431 = vmatprep.subr.mxu0 0.0
      %1432 = vmatpush1.msra.mxu0 0.0
      %1433 = vmatprep.subr.mxu0 0.0
      %1434 = vmatpush1.msra.mxu0 0.0
      %1435 = vmatprep.subr.mxu0 0.0
      %1436 = vmatpush1.msra.mxu0 0.0
      %1437 = vmatprep.subr.mxu0 0.0
      %1438 = vmatpush1.msra.mxu0 0.0
      %1439 = vmatprep.subr.mxu0 0.0
      %1440 = vmatpush1.msra.mxu0 0.0
      %1441 = vmatprep.subr.mxu0 0.0
      %1442 = vmatpush1.msra.mxu0 0.0
      %1443 = vmatprep.subr.mxu0 0.0
      %1444 = vmatpush1.msra.mxu0 0.0
      %1445 = vmatprep.mubr.f32.mxu0 0.0
      %1446 = vmatmul.mubr.f32.gmra.mrb[0].mxu0 %v1365
      %v1447 = vpop.f32.mrb[0].mxu0
      %v1448 = vadd.f32 0.0, %v1447
      %v1449 = vpop.f32.mrb[0].mxu0
      %1450 = vmatprep.mubr.f32.mxu0 0.0
      %1451 = vmatmul.mubr.f32.gmra.mrb[0].mxu0 %v1367
      %v1452 = vpop.f32.mrb[0].mxu0
      %v1453 = vadd.f32 0.0, %v1452
      %v1454 = vpop.f32.mrb[0].mxu0
      %1455 = vmatprep.mubr.f32.mxu0 0.0
      %1456 = vmatmul.mubr.f32.gmra.mrb[0].mxu0 %v1369
      %v1457 = vpop.f32.mrb[0].mxu0
      %v1458 = vadd.f32 0.0, %v1457
      %v1459 = vpop.f32.mrb[0].mxu0
      %1460 = vmatprep.mubr.f32.mxu0 0.0
      %1461 = vmatmul.mubr.f32.gmra.mrb[0].mxu0 %v1371
      %v1462 = vpop.f32.mrb[0].mxu0
      %v1463 = vadd.f32 0.0, %v1462
      %v1464 = vpop.f32.mrb[0].mxu0
      %1465 = vmatprep.mubr.f32.mxu0 0.0
      %1466 = vmatmul.mubr.f32.gmra.mrb[0].mxu0 %v1373
      %v1467 = vpop.f32.mrb[0].mxu0
      %v1468 = vadd.f32 0.0, %v1467
      %v1469 = vpop.f32.mrb[0].mxu0
      %1470 = vmatprep.mubr.f32.mxu0 0.0
      %1471 = vmatmul.mubr.f32.gmra.mrb[0].mxu0 %v1375
      %v1472 = vpop.f32.mrb[0].mxu0
      %v1473 = vadd.f32 0.0, %v1472
      %v1474 = vpop.f32.mrb[0].mxu0
      %1475 = vmatprep.mubr.f32.mxu0 0.0
      %1476 = vmatmul.mubr.f32.gmra.mrb[0].mxu0 %v1377
      %v1477 = vpop.f32.mrb[0].mxu0
      %v1478 = vadd.f32 0.0, %v1477
      %v1479 = vpop.f32.mrb[0].mxu0
      %1480 = vmatprep.mubr.f32.mxu0 0.0
      %1481 = vmatmul.mubr.f32.gmra.mrb[0].mxu0 %v1379
      %v1482 = vpop.f32.mrb[0].mxu0
      %v1483 = vadd.f32 0.0, %v1482
      %v1484 = vpop.f32.mrb[0].mxu0
      %1485 = vdwg.mxu0
      %v1486 = vadd.f32 %v1322, %v1448
      %v1487 = vadd.f32 %v1323, %v1453
      %v1488 = vadd.f32 %v1324, %v1458
      %v1489 = vadd.f32 %v1325, %v1463
      %v1490 = vadd.f32 %v1326, %v1468
      %v1491 = vadd.f32 %v1327, %v1473
      %v1492 = vadd.f32 %v1328, %v1478
      %v1493 = vadd.f32 %v1329, %v1483
      %v1494 = vadd.f32 %v1486, %v915
      %v1495 = vadd.f32 %v1487, %v915
      %v1496 = vadd.f32 %v1488, %v915
      %v1497 = vadd.f32 %v1489, %v915
      %v1498 = vadd.f32 %v1490, %v915
      %v1499 = vadd.f32 %v1491, %v915
      %v1500 = vadd.f32 %v1492, %v915
      %v1501 = vadd.f32 %v1493, %v915
      %vm1502 = vcmp.ge.f32.partialorder %v1494, 0.0
      %vm1503 = vcmp.ge.f32.partialorder %v1495, 0.0
      %vm1504 = vcmp.ge.f32.partialorder %v1496, 0.0
      %vm1505 = vcmp.ge.f32.partialorder %v1497, 0.0
      %vm1506 = vcmp.ge.f32.partialorder %v1498, 0.0
      %vm1507 = vcmp.ge.f32.partialorder %v1499, 0.0
      %vm1508 = vcmp.ge.f32.partialorder %v1500, 0.0
      %vm1509 = vcmp.ge.f32.partialorder %v1501, 0.0
      %v1510 = vmul.f32 %v1494, 0.2
      %v1511 = vmul.f32 %v1495, 0.2
      %v1512 = vmul.f32 %v1496, 0.2
      %v1513 = vmul.f32 %v1497, 0.2
      %v1514 = vmul.f32 %v1498, 0.2
      %v1515 = vmul.f32 %v1499, 0.2
      %v1516 = vmul.f32 %v1500, 0.2
      %v1517 = vmul.f32 %v1501, 0.2
      %v1518 = vsel %vm1502, %v1494, %v1510
      %v1519 = vsel %vm1503, %v1495, %v1511
      %v1520 = vsel %vm1504, %v1496, %v1512
      %v1521 = vsel %vm1505, %v1497, %v1513
      %v1522 = vsel %vm1506, %v1498, %v1514
      %v1523 = vsel %vm1507, %v1499, %v1515
      %v1524 = vsel %vm1508, %v1500, %v1516
      %v1525 = vsel %vm1509, %v1501, %v1517
      %s1526 = scalar_lea.vmem %s1, 32
      %v1527 = vld [vmem:[%s1526] sm:$0xf]
      %v1528 = vunpack.c.l.bf16 %v1527
      %s1529 = scalar_lea.vmem %s1, 36
      %v1530 = vld [vmem:[%s1529] sm:$0xf]
      %v1531 = vunpack.c.l.bf16 %v1530
      %1532 = vmatprep.subr.mxu0 0.0
      %1533 = vmatpush1.msra.mxu0 %v1531
      %1534 = vmatprep.subr.mxu0 0.0
      %1535 = vmatpush1.msra.mxu0 0.0
      %1536 = vmatprep.subr.mxu0 0.0
      %1537 = vmatpush1.msra.mxu0 0.0
      %1538 = vmatprep.subr.mxu0 0.0
      %1539 = vmatpush1.msra.mxu0 0.0
      %1540 = vmatprep.subr.mxu0 0.0
      %1541 = vmatpush1.msra.mxu0 0.0
      %1542 = vmatprep.subr.mxu0 0.0
      %1543 = vmatpush1.msra.mxu0 0.0
      %1544 = vmatprep.subr.mxu0 0.0
      %1545 = vmatpush1.msra.mxu0 0.0
      %1546 = vmatprep.subr.mxu0 0.0
      %1547 = vmatpush1.msra.mxu0 0.0
      %1548 = vmatprep.subr.mxu0 0.0
      %1549 = vmatpush1.msra.mxu0 0.0
      %1550 = vmatprep.subr.mxu0 0.0
      %1551 = vmatpush1.msra.mxu0 0.0
      %1552 = vmatprep.subr.mxu0 0.0
      %1553 = vmatpush1.msra.mxu0 0.0
      %1554 = vmatprep.subr.mxu0 0.0
      %1555 = vmatpush1.msra.mxu0 0.0
      %1556 = vmatprep.subr.mxu0 0.0
      %1557 = vmatpush1.msra.mxu0 0.0
      %1558 = vmatprep.subr.mxu0 0.0
      %1559 = vmatpush1.msra.mxu0 0.0
      %1560 = vmatprep.subr.mxu0 0.0
      %1561 = vmatpush1.msra.mxu0 0.0
      %1562 = vmatprep.subr.mxu0 0.0
      %1563 = vmatpush1.msra.mxu0 0.0
      %1564 = vmatprep.subr.mxu0 0.0
      %1565 = vmatpush1.msra.mxu0 0.0
      %1566 = vmatprep.subr.mxu0 0.0
      %1567 = vmatpush1.msra.mxu0 0.0
      %1568 = vmatprep.subr.mxu0 0.0
      %1569 = vmatpush1.msra.mxu0 0.0
      %1570 = vmatprep.subr.mxu0 0.0
      %1571 = vmatpush1.msra.mxu0 0.0
      %1572 = vmatprep.subr.mxu0 0.0
      %1573 = vmatpush1.msra.mxu0 0.0
      %1574 = vmatprep.subr.mxu0 0.0
      %1575 = vmatpush1.msra.mxu0 0.0
      %1576 = vmatprep.subr.mxu0 0.0
      %1577 = vmatpush1.msra.mxu0 0.0
      %1578 = vmatprep.subr.mxu0 0.0
      %1579 = vmatpush1.msra.mxu0 0.0
      %1580 = vmatprep.subr.mxu0 0.0
      %1581 = vmatpush1.msra.mxu0 0.0
      %1582 = vmatprep.subr.mxu0 0.0
      %1583 = vmatpush1.msra.mxu0 0.0
      %1584 = vmatprep.subr.mxu0 0.0
      %1585 = vmatpush1.msra.mxu0 0.0
      %1586 = vmatprep.subr.mxu0 0.0
      %1587 = vmatpush1.msra.mxu0 0.0
      %1588 = vmatprep.subr.mxu0 0.0
      %1589 = vmatpush1.msra.mxu0 0.0
      %1590 = vmatprep.subr.mxu0 0.0
      %1591 = vmatpush1.msra.mxu0 0.0
      %1592 = vmatprep.subr.mxu0 0.0
      %1593 = vmatpush1.msra.mxu0 0.0
      %1594 = vmatprep.subr.mxu0 0.0
      %1595 = vmatpush1.msra.mxu0 0.0
      %1596 = vmatprep.mubr.f32.mxu0 0.0
      %1597 = vmatmul.mubr.f32.gmra.mrb[0].mxu0 %v781
      %v1598 = vpop.f32.mrb[0].mxu0
      %v1599 = vadd.f32 0.0, %v1598
      %v1600 = vpop.f32.mrb[0].mxu0
      %1601 = vmatprep.mubr.f32.mxu0 0.0
      %1602 = vmatmul.mubr.f32.gmra.mrb[0].mxu0 %v783
      %v1603 = vpop.f32.mrb[0].mxu0
      %v1604 = vadd.f32 0.0, %v1603
      %v1605 = vpop.f32.mrb[0].mxu0
      %1606 = vmatprep.mubr.f32.mxu0 0.0
      %1607 = vmatmul.mubr.f32.gmra.mrb[0].mxu0 %v785
      %v1608 = vpop.f32.mrb[0].mxu0
      %v1609 = vadd.f32 0.0, %v1608
      %v1610 = vpop.f32.mrb[0].mxu0
      %1611 = vmatprep.mubr.f32.mxu0 0.0
      %1612 = vmatmul.mubr.f32.gmra.mrb[0].mxu0 %v787
      %v1613 = vpop.f32.mrb[0].mxu0
      %v1614 = vadd.f32 0.0, %v1613
      %v1615 = vpop.f32.mrb[0].mxu0
      %1616 = vmatprep.mubr.f32.mxu0 0.0
      %1617 = vmatmul.mubr.f32.gmra.mrb[0].mxu0 %v789
      %v1618 = vpop.f32.mrb[0].mxu0
      %v1619 = vadd.f32 0.0, %v1618
      %v1620 = vpop.f32.mrb[0].mxu0
      %1621 = vmatprep.mubr.f32.mxu0 0.0
      %1622 = vmatmul.mubr.f32.gmra.mrb[0].mxu0 %v791
      %v1623 = vpop.f32.mrb[0].mxu0
      %v1624 = vadd.f32 0.0, %v1623
      %v1625 = vpop.f32.mrb[0].mxu0
      %1626 = vmatprep.mubr.f32.mxu0 0.0
      %1627 = vmatmul.mubr.f32.gmra.mrb[0].mxu0 %v793
      %v1628 = vpop.f32.mrb[0].mxu0
      %v1629 = vadd.f32 0.0, %v1628
      %v1630 = vpop.f32.mrb[0].mxu0
      %1631 = vmatprep.mubr.f32.mxu0 0.0
      %1632 = vmatmul.mubr.f32.gmra.mrb[0].mxu0 %v795
      %v1633 = vpop.f32.mrb[0].mxu0
      %v1634 = vadd.f32 0.0, %v1633
      %v1635 = vpop.f32.mrb[0].mxu0
      %1636 = vdwg.mxu0
      %1637 = vmatprep.subr.mxu0 0.0
      %1638 = vmatpush1.msra.mxu0 %v1528
      %1639 = vmatprep.subr.mxu0 0.0
      %1640 = vmatpush1.msra.mxu0 0.0
      %1641 = vmatprep.subr.mxu0 0.0
      %1642 = vmatpush1.msra.mxu0 0.0
      %1643 = vmatprep.subr.mxu0 0.0
      %1644 = vmatpush1.msra.mxu0 0.0
      %1645 = vmatprep.subr.mxu0 0.0
      %1646 = vmatpush1.msra.mxu0 0.0
      %1647 = vmatprep.subr.mxu0 0.0
      %1648 = vmatpush1.msra.mxu0 0.0
      %1649 = vmatprep.subr.mxu0 0.0
      %1650 = vmatpush1.msra.mxu0 0.0
      %1651 = vmatprep.subr.mxu0 0.0
      %1652 = vmatpush1.msra.mxu0 0.0
      %1653 = vmatprep.subr.mxu0 0.0
      %1654 = vmatpush1.msra.mxu0 0.0
      %1655 = vmatprep.subr.mxu0 0.0
      %1656 = vmatpush1.msra.mxu0 0.0
      %1657 = vmatprep.subr.mxu0 0.0
      %1658 = vmatpush1.msra.mxu0 0.0
      %1659 = vmatprep.subr.mxu0 0.0
      %1660 = vmatpush1.msra.mxu0 0.0
      %1661 = vmatprep.subr.mxu0 0.0
      %1662 = vmatpush1.msra.mxu0 0.0
      %1663 = vmatprep.subr.mxu0 0.0
      %1664 = vmatpush1.msra.mxu0 0.0
      %1665 = vmatprep.subr.mxu0 0.0
      %1666 = vmatpush1.msra.mxu0 0.0
      %1667 = vmatprep.subr.mxu0 0.0
      %1668 = vmatpush1.msra.mxu0 0.0
      %1669 = vmatprep.subr.mxu0 0.0
      %1670 = vmatpush1.msra.mxu0 0.0
      %1671 = vmatprep.subr.mxu0 0.0
      %1672 = vmatpush1.msra.mxu0 0.0
      %1673 = vmatprep.subr.mxu0 0.0
      %1674 = vmatpush1.msra.mxu0 0.0
      %1675 = vmatprep.subr.mxu0 0.0
      %1676 = vmatpush1.msra.mxu0 0.0
      %1677 = vmatprep.subr.mxu0 0.0
      %1678 = vmatpush1.msra.mxu0 0.0
      %1679 = vmatprep.subr.mxu0 0.0
      %1680 = vmatpush1.msra.mxu0 0.0
      %1681 = vmatprep.subr.mxu0 0.0
      %1682 = vmatpush1.msra.mxu0 0.0
      %1683 = vmatprep.subr.mxu0 0.0
      %1684 = vmatpush1.msra.mxu0 0.0
      %1685 = vmatprep.subr.mxu0 0.0
      %1686 = vmatpush1.msra.mxu0 0.0
      %1687 = vmatprep.subr.mxu0 0.0
      %1688 = vmatpush1.msra.mxu0 0.0
      %1689 = vmatprep.subr.mxu0 0.0
      %1690 = vmatpush1.msra.mxu0 0.0
      %1691 = vmatprep.subr.mxu0 0.0
      %1692 = vmatpush1.msra.mxu0 0.0
      %1693 = vmatprep.subr.mxu0 0.0
      %1694 = vmatpush1.msra.mxu0 0.0
      %1695 = vmatprep.subr.mxu0 0.0
      %1696 = vmatpush1.msra.mxu0 0.0
      %1697 = vmatprep.subr.mxu0 0.0
      %1698 = vmatpush1.msra.mxu0 0.0
      %1699 = vmatprep.subr.mxu0 0.0
      %1700 = vmatpush1.msra.mxu0 0.0
      %1701 = vmatprep.mubr.f32.mxu0 0.0
      %1702 = vmatmul.mubr.f32.gmra.mrb[0].mxu0 %v610
      %v1703 = vpop.f32.mrb[0].mxu0
      %v1704 = vadd.f32 %v1599, %v1703
      %v1705 = vpop.f32.mrb[0].mxu0
      %1706 = vmatprep.mubr.f32.mxu0 0.0
      %1707 = vmatmul.mubr.f32.gmra.mrb[0].mxu0 %v613
      %v1708 = vpop.f32.mrb[0].mxu0
      %v1709 = vadd.f32 %v1604, %v1708
      %v1710 = vpop.f32.mrb[0].mxu0
      %1711 = vmatprep.mubr.f32.mxu0 0.0
      %1712 = vmatmul.mubr.f32.gmra.mrb[0].mxu0 %v616
      %v1713 = vpop.f32.mrb[0].mxu0
      %v1714 = vadd.f32 %v1609, %v1713
      %v1715 = vpop.f32.mrb[0].mxu0
      %1716 = vmatprep.mubr.f32.mxu0 0.0
      %1717 = vmatmul.mubr.f32.gmra.mrb[0].mxu0 %v619
      %v1718 = vpop.f32.mrb[0].mxu0
      %v1719 = vadd.f32 %v1614, %v1718
      %v1720 = vpop.f32.mrb[0].mxu0
      %1721 = vmatprep.mubr.f32.mxu0 0.0
      %1722 = vmatmul.mubr.f32.gmra.mrb[0].mxu0 %v622
      %v1723 = vpop.f32.mrb[0].mxu0
      %v1724 = vadd.f32 %v1619, %v1723
      %v1725 = vpop.f32.mrb[0].mxu0
      %1726 = vmatprep.mubr.f32.mxu0 0.0
      %1727 = vmatmul.mubr.f32.gmra.mrb[0].mxu0 %v625
      %v1728 = vpop.f32.mrb[0].mxu0
      %v1729 = vadd.f32 %v1624, %v1728
      %v1730 = vpop.f32.mrb[0].mxu0
      %1731 = vmatprep.mubr.f32.mxu0 0.0
      %1732 = vmatmul.mubr.f32.gmra.mrb[0].mxu0 %v628
      %v1733 = vpop.f32.mrb[0].mxu0
      %v1734 = vadd.f32 %v1629, %v1733
      %v1735 = vpop.f32.mrb[0].mxu0
      %1736 = vmatprep.mubr.f32.mxu0 0.0
      %1737 = vmatmul.mubr.f32.gmra.mrb[0].mxu0 %v631
      %v1738 = vpop.f32.mrb[0].mxu0
      %v1739 = vadd.f32 %v1634, %v1738
      %v1740 = vpop.f32.mrb[0].mxu0
      %1741 = vdwg.mxu0
      %s1742 = scalar_lea.vmem %s1, 40
      %v1743 = vld [vmem:[%s1742] sm:$0xf]
      %v1744 = vunpack.c.l.bf16 %v1743
      %v1746 = vsel %vm363, %v277, 0
      %v1749 = vsel %vm363, %v278, 0
      %v1752 = vsel %vm363, %v279, 0
      %v1755 = vsel %vm363, %v280, 0
      %v1758 = vsel %vm363, %v281, 0
      %v1761 = vsel %vm363, %v282, 0
      %v1764 = vsel %vm363, %v283, 0
      %v1767 = vsel %vm363, %v284, 0
      %1769 = vmatprep.subr.mxu0 0.0
      %1770 = vmatpush1.msra.mxu0 %v1744
      %1771 = vmatprep.subr.mxu0 0.0
      %1772 = vmatpush1.msra.mxu0 0.0
      %1773 = vmatprep.subr.mxu0 0.0
      %1774 = vmatpush1.msra.mxu0 0.0
      %1775 = vmatprep.subr.mxu0 0.0
      %1776 = vmatpush1.msra.mxu0 0.0
      %1777 = vmatprep.subr.mxu0 0.0
      %1778 = vmatpush1.msra.mxu0 0.0
      %1779 = vmatprep.subr.mxu0 0.0
      %1780 = vmatpush1.msra.mxu0 0.0
      %1781 = vmatprep.subr.mxu0 0.0
      %1782 = vmatpush1.msra.mxu0 0.0
      %1783 = vmatprep.subr.mxu0 0.0
      %1784 = vmatpush1.msra.mxu0 0.0
      %1785 = vmatprep.subr.mxu0 0.0
      %1786 = vmatpush1.msra.mxu0 0.0
      %1787 = vmatprep.subr.mxu0 0.0
      %1788 = vmatpush1.msra.mxu0 0.0
      %1789 = vmatprep.subr.mxu0 0.0
      %1790 = vmatpush1.msra.mxu0 0.0
      %1791 = vmatprep.subr.mxu0 0.0
      %1792 = vmatpush1.msra.mxu0 0.0
      %1793 = vmatprep.subr.mxu0 0.0
      %1794 = vmatpush1.msra.mxu0 0.0
      %1795 = vmatprep.subr.mxu0 0.0
      %1796 = vmatpush1.msra.mxu0 0.0
      %1797 = vmatprep.subr.mxu0 0.0
      %1798 = vmatpush1.msra.mxu0 0.0
      %1799 = vmatprep.subr.mxu0 0.0
      %1800 = vmatpush1.msra.mxu0 0.0
      %1801 = vmatprep.subr.mxu0 0.0
      %1802 = vmatpush1.msra.mxu0 0.0
      %1803 = vmatprep.subr.mxu0 0.0
      %1804 = vmatpush1.msra.mxu0 0.0
      %1805 = vmatprep.subr.mxu0 0.0
      %1806 = vmatpush1.msra.mxu0 0.0
      %1807 = vmatprep.subr.mxu0 0.0
      %1808 = vmatpush1.msra.mxu0 0.0
      %1809 = vmatprep.subr.mxu0 0.0
      %1810 = vmatpush1.msra.mxu0 0.0
      %1811 = vmatprep.subr.mxu0 0.0
      %1812 = vmatpush1.msra.mxu0 0.0
      %1813 = vmatprep.subr.mxu0 0.0
      %1814 = vmatpush1.msra.mxu0 0.0
      %1815 = vmatprep.subr.mxu0 0.0
      %1816 = vmatpush1.msra.mxu0 0.0
      %1817 = vmatprep.subr.mxu0 0.0
      %1818 = vmatpush1.msra.mxu0 0.0
      %1819 = vmatprep.subr.mxu0 0.0
      %1820 = vmatpush1.msra.mxu0 0.0
      %1821 = vmatprep.subr.mxu0 0.0
      %1822 = vmatpush1.msra.mxu0 0.0
      %1823 = vmatprep.subr.mxu0 0.0
      %1824 = vmatpush1.msra.mxu0 0.0
      %1825 = vmatprep.subr.mxu0 0.0
      %1826 = vmatpush1.msra.mxu0 0.0
      %1827 = vmatprep.subr.mxu0 0.0
      %1828 = vmatpush1.msra.mxu0 0.0
      %1829 = vmatprep.subr.mxu0 0.0
      %1830 = vmatpush1.msra.mxu0 0.0
      %1831 = vmatprep.subr.mxu0 0.0
      %1832 = vmatpush1.msra.mxu0 0.0
      %1833 = vmatprep.mubr.f32.mxu0 0.0
      %1834 = vmatmul.mubr.f32.gmra.mrb[0].mxu0 %v1746
      %v1835 = vpop.f32.mrb[0].mxu0
      %v1836 = vadd.f32 0.0, %v1835
      %v1837 = vpop.f32.mrb[0].mxu0
      %1838 = vmatprep.mubr.f32.mxu0 0.0
      %1839 = vmatmul.mubr.f32.gmra.mrb[0].mxu0 %v1749
      %v1840 = vpop.f32.mrb[0].mxu0
      %v1841 = vadd.f32 0.0, %v1840
      %v1842 = vpop.f32.mrb[0].mxu0
      %1843 = vmatprep.mubr.f32.mxu0 0.0
      %1844 = vmatmul.mubr.f32.gmra.mrb[0].mxu0 %v1752
      %v1845 = vpop.f32.mrb[0].mxu0
      %v1846 = vadd.f32 0.0, %v1845
      %v1847 = vpop.f32.mrb[0].mxu0
      %1848 = vmatprep.mubr.f32.mxu0 0.0
      %1849 = vmatmul.mubr.f32.gmra.mrb[0].mxu0 %v1755
      %v1850 = vpop.f32.mrb[0].mxu0
      %v1851 = vadd.f32 0.0, %v1850
      %v1852 = vpop.f32.mrb[0].mxu0
      %1853 = vmatprep.mubr.f32.mxu0 0.0
      %1854 = vmatmul.mubr.f32.gmra.mrb[0].mxu0 %v1758
      %v1855 = vpop.f32.mrb[0].mxu0
      %v1856 = vadd.f32 0.0, %v1855
      %v1857 = vpop.f32.mrb[0].mxu0
      %1858 = vmatprep.mubr.f32.mxu0 0.0
      %1859 = vmatmul.mubr.f32.gmra.mrb[0].mxu0 %v1761
      %v1860 = vpop.f32.mrb[0].mxu0
      %v1861 = vadd.f32 0.0, %v1860
      %v1862 = vpop.f32.mrb[0].mxu0
      %1863 = vmatprep.mubr.f32.mxu0 0.0
      %1864 = vmatmul.mubr.f32.gmra.mrb[0].mxu0 %v1764
      %v1865 = vpop.f32.mrb[0].mxu0
      %v1866 = vadd.f32 0.0, %v1865
      %v1867 = vpop.f32.mrb[0].mxu0
      %1868 = vmatprep.mubr.f32.mxu0 0.0
      %1869 = vmatmul.mubr.f32.gmra.mrb[0].mxu0 %v1767
      %v1870 = vpop.f32.mrb[0].mxu0
      %v1871 = vadd.f32 0.0, %v1870
      %v1872 = vpop.f32.mrb[0].mxu0
      %1873 = vdwg.mxu0
      %v1874 = vadd.f32 %v1704, %v1836
      %v1875 = vadd.f32 %v1709, %v1841
      %v1876 = vadd.f32 %v1714, %v1846
      %v1877 = vadd.f32 %v1719, %v1851
      %v1878 = vadd.f32 %v1724, %v1856
      %v1879 = vadd.f32 %v1729, %v1861
      %v1880 = vadd.f32 %v1734, %v1866
      %v1881 = vadd.f32 %v1739, %v1871
      %v1890 = vrot.slane %v277, 1
      %v1891 = vrot.slane %v293, 1
      %v1892 = vsel %vm335, %v1890, %v1891
      %v1893 = vrot.slane %v278, 1
      %v1894 = vrot.slane %v294, 1
      %v1895 = vsel %vm335, %v1893, %v1894
      %v1896 = vrot.slane %v279, 1
      %v1897 = vrot.slane %v295, 1
      %v1898 = vsel %vm335, %v1896, %v1897
      %v1899 = vrot.slane %v280, 1
      %v1900 = vrot.slane %v296, 1
      %v1901 = vsel %vm335, %v1899, %v1900
      %v1902 = vrot.slane %v281, 1
      %v1903 = vrot.slane %v297, 1
      %v1904 = vsel %vm335, %v1902, %v1903
      %v1905 = vrot.slane %v282, 1
      %v1906 = vrot.slane %v298, 1
      %v1907 = vsel %vm335, %v1905, %v1906
      %v1908 = vrot.slane %v283, 1
      %v1909 = vrot.slane %v299, 1
      %v1910 = vsel %vm335, %v1908, %v1909
      %v1911 = vrot.slane %v284, 1
      %v1912 = vrot.slane %v300, 1
      %v1913 = vsel %vm335, %v1911, %v1912
      %s1914 = scalar_lea.vmem %s1, 44
      %v1915 = vld [vmem:[%s1914] sm:$0xf]
      %v1916 = vunpack.c.l.bf16 %v1915
      %v1917 = vsel %vm363, %v1892, 0
      %v1919 = vsel %vm363, %v1895, 0
      %v1921 = vsel %vm363, %v1898, 0
      %v1923 = vsel %vm363, %v1901, 0
      %v1925 = vsel %vm363, %v1904, 0
      %v1927 = vsel %vm363, %v1907, 0
      %v1929 = vsel %vm363, %v1910, 0
      %v1931 = vsel %vm363, %v1913, 0
      %1933 = vmatprep.subr.mxu0 0.0
      %1934 = vmatpush1.msra.mxu0 %v1916
      %1935 = vmatprep.subr.mxu0 0.0
      %1936 = vmatpush1.msra.mxu0 0.0
      %1937 = vmatprep.subr.mxu0 0.0
      %1938 = vmatpush1.msra.mxu0 0.0
      %1939 = vmatprep.subr.mxu0 0.0
      %1940 = vmatpush1.msra.mxu0 0.0
      %1941 = vmatprep.subr.mxu0 0.0
      %1942 = vmatpush1.msra.mxu0 0.0
      %1943 = vmatprep.subr.mxu0 0.0
      %1944 = vmatpush1.msra.mxu0 0.0
      %1945 = vmatprep.subr.mxu0 0.0
      %1946 = vmatpush1.msra.mxu0 0.0
      %1947 = vmatprep.subr.mxu0 0.0
      %1948 = vmatpush1.msra.mxu0 0.0
      %1949 = vmatprep.subr.mxu0 0.0
      %1950 = vmatpush1.msra.mxu0 0.0
      %1951 = vmatprep.subr.mxu0 0.0
      %1952 = vmatpush1.msra.mxu0 0.0
      %1953 = vmatprep.subr.mxu0 0.0
      %1954 = vmatpush1.msra.mxu0 0.0
      %1955 = vmatprep.subr.mxu0 0.0
      %1956 = vmatpush1.msra.mxu0 0.0
      %1957 = vmatprep.subr.mxu0 0.0
      %1958 = vmatpush1.msra.mxu0 0.0
      %1959 = vmatprep.subr.mxu0 0.0
      %1960 = vmatpush1.msra.mxu0 0.0
      %1961 = vmatprep.subr.mxu0 0.0
      %1962 = vmatpush1.msra.mxu0 0.0
      %1963 = vmatprep.subr.mxu0 0.0
      %1964 = vmatpush1.msra.mxu0 0.0
      %1965 = vmatprep.subr.mxu0 0.0
      %1966 = vmatpush1.msra.mxu0 0.0
      %1967 = vmatprep.subr.mxu0 0.0
      %1968 = vmatpush1.msra.mxu0 0.0
      %1969 = vmatprep.subr.mxu0 0.0
      %1970 = vmatpush1.msra.mxu0 0.0
      %1971 = vmatprep.subr.mxu0 0.0
      %1972 = vmatpush1.msra.mxu0 0.0
      %1973 = vmatprep.subr.mxu0 0.0
      %1974 = vmatpush1.msra.mxu0 0.0
      %1975 = vmatprep.subr.mxu0 0.0
      %1976 = vmatpush1.msra.mxu0 0.0
      %1977 = vmatprep.subr.mxu0 0.0
      %1978 = vmatpush1.msra.mxu0 0.0
      %1979 = vmatprep.subr.mxu0 0.0
      %1980 = vmatpush1.msra.mxu0 0.0
      %1981 = vmatprep.subr.mxu0 0.0
      %1982 = vmatpush1.msra.mxu0 0.0
      %1983 = vmatprep.subr.mxu0 0.0
      %1984 = vmatpush1.msra.mxu0 0.0
      %1985 = vmatprep.subr.mxu0 0.0
      %1986 = vmatpush1.msra.mxu0 0.0
      %1987 = vmatprep.subr.mxu0 0.0
      %1988 = vmatpush1.msra.mxu0 0.0
      %1989 = vmatprep.subr.mxu0 0.0
      %1990 = vmatpush1.msra.mxu0 0.0
      %1991 = vmatprep.subr.mxu0 0.0
      %1992 = vmatpush1.msra.mxu0 0.0
      %1993 = vmatprep.subr.mxu0 0.0
      %1994 = vmatpush1.msra.mxu0 0.0
      %1995 = vmatprep.subr.mxu0 0.0
      %1996 = vmatpush1.msra.mxu0 0.0
      %1997 = vmatprep.mubr.f32.mxu0 0.0
      %1998 = vmatmul.mubr.f32.gmra.mrb[0].mxu0 %v1917
      %v1999 = vpop.f32.mrb[0].mxu0
      %v2000 = vadd.f32 0.0, %v1999
      %v2001 = vpop.f32.mrb[0].mxu0
      %2002 = vmatprep.mubr.f32.mxu0 0.0
      %2003 = vmatmul.mubr.f32.gmra.mrb[0].mxu0 %v1919
      %v2004 = vpop.f32.mrb[0].mxu0
      %v2005 = vadd.f32 0.0, %v2004
      %v2006 = vpop.f32.mrb[0].mxu0
      %2007 = vmatprep.mubr.f32.mxu0 0.0
      %2008 = vmatmul.mubr.f32.gmra.mrb[0].mxu0 %v1921
      %v2009 = vpop.f32.mrb[0].mxu0
      %v2010 = vadd.f32 0.0, %v2009
      %v2011 = vpop.f32.mrb[0].mxu0
      %2012 = vmatprep.mubr.f32.mxu0 0.0
      %2013 = vmatmul.mubr.f32.gmra.mrb[0].mxu0 %v1923
      %v2014 = vpop.f32.mrb[0].mxu0
      %v2015 = vadd.f32 0.0, %v2014
      %v2016 = vpop.f32.mrb[0].mxu0
      %2017 = vmatprep.mubr.f32.mxu0 0.0
      %2018 = vmatmul.mubr.f32.gmra.mrb[0].mxu0 %v1925
      %v2019 = vpop.f32.mrb[0].mxu0
      %v2020 = vadd.f32 0.0, %v2019
      %v2021 = vpop.f32.mrb[0].mxu0
      %2022 = vmatprep.mubr.f32.mxu0 0.0
      %2023 = vmatmul.mubr.f32.gmra.mrb[0].mxu0 %v1927
      %v2024 = vpop.f32.mrb[0].mxu0
      %v2025 = vadd.f32 0.0, %v2024
      %v2026 = vpop.f32.mrb[0].mxu0
      %2027 = vmatprep.mubr.f32.mxu0 0.0
      %2028 = vmatmul.mubr.f32.gmra.mrb[0].mxu0 %v1929
      %v2029 = vpop.f32.mrb[0].mxu0
      %v2030 = vadd.f32 0.0, %v2029
      %v2031 = vpop.f32.mrb[0].mxu0
      %2032 = vmatprep.mubr.f32.mxu0 0.0
      %2033 = vmatmul.mubr.f32.gmra.mrb[0].mxu0 %v1931
      %v2034 = vpop.f32.mrb[0].mxu0
      %v2035 = vadd.f32 0.0, %v2034
      %v2036 = vpop.f32.mrb[0].mxu0
      %2037 = vdwg.mxu0
      %v2038 = vadd.f32 %v1874, %v2000
      %v2039 = vadd.f32 %v1875, %v2005
      %v2040 = vadd.f32 %v1876, %v2010
      %v2041 = vadd.f32 %v1877, %v2015
      %v2042 = vadd.f32 %v1878, %v2020
      %v2043 = vadd.f32 %v1879, %v2025
      %v2044 = vadd.f32 %v1880, %v2030
      %v2045 = vadd.f32 %v1881, %v2035
      %v2046 = vadd.f32 %v2038, %v915
      %v2047 = vadd.f32 %v2039, %v915
      %v2048 = vadd.f32 %v2040, %v915
      %v2049 = vadd.f32 %v2041, %v915
      %v2050 = vadd.f32 %v2042, %v915
      %v2051 = vadd.f32 %v2043, %v915
      %v2052 = vadd.f32 %v2044, %v915
      %v2053 = vadd.f32 %v2045, %v915
      %vm2054 = vcmp.ge.f32.partialorder %v2046, 0.0
      %vm2055 = vcmp.ge.f32.partialorder %v2047, 0.0
      %vm2056 = vcmp.ge.f32.partialorder %v2048, 0.0
      %vm2057 = vcmp.ge.f32.partialorder %v2049, 0.0
      %vm2058 = vcmp.ge.f32.partialorder %v2050, 0.0
      %vm2059 = vcmp.ge.f32.partialorder %v2051, 0.0
      %vm2060 = vcmp.ge.f32.partialorder %v2052, 0.0
      %vm2061 = vcmp.ge.f32.partialorder %v2053, 0.0
      %v2062 = vmul.f32 %v2046, 0.2
      %v2063 = vmul.f32 %v2047, 0.2
      %v2064 = vmul.f32 %v2048, 0.2
      %v2065 = vmul.f32 %v2049, 0.2
      %v2066 = vmul.f32 %v2050, 0.2
      %v2067 = vmul.f32 %v2051, 0.2
      %v2068 = vmul.f32 %v2052, 0.2
      %v2069 = vmul.f32 %v2053, 0.2
      %v2070 = vsel %vm2054, %v2046, %v2062
      %v2071 = vsel %vm2055, %v2047, %v2063
      %v2072 = vsel %vm2056, %v2048, %v2064
      %v2073 = vsel %vm2057, %v2049, %v2065
      %v2074 = vsel %vm2058, %v2050, %v2066
      %v2075 = vsel %vm2059, %v2051, %v2067
      %v2076 = vsel %vm2060, %v2052, %v2068
      %v2077 = vsel %vm2061, %v2053, %v2069
      %s2078 = scalar_lea.vmem %s1, 48
      %v2079 = vld [vmem:[%s2078] sm:$0xf]
      %v2080 = vunpack.c.l.bf16 %v2079
      %s2081 = scalar_lea.vmem %s1, 52
      %v2082 = vld [vmem:[%s2081] sm:$0xf]
      %v2083 = vunpack.c.l.bf16 %v2082
      %2084 = vmatprep.subr.mxu0 0.0
      %2085 = vmatpush1.msra.mxu0 %v2083
      %2086 = vmatprep.subr.mxu0 0.0
      %2087 = vmatpush1.msra.mxu0 0.0
      %2088 = vmatprep.subr.mxu0 0.0
      %2089 = vmatpush1.msra.mxu0 0.0
      %2090 = vmatprep.subr.mxu0 0.0
      %2091 = vmatpush1.msra.mxu0 0.0
      %2092 = vmatprep.subr.mxu0 0.0
      %2093 = vmatpush1.msra.mxu0 0.0
      %2094 = vmatprep.subr.mxu0 0.0
      %2095 = vmatpush1.msra.mxu0 0.0
      %2096 = vmatprep.subr.mxu0 0.0
      %2097 = vmatpush1.msra.mxu0 0.0
      %2098 = vmatprep.subr.mxu0 0.0
      %2099 = vmatpush1.msra.mxu0 0.0
      %2100 = vmatprep.subr.mxu0 0.0
      %2101 = vmatpush1.msra.mxu0 0.0
      %2102 = vmatprep.subr.mxu0 0.0
      %2103 = vmatpush1.msra.mxu0 0.0
      %2104 = vmatprep.subr.mxu0 0.0
      %2105 = vmatpush1.msra.mxu0 0.0
      %2106 = vmatprep.subr.mxu0 0.0
      %2107 = vmatpush1.msra.mxu0 0.0
      %2108 = vmatprep.subr.mxu0 0.0
      %2109 = vmatpush1.msra.mxu0 0.0
      %2110 = vmatprep.subr.mxu0 0.0
      %2111 = vmatpush1.msra.mxu0 0.0
      %2112 = vmatprep.subr.mxu0 0.0
      %2113 = vmatpush1.msra.mxu0 0.0
      %2114 = vmatprep.subr.mxu0 0.0
      %2115 = vmatpush1.msra.mxu0 0.0
      %2116 = vmatprep.subr.mxu0 0.0
      %2117 = vmatpush1.msra.mxu0 0.0
      %2118 = vmatprep.subr.mxu0 0.0
      %2119 = vmatpush1.msra.mxu0 0.0
      %2120 = vmatprep.subr.mxu0 0.0
      %2121 = vmatpush1.msra.mxu0 0.0
      %2122 = vmatprep.subr.mxu0 0.0
      %2123 = vmatpush1.msra.mxu0 0.0
      %2124 = vmatprep.subr.mxu0 0.0
      %2125 = vmatpush1.msra.mxu0 0.0
      %2126 = vmatprep.subr.mxu0 0.0
      %2127 = vmatpush1.msra.mxu0 0.0
      %2128 = vmatprep.subr.mxu0 0.0
      %2129 = vmatpush1.msra.mxu0 0.0
      %2130 = vmatprep.subr.mxu0 0.0
      %2131 = vmatpush1.msra.mxu0 0.0
      %2132 = vmatprep.subr.mxu0 0.0
      %2133 = vmatpush1.msra.mxu0 0.0
      %2134 = vmatprep.subr.mxu0 0.0
      %2135 = vmatpush1.msra.mxu0 0.0
      %2136 = vmatprep.subr.mxu0 0.0
      %2137 = vmatpush1.msra.mxu0 0.0
      %2138 = vmatprep.subr.mxu0 0.0
      %2139 = vmatpush1.msra.mxu0 0.0
      %2140 = vmatprep.subr.mxu0 0.0
      %2141 = vmatpush1.msra.mxu0 0.0
      %2142 = vmatprep.subr.mxu0 0.0
      %2143 = vmatpush1.msra.mxu0 0.0
      %2144 = vmatprep.subr.mxu0 0.0
      %2145 = vmatpush1.msra.mxu0 0.0
      %2146 = vmatprep.subr.mxu0 0.0
      %2147 = vmatpush1.msra.mxu0 0.0
      %2148 = vmatprep.mubr.f32.mxu0 0.0
      %2149 = vmatmul.mubr.f32.gmra.mrb[0].mxu0 %v1365
      %v2150 = vpop.f32.mrb[0].mxu0
      %v2151 = vadd.f32 0.0, %v2150
      %v2152 = vpop.f32.mrb[0].mxu0
      %2153 = vmatprep.mubr.f32.mxu0 0.0
      %2154 = vmatmul.mubr.f32.gmra.mrb[0].mxu0 %v1367
      %v2155 = vpop.f32.mrb[0].mxu0
      %v2156 = vadd.f32 0.0, %v2155
      %v2157 = vpop.f32.mrb[0].mxu0
      %2158 = vmatprep.mubr.f32.mxu0 0.0
      %2159 = vmatmul.mubr.f32.gmra.mrb[0].mxu0 %v1369
      %v2160 = vpop.f32.mrb[0].mxu0
      %v2161 = vadd.f32 0.0, %v2160
      %v2162 = vpop.f32.mrb[0].mxu0
      %2163 = vmatprep.mubr.f32.mxu0 0.0
      %2164 = vmatmul.mubr.f32.gmra.mrb[0].mxu0 %v1371
      %v2165 = vpop.f32.mrb[0].mxu0
      %v2166 = vadd.f32 0.0, %v2165
      %v2167 = vpop.f32.mrb[0].mxu0
      %2168 = vmatprep.mubr.f32.mxu0 0.0
      %2169 = vmatmul.mubr.f32.gmra.mrb[0].mxu0 %v1373
      %v2170 = vpop.f32.mrb[0].mxu0
      %v2171 = vadd.f32 0.0, %v2170
      %v2172 = vpop.f32.mrb[0].mxu0
      %2173 = vmatprep.mubr.f32.mxu0 0.0
      %2174 = vmatmul.mubr.f32.gmra.mrb[0].mxu0 %v1375
      %v2175 = vpop.f32.mrb[0].mxu0
      %v2176 = vadd.f32 0.0, %v2175
      %v2177 = vpop.f32.mrb[0].mxu0
      %2178 = vmatprep.mubr.f32.mxu0 0.0
      %2179 = vmatmul.mubr.f32.gmra.mrb[0].mxu0 %v1377
      %v2180 = vpop.f32.mrb[0].mxu0
      %v2181 = vadd.f32 0.0, %v2180
      %v2182 = vpop.f32.mrb[0].mxu0
      %2183 = vmatprep.mubr.f32.mxu0 0.0
      %2184 = vmatmul.mubr.f32.gmra.mrb[0].mxu0 %v1379
      %v2185 = vpop.f32.mrb[0].mxu0
      %v2186 = vadd.f32 0.0, %v2185
      %v2187 = vpop.f32.mrb[0].mxu0
      %2188 = vdwg.mxu0
      %2189 = vmatprep.subr.mxu0 0.0
      %2190 = vmatpush1.msra.mxu0 %v2080
      %2191 = vmatprep.subr.mxu0 0.0
      %2192 = vmatpush1.msra.mxu0 0.0
      %2193 = vmatprep.subr.mxu0 0.0
      %2194 = vmatpush1.msra.mxu0 0.0
      %2195 = vmatprep.subr.mxu0 0.0
      %2196 = vmatpush1.msra.mxu0 0.0
      %2197 = vmatprep.subr.mxu0 0.0
      %2198 = vmatpush1.msra.mxu0 0.0
      %2199 = vmatprep.subr.mxu0 0.0
      %2200 = vmatpush1.msra.mxu0 0.0
      %2201 = vmatprep.subr.mxu0 0.0
      %2202 = vmatpush1.msra.mxu0 0.0
      %2203 = vmatprep.subr.mxu0 0.0
      %2204 = vmatpush1.msra.mxu0 0.0
      %2205 = vmatprep.subr.mxu0 0.0
      %2206 = vmatpush1.msra.mxu0 0.0
      %2207 = vmatprep.subr.mxu0 0.0
      %2208 = vmatpush1.msra.mxu0 0.0
      %2209 = vmatprep.subr.mxu0 0.0
      %2210 = vmatpush1.msra.mxu0 0.0
      %2211 = vmatprep.subr.mxu0 0.0
      %2212 = vmatpush1.msra.mxu0 0.0
      %2213 = vmatprep.subr.mxu0 0.0
      %2214 = vmatpush1.msra.mxu0 0.0
      %2215 = vmatprep.subr.mxu0 0.0
      %2216 = vmatpush1.msra.mxu0 0.0
      %2217 = vmatprep.subr.mxu0 0.0
      %2218 = vmatpush1.msra.mxu0 0.0
      %2219 = vmatprep.subr.mxu0 0.0
      %2220 = vmatpush1.msra.mxu0 0.0
      %2221 = vmatprep.subr.mxu0 0.0
      %2222 = vmatpush1.msra.mxu0 0.0
      %2223 = vmatprep.subr.mxu0 0.0
      %2224 = vmatpush1.msra.mxu0 0.0
      %2225 = vmatprep.subr.mxu0 0.0
      %2226 = vmatpush1.msra.mxu0 0.0
      %2227 = vmatprep.subr.mxu0 0.0
      %2228 = vmatpush1.msra.mxu0 0.0
      %2229 = vmatprep.subr.mxu0 0.0
      %2230 = vmatpush1.msra.mxu0 0.0
      %2231 = vmatprep.subr.mxu0 0.0
      %2232 = vmatpush1.msra.mxu0 0.0
      %2233 = vmatprep.subr.mxu0 0.0
      %2234 = vmatpush1.msra.mxu0 0.0
      %2235 = vmatprep.subr.mxu0 0.0
      %2236 = vmatpush1.msra.mxu0 0.0
      %2237 = vmatprep.subr.mxu0 0.0
      %2238 = vmatpush1.msra.mxu0 0.0
      %2239 = vmatprep.subr.mxu0 0.0
      %2240 = vmatpush1.msra.mxu0 0.0
      %2241 = vmatprep.subr.mxu0 0.0
      %2242 = vmatpush1.msra.mxu0 0.0
      %2243 = vmatprep.subr.mxu0 0.0
      %2244 = vmatpush1.msra.mxu0 0.0
      %2245 = vmatprep.subr.mxu0 0.0
      %2246 = vmatpush1.msra.mxu0 0.0
      %2247 = vmatprep.subr.mxu0 0.0
      %2248 = vmatpush1.msra.mxu0 0.0
      %2249 = vmatprep.subr.mxu0 0.0
      %2250 = vmatpush1.msra.mxu0 0.0
      %2251 = vmatprep.subr.mxu0 0.0
      %2252 = vmatpush1.msra.mxu0 0.0
      %2253 = vmatprep.mubr.f32.mxu0 0.0
      %2254 = vmatmul.mubr.f32.gmra.mrb[0].mxu0 %v781
      %v2255 = vpop.f32.mrb[0].mxu0
      %v2256 = vadd.f32 %v2151, %v2255
      %v2257 = vpop.f32.mrb[0].mxu0
      %2258 = vmatprep.mubr.f32.mxu0 0.0
      %2259 = vmatmul.mubr.f32.gmra.mrb[0].mxu0 %v783
      %v2260 = vpop.f32.mrb[0].mxu0
      %v2261 = vadd.f32 %v2156, %v2260
      %v2262 = vpop.f32.mrb[0].mxu0
      %2263 = vmatprep.mubr.f32.mxu0 0.0
      %2264 = vmatmul.mubr.f32.gmra.mrb[0].mxu0 %v785
      %v2265 = vpop.f32.mrb[0].mxu0
      %v2266 = vadd.f32 %v2161, %v2265
      %v2267 = vpop.f32.mrb[0].mxu0
      %2268 = vmatprep.mubr.f32.mxu0 0.0
      %2269 = vmatmul.mubr.f32.gmra.mrb[0].mxu0 %v787
      %v2270 = vpop.f32.mrb[0].mxu0
      %v2271 = vadd.f32 %v2166, %v2270
      %v2272 = vpop.f32.mrb[0].mxu0
      %2273 = vmatprep.mubr.f32.mxu0 0.0
      %2274 = vmatmul.mubr.f32.gmra.mrb[0].mxu0 %v789
      %v2275 = vpop.f32.mrb[0].mxu0
      %v2276 = vadd.f32 %v2171, %v2275
      %v2277 = vpop.f32.mrb[0].mxu0
      %2278 = vmatprep.mubr.f32.mxu0 0.0
      %2279 = vmatmul.mubr.f32.gmra.mrb[0].mxu0 %v791
      %v2280 = vpop.f32.mrb[0].mxu0
      %v2281 = vadd.f32 %v2176, %v2280
      %v2282 = vpop.f32.mrb[0].mxu0
      %2283 = vmatprep.mubr.f32.mxu0 0.0
      %2284 = vmatmul.mubr.f32.gmra.mrb[0].mxu0 %v793
      %v2285 = vpop.f32.mrb[0].mxu0
      %v2286 = vadd.f32 %v2181, %v2285
      %v2287 = vpop.f32.mrb[0].mxu0
      %2288 = vmatprep.mubr.f32.mxu0 0.0
      %2289 = vmatmul.mubr.f32.gmra.mrb[0].mxu0 %v795
      %v2290 = vpop.f32.mrb[0].mxu0
      %v2291 = vadd.f32 %v2186, %v2290
      %v2292 = vpop.f32.mrb[0].mxu0
      %2293 = vdwg.mxu0
      %s2294 = scalar_lea.vmem %s1, 56
      %v2295 = vld [vmem:[%s2294] sm:$0xf]
      %v2296 = vunpack.c.l.bf16 %v2295
      %2297 = vmatprep.subr.mxu0 0.0
      %2298 = vmatpush1.msra.mxu0 %v2296
      %2299 = vmatprep.subr.mxu0 0.0
      %2300 = vmatpush1.msra.mxu0 0.0
      %2301 = vmatprep.subr.mxu0 0.0
      %2302 = vmatpush1.msra.mxu0 0.0
      %2303 = vmatprep.subr.mxu0 0.0
      %2304 = vmatpush1.msra.mxu0 0.0
      %2305 = vmatprep.subr.mxu0 0.0
      %2306 = vmatpush1.msra.mxu0 0.0
      %2307 = vmatprep.subr.mxu0 0.0
      %2308 = vmatpush1.msra.mxu0 0.0
      %2309 = vmatprep.subr.mxu0 0.0
      %2310 = vmatpush1.msra.mxu0 0.0
      %2311 = vmatprep.subr.mxu0 0.0
      %2312 = vmatpush1.msra.mxu0 0.0
      %2313 = vmatprep.subr.mxu0 0.0
      %2314 = vmatpush1.msra.mxu0 0.0
      %2315 = vmatprep.subr.mxu0 0.0
      %2316 = vmatpush1.msra.mxu0 0.0
      %2317 = vmatprep.subr.mxu0 0.0
      %2318 = vmatpush1.msra.mxu0 0.0
      %2319 = vmatprep.subr.mxu0 0.0
      %2320 = vmatpush1.msra.mxu0 0.0
      %2321 = vmatprep.subr.mxu0 0.0
      %2322 = vmatpush1.msra.mxu0 0.0
      %2323 = vmatprep.subr.mxu0 0.0
      %2324 = vmatpush1.msra.mxu0 0.0
      %2325 = vmatprep.subr.mxu0 0.0
      %2326 = vmatpush1.msra.mxu0 0.0
      %2327 = vmatprep.subr.mxu0 0.0
      %2328 = vmatpush1.msra.mxu0 0.0
      %2329 = vmatprep.subr.mxu0 0.0
      %2330 = vmatpush1.msra.mxu0 0.0
      %2331 = vmatprep.subr.mxu0 0.0
      %2332 = vmatpush1.msra.mxu0 0.0
      %2333 = vmatprep.subr.mxu0 0.0
      %2334 = vmatpush1.msra.mxu0 0.0
      %2335 = vmatprep.subr.mxu0 0.0
      %2336 = vmatpush1.msra.mxu0 0.0
      %2337 = vmatprep.subr.mxu0 0.0
      %2338 = vmatpush1.msra.mxu0 0.0
      %2339 = vmatprep.subr.mxu0 0.0
      %2340 = vmatpush1.msra.mxu0 0.0
      %2341 = vmatprep.subr.mxu0 0.0
      %2342 = vmatpush1.msra.mxu0 0.0
      %2343 = vmatprep.subr.mxu0 0.0
      %2344 = vmatpush1.msra.mxu0 0.0
      %2345 = vmatprep.subr.mxu0 0.0
      %2346 = vmatpush1.msra.mxu0 0.0
      %2347 = vmatprep.subr.mxu0 0.0
      %2348 = vmatpush1.msra.mxu0 0.0
      %2349 = vmatprep.subr.mxu0 0.0
      %2350 = vmatpush1.msra.mxu0 0.0
      %2351 = vmatprep.subr.mxu0 0.0
      %2352 = vmatpush1.msra.mxu0 0.0
      %2353 = vmatprep.subr.mxu0 0.0
      %2354 = vmatpush1.msra.mxu0 0.0
      %2355 = vmatprep.subr.mxu0 0.0
      %2356 = vmatpush1.msra.mxu0 0.0
      %2357 = vmatprep.subr.mxu0 0.0
      %2358 = vmatpush1.msra.mxu0 0.0
      %2359 = vmatprep.subr.mxu0 0.0
      %2360 = vmatpush1.msra.mxu0 0.0
      %2361 = vmatprep.mubr.f32.mxu0 0.0
      %2362 = vmatmul.mubr.f32.gmra.mrb[0].mxu0 %v1917
      %v2363 = vpop.f32.mrb[0].mxu0
      %v2364 = vadd.f32 0.0, %v2363
      %v2365 = vpop.f32.mrb[0].mxu0
      %2366 = vmatprep.mubr.f32.mxu0 0.0
      %2367 = vmatmul.mubr.f32.gmra.mrb[0].mxu0 %v1919
      %v2368 = vpop.f32.mrb[0].mxu0
      %v2369 = vadd.f32 0.0, %v2368
      %v2370 = vpop.f32.mrb[0].mxu0
      %2371 = vmatprep.mubr.f32.mxu0 0.0
      %2372 = vmatmul.mubr.f32.gmra.mrb[0].mxu0 %v1921
      %v2373 = vpop.f32.mrb[0].mxu0
      %v2374 = vadd.f32 0.0, %v2373
      %v2375 = vpop.f32.mrb[0].mxu0
      %2376 = vmatprep.mubr.f32.mxu0 0.0
      %2377 = vmatmul.mubr.f32.gmra.mrb[0].mxu0 %v1923
      %v2378 = vpop.f32.mrb[0].mxu0
      %v2379 = vadd.f32 0.0, %v2378
      %v2380 = vpop.f32.mrb[0].mxu0
      %2381 = vmatprep.mubr.f32.mxu0 0.0
      %2382 = vmatmul.mubr.f32.gmra.mrb[0].mxu0 %v1925
      %v2383 = vpop.f32.mrb[0].mxu0
      %v2384 = vadd.f32 0.0, %v2383
      %v2385 = vpop.f32.mrb[0].mxu0
      %2386 = vmatprep.mubr.f32.mxu0 0.0
      %2387 = vmatmul.mubr.f32.gmra.mrb[0].mxu0 %v1927
      %v2388 = vpop.f32.mrb[0].mxu0
      %v2389 = vadd.f32 0.0, %v2388
      %v2390 = vpop.f32.mrb[0].mxu0
      %2391 = vmatprep.mubr.f32.mxu0 0.0
      %2392 = vmatmul.mubr.f32.gmra.mrb[0].mxu0 %v1929
      %v2393 = vpop.f32.mrb[0].mxu0
      %v2394 = vadd.f32 0.0, %v2393
      %v2395 = vpop.f32.mrb[0].mxu0
      %2396 = vmatprep.mubr.f32.mxu0 0.0
      %2397 = vmatmul.mubr.f32.gmra.mrb[0].mxu0 %v1931
      %v2398 = vpop.f32.mrb[0].mxu0
      %v2399 = vadd.f32 0.0, %v2398
      %v2400 = vpop.f32.mrb[0].mxu0
      %2401 = vdwg.mxu0
      %v2402 = vadd.f32 %v2256, %v2364
      %v2403 = vadd.f32 %v2261, %v2369
      %v2404 = vadd.f32 %v2266, %v2374
      %v2405 = vadd.f32 %v2271, %v2379
      %v2406 = vadd.f32 %v2276, %v2384
      %v2407 = vadd.f32 %v2281, %v2389
      %v2408 = vadd.f32 %v2286, %v2394
      %v2409 = vadd.f32 %v2291, %v2399
      %v2418 = vrot.slane %v309, 2
      %v2419 = vrot.slane %v293, 2
      %v2420 = vsel %vm960, %v2418, %v2419
      %v2421 = vrot.slane %v310, 2
      %v2422 = vrot.slane %v294, 2
      %v2423 = vsel %vm960, %v2421, %v2422
      %v2424 = vrot.slane %v311, 2
      %v2425 = vrot.slane %v295, 2
      %v2426 = vsel %vm960, %v2424, %v2425
      %v2427 = vrot.slane %v312, 2
      %v2428 = vrot.slane %v296, 2
      %v2429 = vsel %vm960, %v2427, %v2428
      %v2430 = vrot.slane %v313, 2
      %v2431 = vrot.slane %v297, 2
      %v2432 = vsel %vm960, %v2430, %v2431
      %v2433 = vrot.slane %v314, 2
      %v2434 = vrot.slane %v298, 2
      %v2435 = vsel %vm960, %v2433, %v2434
      %v2436 = vrot.slane %v315, 2
      %v2437 = vrot.slane %v299, 2
      %v2438 = vsel %vm960, %v2436, %v2437
      %v2439 = vrot.slane %v316, 2
      %v2440 = vrot.slane %v300, 2
      %v2441 = vsel %vm960, %v2439, %v2440
      %s2442 = scalar_lea.vmem %s1, 60
      %v2443 = vld [vmem:[%s2442] sm:$0xf]
      %v2444 = vunpack.c.l.bf16 %v2443
      %v2445 = vsel %vm363, %v2420, 0
      %v2447 = vsel %vm363, %v2423, 0
      %v2449 = vsel %vm363, %v2426, 0
      %v2451 = vsel %vm363, %v2429, 0
      %v2453 = vsel %vm363, %v2432, 0
      %v2455 = vsel %vm363, %v2435, 0
      %v2457 = vsel %vm363, %v2438, 0
      %v2459 = vsel %vm363, %v2441, 0
      %2461 = vmatprep.subr.mxu0 0.0
      %2462 = vmatpush1.msra.mxu0 %v2444
      %2463 = vmatprep.subr.mxu0 0.0
      %2464 = vmatpush1.msra.mxu0 0.0
      %2465 = vmatprep.subr.mxu0 0.0
      %2466 = vmatpush1.msra.mxu0 0.0
      %2467 = vmatprep.subr.mxu0 0.0
      %2468 = vmatpush1.msra.mxu0 0.0
      %2469 = vmatprep.subr.mxu0 0.0
      %2470 = vmatpush1.msra.mxu0 0.0
      %2471 = vmatprep.subr.mxu0 0.0
      %2472 = vmatpush1.msra.mxu0 0.0
      %2473 = vmatprep.subr.mxu0 0.0
      %2474 = vmatpush1.msra.mxu0 0.0
      %2475 = vmatprep.subr.mxu0 0.0
      %2476 = vmatpush1.msra.mxu0 0.0
      %2477 = vmatprep.subr.mxu0 0.0
      %2478 = vmatpush1.msra.mxu0 0.0
      %2479 = vmatprep.subr.mxu0 0.0
      %2480 = vmatpush1.msra.mxu0 0.0
      %2481 = vmatprep.subr.mxu0 0.0
      %2482 = vmatpush1.msra.mxu0 0.0
      %2483 = vmatprep.subr.mxu0 0.0
      %2484 = vmatpush1.msra.mxu0 0.0
      %2485 = vmatprep.subr.mxu0 0.0
      %2486 = vmatpush1.msra.mxu0 0.0
      %2487 = vmatprep.subr.mxu0 0.0
      %2488 = vmatpush1.msra.mxu0 0.0
      %2489 = vmatprep.subr.mxu0 0.0
      %2490 = vmatpush1.msra.mxu0 0.0
      %2491 = vmatprep.subr.mxu0 0.0
      %2492 = vmatpush1.msra.mxu0 0.0
      %2493 = vmatprep.subr.mxu0 0.0
      %2494 = vmatpush1.msra.mxu0 0.0
      %2495 = vmatprep.subr.mxu0 0.0
      %2496 = vmatpush1.msra.mxu0 0.0
      %2497 = vmatprep.subr.mxu0 0.0
      %2498 = vmatpush1.msra.mxu0 0.0
      %2499 = vmatprep.subr.mxu0 0.0
      %2500 = vmatpush1.msra.mxu0 0.0
      %2501 = vmatprep.subr.mxu0 0.0
      %2502 = vmatpush1.msra.mxu0 0.0
      %2503 = vmatprep.subr.mxu0 0.0
      %2504 = vmatpush1.msra.mxu0 0.0
      %2505 = vmatprep.subr.mxu0 0.0
      %2506 = vmatpush1.msra.mxu0 0.0
      %2507 = vmatprep.subr.mxu0 0.0
      %2508 = vmatpush1.msra.mxu0 0.0
      %2509 = vmatprep.subr.mxu0 0.0
      %2510 = vmatpush1.msra.mxu0 0.0
      %2511 = vmatprep.subr.mxu0 0.0
      %2512 = vmatpush1.msra.mxu0 0.0
      %2513 = vmatprep.subr.mxu0 0.0
      %2514 = vmatpush1.msra.mxu0 0.0
      %2515 = vmatprep.subr.mxu0 0.0
      %2516 = vmatpush1.msra.mxu0 0.0
      %2517 = vmatprep.subr.mxu0 0.0
      %2518 = vmatpush1.msra.mxu0 0.0
      %2519 = vmatprep.subr.mxu0 0.0
      %2520 = vmatpush1.msra.mxu0 0.0
      %2521 = vmatprep.subr.mxu0 0.0
      %2522 = vmatpush1.msra.mxu0 0.0
      %2523 = vmatprep.subr.mxu0 0.0
      %2524 = vmatpush1.msra.mxu0 0.0
      %2525 = vmatprep.mubr.f32.mxu0 0.0
      %2526 = vmatmul.mubr.f32.gmra.mrb[0].mxu0 %v2445
      %v2527 = vpop.f32.mrb[0].mxu0
      %v2528 = vadd.f32 0.0, %v2527
      %v2529 = vpop.f32.mrb[0].mxu0
      %2530 = vmatprep.mubr.f32.mxu0 0.0
      %2531 = vmatmul.mubr.f32.gmra.mrb[0].mxu0 %v2447
      %v2532 = vpop.f32.mrb[0].mxu0
      %v2533 = vadd.f32 0.0, %v2532
      %v2534 = vpop.f32.mrb[0].mxu0
      %2535 = vmatprep.mubr.f32.mxu0 0.0
      %2536 = vmatmul.mubr.f32.gmra.mrb[0].mxu0 %v2449
      %v2537 = vpop.f32.mrb[0].mxu0
      %v2538 = vadd.f32 0.0, %v2537
      %v2539 = vpop.f32.mrb[0].mxu0
      %2540 = vmatprep.mubr.f32.mxu0 0.0
      %2541 = vmatmul.mubr.f32.gmra.mrb[0].mxu0 %v2451
      %v2542 = vpop.f32.mrb[0].mxu0
      %v2543 = vadd.f32 0.0, %v2542
      %v2544 = vpop.f32.mrb[0].mxu0
      %2545 = vmatprep.mubr.f32.mxu0 0.0
      %2546 = vmatmul.mubr.f32.gmra.mrb[0].mxu0 %v2453
      %v2547 = vpop.f32.mrb[0].mxu0
      %v2548 = vadd.f32 0.0, %v2547
      %v2549 = vpop.f32.mrb[0].mxu0
      %2550 = vmatprep.mubr.f32.mxu0 0.0
      %2551 = vmatmul.mubr.f32.gmra.mrb[0].mxu0 %v2455
      %v2552 = vpop.f32.mrb[0].mxu0
      %v2553 = vadd.f32 0.0, %v2552
      %v2554 = vpop.f32.mrb[0].mxu0
      %2555 = vmatprep.mubr.f32.mxu0 0.0
      %2556 = vmatmul.mubr.f32.gmra.mrb[0].mxu0 %v2457
      %v2557 = vpop.f32.mrb[0].mxu0
      %v2558 = vadd.f32 0.0, %v2557
      %v2559 = vpop.f32.mrb[0].mxu0
      %2560 = vmatprep.mubr.f32.mxu0 0.0
      %2561 = vmatmul.mubr.f32.gmra.mrb[0].mxu0 %v2459
      %v2562 = vpop.f32.mrb[0].mxu0
      %v2563 = vadd.f32 0.0, %v2562
      %v2564 = vpop.f32.mrb[0].mxu0
      %2565 = vdwg.mxu0
      %v2566 = vadd.f32 %v2402, %v2528
      %v2567 = vadd.f32 %v2403, %v2533
      %v2568 = vadd.f32 %v2404, %v2538
      %v2569 = vadd.f32 %v2405, %v2543
      %v2570 = vadd.f32 %v2406, %v2548
      %v2571 = vadd.f32 %v2407, %v2553
      %v2572 = vadd.f32 %v2408, %v2558
      %v2573 = vadd.f32 %v2409, %v2563
      %v2574 = vadd.f32 %v2566, %v915
      %v2575 = vadd.f32 %v2567, %v915
      %v2576 = vadd.f32 %v2568, %v915
      %v2577 = vadd.f32 %v2569, %v915
      %v2578 = vadd.f32 %v2570, %v915
      %v2579 = vadd.f32 %v2571, %v915
      %v2580 = vadd.f32 %v2572, %v915
      %v2581 = vadd.f32 %v2573, %v915
      %vm2582 = vcmp.ge.f32.partialorder %v2574, 0.0
      %vm2583 = vcmp.ge.f32.partialorder %v2575, 0.0
      %vm2584 = vcmp.ge.f32.partialorder %v2576, 0.0
      %vm2585 = vcmp.ge.f32.partialorder %v2577, 0.0
      %vm2586 = vcmp.ge.f32.partialorder %v2578, 0.0
      %vm2587 = vcmp.ge.f32.partialorder %v2579, 0.0
      %vm2588 = vcmp.ge.f32.partialorder %v2580, 0.0
      %vm2589 = vcmp.ge.f32.partialorder %v2581, 0.0
      %v2590 = vmul.f32 %v2574, 0.2
      %v2591 = vmul.f32 %v2575, 0.2
      %v2592 = vmul.f32 %v2576, 0.2
      %v2593 = vmul.f32 %v2577, 0.2
      %v2594 = vmul.f32 %v2578, 0.2
      %v2595 = vmul.f32 %v2579, 0.2
      %v2596 = vmul.f32 %v2580, 0.2
      %v2597 = vmul.f32 %v2581, 0.2
      %v2598 = vsel %vm2582, %v2574, %v2590
      %v2599 = vsel %vm2583, %v2575, %v2591
      %v2600 = vsel %vm2584, %v2576, %v2592
      %v2601 = vsel %vm2585, %v2577, %v2593
      %v2602 = vsel %vm2586, %v2578, %v2594
      %v2603 = vsel %vm2587, %v2579, %v2595
      %v2604 = vsel %vm2588, %v2580, %v2596
      %v2605 = vsel %vm2589, %v2581, %v2597
      %2614 = vrot.lane.b32.xlu0 %v1518, 4
      %v2615 = vpop.permute.xlu0 %2614
      %2616 = vrot.lane.b32.xlu0 %v1519, 4
      %v2617 = vpop.permute.xlu0 %2616
      %2618 = vrot.lane.b32.xlu0 %v1520, 4
      %v2619 = vpop.permute.xlu0 %2618
      %2620 = vrot.lane.b32.xlu0 %v1521, 4
      %v2621 = vpop.permute.xlu0 %2620
      %2622 = vrot.lane.b32.xlu0 %v1522, 4
      %v2623 = vpop.permute.xlu0 %2622
      %2624 = vrot.lane.b32.xlu0 %v1523, 4
      %v2625 = vpop.permute.xlu0 %2624
      %2626 = vrot.lane.b32.xlu0 %v1524, 4
      %v2627 = vpop.permute.xlu0 %2626
      %2628 = vrot.lane.b32.xlu0 %v1525, 4
      %v2629 = vpop.permute.xlu0 %2628
      %vm2638 = vcmask 31744
      %v2639 = vsel %vm2638, %v941, %v2615
      %v2640 = vsel %vm2638, %v942, %v2617
      %v2641 = vsel %vm2638, %v943, %v2619
      %v2642 = vsel %vm2638, %v944, %v2621
      %v2643 = vsel %vm2638, %v945, %v2623
      %v2644 = vsel %vm2638, %v946, %v2625
      %v2645 = vsel %vm2638, %v947, %v2627
      %v2646 = vsel %vm2638, %v948, %v2629
      %2655 = vrot.lane.b32.xlu0 %v2598, 4
      %v2656 = vpop.permute.xlu0 %2655
      %2657 = vrot.lane.b32.xlu0 %v2599, 4
      %v2658 = vpop.permute.xlu0 %2657
      %2659 = vrot.lane.b32.xlu0 %v2600, 4
      %v2660 = vpop.permute.xlu0 %2659
      %2661 = vrot.lane.b32.xlu0 %v2601, 4
      %v2662 = vpop.permute.xlu0 %2661
      %2663 = vrot.lane.b32.xlu0 %v2602, 4
      %v2664 = vpop.permute.xlu0 %2663
      %2665 = vrot.lane.b32.xlu0 %v2603, 4
      %v2666 = vpop.permute.xlu0 %2665
      %2667 = vrot.lane.b32.xlu0 %v2604, 4
      %v2668 = vpop.permute.xlu0 %2667
      %2669 = vrot.lane.b32.xlu0 %v2605, 4
      %v2670 = vpop.permute.xlu0 %2669
      %v2679 = vsel %vm2638, %v2070, %v2656
      %v2680 = vsel %vm2638, %v2071, %v2658
      %v2681 = vsel %vm2638, %v2072, %v2660
      %v2682 = vsel %vm2638, %v2073, %v2662
      %v2683 = vsel %vm2638, %v2074, %v2664
      %v2684 = vsel %vm2638, %v2075, %v2666
      %v2685 = vsel %vm2638, %v2076, %v2668
      %v2686 = vsel %vm2638, %v2077, %v2670
      %v2687 = vpack.c.bf16 %v2639, %v2639
      %v2688 = vpack.c.bf16 %v2679, %v2679
      %v2689 = vpack.c.bf16 %v2640, %v2640
      %v2690 = vpack.c.bf16 %v2680, %v2680
      %v2691 = vpack.c.bf16 %v2641, %v2641
      %v2692 = vpack.c.bf16 %v2681, %v2681
      %v2693 = vpack.c.bf16 %v2642, %v2642
      %v2694 = vpack.c.bf16 %v2682, %v2682
      %v2695 = vpack.c.bf16 %v2643, %v2643
      %v2696 = vpack.c.bf16 %v2683, %v2683
      %v2697 = vpack.c.bf16 %v2644, %v2644
      %v2698 = vpack.c.bf16 %v2684, %v2684
      %v2699 = vpack.c.bf16 %v2645, %v2645
      %v2700 = vpack.c.bf16 %v2685, %v2685
      %v2701 = vpack.c.bf16 %v2646, %v2646
      %v2702 = vpack.c.bf16 %v2686, %v2686
      %vm2703 = vcmask 60416
      %2704 = vst.msk [vmem:[%s170] sm:$0xf] %vm2703, %v2687
      %2705 = vst.msk [vmem:[%s170 + $0x4] sm:$0xf] %vm2703, %v2688
      %2706 = vst.msk [vmem:[%s170 + $0x8] sm:$0xf] %vm2703, %v2689
      %2707 = vst.msk [vmem:[%s170 + $0xc] sm:$0xf] %vm2703, %v2690
      %2708 = vst.msk [vmem:[%s170 + $0x10] sm:$0xf] %vm2703, %v2691
      %2709 = vst.msk [vmem:[%s170 + $0x14] sm:$0xf] %vm2703, %v2692
      %2710 = vst.msk [vmem:[%s170 + $0x18] sm:$0xf] %vm2703, %v2693
      %2711 = vst.msk [vmem:[%s170 + $0x1c] sm:$0xf] %vm2703, %v2694
      %2712 = vst.msk [vmem:[%s170 + $0x20] sm:$0xf] %vm2703, %v2695
      %2713 = vst.msk [vmem:[%s170 + $0x24] sm:$0xf] %vm2703, %v2696
      %2714 = vst.msk [vmem:[%s170 + $0x28] sm:$0xf] %vm2703, %v2697
      %2715 = vst.msk [vmem:[%s170 + $0x2c] sm:$0xf] %vm2703, %v2698
      %2716 = vst.msk [vmem:[%s170 + $0x30] sm:$0xf] %vm2703, %v2699
      %2717 = vst.msk [vmem:[%s170 + $0x34] sm:$0xf] %vm2703, %v2700
      %2718 = vst.msk [vmem:[%s170 + $0x38] sm:$0xf] %vm2703, %v2701
      %2719 = vst.msk [vmem:[%s170 + $0x3c] sm:$0xf] %vm2703, %v2702
      %p2720 = scmp.lt.s32.totalorder %s14, 1
      %s2721 = scalar_select %p2720, %s14, 1
      %s2722 = smul.addr %s2721, 16
      %s2723 = smul.addr %s2722, 4
      %s2724 = scalar_lea.vmem %s3, %s2723
      // Predicated region
      $region33: #{unet_block_innermost.3} parent=31 // pred_check
        %p2725 = pneg %p100
      $region34: #{unet_block_innermost.3} parent=31 // pred_check_branch
        %2727 = sbr.rel (%p2725) target = $region36
      $region35: #{unet_block_innermost.3} parent=31 // pred_region
        _
      $region36: #{unet_block_innermost.3} parent=31 // pred_fallthru
        _
    $region32: #{unet_block_innermost.3} parent=5 // pred_fallthru
      _
    %p2728 = scmp.le.s32.totalorder 2, %s9
    // Predicated region
    $region37: #{unet_block_innermost.3} parent=5 // pred_check
      %p2729 = pneg %p2728
    $region38: #{unet_block_innermost.3} parent=5 // pred_check_branch
      %2731 = sbr.rel (%p2729) target = $region40
    $region39: #{unet_block_innermost.3} parent=5 // pred_region
      %s2732 = ssub.s32 %s9, 2
      // Predicated region
      $region41: #{unet_block_innermost.3} parent=39 // pred_check
        %p2733 = pneg %p106
      $region42: #{unet_block_innermost.3} parent=39 // pred_check_branch
        %2735 = sbr.rel (%p2733) target = $region44
      $region43: #{unet_block_innermost.3} parent=39 // pred_region
        %p2736 = scmp.lt.s32.totalorder %s15, 1
        %s2737 = scalar_select %p2736, %s15, 1
        %s2738 = smul.addr %s2737, 16
        %s2739 = smul.addr %s2738, 4
        %s2740 = scalar_lea.vmem %s3, %s2739
      $region44: #{unet_block_innermost.3} parent=39 // pred_fallthru
        _
    $region40: #{unet_block_innermost.3} parent=5 // pred_fallthru
      _
  $region6: #{unet_block_innermost.3} parent=0 // loop_footer
    %s13 = sadd.s32 1, %s9
  $region7: #{unet_block_innermost.3} parent=0 // loop_footer_branch
    %8 = sbr.rel target = $region3
  $region8: #{unet_block_innermost.3} parent=0 // loop_exit
    _

// kernel: unet_block_innermost.2
$region0: #{unet_block_innermost.2}
  #allocation0 [shape = 'u32[]', space=smem, size = 0x4, offset = 0x4, fixed_abs, tag = 'smem constant byte address 0x4 - core index']
  #allocation1 [shape = 'u32[144,128]{1,0:T(1,128)}', space=vmem, size = 0x12000, scoped, tag = 'internal scratch']
  %s0 = inlined_call_operand.vmem [shape: bf16[2,9,9,4], index: 0, kind: input, shape index: {}]
  %s1 = inlined_call_operand.vmem [shape: bf16[2,9,9,4], index: 1, kind: input, shape index: {}]
  %s2 = inlined_call_operand.vmem [shape: bf16[2,9,9,4], index: 2, kind: input, shape index: {}]
  %s3 = inlined_call_operand.vmem [shape: bf16[2,9,9,4], index: 3, kind: input, shape index: {}]
  %s4 = inlined_call_operand.vmem [shape: bf16[16,4,8], index: 4, kind: input, shape index: {}]
  %s5 = inlined_call_operand.vmem [shape: f32[1,8], index: 5, kind: input, shape index: {}]
  %s6 = inlined_call_operand.vmem [shape: bf16[2,8,8,8], index: 6, kind: output, shape index: {}]
  %s7 = sld [smem:[#allocation0]]
  $region57: #{unet_block_innermost.2} parent=0
    _
  %s9 = ssub.s32 1, %s7
  %s10 = scalar_select 0, %s9, %s7
  loop: start=0, step=1, limit=4
  $region2: #{unet_block_innermost.2} parent=0 // loop_pre_header
    _
  $region3: #{unet_block_innermost.2} parent=0 // loop_header
    %s12 = sphi 0, %s16
    %p13 = scmp.ge.s32.totalorder %s12, 4
    %s19 = sphi 0, %s31
    %s20 = sphi 0, %s27
    %s21 = sphi 0, %s19
    %s22 = sphi 0, %s20
    %s23 = sphi 0, %s21
    %s24 = sphi 0, %s22
    %s34 = sphi 0, %s36
    %s37 = sphi 0, %s34
    %s38 = sphi 0, %s37
    %s54 = sphi 0, %s38
    %s60 = sphi 0, %s62
    %s63 = sphi 0, %s60
    %s64 = sphi 0, %s63
    %s80 = sphi 0, %s64
    %s86 = sphi 0, %s88
    %s89 = sphi 0, %s86
    %s90 = sphi 0, %s89
    %s106 = sphi 0, %s90
    %s112 = sphi 0, %s114
    %s115 = sphi 0, %s112
    %s116 = sphi 0, %s115
    %s132 = sphi 0, %s116
    %s138 = sphi 0, %s140
    %s141 = sphi 0, %s138
    %s142 = sphi 0, %s141
    %s158 = sphi 0, %s142
    %s164 = sphi 0, %s166
    %s167 = sphi 0, %s164
    %s168 = sphi 0, %s167
    %s184 = sphi 0, %s168
    %s192 = sphi 0, %s194
    %s195 = sphi 0, %s192
    %s196 = sphi 0, %s195
    %s212 = sphi 0, %s196
  $region4: #{unet_block_innermost.2} parent=0 // loop_header_branch
    %15 = sbr.rel (%p13) target = $region8
  $region5: #{unet_block_innermost.2} parent=0 // loop_body
    %s17 = ssub.s32 %s12, 1
    %s18 = ssub.s32 %s12, 2
    %s25 = sadd.s32 1, %s20
    %p26 = scmp.ge.s32.totalorder %s25, 2
    %s27 = scalar_select %p26, 0, %s25
    %s28 = sadd.s32 1, %s19
    %s29 = scalar_select %p26, %s28, %s19
    %p30 = scmp.ge.s32.totalorder %s29, 1
    %s31 = scalar_select %p30, 0, %s29
    %s32 = ssub.s32 %s20, %s27
    %p33 = scmp.eq.s32.totalorder %s32, 0
    %s35 = sadd.s32 %s34, 1
    %s36 = scalar_select %p33, %s34, %s35
    %p39 = pneg %p33
    %p40 = scmp.eq.s32.totalorder %s12, 1
    %p41 = por %p39, %p40
    %p42 = scmp.ne.s32.totalorder %s34, %s37
    %p43 = scmp.eq.s32.totalorder %s12, 0
    %p44 = por %p42, %p43
    %p45 = scmp.ne.s32.totalorder %s34, %s37
    %p46 = scmp.eq.s32.totalorder %s17, 1
    %p47 = por %p45, %p46
    %p48 = scmp.ne.s32.totalorder %s37, %s38
    %p49 = scmp.eq.s32.totalorder %s17, 0
    %p50 = por %p48, %p49
    %p51 = scmp.ne.s32.totalorder %s37, %s38
    %p52 = scmp.eq.s32.totalorder %s18, 1
    %p53 = por %p51, %p52
    %p55 = scmp.ne.s32.totalorder %s38, %s54
    %p56 = scmp.eq.s32.totalorder %s18, 0
    %p57 = por %p55, %p56
    %s58 = ssub.s32 %s20, %s27
    %p59 = scmp.eq.s32.totalorder %s58, 0
    %s61 = sadd.s32 %s60, 1
    %s62 = scalar_select %p59, %s60, %s61
    %p65 = pneg %p59
    %p66 = scmp.eq.s32.totalorder %s12, 1
    %p67 = por %p65, %p66
    %p68 = scmp.ne.s32.totalorder %s60, %s63
    %p69 = scmp.eq.s32.totalorder %s12, 0
    %p70 = por %p68, %p69
    %p71 = scmp.ne.s32.totalorder %s60, %s63
    %p72 = scmp.eq.s32.totalorder %s17, 1
    %p73 = por %p71, %p72
    %p74 = scmp.ne.s32.totalorder %s63, %s64
    %p75 = scmp.eq.s32.totalorder %s17, 0
    %p76 = por %p74, %p75
    %p77 = scmp.ne.s32.totalorder %s63, %s64
    %p78 = scmp.eq.s32.totalorder %s18, 1
    %p79 = por %p77, %p78
    %p81 = scmp.ne.s32.totalorder %s64, %s80
    %p82 = scmp.eq.s32.totalorder %s18, 0
    %p83 = por %p81, %p82
    %s84 = ssub.s32 %s20, %s27
    %p85 = scmp.eq.s32.totalorder %s84, 0
    %s87 = sadd.s32 %s86, 1
    %s88 = scalar_select %p85, %s86, %s87
    %p91 = pneg %p85
    %p92 = scmp.eq.s32.totalorder %s12, 1
    %p93 = por %p91, %p92
    %p94 = scmp.ne.s32.totalorder %s86, %s89
    %p95 = scmp.eq.s32.totalorder %s12, 0
    %p96 = por %p94, %p95
    %p97 = scmp.ne.s32.totalorder %s86, %s89
    %p98 = scmp.eq.s32.totalorder %s17, 1
    %p99 = por %p97, %p98
    %p100 = scmp.ne.s32.totalorder %s89, %s90
    %p101 = scmp.eq.s32.totalorder %s17, 0
    %p102 = por %p100, %p101
    %p103 = scmp.ne.s32.totalorder %s89, %s90
    %p104 = scmp.eq.s32.totalorder %s18, 1
    %p105 = por %p103, %p104
    %p107 = scmp.ne.s32.totalorder %s90, %s106
    %p108 = scmp.eq.s32.totalorder %s18, 0
    %p109 = por %p107, %p108
    %s110 = ssub.s32 %s20, %s27
    %p111 = scmp.eq.s32.totalorder %s110, 0
    %s113 = sadd.s32 %s112, 1
    %s114 = scalar_select %p111, %s112, %s113
    %p117 = pneg %p111
    %p118 = scmp.eq.s32.totalorder %s12, 1
    %p119 = por %p117, %p118
    %p120 = scmp.ne.s32.totalorder %s112, %s115
    %p121 = scmp.eq.s32.totalorder %s12, 0
    %p122 = por %p120, %p121
    %p123 = scmp.ne.s32.totalorder %s112, %s115
    %p124 = scmp.eq.s32.totalorder %s17, 1
    %p125 = por %p123, %p124
    %p126 = scmp.ne.s32.totalorder %s115, %s116
    %p127 = scmp.eq.s32.totalorder %s17, 0
    %p128 = por %p126, %p127
    %p129 = scmp.ne.s32.totalorder %s115, %s116
    %p130 = scmp.eq.s32.totalorder %s18, 1
    %p131 = por %p129, %p130
    %p133 = scmp.ne.s32.totalorder %s116, %s132
    %p134 = scmp.eq.s32.totalorder %s18, 0
    %p135 = por %p133, %p134
    %s136 = ssub.s32 %s19, %s31
    %p137 = scmp.eq.s32.totalorder %s136, 0
    %s139 = sadd.s32 %s138, 1
    %s140 = scalar_select %p137, %s138, %s139
    %p143 = pneg %p137
    %p144 = scmp.eq.s32.totalorder %s12, 1
    %p145 = por %p143, %p144
    %p146 = scmp.ne.s32.totalorder %s138, %s141
    %p147 = scmp.eq.s32.totalorder %s12, 0
    %p148 = por %p146, %p147
    %p149 = scmp.ne.s32.totalorder %s138, %s141
    %p150 = scmp.eq.s32.totalorder %s17, 1
    %p151 = por %p149, %p150
    %p152 = scmp.ne.s32.totalorder %s141, %s142
    %p153 = scmp.eq.s32.totalorder %s17, 0
    %p154 = por %p152, %p153
    %p155 = scmp.ne.s32.totalorder %s141, %s142
    %p156 = scmp.eq.s32.totalorder %s18, 1
    %p157 = por %p155, %p156
    %p159 = scmp.ne.s32.totalorder %s142, %s158
    %p160 = scmp.eq.s32.totalorder %s18, 0
    %p161 = por %p159, %p160
    %s162 = ssub.s32 %s19, %s31
    %p163 = scmp.eq.s32.totalorder %s162, 0
    %s165 = sadd.s32 %s164, 1
    %s166 = scalar_select %p163, %s164, %s165
    %p169 = pneg %p163
    %p170 = scmp.eq.s32.totalorder %s12, 1
    %p171 = por %p169, %p170
    %p172 = scmp.ne.s32.totalorder %s164, %s167
    %p173 = scmp.eq.s32.totalorder %s12, 0
    %p174 = por %p172, %p173
    %p175 = scmp.ne.s32.totalorder %s164, %s167
    %p176 = scmp.eq.s32.totalorder %s17, 1
    %p177 = por %p175, %p176
    %p178 = scmp.ne.s32.totalorder %s167, %s168
    %p179 = scmp.eq.s32.totalorder %s17, 0
    %p180 = por %p178, %p179
    %p181 = scmp.ne.s32.totalorder %s167, %s168
    %p182 = scmp.eq.s32.totalorder %s18, 1
    %p183 = por %p181, %p182
    %p185 = scmp.ne.s32.totalorder %s168, %s184
    %p186 = scmp.eq.s32.totalorder %s18, 0
    %p187 = por %p185, %p186
    %s188 = ssub.s32 %s20, %s27
    %s189 = ssub.s32 %s19, %s31
    %s190 = sor.u32 %s188, %s189
    %p191 = scmp.eq.s32.totalorder %s190, 0
    %s193 = sadd.s32 %s192, 1
    %s194 = scalar_select %p191, %s192, %s193
    %p197 = pneg %p191
    %p198 = scmp.eq.s32.totalorder %s12, 1
    %p199 = por %p197, %p198
    %p200 = scmp.ne.s32.totalorder %s192, %s195
    %p201 = scmp.eq.s32.totalorder %s12, 0
    %p202 = por %p200, %p201
    %p203 = scmp.ne.s32.totalorder %s192, %s195
    %p204 = scmp.eq.s32.totalorder %s17, 1
    %p205 = por %p203, %p204
    %p206 = scmp.ne.s32.totalorder %s195, %s196
    %p207 = scmp.eq.s32.totalorder %s17, 0
    %p208 = por %p206, %p207
    %p209 = scmp.ne.s32.totalorder %s195, %s196
    %p210 = scmp.eq.s32.totalorder %s18, 1
    %p211 = por %p209, %p210
    %p213 = scmp.ne.s32.totalorder %s196, %s212
    %p214 = scmp.eq.s32.totalorder %s18, 0
    %p215 = por %p213, %p214
    %p216 = scmp.le.s32.totalorder 1, %s12
    %p217 = scmp.lt.s32.totalorder %s12, 3
    %p218 = pnand %p216, %p217
    %p219 = pneg %p218
    // Predicated region
    $region9: #{unet_block_innermost.2} parent=5 // pred_check
      _
    $region10: #{unet_block_innermost.2} parent=5 // pred_check_branch
      %221 = sbr.rel (%p218) target = $region12
    $region11: #{unet_block_innermost.2} parent=5 // pred_region
      %s222 = ssub.s32 %s12, 1
      // Predicated region
      $region13: #{unet_block_innermost.2} parent=11 // pred_check
        %p223 = pneg %p154
      $region14: #{unet_block_innermost.2} parent=11 // pred_check_branch
        %225 = sbr.rel (%p223) target = $region16
      $region15: #{unet_block_innermost.2} parent=11 // pred_region
        %p226 = scmp.lt.s32.totalorder %s21, 0
        %s227 = scalar_select %p226, %s21, 0
        %s228 = smul.addr %s227, 2
        %s229 = scalar_lea.vmem %s4, %s228
      $region16: #{unet_block_innermost.2} parent=11 // pred_fallthru
        _
      // Predicated region
      $region17: #{unet_block_innermost.2} parent=11 // pred_check
        %p230 = pneg %p180
      $region18: #{unet_block_innermost.2} parent=11 // pred_check_branch
        %232 = sbr.rel (%p230) target = $region20
      $region19: #{unet_block_innermost.2} parent=11 // pred_region
        %p233 = scmp.lt.s32.totalorder %s21, 0
        %s234 = scalar_select %p233, %s21, 0
        %s235 = scalar_lea.vmem %s5, %s234
      $region20: #{unet_block_innermost.2} parent=11 // pred_fallthru
        _
    $region12: #{unet_block_innermost.2} parent=5 // pred_fallthru
      _
    %p236 = scmp.lt.s32.totalorder %s12, 2
    // Predicated region
    $region21: #{unet_block_innermost.2} parent=5 // pred_check
      %p237 = pneg %p236
    $region22: #{unet_block_innermost.2} parent=5 // pred_check_branch
      %239 = sbr.rel (%p237) target = $region24
    $region23: #{unet_block_innermost.2} parent=5 // pred_region
      // Predicated region
      $region25: #{unet_block_innermost.2} parent=23 // pred_check
        %p240 = pneg %p44
      $region26: #{unet_block_innermost.2} parent=23 // pred_check_branch
        %242 = sbr.rel (%p240) target = $region28
      $region27: #{unet_block_innermost.2} parent=23 // pred_region
        %p243 = scmp.lt.s32.totalorder %s20, 1
        %s244 = scalar_select %p243, %s20, 1
        %s245 = smul.addr %s244, 18
        %s246 = smul.addr %s245, 4
        %s247 = scalar_lea.vmem %s0, %s246
      $region28: #{unet_block_innermost.2} parent=23 // pred_fallthru
        _
      // Predicated region
      $region29: #{unet_block_innermost.2} parent=23 // pred_check
        %p248 = pneg %p70
      $region30: #{unet_block_innermost.2} parent=23 // pred_check_branch
        %250 = sbr.rel (%p248) target = $region32
      $region31: #{unet_block_innermost.2} parent=23 // pred_region
        %p251 = scmp.lt.s32.totalorder %s20, 1
        %s252 = scalar_select %p251, %s20, 1
        %s253 = smul.addr %s252, 18
        %s254 = smul.addr %s253, 4
        %s255 = scalar_lea.vmem %s1, %s254
      $region32: #{unet_block_innermost.2} parent=23 // pred_fallthru
        _
      // Predicated region
      $region33: #{unet_block_innermost.2} parent=23 // pred_check
        %p256 = pneg %p96
      $region34: #{unet_block_innermost.2} parent=23 // pred_check_branch
        %258 = sbr.rel (%p256) target = $region36
      $region35: #{unet_block_innermost.2} parent=23 // pred_region
        %p259 = scmp.lt.s32.totalorder %s20, 1
        %s260 = scalar_select %p259, %s20, 1
        %s261 = smul.addr %s260, 18
        %s262 = smul.addr %s261, 4
        %s263 = scalar_lea.vmem %s2, %s262
      $region36: #{unet_block_innermost.2} parent=23 // pred_fallthru
        _
      // Predicated region
      $region37: #{unet_block_innermost.2} parent=23 // pred_check
        %p264 = pneg %p122
      $region38: #{unet_block_innermost.2} parent=23 // pred_check_branch
        %266 = sbr.rel (%p264) target = $region40
      $region39: #{unet_block_innermost.2} parent=23 // pred_region
        %p267 = scmp.lt.s32.totalorder %s20, 1
        %s268 = scalar_select %p267, %s20, 1
        %s269 = smul.addr %s268, 18
        %s270 = smul.addr %s269, 4
        %s271 = scalar_lea.vmem %s3, %s270
      $region40: #{unet_block_innermost.2} parent=23 // pred_fallthru
        _
    $region24: #{unet_block_innermost.2} parent=5 // pred_fallthru
      _
    %p272 = scmp.le.s32.totalorder 1, %s12
    %p273 = scmp.lt.s32.totalorder %s12, 3
    %p274 = pnand %p272, %p273
    %p275 = pneg %p274
    // Predicated region
    $region41: #{unet_block_innermost.2} parent=5 // pred_check
      _
    $region42: #{unet_block_innermost.2} parent=5 // pred_check_branch
      %277 = sbr.rel (%p274) target = $region44
    $region43: #{unet_block_innermost.2} parent=5 // pred_region
      %s278 = ssub.s32 %s12, 1
      %p279 = scmp.lt.s32.totalorder %s22, 1
      %s280 = scalar_select %p279, %s22, 1
      %s281 = smul.addr %s280, 18
      %s282 = smul.addr %s281, 4
      %s283 = scalar_lea.vmem %s0, %s282
      %p284 = pneg %p50
      %p285 = pneg %p47
      %p286 = scmp.lt.s32.totalorder %s22, 1
      %s287 = scalar_select %p286, %s22, 1
      %s288 = smul.addr %s287, 18
      %s289 = smul.addr %s288, 4
      %s290 = scalar_lea.vmem %s1, %s289
      %p291 = pneg %p76
      %p292 = pneg %p73
      %p293 = scmp.lt.s32.totalorder %s22, 1
      %s294 = scalar_select %p293, %s22, 1
      %s295 = smul.addr %s294, 18
      %s296 = smul.addr %s295, 4
      %s297 = scalar_lea.vmem %s2, %s296
      %p298 = pneg %p102
      %p299 = pneg %p99
      %p300 = scmp.lt.s32.totalorder %s22, 1
      %s301 = scalar_select %p300, %s22, 1
      %s302 = smul.addr %s301, 18
      %s303 = smul.addr %s302, 4
      %s304 = scalar_lea.vmem %s3, %s303
      %p305 = pneg %p128
      %p306 = pneg %p125
      %p307 = scmp.lt.s32.totalorder %s21, 0
      %s308 = scalar_select %p307, %s21, 0
      %s309 = smul.addr %s308, 2
      %s310 = scalar_lea.vmem %s4, %s309
      %p311 = pneg %p154
      %p312 = pneg %p151
      %p313 = scmp.lt.s32.totalorder %s21, 0
      %s314 = scalar_select %p313, %s21, 0
      %s315 = scalar_lea.vmem %s5, %s314
      %p316 = pneg %p180
      %p317 = pneg %p177
      %p318 = pneg %p208
      %p319 = pneg %p205
      %p320 = scmp.lt.s32.totalorder %s22, 1
      %s321 = scalar_select %p320, %s22, 1
      %p322 = scmp.lt.s32.totalorder %s21, 0
      %s323 = scalar_select %p322, %s21, 0
      %s324 = smul.addr %s321, 8
      %s325 = sadd.s32 %s323, %s324
      %s326 = smul.addr %s325, 4
      %s327 = scalar_lea.vmem %s6, %s326
      %p328 = scmp.lt.s32.totalorder %s22, 1
      %s329 = scalar_select %p328, %s22, 1
      %s330 = smul.addr %s329, 18
      %s331 = smul.addr %s330, 4
      %s332 = scalar_lea.vmem %s0, %s331
      %p333 = scmp.lt.s32.totalorder %s22, 1
      %s334 = scalar_select %p333, %s22, 1
      %s335 = smul.addr %s334, 18
      %s336 = smul.addr %s335, 4
      %s337 = scalar_lea.vmem %s1, %s336
      %p338 = scmp.lt.s32.totalorder %s22, 1
      %s339 = scalar_select %p338, %s22, 1
      %s340 = smul.addr %s339, 18
      %s341 = smul.addr %s340, 4
      %s342 = scalar_lea.vmem %s2, %s341
      %p343 = scmp.lt.s32.totalorder %s22, 1
      %s344 = scalar_select %p343, %s22, 1
      %s345 = smul.addr %s344, 18
      %s346 = smul.addr %s345, 4
      %s347 = scalar_lea.vmem %s3, %s346
      %p348 = scmp.lt.s32.totalorder %s21, 0
      %s349 = scalar_select %p348, %s21, 0
      %s350 = smul.addr %s349, 2
      %s351 = scalar_lea.vmem %s4, %s350
      %p352 = scmp.lt.s32.totalorder %s21, 0
      %s353 = scalar_select %p352, %s21, 0
      %s354 = scalar_lea.vmem %s5, %s353
      %p355 = scmp.lt.s32.totalorder %s22, 1
      %s356 = scalar_select %p355, %s22, 1
      %p357 = scmp.lt.s32.totalorder %s21, 0
      %s358 = scalar_select %p357, %s21, 0
      %s359 = smul.addr %s356, 8
      %s360 = sadd.s32 %s358, %s359
      %s361 = smul.addr %s360, 4
      %s362 = scalar_lea.vmem %s6, %s361
      %v363 = vld [vmem:[%s332] sm:$0xf]
      %v364 = vld [vmem:[%s332 + $0x8] sm:$0xf]
      %v365 = vld [vmem:[%s332 + $0x10] sm:$0xf]
      %v366 = vld [vmem:[%s332 + $0x18] sm:$0xf]
      %v367 = vld [vmem:[%s332 + $0x20] sm:$0xf]
      %v368 = vld [vmem:[%s332 + $0x28] sm:$0xf]
      %v369 = vld [vmem:[%s332 + $0x30] sm:$0xf]
      %v370 = vld [vmem:[%s332 + $0x38] sm:$0xf]
      %v371 = vunpack.c.l.bf16 %v363
      %v372 = vunpack.c.l.bf16 %v364
      %v373 = vunpack.c.l.bf16 %v365
      %v374 = vunpack.c.l.bf16 %v366
      %v375 = vunpack.c.l.bf16 %v367
      %v376 = vunpack.c.l.bf16 %v368
      %v377 = vunpack.c.l.bf16 %v369
      %v378 = vunpack.c.l.bf16 %v370
      %v379 = vld [vmem:[%s337] sm:$0xf]
      %v380 = vld [vmem:[%s337 + $0x8] sm:$0xf]
      %v381 = vld [vmem:[%s337 + $0x10] sm:$0xf]
      %v382 = vld [vmem:[%s337 + $0x18] sm:$0xf]
      %v383 = vld [vmem:[%s337 + $0x20] sm:$0xf]
      %v384 = vld [vmem:[%s337 + $0x28] sm:$0xf]
      %v385 = vld [vmem:[%s337 + $0x30] sm:$0xf]
      %v386 = vld [vmem:[%s337 + $0x38] sm:$0xf]
      %v387 = vunpack.c.l.bf16 %v379
      %v388 = vunpack.c.l.bf16 %v380
      %v389 = vunpack.c.l.bf16 %v381
      %v390 = vunpack.c.l.bf16 %v382
      %v391 = vunpack.c.l.bf16 %v383
      %v392 = vunpack.c.l.bf16 %v384
      %v393 = vunpack.c.l.bf16 %v385
      %v394 = vunpack.c.l.bf16 %v386
      %v395 = vld [vmem:[%s332 + $0x4] sm:$0x1]
      %v396 = vld [vmem:[%s332 + $0xc] sm:$0x1]
      %v397 = vld [vmem:[%s332 + $0x14] sm:$0x1]
      %v398 = vld [vmem:[%s332 + $0x1c] sm:$0x1]
      %v399 = vld [vmem:[%s332 + $0x24] sm:$0x1]
      %v400 = vld [vmem:[%s332 + $0x2c] sm:$0x1]
      %v401 = vld [vmem:[%s332 + $0x34] sm:$0x1]
      %v402 = vld [vmem:[%s332 + $0x3c] sm:$0x1]
      %v403 = vunpack.c.l.bf16 %v395
      %v404 = vunpack.c.l.bf16 %v396
      %v405 = vunpack.c.l.bf16 %v397
      %v406 = vunpack.c.l.bf16 %v398
      %v407 = vunpack.c.l.bf16 %v399
      %v408 = vunpack.c.l.bf16 %v400
      %v409 = vunpack.c.l.bf16 %v401
      %v410 = vunpack.c.l.bf16 %v402
      %v411 = vld [vmem:[%s337 + $0x4] sm:$0x1]
      %v412 = vld [vmem:[%s337 + $0xc] sm:$0x1]
      %v413 = vld [vmem:[%s337 + $0x14] sm:$0x1]
      %v414 = vld [vmem:[%s337 + $0x1c] sm:$0x1]
      %v415 = vld [vmem:[%s337 + $0x24] sm:$0x1]
      %v416 = vld [vmem:[%s337 + $0x2c] sm:$0x1]
      %v417 = vld [vmem:[%s337 + $0x34] sm:$0x1]
      %v418 = vld [vmem:[%s337 + $0x3c] sm:$0x1]
      %v419 = vunpack.c.l.bf16 %v411
      %v420 = vunpack.c.l.bf16 %v412
      %v421 = vunpack.c.l.bf16 %v413
      %v422 = vunpack.c.l.bf16 %v414
      %v423 = vunpack.c.l.bf16 %v415
      %v424 = vunpack.c.l.bf16 %v416
      %v425 = vunpack.c.l.bf16 %v417
      %v426 = vunpack.c.l.bf16 %v418
      %v427 = vld [vmem:[%s342] sm:$0xf]
      %v428 = vld [vmem:[%s342 + $0x8] sm:$0xf]
      %v429 = vld [vmem:[%s342 + $0x10] sm:$0xf]
      %v430 = vld [vmem:[%s342 + $0x18] sm:$0xf]
      %v431 = vld [vmem:[%s342 + $0x20] sm:$0xf]
      %v432 = vld [vmem:[%s342 + $0x28] sm:$0xf]
      %v433 = vld [vmem:[%s342 + $0x30] sm:$0xf]
      %v434 = vld [vmem:[%s342 + $0x38] sm:$0xf]
      %v435 = vunpack.c.l.bf16 %v427
      %v436 = vunpack.c.l.bf16 %v428
      %v437 = vunpack.c.l.bf16 %v429
      %v438 = vunpack.c.l.bf16 %v430
      %v439 = vunpack.c.l.bf16 %v431
      %v440 = vunpack.c.l.bf16 %v432
      %v441 = vunpack.c.l.bf16 %v433
      %v442 = vunpack.c.l.bf16 %v434
      %v443 = vld [vmem:[%s347] sm:$0xf]
      %v444 = vld [vmem:[%s347 + $0x8] sm:$0xf]
      %v445 = vld [vmem:[%s347 + $0x10] sm:$0xf]
      %v446 = vld [vmem:[%s347 + $0x18] sm:$0xf]
      %v447 = vld [vmem:[%s347 + $0x20] sm:$0xf]
      %v448 = vld [vmem:[%s347 + $0x28] sm:$0xf]
      %v449 = vld [vmem:[%s347 + $0x30] sm:$0xf]
      %v450 = vld [vmem:[%s347 + $0x38] sm:$0xf]
      %v451 = vunpack.c.l.bf16 %v443
      %v452 = vunpack.c.l.bf16 %v444
      %v453 = vunpack.c.l.bf16 %v445
      %v454 = vunpack.c.l.bf16 %v446
      %v455 = vunpack.c.l.bf16 %v447
      %v456 = vunpack.c.l.bf16 %v448
      %v457 = vunpack.c.l.bf16 %v449
      %v458 = vunpack.c.l.bf16 %v450
      %v459 = vld [vmem:[%s342 + $0x4] sm:$0x1]
      %v460 = vld [vmem:[%s342 + $0xc] sm:$0x1]
      %v461 = vld [vmem:[%s342 + $0x14] sm:$0x1]
      %v462 = vld [vmem:[%s342 + $0x1c] sm:$0x1]
      %v463 = vld [vmem:[%s342 + $0x24] sm:$0x1]
      %v464 = vld [vmem:[%s342 + $0x2c] sm:$0x1]
      %v465 = vld [vmem:[%s342 + $0x34] sm:$0x1]
      %v466 = vld [vmem:[%s342 + $0x3c] sm:$0x1]
      %v467 = vunpack.c.l.bf16 %v459
      %v468 = vunpack.c.l.bf16 %v460
      %v469 = vunpack.c.l.bf16 %v461
      %v470 = vunpack.c.l.bf16 %v462
      %v471 = vunpack.c.l.bf16 %v463
      %v472 = vunpack.c.l.bf16 %v464
      %v473 = vunpack.c.l.bf16 %v465
      %v474 = vunpack.c.l.bf16 %v466
      %v475 = vld [vmem:[%s347 + $0x4] sm:$0x1]
      %v476 = vld [vmem:[%s347 + $0xc] sm:$0x1]
      %v477 = vld [vmem:[%s347 + $0x14] sm:$0x1]
      %v478 = vld [vmem:[%s347 + $0x1c] sm:$0x1]
      %v479 = vld [vmem:[%s347 + $0x24] sm:$0x1]
      %v480 = vld [vmem:[%s347 + $0x2c] sm:$0x1]
      %v481 = vld [vmem:[%s347 + $0x34] sm:$0x1]
      %v482 = vld [vmem:[%s347 + $0x3c] sm:$0x1]
      %v483 = vunpack.c.l.bf16 %v475
      %v484 = vunpack.c.l.bf16 %v476
      %v485 = vunpack.c.l.bf16 %v477
      %v486 = vunpack.c.l.bf16 %v478
      %v487 = vunpack.c.l.bf16 %v479
      %v488 = vunpack.c.l.bf16 %v480
      %v489 = vunpack.c.l.bf16 %v481
      %v490 = vunpack.c.l.bf16 %v482
      %s491 = scalar_lea.vmem %s332, 8
      %v492 = vld [vmem:[%s491] sm:$0xf]
      %v493 = vld [vmem:[%s491 + $0x8] sm:$0xf]
      %v494 = vld [vmem:[%s491 + $0x10] sm:$0xf]
      %v495 = vld [vmem:[%s491 + $0x18] sm:$0xf]
      %v496 = vld [vmem:[%s491 + $0x20] sm:$0xf]
      %v497 = vld [vmem:[%s491 + $0x28] sm:$0xf]
      %v498 = vld [vmem:[%s491 + $0x30] sm:$0xf]
      %v499 = vld [vmem:[%s491 + $0x38] sm:$0xf]
      %v500 = vunpack.c.l.bf16 %v492
      %v501 = vunpack.c.l.bf16 %v493
      %v502 = vunpack.c.l.bf16 %v494
      %v503 = vunpack.c.l.bf16 %v495
      %v504 = vunpack.c.l.bf16 %v496
      %v505 = vunpack.c.l.bf16 %v497
      %v506 = vunpack.c.l.bf16 %v498
      %v507 = vunpack.c.l.bf16 %v499
      %s508 = scalar_lea.vmem %s337, 8
      %v509 = vld [vmem:[%s508] sm:$0xf]
      %v510 = vld [vmem:[%s508 + $0x8] sm:$0xf]
      %v511 = vld [vmem:[%s508 + $0x10] sm:$0xf]
      %v512 = vld [vmem:[%s508 + $0x18] sm:$0xf]
      %v513 = vld [vmem:[%s508 + $0x20] sm:$0xf]
      %v514 = vld [vmem:[%s508 + $0x28] sm:$0xf]
      %v515 = vld [vmem:[%s508 + $0x30] sm:$0xf]
      %v516 = vld [vmem:[%s508 + $0x38] sm:$0xf]
      %v517 = vunpack.c.l.bf16 %v509
      %v518 = vunpack.c.l.bf16 %v510
      %v519 = vunpack.c.l.bf16 %v511
      %v520 = vunpack.c.l.bf16 %v512
      %v521 = vunpack.c.l.bf16 %v513
      %v522 = vunpack.c.l.bf16 %v514
      %v523 = vunpack.c.l.bf16 %v515
      %v524 = vunpack.c.l.bf16 %v516
      %v525 = vld [vmem:[%s491 + $0x4] sm:$0x1]
      %v526 = vld [vmem:[%s491 + $0xc] sm:$0x1]
      %v527 = vld [vmem:[%s491 + $0x14] sm:$0x1]
      %v528 = vld [vmem:[%s491 + $0x1c] sm:$0x1]
      %v529 = vld [vmem:[%s491 + $0x24] sm:$0x1]
      %v530 = vld [vmem:[%s491 + $0x2c] sm:$0x1]
      %v531 = vld [vmem:[%s491 + $0x34] sm:$0x1]
      %v532 = vld [vmem:[%s491 + $0x3c] sm:$0x1]
      %v533 = vunpack.c.l.bf16 %v525
      %v534 = vunpack.c.l.bf16 %v526
      %v535 = vunpack.c.l.bf16 %v527
      %v536 = vunpack.c.l.bf16 %v528
      %v537 = vunpack.c.l.bf16 %v529
      %v538 = vunpack.c.l.bf16 %v530
      %v539 = vunpack.c.l.bf16 %v531
      %v540 = vunpack.c.l.bf16 %v532
      %v541 = vld [vmem:[%s508 + $0x4] sm:$0x1]
      %v542 = vld [vmem:[%s508 + $0xc] sm:$0x1]
      %v543 = vld [vmem:[%s508 + $0x14] sm:$0x1]
      %v544 = vld [vmem:[%s508 + $0x1c] sm:$0x1]
      %v545 = vld [vmem:[%s508 + $0x24] sm:$0x1]
      %v546 = vld [vmem:[%s508 + $0x2c] sm:$0x1]
      %v547 = vld [vmem:[%s508 + $0x34] sm:$0x1]
      %v548 = vld [vmem:[%s508 + $0x3c] sm:$0x1]
      %v549 = vunpack.c.l.bf16 %v541
      %v550 = vunpack.c.l.bf16 %v542
      %v551 = vunpack.c.l.bf16 %v543
      %v552 = vunpack.c.l.bf16 %v544
      %v553 = vunpack.c.l.bf16 %v545
      %v554 = vunpack.c.l.bf16 %v546
      %v555 = vunpack.c.l.bf16 %v547
      %v556 = vunpack.c.l.bf16 %v548
      %s557 = scalar_lea.vmem %s342, 8
      %v558 = vld [vmem:[%s557] sm:$0xf]
      %v559 = vld [vmem:[%s557 + $0x8] sm:$0xf]
      %v560 = vld [vmem:[%s557 + $0x10] sm:$0xf]
      %v561 = vld [vmem:[%s557 + $0x18] sm:$0xf]
      %v562 = vld [vmem:[%s557 + $0x20] sm:$0xf]
      %v563 = vld [vmem:[%s557 + $0x28] sm:$0xf]
      %v564 = vld [vmem:[%s557 + $0x30] sm:$0xf]
      %v565 = vld [vmem:[%s557 + $0x38] sm:$0xf]
      %v566 = vunpack.c.l.bf16 %v558
      %v567 = vunpack.c.l.bf16 %v559
      %v568 = vunpack.c.l.bf16 %v560
      %v569 = vunpack.c.l.bf16 %v561
      %v570 = vunpack.c.l.bf16 %v562
      %v571 = vunpack.c.l.bf16 %v563
      %v572 = vunpack.c.l.bf16 %v564
      %v573 = vunpack.c.l.bf16 %v565
      %s574 = scalar_lea.vmem %s347, 8
      %v575 = vld [vmem:[%s574] sm:$0xf]
      %v576 = vld [vmem:[%s574 + $0x8] sm:$0xf]
      %v577 = vld [vmem:[%s574 + $0x10] sm:$0xf]
      %v578 = vld [vmem:[%s574 + $0x18] sm:$0xf]
      %v579 = vld [vmem:[%s574 + $0x20] sm:$0xf]
      %v580 = vld [vmem:[%s574 + $0x28] sm:$0xf]
      %v581 = vld [vmem:[%s574 + $0x30] sm:$0xf]
      %v582 = vld [vmem:[%s574 + $0x38] sm:$0xf]
      %v583 = vunpack.c.l.bf16 %v575
      %v584 = vunpack.c.l.bf16 %v576
      %v585 = vunpack.c.l.bf16 %v577
      %v586 = vunpack.c.l.bf16 %v578
      %v587 = vunpack.c.l.bf16 %v579
      %v588 = vunpack.c.l.bf16 %v580
      %v589 = vunpack.c.l.bf16 %v581
      %v590 = vunpack.c.l.bf16 %v582
      %v591 = vld [vmem:[%s557 + $0x4] sm:$0x1]
      %v592 = vld [vmem:[%s557 + $0xc] sm:$0x1]
      %v593 = vld [vmem:[%s557 + $0x14] sm:$0x1]
      %v594 = vld [vmem:[%s557 + $0x1c] sm:$0x1]
      %v595 = vld [vmem:[%s557 + $0x24] sm:$0x1]
      %v596 = vld [vmem:[%s557 + $0x2c] sm:$0x1]
      %v597 = vld [vmem:[%s557 + $0x34] sm:$0x1]
      %v598 = vld [vmem:[%s557 + $0x3c] sm:$0x1]
      %v599 = vunpack.c.l.bf16 %v591
      %v600 = vunpack.c.l.bf16 %v592
      %v601 = vunpack.c.l.bf16 %v593
      %v602 = vunpack.c.l.bf16 %v594
      %v603 = vunpack.c.l.bf16 %v595
      %v604 = vunpack.c.l.bf16 %v596
      %v605 = vunpack.c.l.bf16 %v597
      %v606 = vunpack.c.l.bf16 %v598
      %v607 = vld [vmem:[%s574 + $0x4] sm:$0x1]
      %v608 = vld [vmem:[%s574 + $0xc] sm:$0x1]
      %v609 = vld [vmem:[%s574 + $0x14] sm:$0x1]
      %v610 = vld [vmem:[%s574 + $0x1c] sm:$0x1]
      %v611 = vld [vmem:[%s574 + $0x24] sm:$0x1]
      %v612 = vld [vmem:[%s574 + $0x2c] sm:$0x1]
      %v613 = vld [vmem:[%s574 + $0x34] sm:$0x1]
      %v614 = vld [vmem:[%s574 + $0x3c] sm:$0x1]
      %v615 = vunpack.c.l.bf16 %v607
      %v616 = vunpack.c.l.bf16 %v608
      %v617 = vunpack.c.l.bf16 %v609
      %v618 = vunpack.c.l.bf16 %v610
      %v619 = vunpack.c.l.bf16 %v611
      %v620 = vunpack.c.l.bf16 %v612
      %v621 = vunpack.c.l.bf16 %v613
      %v622 = vunpack.c.l.bf16 %v614
      %v623 = vld [vmem:[%s351] sm:$0x3]
      %v624 = vunpack.c.l.bf16 %v623
      %s625 = scalar_lea.vmem %s351, 2
      %v626 = vld [vmem:[%s625] sm:$0x3]
      %v627 = vunpack.c.l.bf16 %v626
      %vm628 = vcmask 31744
      %v630 = vsel %vm628, %v387, 0
      %v633 = vsel %vm628, %v388, 0
      %v636 = vsel %vm628, %v389, 0
      %v639 = vsel %vm628, %v390, 0
      %v642 = vsel %vm628, %v391, 0
      %v645 = vsel %vm628, %v392, 0
      %v648 = vsel %vm628, %v393, 0
      %v651 = vsel %vm628, %v394, 0
      %vm653 = vcmask 1043456
      %v655 = vsel %vm653, %v627, 0
      %657 = vmatprep.subr.mxu0 0.0
      %658 = vmatpush1.msra.mxu0 %v655
      %659 = vmatprep.subr.mxu0 0.0
      %660 = vmatpush1.msra.mxu0 0.0
      %661 = vmatprep.subr.mxu0 0.0
      %662 = vmatpush1.msra.mxu0 0.0
      %663 = vmatprep.subr.mxu0 0.0
      %664 = vmatpush1.msra.mxu0 0.0
      %665 = vmatprep.subr.mxu0 0.0
      %666 = vmatpush1.msra.mxu0 0.0
      %667 = vmatprep.subr.mxu0 0.0
      %668 = vmatpush1.msra.mxu0 0.0
      %669 = vmatprep.subr.mxu0 0.0
      %670 = vmatpush1.msra.mxu0 0.0
      %671 = vmatprep.subr.mxu0 0.0
      %672 = vmatpush1.msra.mxu0 0.0
      %673 = vmatprep.subr.mxu0 0.0
      %674 = vmatpush1.msra.mxu0 0.0
      %675 = vmatprep.subr.mxu0 0.0
      %676 = vmatpush1.msra.mxu0 0.0
      %677 = vmatprep.subr.mxu0 0.0
      %678 = vmatpush1.msra.mxu0 0.0
      %679 = vmatprep.subr.mxu0 0.0
      %680 = vmatpush1.msra.mxu0 0.0
      %681 = vmatprep.subr.mxu0 0.0
      %682 = vmatpush1.msra.mxu0 0.0
      %683 = vmatprep.subr.mxu0 0.0
      %684 = vmatpush1.msra.mxu0 0.0
      %685 = vmatprep.subr.mxu0 0.0
      %686 = vmatpush1.msra.mxu0 0.0
      %687 = vmatprep.subr.mxu0 0.0
      %688 = vmatpush1.msra.mxu0 0.0
      %689 = vmatprep.subr.mxu0 0.0
      %690 = vmatpush1.msra.mxu0 0.0
      %691 = vmatprep.subr.mxu0 0.0
      %692 = vmatpush1.msra.mxu0 0.0
      %693 = vmatprep.subr.mxu0 0.0
      %694 = vmatpush1.msra.mxu0 0.0
      %695 = vmatprep.subr.mxu0 0.0
      %696 = vmatpush1.msra.mxu0 0.0
      %697 = vmatprep.subr.mxu0 0.0
      %698 = vmatpush1.msra.mxu0 0.0
      %699 = vmatprep.subr.mxu0 0.0
      %700 = vmatpush1.msra.mxu0 0.0
      %701 = vmatprep.subr.mxu0 0.0
      %702 = vmatpush1.msra.mxu0 0.0
      %703 = vmatprep.subr.mxu0 0.0
      %704 = vmatpush1.msra.mxu0 0.0
      %705 = vmatprep.subr.mxu0 0.0
      %706 = vmatpush1.msra.mxu0 0.0
      %707 = vmatprep.subr.mxu0 0.0
      %708 = vmatpush1.msra.mxu0 0.0
      %709 = vmatprep.subr.mxu0 0.0
      %710 = vmatpush1.msra.mxu0 0.0
      %711 = vmatprep.subr.mxu0 0.0
      %712 = vmatpush1.msra.mxu0 0.0
      %713 = vmatprep.subr.mxu0 0.0
      %714 = vmatpush1.msra.mxu0 0.0
      %715 = vmatprep.subr.mxu0 0.0
      %716 = vmatpush1.msra.mxu0 0.0
      %717 = vmatprep.subr.mxu0 0.0
      %718 = vmatpush1.msra.mxu0 0.0
      %719 = vmatprep.subr.mxu0 0.0
      %720 = vmatpush1.msra.mxu0 0.0
      %721 = vmatprep.mubr.f32.mxu0 0.0
      %722 = vmatmul.mubr.f32.gmra.mrb[0].mxu0 %v630
      %v723 = vpop.f32.mrb[0].mxu0
      %v724 = vadd.f32 0.0, %v723
      %v725 = vpop.f32.mrb[0].mxu0
      %726 = vmatprep.mubr.f32.mxu0 0.0
      %727 = vmatmul.mubr.f32.gmra.mrb[0].mxu0 %v633
      %v728 = vpop.f32.mrb[0].mxu0
      %v729 = vadd.f32 0.0, %v728
      %v730 = vpop.f32.mrb[0].mxu0
      %731 = vmatprep.mubr.f32.mxu0 0.0
      %732 = vmatmul.mubr.f32.gmra.mrb[0].mxu0 %v636
      %v733 = vpop.f32.mrb[0].mxu0
      %v734 = vadd.f32 0.0, %v733
      %v735 = vpop.f32.mrb[0].mxu0
      %736 = vmatprep.mubr.f32.mxu0 0.0
      %737 = vmatmul.mubr.f32.gmra.mrb[0].mxu0 %v639
      %v738 = vpop.f32.mrb[0].mxu0
      %v739 = vadd.f32 0.0, %v738
      %v740 = vpop.f32.mrb[0].mxu0
      %741 = vmatprep.mubr.f32.mxu0 0.0
      %742 = vmatmul.mubr.f32.gmra.mrb[0].mxu0 %v642
      %v743 = vpop.f32.mrb[0].mxu0
      %v744 = vadd.f32 0.0, %v743
      %v745 = vpop.f32.mrb[0].mxu0
      %746 = vmatprep.mubr.f32.mxu0 0.0
      %747 = vmatmul.mubr.f32.gmra.mrb[0].mxu0 %v645
      %v748 = vpop.f32.mrb[0].mxu0
      %v749 = vadd.f32 0.0, %v748
      %v750 = vpop.f32.mrb[0].mxu0
      %751 = vmatprep.mubr.f32.mxu0 0.0
      %752 = vmatmul.mubr.f32.gmra.mrb[0].mxu0 %v648
      %v753 = vpop.f32.mrb[0].mxu0
      %v754 = vadd.f32 0.0, %v753
      %v755 = vpop.f32.mrb[0].mxu0
      %756 = vmatprep.mubr.f32.mxu0 0.0
      %757 = vmatmul.mubr.f32.gmra.mrb[0].mxu0 %v651
      %v758 = vpop.f32.mrb[0].mxu0
      %v759 = vadd.f32 0.0, %v758
      %v760 = vpop.f32.mrb[0].mxu0
      %761 = vdwg.mxu0
      %v763 = vsel %vm628, %v371, 0
      %v766 = vsel %vm628, %v372, 0
      %v769 = vsel %vm628, %v373, 0
      %v772 = vsel %vm628, %v374, 0
      %v775 = vsel %vm628, %v375, 0
      %v778 = vsel %vm628, %v376, 0
      %v781 = vsel %vm628, %v377, 0
      %v784 = vsel %vm628, %v378, 0
      %v787 = vsel %vm653, %v624, 0
      %789 = vmatprep.subr.mxu0 0.0
      %790 = vmatpush1.msra.mxu0 %v787
      %791 = vmatprep.subr.mxu0 0.0
      %792 = vmatpush1.msra.mxu0 0.0
      %793 = vmatprep.subr.mxu0 0.0
      %794 = vmatpush1.msra.mxu0 0.0
      %795 = vmatprep.subr.mxu0 0.0
      %796 = vmatpush1.msra.mxu0 0.0
      %797 = vmatprep.subr.mxu0 0.0
      %798 = vmatpush1.msra.mxu0 0.0
      %799 = vmatprep.subr.mxu0 0.0
      %800 = vmatpush1.msra.mxu0 0.0
      %801 = vmatprep.subr.mxu0 0.0
      %802 = vmatpush1.msra.mxu0 0.0
      %803 = vmatprep.subr.mxu0 0.0
      %804 = vmatpush1.msra.mxu0 0.0
      %805 = vmatprep.subr.mxu0 0.0
      %806 = vmatpush1.msra.mxu0 0.0
      %807 = vmatprep.subr.mxu0 0.0
      %808 = vmatpush1.msra.mxu0 0.0
      %809 = vmatprep.subr.mxu0 0.0
      %810 = vmatpush1.msra.mxu0 0.0
      %811 = vmatprep.subr.mxu0 0.0
      %812 = vmatpush1.msra.mxu0 0.0
      %813 = vmatprep.subr.mxu0 0.0
      %814 = vmatpush1.msra.mxu0 0.0
      %815 = vmatprep.subr.mxu0 0.0
      %816 = vmatpush1.msra.mxu0 0.0
      %817 = vmatprep.subr.mxu0 0.0
      %818 = vmatpush1.msra.mxu0 0.0
      %819 = vmatprep.subr.mxu0 0.0
      %820 = vmatpush1.msra.mxu0 0.0
      %821 = vmatprep.subr.mxu0 0.0
      %822 = vmatpush1.msra.mxu0 0.0
      %823 = vmatprep.subr.mxu0 0.0
      %824 = vmatpush1.msra.mxu0 0.0
      %825 = vmatprep.subr.mxu0 0.0
      %826 = vmatpush1.msra.mxu0 0.0
      %827 = vmatprep.subr.mxu0 0.0
      %828 = vmatpush1.msra.mxu0 0.0
      %829 = vmatprep.subr.mxu0 0.0
      %830 = vmatpush1.msra.mxu0 0.0
      %831 = vmatprep.subr.mxu0 0.0
      %832 = vmatpush1.msra.mxu0 0.0
      %833 = vmatprep.subr.mxu0 0.0
      %834 = vmatpush1.msra.mxu0 0.0
      %835 = vmatprep.subr.mxu0 0.0
      %836 = vmatpush1.msra.mxu0 0.0
      %837 = vmatprep.subr.mxu0 0.0
      %838 = vmatpush1.msra.mxu0 0.0
      %839 = vmatprep.subr.mxu0 0.0
      %840 = vmatpush1.msra.mxu0 0.0
      %841 = vmatprep.subr.mxu0 0.0
      %842 = vmatpush1.msra.mxu0 0.0
      %843 = vmatprep.subr.mxu0 0.0
      %844 = vmatpush1.msra.mxu0 0.0
      %845 = vmatprep.subr.mxu0 0.0
      %846 = vmatpush1.msra.mxu0 0.0
      %847 = vmatprep.subr.mxu0 0.0
      %848 = vmatpush1.msra.mxu0 0.0
      %849 = vmatprep.subr.mxu0 0.0
      %850 = vmatpush1.msra.mxu0 0.0
      %851 = vmatprep.subr.mxu0 0.0
      %852 = vmatpush1.msra.mxu0 0.0
      %853 = vmatprep.mubr.f32.mxu0 0.0
      %854 = vmatmul.mubr.f32.gmra.mrb[0].mxu0 %v763
      %v855 = vpop.f32.mrb[0].mxu0
      %v856 = vadd.f32 %v724, %v855
      %v857 = vpop.f32.mrb[0].mxu0
      %858 = vmatprep.mubr.f32.mxu0 0.0
      %859 = vmatmul.mubr.f32.gmra.mrb[0].mxu0 %v766
      %v860 = vpop.f32.mrb[0].mxu0
      %v861 = vadd.f32 %v729, %v860
      %v862 = vpop.f32.mrb[0].mxu0
      %863 = vmatprep.mubr.f32.mxu0 0.0
      %864 = vmatmul.mubr.f32.gmra.mrb[0].mxu0 %v769
      %v865 = vpop.f32.mrb[0].mxu0
      %v866 = vadd.f32 %v734, %v865
      %v867 = vpop.f32.mrb[0].mxu0
      %868 = vmatprep.mubr.f32.mxu0 0.0
      %869 = vmatmul.mubr.f32.gmra.mrb[0].mxu0 %v772
      %v870 = vpop.f32.mrb[0].mxu0
      %v871 = vadd.f32 %v739, %v870
      %v872 = vpop.f32.mrb[0].mxu0
      %873 = vmatprep.mubr.f32.mxu0 0.0
      %874 = vmatmul.mubr.f32.gmra.mrb[0].mxu0 %v775
      %v875 = vpop.f32.mrb[0].mxu0
      %v876 = vadd.f32 %v744, %v875
      %v877 = vpop.f32.mrb[0].mxu0
      %878 = vmatprep.mubr.f32.mxu0 0.0
      %879 = vmatmul.mubr.f32.gmra.mrb[0].mxu0 %v778
      %v880 = vpop.f32.mrb[0].mxu0
      %v881 = vadd.f32 %v749, %v880
      %v882 = vpop.f32.mrb[0].mxu0
      %883 = vmatprep.mubr.f32.mxu0 0.0
      %884 = vmatmul.mubr.f32.gmra.mrb[0].mxu0 %v781
      %v885 = vpop.f32.mrb[0].mxu0
      %v886 = vadd.f32 %v754, %v885
      %v887 = vpop.f32.mrb[0].mxu0
      %888 = vmatprep.mubr.f32.mxu0 0.0
      %889 = vmatmul.mubr.f32.gmra.mrb[0].mxu0 %v784
      %v890 = vpop.f32.mrb[0].mxu0
      %v891 = vadd.f32 %v759, %v890
      %v892 = vpop.f32.mrb[0].mxu0
      %893 = vdwg.mxu0
      %vm902 = vcmask 1046528
      %v903 = vrot.slane %v371, 1
      %v904 = vrot.slane %v403, 1
      %v905 = vsel %vm902, %v903, %v904
      %v906 = vrot.slane %v372, 1
      %v907 = vrot.slane %v404, 1
      %v908 = vsel %vm902, %v906, %v907
      %v909 = vrot.slane %v373, 1
      %v910 = vrot.slane %v405, 1
      %v911 = vsel %vm902, %v909, %v910
      %v912 = vrot.slane %v374, 1
      %v913 = vrot.slane %v406, 1
      %v914 = vsel %vm902, %v912, %v913
      %v915 = vrot.slane %v375, 1
      %v916 = vrot.slane %v407, 1
      %v917 = vsel %vm902, %v915, %v916
      %v918 = vrot.slane %v376, 1
      %v919 = vrot.slane %v408, 1
      %v920 = vsel %vm902, %v918, %v919
      %v921 = vrot.slane %v377, 1
      %v922 = vrot.slane %v409, 1
      %v923 = vsel %vm902, %v921, %v922
      %v924 = vrot.slane %v378, 1
      %v925 = vrot.slane %v410, 1
      %v926 = vsel %vm902, %v924, %v925
      %s927 = scalar_lea.vmem %s351, 4
      %v928 = vld [vmem:[%s927] sm:$0x3]
      %v929 = vunpack.c.l.bf16 %v928
      %v930 = vsel %vm628, %v905, 0
      %v932 = vsel %vm628, %v908, 0
      %v934 = vsel %vm628, %v911, 0
      %v936 = vsel %vm628, %v914, 0
      %v938 = vsel %vm628, %v917, 0
      %v940 = vsel %vm628, %v920, 0
      %v942 = vsel %vm628, %v923, 0
      %v944 = vsel %vm628, %v926, 0
      %v947 = vsel %vm653, %v929, 0
      %949 = vmatprep.subr.mxu0 0.0
      %950 = vmatpush1.msra.mxu0 %v947
      %951 = vmatprep.subr.mxu0 0.0
      %952 = vmatpush1.msra.mxu0 0.0
      %953 = vmatprep.subr.mxu0 0.0
      %954 = vmatpush1.msra.mxu0 0.0
      %955 = vmatprep.subr.mxu0 0.0
      %956 = vmatpush1.msra.mxu0 0.0
      %957 = vmatprep.subr.mxu0 0.0
      %958 = vmatpush1.msra.mxu0 0.0
      %959 = vmatprep.subr.mxu0 0.0
      %960 = vmatpush1.msra.mxu0 0.0
      %961 = vmatprep.subr.mxu0 0.0
      %962 = vmatpush1.msra.mxu0 0.0
      %963 = vmatprep.subr.mxu0 0.0
      %964 = vmatpush1.msra.mxu0 0.0
      %965 = vmatprep.subr.mxu0 0.0
      %966 = vmatpush1.msra.mxu0 0.0
      %967 = vmatprep.subr.mxu0 0.0
      %968 = vmatpush1.msra.mxu0 0.0
      %969 = vmatprep.subr.mxu0 0.0
      %970 = vmatpush1.msra.mxu0 0.0
      %971 = vmatprep.subr.mxu0 0.0
      %972 = vmatpush1.msra.mxu0 0.0
      %973 = vmatprep.subr.mxu0 0.0
      %974 = vmatpush1.msra.mxu0 0.0
      %975 = vmatprep.subr.mxu0 0.0
      %976 = vmatpush1.msra.mxu0 0.0
      %977 = vmatprep.subr.mxu0 0.0
      %978 = vmatpush1.msra.mxu0 0.0
      %979 = vmatprep.subr.mxu0 0.0
      %980 = vmatpush1.msra.mxu0 0.0
      %981 = vmatprep.subr.mxu0 0.0
      %982 = vmatpush1.msra.mxu0 0.0
      %983 = vmatprep.subr.mxu0 0.0
      %984 = vmatpush1.msra.mxu0 0.0
      %985 = vmatprep.subr.mxu0 0.0
      %986 = vmatpush1.msra.mxu0 0.0
      %987 = vmatprep.subr.mxu0 0.0
      %988 = vmatpush1.msra.mxu0 0.0
      %989 = vmatprep.subr.mxu0 0.0
      %990 = vmatpush1.msra.mxu0 0.0
      %991 = vmatprep.subr.mxu0 0.0
      %992 = vmatpush1.msra.mxu0 0.0
      %993 = vmatprep.subr.mxu0 0.0
      %994 = vmatpush1.msra.mxu0 0.0
      %995 = vmatprep.subr.mxu0 0.0
      %996 = vmatpush1.msra.mxu0 0.0
      %997 = vmatprep.subr.mxu0 0.0
      %998 = vmatpush1.msra.mxu0 0.0
      %999 = vmatprep.subr.mxu0 0.0
      %1000 = vmatpush1.msra.mxu0 0.0
      %1001 = vmatprep.subr.mxu0 0.0
      %1002 = vmatpush1.msra.mxu0 0.0
      %1003 = vmatprep.subr.mxu0 0.0
      %1004 = vmatpush1.msra.mxu0 0.0
      %1005 = vmatprep.subr.mxu0 0.0
      %1006 = vmatpush1.msra.mxu0 0.0
      %1007 = vmatprep.subr.mxu0 0.0
      %1008 = vmatpush1.msra.mxu0 0.0
      %1009 = vmatprep.subr.mxu0 0.0
      %1010 = vmatpush1.msra.mxu0 0.0
      %1011 = vmatprep.subr.mxu0 0.0
      %1012 = vmatpush1.msra.mxu0 0.0
      %1013 = vmatprep.mubr.f32.mxu0 0.0
      %1014 = vmatmul.mubr.f32.gmra.mrb[0].mxu0 %v930
      %v1015 = vpop.f32.mrb[0].mxu0
      %v1016 = vadd.f32 0.0, %v1015
      %v1017 = vpop.f32.mrb[0].mxu0
      %1018 = vmatprep.mubr.f32.mxu0 0.0
      %1019 = vmatmul.mubr.f32.gmra.mrb[0].mxu0 %v932
      %v1020 = vpop.f32.mrb[0].mxu0
      %v1021 = vadd.f32 0.0, %v1020
      %v1022 = vpop.f32.mrb[0].mxu0
      %1023 = vmatprep.mubr.f32.mxu0 0.0
      %1024 = vmatmul.mubr.f32.gmra.mrb[0].mxu0 %v934
      %v1025 = vpop.f32.mrb[0].mxu0
      %v1026 = vadd.f32 0.0, %v1025
      %v1027 = vpop.f32.mrb[0].mxu0
      %1028 = vmatprep.mubr.f32.mxu0 0.0
      %1029 = vmatmul.mubr.f32.gmra.mrb[0].mxu0 %v936
      %v1030 = vpop.f32.mrb[0].mxu0
      %v1031 = vadd.f32 0.0, %v1030
      %v1032 = vpop.f32.mrb[0].mxu0
      %1033 = vmatprep.mubr.f32.mxu0 0.0
      %1034 = vmatmul.mubr.f32.gmra.mrb[0].mxu0 %v938
      %v1035 = vpop.f32.mrb[0].mxu0
      %v1036 = vadd.f32 0.0, %v1035
      %v1037 = vpop.f32.mrb[0].mxu0
      %1038 = vmatprep.mubr.f32.mxu0 0.0
      %1039 = vmatmul.mubr.f32.gmra.mrb[0].mxu0 %v940
      %v1040 = vpop.f32.mrb[0].mxu0
      %v1041 = vadd.f32 0.0, %v1040
      %v1042 = vpop.f32.mrb[0].mxu0
      %1043 = vmatprep.mubr.f32.mxu0 0.0
      %1044 = vmatmul.mubr.f32.gmra.mrb[0].mxu0 %v942
      %v1045 = vpop.f32.mrb[0].mxu0
      %v1046 = vadd.f32 0.0, %v1045
      %v1047 = vpop.f32.mrb[0].mxu0
      %1048 = vmatprep.mubr.f32.mxu0 0.0
      %1049 = vmatmul.mubr.f32.gmra.mrb[0].mxu0 %v944
      %v1050 = vpop.f32.mrb[0].mxu0
      %v1051 = vadd.f32 0.0, %v1050
      %v1052 = vpop.f32.mrb[0].mxu0
      %1053 = vdwg.mxu0
      %v1054 = vadd.f32 %v856, %v1016
      %v1055 = vadd.f32 %v861, %v1021
      %v1056 = vadd.f32 %v866, %v1026
      %v1057 = vadd.f32 %v871, %v1031
      %v1058 = vadd.f32 %v876, %v1036
      %v1059 = vadd.f32 %v881, %v1041
      %v1060 = vadd.f32 %v886, %v1046
      %v1061 = vadd.f32 %v891, %v1051
      %v1070 = vrot.slane %v387, 1
      %v1071 = vrot.slane %v419, 1
      %v1072 = vsel %vm902, %v1070, %v1071
      %v1073 = vrot.slane %v388, 1
      %v1074 = vrot.slane %v420, 1
      %v1075 = vsel %vm902, %v1073, %v1074
      %v1076 = vrot.slane %v389, 1
      %v1077 = vrot.slane %v421, 1
      %v1078 = vsel %vm902, %v1076, %v1077
      %v1079 = vrot.slane %v390, 1
      %v1080 = vrot.slane %v422, 1
      %v1081 = vsel %vm902, %v1079, %v1080
      %v1082 = vrot.slane %v391, 1
      %v1083 = vrot.slane %v423, 1
      %v1084 = vsel %vm902, %v1082, %v1083
      %v1085 = vrot.slane %v392, 1
      %v1086 = vrot.slane %v424, 1
      %v1087 = vsel %vm902, %v1085, %v1086
      %v1088 = vrot.slane %v393, 1
      %v1089 = vrot.slane %v425, 1
      %v1090 = vsel %vm902, %v1088, %v1089
      %v1091 = vrot.slane %v394, 1
      %v1092 = vrot.slane %v426, 1
      %v1093 = vsel %vm902, %v1091, %v1092
      %s1094 = scalar_lea.vmem %s351, 6
      %v1095 = vld [vmem:[%s1094] sm:$0x3]
      %v1096 = vunpack.c.l.bf16 %v1095
      %v1097 = vsel %vm628, %v1072, 0
      %v1099 = vsel %vm628, %v1075, 0
      %v1101 = vsel %vm628, %v1078, 0
      %v1103 = vsel %vm628, %v1081, 0
      %v1105 = vsel %vm628, %v1084, 0
      %v1107 = vsel %vm628, %v1087, 0
      %v1109 = vsel %vm628, %v1090, 0
      %v1111 = vsel %vm628, %v1093, 0
      %v1114 = vsel %vm653, %v1096, 0
      %1116 = vmatprep.subr.mxu0 0.0
      %1117 = vmatpush1.msra.mxu0 %v1114
      %1118 = vmatprep.subr.mxu0 0.0
      %1119 = vmatpush1.msra.mxu0 0.0
      %1120 = vmatprep.subr.mxu0 0.0
      %1121 = vmatpush1.msra.mxu0 0.0
      %1122 = vmatprep.subr.mxu0 0.0
      %1123 = vmatpush1.msra.mxu0 0.0
      %1124 = vmatprep.subr.mxu0 0.0
      %1125 = vmatpush1.msra.mxu0 0.0
      %1126 = vmatprep.subr.mxu0 0.0
      %1127 = vmatpush1.msra.mxu0 0.0
      %1128 = vmatprep.subr.mxu0 0.0
      %1129 = vmatpush1.msra.mxu0 0.0
      %1130 = vmatprep.subr.mxu0 0.0
      %1131 = vmatpush1.msra.mxu0 0.0
      %1132 = vmatprep.subr.mxu0 0.0
      %1133 = vmatpush1.msra.mxu0 0.0
      %1134 = vmatprep.subr.mxu0 0.0
      %1135 = vmatpush1.msra.mxu0 0.0
      %1136 = vmatprep.subr.mxu0 0.0
      %1137 = vmatpush1.msra.mxu0 0.0
      %1138 = vmatprep.subr.mxu0 0.0
      %1139 = vmatpush1.msra.mxu0 0.0
      %1140 = vmatprep.subr.mxu0 0.0
      %1141 = vmatpush1.msra.mxu0 0.0
      %1142 = vmatprep.subr.mxu0 0.0
      %1143 = vmatpush1.msra.mxu0 0.0
      %1144 = vmatprep.subr.mxu0 0.0
      %1145 = vmatpush1.msra.mxu0 0.0
      %1146 = vmatprep.subr.mxu0 0.0
      %1147 = vmatpush1.msra.mxu0 0.0
      %1148 = vmatprep.subr.mxu0 0.0
      %1149 = vmatpush1.msra.mxu0 0.0
      %1150 = vmatprep.subr.mxu0 0.0
      %1151 = vmatpush1.msra.mxu0 0.0
      %1152 = vmatprep.subr.mxu0 0.0
      %1153 = vmatpush1.msra.mxu0 0.0
      %1154 = vmatprep.subr.mxu0 0.0
      %1155 = vmatpush1.msra.mxu0 0.0
      %1156 = vmatprep.subr.mxu0 0.0
      %1157 = vmatpush1.msra.mxu0 0.0
      %1158 = vmatprep.subr.mxu0 0.0
      %1159 = vmatpush1.msra.mxu0 0.0
      %1160 = vmatprep.subr.mxu0 0.0
      %1161 = vmatpush1.msra.mxu0 0.0
      %1162 = vmatprep.subr.mxu0 0.0
      %1163 = vmatpush1.msra.mxu0 0.0
      %1164 = vmatprep.subr.mxu0 0.0
      %1165 = vmatpush1.msra.mxu0 0.0
      %1166 = vmatprep.subr.mxu0 0.0
      %1167 = vmatpush1.msra.mxu0 0.0
      %1168 = vmatprep.subr.mxu0 0.0
      %1169 = vmatpush1.msra.mxu0 0.0
      %1170 = vmatprep.subr.mxu0 0.0
      %1171 = vmatpush1.msra.mxu0 0.0
      %1172 = vmatprep.subr.mxu0 0.0
      %1173 = vmatpush1.msra.mxu0 0.0
      %1174 = vmatprep.subr.mxu0 0.0
      %1175 = vmatpush1.msra.mxu0 0.0
      %1176 = vmatprep.subr.mxu0 0.0
      %1177 = vmatpush1.msra.mxu0 0.0
      %1178 = vmatprep.subr.mxu0 0.0
      %1179 = vmatpush1.msra.mxu0 0.0
      %1180 = vmatprep.mubr.f32.mxu0 0.0
      %1181 = vmatmul.mubr.f32.gmra.mrb[0].mxu0 %v1097
      %v1182 = vpop.f32.mrb[0].mxu0
      %v1183 = vadd.f32 0.0, %v1182
      %v1184 = vpop.f32.mrb[0].mxu0
      %1185 = vmatprep.mubr.f32.mxu0 0.0
      %1186 = vmatmul.mubr.f32.gmra.mrb[0].mxu0 %v1099
      %v1187 = vpop.f32.mrb[0].mxu0
      %v1188 = vadd.f32 0.0, %v1187
      %v1189 = vpop.f32.mrb[0].mxu0
      %1190 = vmatprep.mubr.f32.mxu0 0.0
      %1191 = vmatmul.mubr.f32.gmra.mrb[0].mxu0 %v1101
      %v1192 = vpop.f32.mrb[0].mxu0
      %v1193 = vadd.f32 0.0, %v1192
      %v1194 = vpop.f32.mrb[0].mxu0
      %1195 = vmatprep.mubr.f32.mxu0 0.0
      %1196 = vmatmul.mubr.f32.gmra.mrb[0].mxu0 %v1103
      %v1197 = vpop.f32.mrb[0].mxu0
      %v1198 = vadd.f32 0.0, %v1197
      %v1199 = vpop.f32.mrb[0].mxu0
      %1200 = vmatprep.mubr.f32.mxu0 0.0
      %1201 = vmatmul.mubr.f32.gmra.mrb[0].mxu0 %v1105
      %v1202 = vpop.f32.mrb[0].mxu0
      %v1203 = vadd.f32 0.0, %v1202
      %v1204 = vpop.f32.mrb[0].mxu0
      %1205 = vmatprep.mubr.f32.mxu0 0.0
      %1206 = vmatmul.mubr.f32.gmra.mrb[0].mxu0 %v1107
      %v1207 = vpop.f32.mrb[0].mxu0
      %v1208 = vadd.f32 0.0, %v1207
      %v1209 = vpop.f32.mrb[0].mxu0
      %1210 = vmatprep.mubr.f32.mxu0 0.0
      %1211 = vmatmul.mubr.f32.gmra.mrb[0].mxu0 %v1109
      %v1212 = vpop.f32.mrb[0].mxu0
      %v1213 = vadd.f32 0.0, %v1212
      %v1214 = vpop.f32.mrb[0].mxu0
      %1215 = vmatprep.mubr.f32.mxu0 0.0
      %1216 = vmatmul.mubr.f32.gmra.mrb[0].mxu0 %v1111
      %v1217 = vpop.f32.mrb[0].mxu0
      %v1218 = vadd.f32 0.0, %v1217
      %v1219 = vpop.f32.mrb[0].mxu0
      %1220 = vdwg.mxu0
      %v1221 = vadd.f32 %v1054, %v1183
      %v1222 = vadd.f32 %v1055, %v1188
      %v1223 = vadd.f32 %v1056, %v1193
      %v1224 = vadd.f32 %v1057, %v1198
      %v1225 = vadd.f32 %v1058, %v1203
      %v1226 = vadd.f32 %v1059, %v1208
      %v1227 = vadd.f32 %v1060, %v1213
      %v1228 = vadd.f32 %v1061, %v1218
      %s1229 = scalar_lea.vmem %s351, 8
      %v1230 = vld [vmem:[%s1229] sm:$0x3]
      %v1231 = vunpack.c.l.bf16 %v1230
      %v1233 = vsel %vm628, %v435, 0
      %v1236 = vsel %vm628, %v436, 0
      %v1239 = vsel %vm628, %v437, 0
      %v1242 = vsel %vm628, %v438, 0
      %v1245 = vsel %vm628, %v439, 0
      %v1248 = vsel %vm628, %v440, 0
      %v1251 = vsel %vm628, %v441, 0
      %v1254 = vsel %vm628, %v442, 0
      %v1257 = vsel %vm653, %v1231, 0
      %1259 = vmatprep.subr.mxu0 0.0
      %1260 = vmatpush1.msra.mxu0 %v1257
      %1261 = vmatprep.subr.mxu0 0.0
      %1262 = vmatpush1.msra.mxu0 0.0
      %1263 = vmatprep.subr.mxu0 0.0
      %1264 = vmatpush1.msra.mxu0 0.0
      %1265 = vmatprep.subr.mxu0 0.0
      %1266 = vmatpush1.msra.mxu0 0.0
      %1267 = vmatprep.subr.mxu0 0.0
      %1268 = vmatpush1.msra.mxu0 0.0
      %1269 = vmatprep.subr.mxu0 0.0
      %1270 = vmatpush1.msra.mxu0 0.0
      %1271 = vmatprep.subr.mxu0 0.0
      %1272 = vmatpush1.msra.mxu0 0.0
      %1273 = vmatprep.subr.mxu0 0.0
      %1274 = vmatpush1.msra.mxu0 0.0
      %1275 = vmatprep.subr.mxu0 0.0
      %1276 = vmatpush1.msra.mxu0 0.0
      %1277 = vmatprep.subr.mxu0 0.0
      %1278 = vmatpush1.msra.mxu0 0.0
      %1279 = vmatprep.subr.mxu0 0.0
      %1280 = vmatpush1.msra.mxu0 0.0
      %1281 = vmatprep.subr.mxu0 0.0
      %1282 = vmatpush1.msra.mxu0 0.0
      %1283 = vmatprep.subr.mxu0 0.0
      %1284 = vmatpush1.msra.mxu0 0.0
      %1285 = vmatprep.subr.mxu0 0.0
      %1286 = vmatpush1.msra.mxu0 0.0
      %1287 = vmatprep.subr.mxu0 0.0
      %1288 = vmatpush1.msra.mxu0 0.0
      %1289 = vmatprep.subr.mxu0 0.0
      %1290 = vmatpush1.msra.mxu0 0.0
      %1291 = vmatprep.subr.mxu0 0.0
      %1292 = vmatpush1.msra.mxu0 0.0
      %1293 = vmatprep.subr.mxu0 0.0
      %1294 = vmatpush1.msra.mxu0 0.0
      %1295 = vmatprep.subr.mxu0 0.0
      %1296 = vmatpush1.msra.mxu0 0.0
      %1297 = vmatprep.subr.mxu0 0.0
      %1298 = vmatpush1.msra.mxu0 0.0
      %1299 = vmatprep.subr.mxu0 0.0
      %1300 = vmatpush1.msra.mxu0 0.0
      %1301 = vmatprep.subr.mxu0 0.0
      %1302 = vmatpush1.msra.mxu0 0.0
      %1303 = vmatprep.subr.mxu0 0.0
      %1304 = vmatpush1.msra.mxu0 0.0
      %1305 = vmatprep.subr.mxu0 0.0
      %1306 = vmatpush1.msra.mxu0 0.0
      %1307 = vmatprep.subr.mxu0 0.0
      %1308 = vmatpush1.msra.mxu0 0.0
      %1309 = vmatprep.subr.mxu0 0.0
      %1310 = vmatpush1.msra.mxu0 0.0
      %1311 = vmatprep.subr.mxu0 0.0
      %1312 = vmatpush1.msra.mxu0 0.0
      %1313 = vmatprep.subr.mxu0 0.0
      %1314 = vmatpush1.msra.mxu0 0.0
      %1315 = vmatprep.subr.mxu0 0.0
      %1316 = vmatpush1.msra.mxu0 0.0
      %1317 = vmatprep.subr.mxu0 0.0
      %1318 = vmatpush1.msra.mxu0 0.0
      %1319 = vmatprep.subr.mxu0 0.0
      %1320 = vmatpush1.msra.mxu0 0.0
      %1321 = vmatprep.subr.mxu0 0.0
      %1322 = vmatpush1.msra.mxu0 0.0
      %1323 = vmatprep.mubr.f32.mxu0 0.0
      %1324 = vmatmul.mubr.f32.gmra.mrb[0].mxu0 %v1233
      %v1325 = vpop.f32.mrb[0].mxu0
      %v1326 = vadd.f32 0.0, %v1325
      %v1327 = vpop.f32.mrb[0].mxu0
      %1328 = vmatprep.mubr.f32.mxu0 0.0
      %1329 = vmatmul.mubr.f32.gmra.mrb[0].mxu0 %v1236
      %v1330 = vpop.f32.mrb[0].mxu0
      %v1331 = vadd.f32 0.0, %v1330
      %v1332 = vpop.f32.mrb[0].mxu0
      %1333 = vmatprep.mubr.f32.mxu0 0.0
      %1334 = vmatmul.mubr.f32.gmra.mrb[0].mxu0 %v1239
      %v1335 = vpop.f32.mrb[0].mxu0
      %v1336 = vadd.f32 0.0, %v1335
      %v1337 = vpop.f32.mrb[0].mxu0
      %1338 = vmatprep.mubr.f32.mxu0 0.0
      %1339 = vmatmul.mubr.f32.gmra.mrb[0].mxu0 %v1242
      %v1340 = vpop.f32.mrb[0].mxu0
      %v1341 = vadd.f32 0.0, %v1340
      %v1342 = vpop.f32.mrb[0].mxu0
      %1343 = vmatprep.mubr.f32.mxu0 0.0
      %1344 = vmatmul.mubr.f32.gmra.mrb[0].mxu0 %v1245
      %v1345 = vpop.f32.mrb[0].mxu0
      %v1346 = vadd.f32 0.0, %v1345
      %v1347 = vpop.f32.mrb[0].mxu0
      %1348 = vmatprep.mubr.f32.mxu0 0.0
      %1349 = vmatmul.mubr.f32.gmra.mrb[0].mxu0 %v1248
      %v1350 = vpop.f32.mrb[0].mxu0
      %v1351 = vadd.f32 0.0, %v1350
      %v1352 = vpop.f32.mrb[0].mxu0
      %1353 = vmatprep.mubr.f32.mxu0 0.0
      %1354 = vmatmul.mubr.f32.gmra.mrb[0].mxu0 %v1251
      %v1355 = vpop.f32.mrb[0].mxu0
      %v1356 = vadd.f32 0.0, %v1355
      %v1357 = vpop.f32.mrb[0].mxu0
      %1358 = vmatprep.mubr.f32.mxu0 0.0
      %1359 = vmatmul.mubr.f32.gmra.mrb[0].mxu0 %v1254
      %v1360 = vpop.f32.mrb[0].mxu0
      %v1361 = vadd.f32 0.0, %v1360
      %v1362 = vpop.f32.mrb[0].mxu0
      %1363 = vdwg.mxu0
      %v1364 = vadd.f32 %v1221, %v1326
      %v1365 = vadd.f32 %v1222, %v1331
      %v1366 = vadd.f32 %v1223, %v1336
      %v1367 = vadd.f32 %v1224, %v1341
      %v1368 = vadd.f32 %v1225, %v1346
      %v1369 = vadd.f32 %v1226, %v1351
      %v1370 = vadd.f32 %v1227, %v1356
      %v1371 = vadd.f32 %v1228, %v1361
      %s1372 = scalar_lea.vmem %s351, 10
      %v1373 = vld [vmem:[%s1372] sm:$0x3]
      %v1374 = vunpack.c.l.bf16 %v1373
      %v1376 = vsel %vm628, %v451, 0
      %v1379 = vsel %vm628, %v452, 0
      %v1382 = vsel %vm628, %v453, 0
      %v1385 = vsel %vm628, %v454, 0
      %v1388 = vsel %vm628, %v455, 0
      %v1391 = vsel %vm628, %v456, 0
      %v1394 = vsel %vm628, %v457, 0
      %v1397 = vsel %vm628, %v458, 0
      %v1400 = vsel %vm653, %v1374, 0
      %1402 = vmatprep.subr.mxu0 0.0
      %1403 = vmatpush1.msra.mxu0 %v1400
      %1404 = vmatprep.subr.mxu0 0.0
      %1405 = vmatpush1.msra.mxu0 0.0
      %1406 = vmatprep.subr.mxu0 0.0
      %1407 = vmatpush1.msra.mxu0 0.0
      %1408 = vmatprep.subr.mxu0 0.0
      %1409 = vmatpush1.msra.mxu0 0.0
      %1410 = vmatprep.subr.mxu0 0.0
      %1411 = vmatpush1.msra.mxu0 0.0
      %1412 = vmatprep.subr.mxu0 0.0
      %1413 = vmatpush1.msra.mxu0 0.0
      %1414 = vmatprep.subr.mxu0 0.0
      %1415 = vmatpush1.msra.mxu0 0.0
      %1416 = vmatprep.subr.mxu0 0.0
      %1417 = vmatpush1.msra.mxu0 0.0
      %1418 = vmatprep.subr.mxu0 0.0
      %1419 = vmatpush1.msra.mxu0 0.0
      %1420 = vmatprep.subr.mxu0 0.0
      %1421 = vmatpush1.msra.mxu0 0.0
      %1422 = vmatprep.subr.mxu0 0.0
      %1423 = vmatpush1.msra.mxu0 0.0
      %1424 = vmatprep.subr.mxu0 0.0
      %1425 = vmatpush1.msra.mxu0 0.0
      %1426 = vmatprep.subr.mxu0 0.0
      %1427 = vmatpush1.msra.mxu0 0.0
      %1428 = vmatprep.subr.mxu0 0.0
      %1429 = vmatpush1.msra.mxu0 0.0
      %1430 = vmatprep.subr.mxu0 0.0
      %1431 = vmatpush1.msra.mxu0 0.0
      %1432 = vmatprep.subr.mxu0 0.0
      %1433 = vmatpush1.msra.mxu0 0.0
      %1434 = vmatprep.subr.mxu0 0.0
      %1435 = vmatpush1.msra.mxu0 0.0
      %1436 = vmatprep.subr.mxu0 0.0
      %1437 = vmatpush1.msra.mxu0 0.0
      %1438 = vmatprep.subr.mxu0 0.0
      %1439 = vmatpush1.msra.mxu0 0.0
      %1440 = vmatprep.subr.mxu0 0.0
      %1441 = vmatpush1.msra.mxu0 0.0
      %1442 = vmatprep.subr.mxu0 0.0
      %1443 = vmatpush1.msra.mxu0 0.0
      %1444 = vmatprep.subr.mxu0 0.0
      %1445 = vmatpush1.msra.mxu0 0.0
      %1446 = vmatprep.subr.mxu0 0.0
      %1447 = vmatpush1.msra.mxu0 0.0
      %1448 = vmatprep.subr.mxu0 0.0
      %1449 = vmatpush1.msra.mxu0 0.0
      %1450 = vmatprep.subr.mxu0 0.0
      %1451 = vmatpush1.msra.mxu0 0.0
      %1452 = vmatprep.subr.mxu0 0.0
      %1453 = vmatpush1.msra.mxu0 0.0
      %1454 = vmatprep.subr.mxu0 0.0
      %1455 = vmatpush1.msra.mxu0 0.0
      %1456 = vmatprep.subr.mxu0 0.0
      %1457 = vmatpush1.msra.mxu0 0.0
      %1458 = vmatprep.subr.mxu0 0.0
      %1459 = vmatpush1.msra.mxu0 0.0
      %1460 = vmatprep.subr.mxu0 0.0
      %1461 = vmatpush1.msra.mxu0 0.0
      %1462 = vmatprep.subr.mxu0 0.0
      %1463 = vmatpush1.msra.mxu0 0.0
      %1464 = vmatprep.subr.mxu0 0.0
      %1465 = vmatpush1.msra.mxu0 0.0
      %1466 = vmatprep.mubr.f32.mxu0 0.0
      %1467 = vmatmul.mubr.f32.gmra.mrb[0].mxu0 %v1376
      %v1468 = vpop.f32.mrb[0].mxu0
      %v1469 = vadd.f32 0.0, %v1468
      %v1470 = vpop.f32.mrb[0].mxu0
      %1471 = vmatprep.mubr.f32.mxu0 0.0
      %1472 = vmatmul.mubr.f32.gmra.mrb[0].mxu0 %v1379
      %v1473 = vpop.f32.mrb[0].mxu0
      %v1474 = vadd.f32 0.0, %v1473
      %v1475 = vpop.f32.mrb[0].mxu0
      %1476 = vmatprep.mubr.f32.mxu0 0.0
      %1477 = vmatmul.mubr.f32.gmra.mrb[0].mxu0 %v1382
      %v1478 = vpop.f32.mrb[0].mxu0
      %v1479 = vadd.f32 0.0, %v1478
      %v1480 = vpop.f32.mrb[0].mxu0
      %1481 = vmatprep.mubr.f32.mxu0 0.0
      %1482 = vmatmul.mubr.f32.gmra.mrb[0].mxu0 %v1385
      %v1483 = vpop.f32.mrb[0].mxu0
      %v1484 = vadd.f32 0.0, %v1483
      %v1485 = vpop.f32.mrb[0].mxu0
      %1486 = vmatprep.mubr.f32.mxu0 0.0
      %1487 = vmatmul.mubr.f32.gmra.mrb[0].mxu0 %v1388
      %v1488 = vpop.f32.mrb[0].mxu0
      %v1489 = vadd.f32 0.0, %v1488
      %v1490 = vpop.f32.mrb[0].mxu0
      %1491 = vmatprep.mubr.f32.mxu0 0.0
      %1492 = vmatmul.mubr.f32.gmra.mrb[0].mxu0 %v1391
      %v1493 = vpop.f32.mrb[0].mxu0
      %v1494 = vadd.f32 0.0, %v1493
      %v1495 = vpop.f32.mrb[0].mxu0
      %1496 = vmatprep.mubr.f32.mxu0 0.0
      %1497 = vmatmul.mubr.f32.gmra.mrb[0].mxu0 %v1394
      %v1498 = vpop.f32.mrb[0].mxu0
      %v1499 = vadd.f32 0.0, %v1498
      %v1500 = vpop.f32.mrb[0].mxu0
      %1501 = vmatprep.mubr.f32.mxu0 0.0
      %1502 = vmatmul.mubr.f32.gmra.mrb[0].mxu0 %v1397
      %v1503 = vpop.f32.mrb[0].mxu0
      %v1504 = vadd.f32 0.0, %v1503
      %v1505 = vpop.f32.mrb[0].mxu0
      %1506 = vdwg.mxu0
      %v1507 = vadd.f32 %v1364, %v1469
      %v1508 = vadd.f32 %v1365, %v1474
      %v1509 = vadd.f32 %v1366, %v1479
      %v1510 = vadd.f32 %v1367, %v1484
      %v1511 = vadd.f32 %v1368, %v1489
      %v1512 = vadd.f32 %v1369, %v1494
      %v1513 = vadd.f32 %v1370, %v1499
      %v1514 = vadd.f32 %v1371, %v1504
      %v1523 = vrot.slane %v435, 1
      %v1524 = vrot.slane %v467, 1
      %v1525 = vsel %vm902, %v1523, %v1524
      %v1526 = vrot.slane %v436, 1
      %v1527 = vrot.slane %v468, 1
      %v1528 = vsel %vm902, %v1526, %v1527
      %v1529 = vrot.slane %v437, 1
      %v1530 = vrot.slane %v469, 1
      %v1531 = vsel %vm902, %v1529, %v1530
      %v1532 = vrot.slane %v438, 1
      %v1533 = vrot.slane %v470, 1
      %v1534 = vsel %vm902, %v1532, %v1533
      %v1535 = vrot.slane %v439, 1
      %v1536 = vrot.slane %v471, 1
      %v1537 = vsel %vm902, %v1535, %v1536
      %v1538 = vrot.slane %v440, 1
      %v1539 = vrot.slane %v472, 1
      %v1540 = vsel %vm902, %v1538, %v1539
      %v1541 = vrot.slane %v441, 1
      %v1542 = vrot.slane %v473, 1
      %v1543 = vsel %vm902, %v1541, %v1542
      %v1544 = vrot.slane %v442, 1
      %v1545 = vrot.slane %v474, 1
      %v1546 = vsel %vm902, %v1544, %v1545
      %s1547 = scalar_lea.vmem %s351, 12
      %v1548 = vld [vmem:[%s1547] sm:$0x3]
      %v1549 = vunpack.c.l.bf16 %v1548
      %v1550 = vsel %vm628, %v1525, 0
      %v1552 = vsel %vm628, %v1528, 0
      %v1554 = vsel %vm628, %v1531, 0
      %v1556 = vsel %vm628, %v1534, 0
      %v1558 = vsel %vm628, %v1537, 0
      %v1560 = vsel %vm628, %v1540, 0
      %v1562 = vsel %vm628, %v1543, 0
      %v1564 = vsel %vm628, %v1546, 0
      %v1567 = vsel %vm653, %v1549, 0
      %1569 = vmatprep.subr.mxu0 0.0
      %1570 = vmatpush1.msra.mxu0 %v1567
      %1571 = vmatprep.subr.mxu0 0.0
      %1572 = vmatpush1.msra.mxu0 0.0
      %1573 = vmatprep.subr.mxu0 0.0
      %1574 = vmatpush1.msra.mxu0 0.0
      %1575 = vmatprep.subr.mxu0 0.0
      %1576 = vmatpush1.msra.mxu0 0.0
      %1577 = vmatprep.subr.mxu0 0.0
      %1578 = vmatpush1.msra.mxu0 0.0
      %1579 = vmatprep.subr.mxu0 0.0
      %1580 = vmatpush1.msra.mxu0 0.0
      %1581 = vmatprep.subr.mxu0 0.0
      %1582 = vmatpush1.msra.mxu0 0.0
      %1583 = vmatprep.subr.mxu0 0.0
      %1584 = vmatpush1.msra.mxu0 0.0
      %1585 = vmatprep.subr.mxu0 0.0
      %1586 = vmatpush1.msra.mxu0 0.0
      %1587 = vmatprep.subr.mxu0 0.0
      %1588 = vmatpush1.msra.mxu0 0.0
      %1589 = vmatprep.subr.mxu0 0.0
      %1590 = vmatpush1.msra.mxu0 0.0
      %1591 = vmatprep.subr.mxu0 0.0
      %1592 = vmatpush1.msra.mxu0 0.0
      %1593 = vmatprep.subr.mxu0 0.0
      %1594 = vmatpush1.msra.mxu0 0.0
      %1595 = vmatprep.subr.mxu0 0.0
      %1596 = vmatpush1.msra.mxu0 0.0
      %1597 = vmatprep.subr.mxu0 0.0
      %1598 = vmatpush1.msra.mxu0 0.0
      %1599 = vmatprep.subr.mxu0 0.0
      %1600 = vmatpush1.msra.mxu0 0.0
      %1601 = vmatprep.subr.mxu0 0.0
      %1602 = vmatpush1.msra.mxu0 0.0
      %1603 = vmatprep.subr.mxu0 0.0
      %1604 = vmatpush1.msra.mxu0 0.0
      %1605 = vmatprep.subr.mxu0 0.0
      %1606 = vmatpush1.msra.mxu0 0.0
      %1607 = vmatprep.subr.mxu0 0.0
      %1608 = vmatpush1.msra.mxu0 0.0
      %1609 = vmatprep.subr.mxu0 0.0
      %1610 = vmatpush1.msra.mxu0 0.0
      %1611 = vmatprep.subr.mxu0 0.0
      %1612 = vmatpush1.msra.mxu0 0.0
      %1613 = vmatprep.subr.mxu0 0.0
      %1614 = vmatpush1.msra.mxu0 0.0
      %1615 = vmatprep.subr.mxu0 0.0
      %1616 = vmatpush1.msra.mxu0 0.0
      %1617 = vmatprep.subr.mxu0 0.0
      %1618 = vmatpush1.msra.mxu0 0.0
      %1619 = vmatprep.subr.mxu0 0.0
      %1620 = vmatpush1.msra.mxu0 0.0
      %1621 = vmatprep.subr.mxu0 0.0
      %1622 = vmatpush1.msra.mxu0 0.0
      %1623 = vmatprep.subr.mxu0 0.0
      %1624 = vmatpush1.msra.mxu0 0.0
      %1625 = vmatprep.subr.mxu0 0.0
      %1626 = vmatpush1.msra.mxu0 0.0
      %1627 = vmatprep.subr.mxu0 0.0
      %1628 = vmatpush1.msra.mxu0 0.0
      %1629 = vmatprep.subr.mxu0 0.0
      %1630 = vmatpush1.msra.mxu0 0.0
      %1631 = vmatprep.subr.mxu0 0.0
      %1632 = vmatpush1.msra.mxu0 0.0
      %1633 = vmatprep.mubr.f32.mxu0 0.0
      %1634 = vmatmul.mubr.f32.gmra.mrb[0].mxu0 %v1550
      %v1635 = vpop.f32.mrb[0].mxu0
      %v1636 = vadd.f32 0.0, %v1635
      %v1637 = vpop.f32.mrb[0].mxu0
      %1638 = vmatprep.mubr.f32.mxu0 0.0
      %1639 = vmatmul.mubr.f32.gmra.mrb[0].mxu0 %v1552
      %v1640 = vpop.f32.mrb[0].mxu0
      %v1641 = vadd.f32 0.0, %v1640
      %v1642 = vpop.f32.mrb[0].mxu0
      %1643 = vmatprep.mubr.f32.mxu0 0.0
      %1644 = vmatmul.mubr.f32.gmra.mrb[0].mxu0 %v1554
      %v1645 = vpop.f32.mrb[0].mxu0
      %v1646 = vadd.f32 0.0, %v1645
      %v1647 = vpop.f32.mrb[0].mxu0
      %1648 = vmatprep.mubr.f32.mxu0 0.0
      %1649 = vmatmul.mubr.f32.gmra.mrb[0].mxu0 %v1556
      %v1650 = vpop.f32.mrb[0].mxu0
      %v1651 = vadd.f32 0.0, %v1650
      %v1652 = vpop.f32.mrb[0].mxu0
      %1653 = vmatprep.mubr.f32.mxu0 0.0
      %1654 = vmatmul.mubr.f32.gmra.mrb[0].mxu0 %v1558
      %v1655 = vpop.f32.mrb[0].mxu0
      %v1656 = vadd.f32 0.0, %v1655
      %v1657 = vpop.f32.mrb[0].mxu0
      %1658 = vmatprep.mubr.f32.mxu0 0.0
      %1659 = vmatmul.mubr.f32.gmra.mrb[0].mxu0 %v1560
      %v1660 = vpop.f32.mrb[0].mxu0
      %v1661 = vadd.f32 0.0, %v1660
      %v1662 = vpop.f32.mrb[0].mxu0
      %1663 = vmatprep.mubr.f32.mxu0 0.0
      %1664 = vmatmul.mubr.f32.gmra.mrb[0].mxu0 %v1562
      %v1665 = vpop.f32.mrb[0].mxu0
      %v1666 = vadd.f32 0.0, %v1665
      %v1667 = vpop.f32.mrb[0].mxu0
      %1668 = vmatprep.mubr.f32.mxu0 0.0
      %1669 = vmatmul.mubr.f32.gmra.mrb[0].mxu0 %v1564
      %v1670 = vpop.f32.mrb[0].mxu0
      %v1671 = vadd.f32 0.0, %v1670
      %v1672 = vpop.f32.mrb[0].mxu0
      %1673 = vdwg.mxu0
      %v1674 = vadd.f32 %v1507, %v1636
      %v1675 = vadd.f32 %v1508, %v1641
      %v1676 = vadd.f32 %v1509, %v1646
      %v1677 = vadd.f32 %v1510, %v1651
      %v1678 = vadd.f32 %v1511, %v1656
      %v1679 = vadd.f32 %v1512, %v1661
      %v1680 = vadd.f32 %v1513, %v1666
      %v1681 = vadd.f32 %v1514, %v1671
      %v1690 = vrot.slane %v451, 1
      %v1691 = vrot.slane %v483, 1
      %v1692 = vsel %vm902, %v1690, %v1691
      %v1693 = vrot.slane %v452, 1
      %v1694 = vrot.slane %v484, 1
      %v1695 = vsel %vm902, %v1693, %v1694
      %v1696 = vrot.slane %v453, 1
      %v1697 = vrot.slane %v485, 1
      %v1698 = vsel %vm902, %v1696, %v1697
      %v1699 = vrot.slane %v454, 1
      %v1700 = vrot.slane %v486, 1
      %v1701 = vsel %vm902, %v1699, %v1700
      %v1702 = vrot.slane %v455, 1
      %v1703 = vrot.slane %v487, 1
      %v1704 = vsel %vm902, %v1702, %v1703
      %v1705 = vrot.slane %v456, 1
      %v1706 = vrot.slane %v488, 1
      %v1707 = vsel %vm902, %v1705, %v1706
      %v1708 = vrot.slane %v457, 1
      %v1709 = vrot.slane %v489, 1
      %v1710 = vsel %vm902, %v1708, %v1709
      %v1711 = vrot.slane %v458, 1
      %v1712 = vrot.slane %v490, 1
      %v1713 = vsel %vm902, %v1711, %v1712
      %s1714 = scalar_lea.vmem %s351, 14
      %v1715 = vld [vmem:[%s1714] sm:$0x3]
      %v1716 = vunpack.c.l.bf16 %v1715
      %v1717 = vsel %vm628, %v1692, 0
      %v1719 = vsel %vm628, %v1695, 0
      %v1721 = vsel %vm628, %v1698, 0
      %v1723 = vsel %vm628, %v1701, 0
      %v1725 = vsel %vm628, %v1704, 0
      %v1727 = vsel %vm628, %v1707, 0
      %v1729 = vsel %vm628, %v1710, 0
      %v1731 = vsel %vm628, %v1713, 0
      %v1734 = vsel %vm653, %v1716, 0
      %1736 = vmatprep.subr.mxu0 0.0
      %1737 = vmatpush1.msra.mxu0 %v1734
      %1738 = vmatprep.subr.mxu0 0.0
      %1739 = vmatpush1.msra.mxu0 0.0
      %1740 = vmatprep.subr.mxu0 0.0
      %1741 = vmatpush1.msra.mxu0 0.0
      %1742 = vmatprep.subr.mxu0 0.0
      %1743 = vmatpush1.msra.mxu0 0.0
      %1744 = vmatprep.subr.mxu0 0.0
      %1745 = vmatpush1.msra.mxu0 0.0
      %1746 = vmatprep.subr.mxu0 0.0
      %1747 = vmatpush1.msra.mxu0 0.0
      %1748 = vmatprep.subr.mxu0 0.0
      %1749 = vmatpush1.msra.mxu0 0.0
      %1750 = vmatprep.subr.mxu0 0.0
      %1751 = vmatpush1.msra.mxu0 0.0
      %1752 = vmatprep.subr.mxu0 0.0
      %1753 = vmatpush1.msra.mxu0 0.0
      %1754 = vmatprep.subr.mxu0 0.0
      %1755 = vmatpush1.msra.mxu0 0.0
      %1756 = vmatprep.subr.mxu0 0.0
      %1757 = vmatpush1.msra.mxu0 0.0
      %1758 = vmatprep.subr.mxu0 0.0
      %1759 = vmatpush1.msra.mxu0 0.0
      %1760 = vmatprep.subr.mxu0 0.0
      %1761 = vmatpush1.msra.mxu0 0.0
      %1762 = vmatprep.subr.mxu0 0.0
      %1763 = vmatpush1.msra.mxu0 0.0
      %1764 = vmatprep.subr.mxu0 0.0
      %1765 = vmatpush1.msra.mxu0 0.0
      %1766 = vmatprep.subr.mxu0 0.0
      %1767 = vmatpush1.msra.mxu0 0.0
      %1768 = vmatprep.subr.mxu0 0.0
      %1769 = vmatpush1.msra.mxu0 0.0
      %1770 = vmatprep.subr.mxu0 0.0
      %1771 = vmatpush1.msra.mxu0 0.0
      %1772 = vmatprep.subr.mxu0 0.0
      %1773 = vmatpush1.msra.mxu0 0.0
      %1774 = vmatprep.subr.mxu0 0.0
      %1775 = vmatpush1.msra.mxu0 0.0
      %1776 = vmatprep.subr.mxu0 0.0
      %1777 = vmatpush1.msra.mxu0 0.0
      %1778 = vmatprep.subr.mxu0 0.0
      %1779 = vmatpush1.msra.mxu0 0.0
      %1780 = vmatprep.subr.mxu0 0.0
      %1781 = vmatpush1.msra.mxu0 0.0
      %1782 = vmatprep.subr.mxu0 0.0
      %1783 = vmatpush1.msra.mxu0 0.0
      %1784 = vmatprep.subr.mxu0 0.0
      %1785 = vmatpush1.msra.mxu0 0.0
      %1786 = vmatprep.subr.mxu0 0.0
      %1787 = vmatpush1.msra.mxu0 0.0
      %1788 = vmatprep.subr.mxu0 0.0
      %1789 = vmatpush1.msra.mxu0 0.0
      %1790 = vmatprep.subr.mxu0 0.0
      %1791 = vmatpush1.msra.mxu0 0.0
      %1792 = vmatprep.subr.mxu0 0.0
      %1793 = vmatpush1.msra.mxu0 0.0
      %1794 = vmatprep.subr.mxu0 0.0
      %1795 = vmatpush1.msra.mxu0 0.0
      %1796 = vmatprep.subr.mxu0 0.0
      %1797 = vmatpush1.msra.mxu0 0.0
      %1798 = vmatprep.subr.mxu0 0.0
      %1799 = vmatpush1.msra.mxu0 0.0
      %1800 = vmatprep.mubr.f32.mxu0 0.0
      %1801 = vmatmul.mubr.f32.gmra.mrb[0].mxu0 %v1717
      %v1802 = vpop.f32.mrb[0].mxu0
      %v1803 = vadd.f32 0.0, %v1802
      %v1804 = vpop.f32.mrb[0].mxu0
      %1805 = vmatprep.mubr.f32.mxu0 0.0
      %1806 = vmatmul.mubr.f32.gmra.mrb[0].mxu0 %v1719
      %v1807 = vpop.f32.mrb[0].mxu0
      %v1808 = vadd.f32 0.0, %v1807
      %v1809 = vpop.f32.mrb[0].mxu0
      %1810 = vmatprep.mubr.f32.mxu0 0.0
      %1811 = vmatmul.mubr.f32.gmra.mrb[0].mxu0 %v1721
      %v1812 = vpop.f32.mrb[0].mxu0
      %v1813 = vadd.f32 0.0, %v1812
      %v1814 = vpop.f32.mrb[0].mxu0
      %1815 = vmatprep.mubr.f32.mxu0 0.0
      %1816 = vmatmul.mubr.f32.gmra.mrb[0].mxu0 %v1723
      %v1817 = vpop.f32.mrb[0].mxu0
      %v1818 = vadd.f32 0.0, %v1817
      %v1819 = vpop.f32.mrb[0].mxu0
      %1820 = vmatprep.mubr.f32.mxu0 0.0
      %1821 = vmatmul.mubr.f32.gmra.mrb[0].mxu0 %v1725
      %v1822 = vpop.f32.mrb[0].mxu0
      %v1823 = vadd.f32 0.0, %v1822
      %v1824 = vpop.f32.mrb[0].mxu0
      %1825 = vmatprep.mubr.f32.mxu0 0.0
      %1826 = vmatmul.mubr.f32.gmra.mrb[0].mxu0 %v1727
      %v1827 = vpop.f32.mrb[0].mxu0
      %v1828 = vadd.f32 0.0, %v1827
      %v1829 = vpop.f32.mrb[0].mxu0
      %1830 = vmatprep.mubr.f32.mxu0 0.0
      %1831 = vmatmul.mubr.f32.gmra.mrb[0].mxu0 %v1729
      %v1832 = vpop.f32.mrb[0].mxu0
      %v1833 = vadd.f32 0.0, %v1832
      %v1834 = vpop.f32.mrb[0].mxu0
      %1835 = vmatprep.mubr.f32.mxu0 0.0
      %1836 = vmatmul.mubr.f32.gmra.mrb[0].mxu0 %v1731
      %v1837 = vpop.f32.mrb[0].mxu0
      %v1838 = vadd.f32 0.0, %v1837
      %v1839 = vpop.f32.mrb[0].mxu0
      %1840 = vdwg.mxu0
      %v1841 = vadd.f32 %v1674, %v1803
      %v1842 = vadd.f32 %v1675, %v1808
      %v1843 = vadd.f32 %v1676, %v1813
      %v1844 = vadd.f32 %v1677, %v1818
      %v1845 = vadd.f32 %v1678, %v1823
      %v1846 = vadd.f32 %v1679, %v1828
      %v1847 = vadd.f32 %v1680, %v1833
      %v1848 = vadd.f32 %v1681, %v1838
      %s1849 = scalar_lea.vmem %s351, 16
      %v1850 = vld [vmem:[%s1849] sm:$0x3]
      %v1851 = vunpack.c.l.bf16 %v1850
      %v1853 = vsel %vm628, %v500, 0
      %v1856 = vsel %vm628, %v501, 0
      %v1859 = vsel %vm628, %v502, 0
      %v1862 = vsel %vm628, %v503, 0
      %v1865 = vsel %vm628, %v504, 0
      %v1868 = vsel %vm628, %v505, 0
      %v1871 = vsel %vm628, %v506, 0
      %v1874 = vsel %vm628, %v507, 0
      %v1877 = vsel %vm653, %v1851, 0
      %1879 = vmatprep.subr.mxu0 0.0
      %1880 = vmatpush1.msra.mxu0 %v1877
      %1881 = vmatprep.subr.mxu0 0.0
      %1882 = vmatpush1.msra.mxu0 0.0
      %1883 = vmatprep.subr.mxu0 0.0
      %1884 = vmatpush1.msra.mxu0 0.0
      %1885 = vmatprep.subr.mxu0 0.0
      %1886 = vmatpush1.msra.mxu0 0.0
      %1887 = vmatprep.subr.mxu0 0.0
      %1888 = vmatpush1.msra.mxu0 0.0
      %1889 = vmatprep.subr.mxu0 0.0
      %1890 = vmatpush1.msra.mxu0 0.0
      %1891 = vmatprep.subr.mxu0 0.0
      %1892 = vmatpush1.msra.mxu0 0.0
      %1893 = vmatprep.subr.mxu0 0.0
      %1894 = vmatpush1.msra.mxu0 0.0
      %1895 = vmatprep.subr.mxu0 0.0
      %1896 = vmatpush1.msra.mxu0 0.0
      %1897 = vmatprep.subr.mxu0 0.0
      %1898 = vmatpush1.msra.mxu0 0.0
      %1899 = vmatprep.subr.mxu0 0.0
      %1900 = vmatpush1.msra.mxu0 0.0
      %1901 = vmatprep.subr.mxu0 0.0
      %1902 = vmatpush1.msra.mxu0 0.0
      %1903 = vmatprep.subr.mxu0 0.0
      %1904 = vmatpush1.msra.mxu0 0.0
      %1905 = vmatprep.subr.mxu0 0.0
      %1906 = vmatpush1.msra.mxu0 0.0
      %1907 = vmatprep.subr.mxu0 0.0
      %1908 = vmatpush1.msra.mxu0 0.0
      %1909 = vmatprep.subr.mxu0 0.0
      %1910 = vmatpush1.msra.mxu0 0.0
      %1911 = vmatprep.subr.mxu0 0.0
      %1912 = vmatpush1.msra.mxu0 0.0
      %1913 = vmatprep.subr.mxu0 0.0
      %1914 = vmatpush1.msra.mxu0 0.0
      %1915 = vmatprep.subr.mxu0 0.0
      %1916 = vmatpush1.msra.mxu0 0.0
      %1917 = vmatprep.subr.mxu0 0.0
      %1918 = vmatpush1.msra.mxu0 0.0
      %1919 = vmatprep.subr.mxu0 0.0
      %1920 = vmatpush1.msra.mxu0 0.0
      %1921 = vmatprep.subr.mxu0 0.0
      %1922 = vmatpush1.msra.mxu0 0.0
      %1923 = vmatprep.subr.mxu0 0.0
      %1924 = vmatpush1.msra.mxu0 0.0
      %1925 = vmatprep.subr.mxu0 0.0
      %1926 = vmatpush1.msra.mxu0 0.0
      %1927 = vmatprep.subr.mxu0 0.0
      %1928 = vmatpush1.msra.mxu0 0.0
      %1929 = vmatprep.subr.mxu0 0.0
      %1930 = vmatpush1.msra.mxu0 0.0
      %1931 = vmatprep.subr.mxu0 0.0
      %1932 = vmatpush1.msra.mxu0 0.0
      %1933 = vmatprep.subr.mxu0 0.0
      %1934 = vmatpush1.msra.mxu0 0.0
      %1935 = vmatprep.subr.mxu0 0.0
      %1936 = vmatpush1.msra.mxu0 0.0
      %1937 = vmatprep.subr.mxu0 0.0
      %1938 = vmatpush1.msra.mxu0 0.0
      %1939 = vmatprep.subr.mxu0 0.0
      %1940 = vmatpush1.msra.mxu0 0.0
      %1941 = vmatprep.subr.mxu0 0.0
      %1942 = vmatpush1.msra.mxu0 0.0
      %1943 = vmatprep.mubr.f32.mxu0 0.0
      %1944 = vmatmul.mubr.f32.gmra.mrb[0].mxu0 %v1853
      %v1945 = vpop.f32.mrb[0].mxu0
      %v1946 = vadd.f32 0.0, %v1945
      %v1947 = vpop.f32.mrb[0].mxu0
      %1948 = vmatprep.mubr.f32.mxu0 0.0
      %1949 = vmatmul.mubr.f32.gmra.mrb[0].mxu0 %v1856
      %v1950 = vpop.f32.mrb[0].mxu0
      %v1951 = vadd.f32 0.0, %v1950
      %v1952 = vpop.f32.mrb[0].mxu0
      %1953 = vmatprep.mubr.f32.mxu0 0.0
      %1954 = vmatmul.mubr.f32.gmra.mrb[0].mxu0 %v1859
      %v1955 = vpop.f32.mrb[0].mxu0
      %v1956 = vadd.f32 0.0, %v1955
      %v1957 = vpop.f32.mrb[0].mxu0
      %1958 = vmatprep.mubr.f32.mxu0 0.0
      %1959 = vmatmul.mubr.f32.gmra.mrb[0].mxu0 %v1862
      %v1960 = vpop.f32.mrb[0].mxu0
      %v1961 = vadd.f32 0.0, %v1960
      %v1962 = vpop.f32.mrb[0].mxu0
      %1963 = vmatprep.mubr.f32.mxu0 0.0
      %1964 = vmatmul.mubr.f32.gmra.mrb[0].mxu0 %v1865
      %v1965 = vpop.f32.mrb[0].mxu0
      %v1966 = vadd.f32 0.0, %v1965
      %v1967 = vpop.f32.mrb[0].mxu0
      %1968 = vmatprep.mubr.f32.mxu0 0.0
      %1969 = vmatmul.mubr.f32.gmra.mrb[0].mxu0 %v1868
      %v1970 = vpop.f32.mrb[0].mxu0
      %v1971 = vadd.f32 0.0, %v1970
      %v1972 = vpop.f32.mrb[0].mxu0
      %1973 = vmatprep.mubr.f32.mxu0 0.0
      %1974 = vmatmul.mubr.f32.gmra.mrb[0].mxu0 %v1871
      %v1975 = vpop.f32.mrb[0].mxu0
      %v1976 = vadd.f32 0.0, %v1975
      %v1977 = vpop.f32.mrb[0].mxu0
      %1978 = vmatprep.mubr.f32.mxu0 0.0
      %1979 = vmatmul.mubr.f32.gmra.mrb[0].mxu0 %v1874
      %v1980 = vpop.f32.mrb[0].mxu0
      %v1981 = vadd.f32 0.0, %v1980
      %v1982 = vpop.f32.mrb[0].mxu0
      %1983 = vdwg.mxu0
      %v1984 = vadd.f32 %v1841, %v1946
      %v1985 = vadd.f32 %v1842, %v1951
      %v1986 = vadd.f32 %v1843, %v1956
      %v1987 = vadd.f32 %v1844, %v1961
      %v1988 = vadd.f32 %v1845, %v1966
      %v1989 = vadd.f32 %v1846, %v1971
      %v1990 = vadd.f32 %v1847, %v1976
      %v1991 = vadd.f32 %v1848, %v1981
      %s1992 = scalar_lea.vmem %s351, 18
      %v1993 = vld [vmem:[%s1992] sm:$0x3]
      %v1994 = vunpack.c.l.bf16 %v1993
      %v1996 = vsel %vm628, %v517, 0
      %v1999 = vsel %vm628, %v518, 0
      %v2002 = vsel %vm628, %v519, 0
      %v2005 = vsel %vm628, %v520, 0
      %v2008 = vsel %vm628, %v521, 0
      %v2011 = vsel %vm628, %v522, 0
      %v2014 = vsel %vm628, %v523, 0
      %v2017 = vsel %vm628, %v524, 0
      %v2020 = vsel %vm653, %v1994, 0
      %2022 = vmatprep.subr.mxu0 0.0
      %2023 = vmatpush1.msra.mxu0 %v2020
      %2024 = vmatprep.subr.mxu0 0.0
      %2025 = vmatpush1.msra.mxu0 0.0
      %2026 = vmatprep.subr.mxu0 0.0
      %2027 = vmatpush1.msra.mxu0 0.0
      %2028 = vmatprep.subr.mxu0 0.0
      %2029 = vmatpush1.msra.mxu0 0.0
      %2030 = vmatprep.subr.mxu0 0.0
      %2031 = vmatpush1.msra.mxu0 0.0
      %2032 = vmatprep.subr.mxu0 0.0
      %2033 = vmatpush1.msra.mxu0 0.0
      %2034 = vmatprep.subr.mxu0 0.0
      %2035 = vmatpush1.msra.mxu0 0.0
      %2036 = vmatprep.subr.mxu0 0.0
      %2037 = vmatpush1.msra.mxu0 0.0
      %2038 = vmatprep.subr.mxu0 0.0
      %2039 = vmatpush1.msra.mxu0 0.0
      %2040 = vmatprep.subr.mxu0 0.0
      %2041 = vmatpush1.msra.mxu0 0.0
      %2042 = vmatprep.subr.mxu0 0.0
      %2043 = vmatpush1.msra.mxu0 0.0
      %2044 = vmatprep.subr.mxu0 0.0
      %2045 = vmatpush1.msra.mxu0 0.0
      %2046 = vmatprep.subr.mxu0 0.0
      %2047 = vmatpush1.msra.mxu0 0.0
      %2048 = vmatprep.subr.mxu0 0.0
      %2049 = vmatpush1.msra.mxu0 0.0
      %2050 = vmatprep.subr.mxu0 0.0
      %2051 = vmatpush1.msra.mxu0 0.0
      %2052 = vmatprep.subr.mxu0 0.0
      %2053 = vmatpush1.msra.mxu0 0.0
      %2054 = vmatprep.subr.mxu0 0.0
      %2055 = vmatpush1.msra.mxu0 0.0
      %2056 = vmatprep.subr.mxu0 0.0
      %2057 = vmatpush1.msra.mxu0 0.0
      %2058 = vmatprep.subr.mxu0 0.0
      %2059 = vmatpush1.msra.mxu0 0.0
      %2060 = vmatprep.subr.mxu0 0.0
      %2061 = vmatpush1.msra.mxu0 0.0
      %2062 = vmatprep.subr.mxu0 0.0
      %2063 = vmatpush1.msra.mxu0 0.0
      %2064 = vmatprep.subr.mxu0 0.0
      %2065 = vmatpush1.msra.mxu0 0.0
      %2066 = vmatprep.subr.mxu0 0.0
      %2067 = vmatpush1.msra.mxu0 0.0
      %2068 = vmatprep.subr.mxu0 0.0
      %2069 = vmatpush1.msra.mxu0 0.0
      %2070 = vmatprep.subr.mxu0 0.0
      %2071 = vmatpush1.msra.mxu0 0.0
      %2072 = vmatprep.subr.mxu0 0.0
      %2073 = vmatpush1.msra.mxu0 0.0
      %2074 = vmatprep.subr.mxu0 0.0
      %2075 = vmatpush1.msra.mxu0 0.0
      %2076 = vmatprep.subr.mxu0 0.0
      %2077 = vmatpush1.msra.mxu0 0.0
      %2078 = vmatprep.subr.mxu0 0.0
      %2079 = vmatpush1.msra.mxu0 0.0
      %2080 = vmatprep.subr.mxu0 0.0
      %2081 = vmatpush1.msra.mxu0 0.0
      %2082 = vmatprep.subr.mxu0 0.0
      %2083 = vmatpush1.msra.mxu0 0.0
      %2084 = vmatprep.subr.mxu0 0.0
      %2085 = vmatpush1.msra.mxu0 0.0
      %2086 = vmatprep.mubr.f32.mxu0 0.0
      %2087 = vmatmul.mubr.f32.gmra.mrb[0].mxu0 %v1996
      %v2088 = vpop.f32.mrb[0].mxu0
      %v2089 = vadd.f32 0.0, %v2088
      %v2090 = vpop.f32.mrb[0].mxu0
      %2091 = vmatprep.mubr.f32.mxu0 0.0
      %2092 = vmatmul.mubr.f32.gmra.mrb[0].mxu0 %v1999
      %v2093 = vpop.f32.mrb[0].mxu0
      %v2094 = vadd.f32 0.0, %v2093
      %v2095 = vpop.f32.mrb[0].mxu0
      %2096 = vmatprep.mubr.f32.mxu0 0.0
      %2097 = vmatmul.mubr.f32.gmra.mrb[0].mxu0 %v2002
      %v2098 = vpop.f32.mrb[0].mxu0
      %v2099 = vadd.f32 0.0, %v2098
      %v2100 = vpop.f32.mrb[0].mxu0
      %2101 = vmatprep.mubr.f32.mxu0 0.0
      %2102 = vmatmul.mubr.f32.gmra.mrb[0].mxu0 %v2005
      %v2103 = vpop.f32.mrb[0].mxu0
      %v2104 = vadd.f32 0.0, %v2103
      %v2105 = vpop.f32.mrb[0].mxu0
      %2106 = vmatprep.mubr.f32.mxu0 0.0
      %2107 = vmatmul.mubr.f32.gmra.mrb[0].mxu0 %v2008
      %v2108 = vpop.f32.mrb[0].mxu0
      %v2109 = vadd.f32 0.0, %v2108
      %v2110 = vpop.f32.mrb[0].mxu0
      %2111 = vmatprep.mubr.f32.mxu0 0.0
      %2112 = vmatmul.mubr.f32.gmra.mrb[0].mxu0 %v2011
      %v2113 = vpop.f32.mrb[0].mxu0
      %v2114 = vadd.f32 0.0, %v2113
      %v2115 = vpop.f32.mrb[0].mxu0
      %2116 = vmatprep.mubr.f32.mxu0 0.0
      %2117 = vmatmul.mubr.f32.gmra.mrb[0].mxu0 %v2014
      %v2118 = vpop.f32.mrb[0].mxu0
      %v2119 = vadd.f32 0.0, %v2118
      %v2120 = vpop.f32.mrb[0].mxu0
      %2121 = vmatprep.mubr.f32.mxu0 0.0
      %2122 = vmatmul.mubr.f32.gmra.mrb[0].mxu0 %v2017
      %v2123 = vpop.f32.mrb[0].mxu0
      %v2124 = vadd.f32 0.0, %v2123
      %v2125 = vpop.f32.mrb[0].mxu0
      %2126 = vdwg.mxu0
      %v2127 = vadd.f32 %v1984, %v2089
      %v2128 = vadd.f32 %v1985, %v2094
      %v2129 = vadd.f32 %v1986, %v2099
      %v2130 = vadd.f32 %v1987, %v2104
      %v2131 = vadd.f32 %v1988, %v2109
      %v2132 = vadd.f32 %v1989, %v2114
      %v2133 = vadd.f32 %v1990, %v2119
      %v2134 = vadd.f32 %v1991, %v2124
      %v2143 = vrot.slane %v500, 1
      %v2144 = vrot.slane %v533, 1
      %v2145 = vsel %vm902, %v2143, %v2144
      %v2146 = vrot.slane %v501, 1
      %v2147 = vrot.slane %v534, 1
      %v2148 = vsel %vm902, %v2146, %v2147
      %v2149 = vrot.slane %v502, 1
      %v2150 = vrot.slane %v535, 1
      %v2151 = vsel %vm902, %v2149, %v2150
      %v2152 = vrot.slane %v503, 1
      %v2153 = vrot.slane %v536, 1
      %v2154 = vsel %vm902, %v2152, %v2153
      %v2155 = vrot.slane %v504, 1
      %v2156 = vrot.slane %v537, 1
      %v2157 = vsel %vm902, %v2155, %v2156
      %v2158 = vrot.slane %v505, 1
      %v2159 = vrot.slane %v538, 1
      %v2160 = vsel %vm902, %v2158, %v2159
      %v2161 = vrot.slane %v506, 1
      %v2162 = vrot.slane %v539, 1
      %v2163 = vsel %vm902, %v2161, %v2162
      %v2164 = vrot.slane %v507, 1
      %v2165 = vrot.slane %v540, 1
      %v2166 = vsel %vm902, %v2164, %v2165
      %s2167 = scalar_lea.vmem %s351, 20
      %v2168 = vld [vmem:[%s2167] sm:$0x3]
      %v2169 = vunpack.c.l.bf16 %v2168
      %v2170 = vsel %vm628, %v2145, 0
      %v2172 = vsel %vm628, %v2148, 0
      %v2174 = vsel %vm628, %v2151, 0
      %v2176 = vsel %vm628, %v2154, 0
      %v2178 = vsel %vm628, %v2157, 0
      %v2180 = vsel %vm628, %v2160, 0
      %v2182 = vsel %vm628, %v2163, 0
      %v2184 = vsel %vm628, %v2166, 0
      %v2187 = vsel %vm653, %v2169, 0
      %2189 = vmatprep.subr.mxu0 0.0
      %2190 = vmatpush1.msra.mxu0 %v2187
      %2191 = vmatprep.subr.mxu0 0.0
      %2192 = vmatpush1.msra.mxu0 0.0
      %2193 = vmatprep.subr.mxu0 0.0
      %2194 = vmatpush1.msra.mxu0 0.0
      %2195 = vmatprep.subr.mxu0 0.0
      %2196 = vmatpush1.msra.mxu0 0.0
      %2197 = vmatprep.subr.mxu0 0.0
      %2198 = vmatpush1.msra.mxu0 0.0
      %2199 = vmatprep.subr.mxu0 0.0
      %2200 = vmatpush1.msra.mxu0 0.0
      %2201 = vmatprep.subr.mxu0 0.0
      %2202 = vmatpush1.msra.mxu0 0.0
      %2203 = vmatprep.subr.mxu0 0.0
      %2204 = vmatpush1.msra.mxu0 0.0
      %2205 = vmatprep.subr.mxu0 0.0
      %2206 = vmatpush1.msra.mxu0 0.0
      %2207 = vmatprep.subr.mxu0 0.0
      %2208 = vmatpush1.msra.mxu0 0.0
      %2209 = vmatprep.subr.mxu0 0.0
      %2210 = vmatpush1.msra.mxu0 0.0
      %2211 = vmatprep.subr.mxu0 0.0
      %2212 = vmatpush1.msra.mxu0 0.0
      %2213 = vmatprep.subr.mxu0 0.0
      %2214 = vmatpush1.msra.mxu0 0.0
      %2215 = vmatprep.subr.mxu0 0.0
      %2216 = vmatpush1.msra.mxu0 0.0
      %2217 = vmatprep.subr.mxu0 0.0
      %2218 = vmatpush1.msra.mxu0 0.0
      %2219 = vmatprep.subr.mxu0 0.0
      %2220 = vmatpush1.msra.mxu0 0.0
      %2221 = vmatprep.subr.mxu0 0.0
      %2222 = vmatpush1.msra.mxu0 0.0
      %2223 = vmatprep.subr.mxu0 0.0
      %2224 = vmatpush1.msra.mxu0 0.0
      %2225 = vmatprep.subr.mxu0 0.0
      %2226 = vmatpush1.msra.mxu0 0.0
      %2227 = vmatprep.subr.mxu0 0.0
      %2228 = vmatpush1.msra.mxu0 0.0
      %2229 = vmatprep.subr.mxu0 0.0
      %2230 = vmatpush1.msra.mxu0 0.0
      %2231 = vmatprep.subr.mxu0 0.0
      %2232 = vmatpush1.msra.mxu0 0.0
      %2233 = vmatprep.subr.mxu0 0.0
      %2234 = vmatpush1.msra.mxu0 0.0
      %2235 = vmatprep.subr.mxu0 0.0
      %2236 = vmatpush1.msra.mxu0 0.0
      %2237 = vmatprep.subr.mxu0 0.0
      %2238 = vmatpush1.msra.mxu0 0.0
      %2239 = vmatprep.subr.mxu0 0.0
      %2240 = vmatpush1.msra.mxu0 0.0
      %2241 = vmatprep.subr.mxu0 0.0
      %2242 = vmatpush1.msra.mxu0 0.0
      %2243 = vmatprep.subr.mxu0 0.0
      %2244 = vmatpush1.msra.mxu0 0.0
      %2245 = vmatprep.subr.mxu0 0.0
      %2246 = vmatpush1.msra.mxu0 0.0
      %2247 = vmatprep.subr.mxu0 0.0
      %2248 = vmatpush1.msra.mxu0 0.0
      %2249 = vmatprep.subr.mxu0 0.0
      %2250 = vmatpush1.msra.mxu0 0.0
      %2251 = vmatprep.subr.mxu0 0.0
      %2252 = vmatpush1.msra.mxu0 0.0
      %2253 = vmatprep.mubr.f32.mxu0 0.0
      %2254 = vmatmul.mubr.f32.gmra.mrb[0].mxu0 %v2170
      %v2255 = vpop.f32.mrb[0].mxu0
      %v2256 = vadd.f32 0.0, %v2255
      %v2257 = vpop.f32.mrb[0].mxu0
      %2258 = vmatprep.mubr.f32.mxu0 0.0
      %2259 = vmatmul.mubr.f32.gmra.mrb[0].mxu0 %v2172
      %v2260 = vpop.f32.mrb[0].mxu0
      %v2261 = vadd.f32 0.0, %v2260
      %v2262 = vpop.f32.mrb[0].mxu0
      %2263 = vmatprep.mubr.f32.mxu0 0.0
      %2264 = vmatmul.mubr.f32.gmra.mrb[0].mxu0 %v2174
      %v2265 = vpop.f32.mrb[0].mxu0
      %v2266 = vadd.f32 0.0, %v2265
      %v2267 = vpop.f32.mrb[0].mxu0
      %2268 = vmatprep.mubr.f32.mxu0 0.0
      %2269 = vmatmul.mubr.f32.gmra.mrb[0].mxu0 %v2176
      %v2270 = vpop.f32.mrb[0].mxu0
      %v2271 = vadd.f32 0.0, %v2270
      %v2272 = vpop.f32.mrb[0].mxu0
      %2273 = vmatprep.mubr.f32.mxu0 0.0
      %2274 = vmatmul.mubr.f32.gmra.mrb[0].mxu0 %v2178
      %v2275 = vpop.f32.mrb[0].mxu0
      %v2276 = vadd.f32 0.0, %v2275
      %v2277 = vpop.f32.mrb[0].mxu0
      %2278 = vmatprep.mubr.f32.mxu0 0.0
      %2279 = vmatmul.mubr.f32.gmra.mrb[0].mxu0 %v2180
      %v2280 = vpop.f32.mrb[0].mxu0
      %v2281 = vadd.f32 0.0, %v2280
      %v2282 = vpop.f32.mrb[0].mxu0
      %2283 = vmatprep.mubr.f32.mxu0 0.0
      %2284 = vmatmul.mubr.f32.gmra.mrb[0].mxu0 %v2182
      %v2285 = vpop.f32.mrb[0].mxu0
      %v2286 = vadd.f32 0.0, %v2285
      %v2287 = vpop.f32.mrb[0].mxu0
      %2288 = vmatprep.mubr.f32.mxu0 0.0
      %2289 = vmatmul.mubr.f32.gmra.mrb[0].mxu0 %v2184
      %v2290 = vpop.f32.mrb[0].mxu0
      %v2291 = vadd.f32 0.0, %v2290
      %v2292 = vpop.f32.mrb[0].mxu0
      %2293 = vdwg.mxu0
      %v2294 = vadd.f32 %v2127, %v2256
      %v2295 = vadd.f32 %v2128, %v2261
      %v2296 = vadd.f32 %v2129, %v2266
      %v2297 = vadd.f32 %v2130, %v2271
      %v2298 = vadd.f32 %v2131, %v2276
      %v2299 = vadd.f32 %v2132, %v2281
      %v2300 = vadd.f32 %v2133, %v2286
      %v2301 = vadd.f32 %v2134, %v2291
      %v2310 = vrot.slane %v517, 1
      %v2311 = vrot.slane %v549, 1
      %v2312 = vsel %vm902, %v2310, %v2311
      %v2313 = vrot.slane %v518, 1
      %v2314 = vrot.slane %v550, 1
      %v2315 = vsel %vm902, %v2313, %v2314
      %v2316 = vrot.slane %v519, 1
      %v2317 = vrot.slane %v551, 1
      %v2318 = vsel %vm902, %v2316, %v2317
      %v2319 = vrot.slane %v520, 1
      %v2320 = vrot.slane %v552, 1
      %v2321 = vsel %vm902, %v2319, %v2320
      %v2322 = vrot.slane %v521, 1
      %v2323 = vrot.slane %v553, 1
      %v2324 = vsel %vm902, %v2322, %v2323
      %v2325 = vrot.slane %v522, 1
      %v2326 = vrot.slane %v554, 1
      %v2327 = vsel %vm902, %v2325, %v2326
      %v2328 = vrot.slane %v523, 1
      %v2329 = vrot.slane %v555, 1
      %v2330 = vsel %vm902, %v2328, %v2329
      %v2331 = vrot.slane %v524, 1
      %v2332 = vrot.slane %v556, 1
      %v2333 = vsel %vm902, %v2331, %v2332
      %s2334 = scalar_lea.vmem %s351, 22
      %v2335 = vld [vmem:[%s2334] sm:$0x3]
      %v2336 = vunpack.c.l.bf16 %v2335
      %v2337 = vsel %vm628, %v2312, 0
      %v2339 = vsel %vm628, %v2315, 0
      %v2341 = vsel %vm628, %v2318, 0
      %v2343 = vsel %vm628, %v2321, 0
      %v2345 = vsel %vm628, %v2324, 0
      %v2347 = vsel %vm628, %v2327, 0
      %v2349 = vsel %vm628, %v2330, 0
      %v2351 = vsel %vm628, %v2333, 0
      %v2354 = vsel %vm653, %v2336, 0
      %2356 = vmatprep.subr.mxu0 0.0
      %2357 = vmatpush1.msra.mxu0 %v2354
      %2358 = vmatprep.subr.mxu0 0.0
      %2359 = vmatpush1.msra.mxu0 0.0
      %2360 = vmatprep.subr.mxu0 0.0
      %2361 = vmatpush1.msra.mxu0 0.0
      %2362 = vmatprep.subr.mxu0 0.0
      %2363 = vmatpush1.msra.mxu0 0.0
      %2364 = vmatprep.subr.mxu0 0.0
      %2365 = vmatpush1.msra.mxu0 0.0
      %2366 = vmatprep.subr.mxu0 0.0
      %2367 = vmatpush1.msra.mxu0 0.0
      %2368 = vmatprep.subr.mxu0 0.0
      %2369 = vmatpush1.msra.mxu0 0.0
      %2370 = vmatprep.subr.mxu0 0.0
      %2371 = vmatpush1.msra.mxu0 0.0
      %2372 = vmatprep.subr.mxu0 0.0
      %2373 = vmatpush1.msra.mxu0 0.0
      %2374 = vmatprep.subr.mxu0 0.0
      %2375 = vmatpush1.msra.mxu0 0.0
      %2376 = vmatprep.subr.mxu0 0.0
      %2377 = vmatpush1.msra.mxu0 0.0
      %2378 = vmatprep.subr.mxu0 0.0
      %2379 = vmatpush1.msra.mxu0 0.0
      %2380 = vmatprep.subr.mxu0 0.0
      %2381 = vmatpush1.msra.mxu0 0.0
      %2382 = vmatprep.subr.mxu0 0.0
      %2383 = vmatpush1.msra.mxu0 0.0
      %2384 = vmatprep.subr.mxu0 0.0
      %2385 = vmatpush1.msra.mxu0 0.0
      %2386 = vmatprep.subr.mxu0 0.0
      %2387 = vmatpush1.msra.mxu0 0.0
      %2388 = vmatprep.subr.mxu0 0.0
      %2389 = vmatpush1.msra.mxu0 0.0
      %2390 = vmatprep.subr.mxu0 0.0
      %2391 = vmatpush1.msra.mxu0 0.0
      %2392 = vmatprep.subr.mxu0 0.0
      %2393 = vmatpush1.msra.mxu0 0.0
      %2394 = vmatprep.subr.mxu0 0.0
      %2395 = vmatpush1.msra.mxu0 0.0
      %2396 = vmatprep.subr.mxu0 0.0
      %2397 = vmatpush1.msra.mxu0 0.0
      %2398 = vmatprep.subr.mxu0 0.0
      %2399 = vmatpush1.msra.mxu0 0.0
      %2400 = vmatprep.subr.mxu0 0.0
      %2401 = vmatpush1.msra.mxu0 0.0
      %2402 = vmatprep.subr.mxu0 0.0
      %2403 = vmatpush1.msra.mxu0 0.0
      %2404 = vmatprep.subr.mxu0 0.0
      %2405 = vmatpush1.msra.mxu0 0.0
      %2406 = vmatprep.subr.mxu0 0.0
      %2407 = vmatpush1.msra.mxu0 0.0
      %2408 = vmatprep.subr.mxu0 0.0
      %2409 = vmatpush1.msra.mxu0 0.0
      %2410 = vmatprep.subr.mxu0 0.0
      %2411 = vmatpush1.msra.mxu0 0.0
      %2412 = vmatprep.subr.mxu0 0.0
      %2413 = vmatpush1.msra.mxu0 0.0
      %2414 = vmatprep.subr.mxu0 0.0
      %2415 = vmatpush1.msra.mxu0 0.0
      %2416 = vmatprep.subr.mxu0 0.0
      %2417 = vmatpush1.msra.mxu0 0.0
      %2418 = vmatprep.subr.mxu0 0.0
      %2419 = vmatpush1.msra.mxu0 0.0
      %2420 = vmatprep.mubr.f32.mxu0 0.0
      %2421 = vmatmul.mubr.f32.gmra.mrb[0].mxu0 %v2337
      %v2422 = vpop.f32.mrb[0].mxu0
      %v2423 = vadd.f32 0.0, %v2422
      %v2424 = vpop.f32.mrb[0].mxu0
      %2425 = vmatprep.mubr.f32.mxu0 0.0
      %2426 = vmatmul.mubr.f32.gmra.mrb[0].mxu0 %v2339
      %v2427 = vpop.f32.mrb[0].mxu0
      %v2428 = vadd.f32 0.0, %v2427
      %v2429 = vpop.f32.mrb[0].mxu0
      %2430 = vmatprep.mubr.f32.mxu0 0.0
      %2431 = vmatmul.mubr.f32.gmra.mrb[0].mxu0 %v2341
      %v2432 = vpop.f32.mrb[0].mxu0
      %v2433 = vadd.f32 0.0, %v2432
      %v2434 = vpop.f32.mrb[0].mxu0
      %2435 = vmatprep.mubr.f32.mxu0 0.0
      %2436 = vmatmul.mubr.f32.gmra.mrb[0].mxu0 %v2343
      %v2437 = vpop.f32.mrb[0].mxu0
      %v2438 = vadd.f32 0.0, %v2437
      %v2439 = vpop.f32.mrb[0].mxu0
      %2440 = vmatprep.mubr.f32.mxu0 0.0
      %2441 = vmatmul.mubr.f32.gmra.mrb[0].mxu0 %v2345
      %v2442 = vpop.f32.mrb[0].mxu0
      %v2443 = vadd.f32 0.0, %v2442
      %v2444 = vpop.f32.mrb[0].mxu0
      %2445 = vmatprep.mubr.f32.mxu0 0.0
      %2446 = vmatmul.mubr.f32.gmra.mrb[0].mxu0 %v2347
      %v2447 = vpop.f32.mrb[0].mxu0
      %v2448 = vadd.f32 0.0, %v2447
      %v2449 = vpop.f32.mrb[0].mxu0
      %2450 = vmatprep.mubr.f32.mxu0 0.0
      %2451 = vmatmul.mubr.f32.gmra.mrb[0].mxu0 %v2349
      %v2452 = vpop.f32.mrb[0].mxu0
      %v2453 = vadd.f32 0.0, %v2452
      %v2454 = vpop.f32.mrb[0].mxu0
      %2455 = vmatprep.mubr.f32.mxu0 0.0
      %2456 = vmatmul.mubr.f32.gmra.mrb[0].mxu0 %v2351
      %v2457 = vpop.f32.mrb[0].mxu0
      %v2458 = vadd.f32 0.0, %v2457
      %v2459 = vpop.f32.mrb[0].mxu0
      %2460 = vdwg.mxu0
      %v2461 = vadd.f32 %v2294, %v2423
      %v2462 = vadd.f32 %v2295, %v2428
      %v2463 = vadd.f32 %v2296, %v2433
      %v2464 = vadd.f32 %v2297, %v2438
      %v2465 = vadd.f32 %v2298, %v2443
      %v2466 = vadd.f32 %v2299, %v2448
      %v2467 = vadd.f32 %v2300, %v2453
      %v2468 = vadd.f32 %v2301, %v2458
      %s2469 = scalar_lea.vmem %s351, 24
      %v2470 = vld [vmem:[%s2469] sm:$0x3]
      %v2471 = vunpack.c.l.bf16 %v2470
      %v2473 = vsel %vm628, %v566, 0
      %v2476 = vsel %vm628, %v567, 0
      %v2479 = vsel %vm628, %v568, 0
      %v2482 = vsel %vm628, %v569, 0
      %v2485 = vsel %vm628, %v570, 0
      %v2488 = vsel %vm628, %v571, 0
      %v2491 = vsel %vm628, %v572, 0
      %v2494 = vsel %vm628, %v573, 0
      %v2497 = vsel %vm653, %v2471, 0
      %2499 = vmatprep.subr.mxu0 0.0
      %2500 = vmatpush1.msra.mxu0 %v2497
      %2501 = vmatprep.subr.mxu0 0.0
      %2502 = vmatpush1.msra.mxu0 0.0
      %2503 = vmatprep.subr.mxu0 0.0
      %2504 = vmatpush1.msra.mxu0 0.0
      %2505 = vmatprep.subr.mxu0 0.0
      %2506 = vmatpush1.msra.mxu0 0.0
      %2507 = vmatprep.subr.mxu0 0.0
      %2508 = vmatpush1.msra.mxu0 0.0
      %2509 = vmatprep.subr.mxu0 0.0
      %2510 = vmatpush1.msra.mxu0 0.0
      %2511 = vmatprep.subr.mxu0 0.0
      %2512 = vmatpush1.msra.mxu0 0.0
      %2513 = vmatprep.subr.mxu0 0.0
      %2514 = vmatpush1.msra.mxu0 0.0
      %2515 = vmatprep.subr.mxu0 0.0
      %2516 = vmatpush1.msra.mxu0 0.0
      %2517 = vmatprep.subr.mxu0 0.0
      %2518 = vmatpush1.msra.mxu0 0.0
      %2519 = vmatprep.subr.mxu0 0.0
      %2520 = vmatpush1.msra.mxu0 0.0
      %2521 = vmatprep.subr.mxu0 0.0
      %2522 = vmatpush1.msra.mxu0 0.0
      %2523 = vmatprep.subr.mxu0 0.0
      %2524 = vmatpush1.msra.mxu0 0.0
      %2525 = vmatprep.subr.mxu0 0.0
      %2526 = vmatpush1.msra.mxu0 0.0
      %2527 = vmatprep.subr.mxu0 0.0
      %2528 = vmatpush1.msra.mxu0 0.0
      %2529 = vmatprep.subr.mxu0 0.0
      %2530 = vmatpush1.msra.mxu0 0.0
      %2531 = vmatprep.subr.mxu0 0.0
      %2532 = vmatpush1.msra.mxu0 0.0
      %2533 = vmatprep.subr.mxu0 0.0
      %2534 = vmatpush1.msra.mxu0 0.0
      %2535 = vmatprep.subr.mxu0 0.0
      %2536 = vmatpush1.msra.mxu0 0.0
      %2537 = vmatprep.subr.mxu0 0.0
      %2538 = vmatpush1.msra.mxu0 0.0
      %2539 = vmatprep.subr.mxu0 0.0
      %2540 = vmatpush1.msra.mxu0 0.0
      %2541 = vmatprep.subr.mxu0 0.0
      %2542 = vmatpush1.msra.mxu0 0.0
      %2543 = vmatprep.subr.mxu0 0.0
      %2544 = vmatpush1.msra.mxu0 0.0
      %2545 = vmatprep.subr.mxu0 0.0
      %2546 = vmatpush1.msra.mxu0 0.0
      %2547 = vmatprep.subr.mxu0 0.0
      %2548 = vmatpush1.msra.mxu0 0.0
      %2549 = vmatprep.subr.mxu0 0.0
      %2550 = vmatpush1.msra.mxu0 0.0
      %2551 = vmatprep.subr.mxu0 0.0
      %2552 = vmatpush1.msra.mxu0 0.0
      %2553 = vmatprep.subr.mxu0 0.0
      %2554 = vmatpush1.msra.mxu0 0.0
      %2555 = vmatprep.subr.mxu0 0.0
      %2556 = vmatpush1.msra.mxu0 0.0
      %2557 = vmatprep.subr.mxu0 0.0
      %2558 = vmatpush1.msra.mxu0 0.0
      %2559 = vmatprep.subr.mxu0 0.0
      %2560 = vmatpush1.msra.mxu0 0.0
      %2561 = vmatprep.subr.mxu0 0.0
      %2562 = vmatpush1.msra.mxu0 0.0
      %2563 = vmatprep.mubr.f32.mxu0 0.0
      %2564 = vmatmul.mubr.f32.gmra.mrb[0].mxu0 %v2473
      %v2565 = vpop.f32.mrb[0].mxu0
      %v2566 = vadd.f32 0.0, %v2565
      %v2567 = vpop.f32.mrb[0].mxu0
      %2568 = vmatprep.mubr.f32.mxu0 0.0
      %2569 = vmatmul.mubr.f32.gmra.mrb[0].mxu0 %v2476
      %v2570 = vpop.f32.mrb[0].mxu0
      %v2571 = vadd.f32 0.0, %v2570
      %v2572 = vpop.f32.mrb[0].mxu0
      %2573 = vmatprep.mubr.f32.mxu0 0.0
      %2574 = vmatmul.mubr.f32.gmra.mrb[0].mxu0 %v2479
      %v2575 = vpop.f32.mrb[0].mxu0
      %v2576 = vadd.f32 0.0, %v2575
      %v2577 = vpop.f32.mrb[0].mxu0
      %2578 = vmatprep.mubr.f32.mxu0 0.0
      %2579 = vmatmul.mubr.f32.gmra.mrb[0].mxu0 %v2482
      %v2580 = vpop.f32.mrb[0].mxu0
      %v2581 = vadd.f32 0.0, %v2580
      %v2582 = vpop.f32.mrb[0].mxu0
      %2583 = vmatprep.mubr.f32.mxu0 0.0
      %2584 = vmatmul.mubr.f32.gmra.mrb[0].mxu0 %v2485
      %v2585 = vpop.f32.mrb[0].mxu0
      %v2586 = vadd.f32 0.0, %v2585
      %v2587 = vpop.f32.mrb[0].mxu0
      %2588 = vmatprep.mubr.f32.mxu0 0.0
      %2589 = vmatmul.mubr.f32.gmra.mrb[0].mxu0 %v2488
      %v2590 = vpop.f32.mrb[0].mxu0
      %v2591 = vadd.f32 0.0, %v2590
      %v2592 = vpop.f32.mrb[0].mxu0
      %2593 = vmatprep.mubr.f32.mxu0 0.0
      %2594 = vmatmul.mubr.f32.gmra.mrb[0].mxu0 %v2491
      %v2595 = vpop.f32.mrb[0].mxu0
      %v2596 = vadd.f32 0.0, %v2595
      %v2597 = vpop.f32.mrb[0].mxu0
      %2598 = vmatprep.mubr.f32.mxu0 0.0
      %2599 = vmatmul.mubr.f32.gmra.mrb[0].mxu0 %v2494
      %v2600 = vpop.f32.mrb[0].mxu0
      %v2601 = vadd.f32 0.0, %v2600
      %v2602 = vpop.f32.mrb[0].mxu0
      %2603 = vdwg.mxu0
      %v2604 = vadd.f32 %v2461, %v2566
      %v2605 = vadd.f32 %v2462, %v2571
      %v2606 = vadd.f32 %v2463, %v2576
      %v2607 = vadd.f32 %v2464, %v2581
      %v2608 = vadd.f32 %v2465, %v2586
      %v2609 = vadd.f32 %v2466, %v2591
      %v2610 = vadd.f32 %v2467, %v2596
      %v2611 = vadd.f32 %v2468, %v2601
      %s2612 = scalar_lea.vmem %s351, 26
      %v2613 = vld [vmem:[%s2612] sm:$0x3]
      %v2614 = vunpack.c.l.bf16 %v2613
      %v2616 = vsel %vm628, %v583, 0
      %v2619 = vsel %vm628, %v584, 0
      %v2622 = vsel %vm628, %v585, 0
      %v2625 = vsel %vm628, %v586, 0
      %v2628 = vsel %vm628, %v587, 0
      %v2631 = vsel %vm628, %v588, 0
      %v2634 = vsel %vm628, %v589, 0
      %v2637 = vsel %vm628, %v590, 0
      %v2640 = vsel %vm653, %v2614, 0
      %2642 = vmatprep.subr.mxu0 0.0
      %2643 = vmatpush1.msra.mxu0 %v2640
      %2644 = vmatprep.subr.mxu0 0.0
      %2645 = vmatpush1.msra.mxu0 0.0
      %2646 = vmatprep.subr.mxu0 0.0
      %2647 = vmatpush1.msra.mxu0 0.0
      %2648 = vmatprep.subr.mxu0 0.0
      %2649 = vmatpush1.msra.mxu0 0.0
      %2650 = vmatprep.subr.mxu0 0.0
      %2651 = vmatpush1.msra.mxu0 0.0
      %2652 = vmatprep.subr.mxu0 0.0
      %2653 = vmatpush1.msra.mxu0 0.0
      %2654 = vmatprep.subr.mxu0 0.0
      %2655 = vmatpush1.msra.mxu0 0.0
      %2656 = vmatprep.subr.mxu0 0.0
      %2657 = vmatpush1.msra.mxu0 0.0
      %2658 = vmatprep.subr.mxu0 0.0
      %2659 = vmatpush1.msra.mxu0 0.0
      %2660 = vmatprep.subr.mxu0 0.0
      %2661 = vmatpush1.msra.mxu0 0.0
      %2662 = vmatprep.subr.mxu0 0.0
      %2663 = vmatpush1.msra.mxu0 0.0
      %2664 = vmatprep.subr.mxu0 0.0
      %2665 = vmatpush1.msra.mxu0 0.0
      %2666 = vmatprep.subr.mxu0 0.0
      %2667 = vmatpush1.msra.mxu0 0.0
      %2668 = vmatprep.subr.mxu0 0.0
      %2669 = vmatpush1.msra.mxu0 0.0
      %2670 = vmatprep.subr.mxu0 0.0
      %2671 = vmatpush1.msra.mxu0 0.0
      %2672 = vmatprep.subr.mxu0 0.0
      %2673 = vmatpush1.msra.mxu0 0.0
      %2674 = vmatprep.subr.mxu0 0.0
      %2675 = vmatpush1.msra.mxu0 0.0
      %2676 = vmatprep.subr.mxu0 0.0
      %2677 = vmatpush1.msra.mxu0 0.0
      %2678 = vmatprep.subr.mxu0 0.0
      %2679 = vmatpush1.msra.mxu0 0.0
      %2680 = vmatprep.subr.mxu0 0.0
      %2681 = vmatpush1.msra.mxu0 0.0
      %2682 = vmatprep.subr.mxu0 0.0
      %2683 = vmatpush1.msra.mxu0 0.0
      %2684 = vmatprep.subr.mxu0 0.0
      %2685 = vmatpush1.msra.mxu0 0.0
      %2686 = vmatprep.subr.mxu0 0.0
      %2687 = vmatpush1.msra.mxu0 0.0
      %2688 = vmatprep.subr.mxu0 0.0
      %2689 = vmatpush1.msra.mxu0 0.0
      %2690 = vmatprep.subr.mxu0 0.0
      %2691 = vmatpush1.msra.mxu0 0.0
      %2692 = vmatprep.subr.mxu0 0.0
      %2693 = vmatpush1.msra.mxu0 0.0
      %2694 = vmatprep.subr.mxu0 0.0
      %2695 = vmatpush1.msra.mxu0 0.0
      %2696 = vmatprep.subr.mxu0 0.0
      %2697 = vmatpush1.msra.mxu0 0.0
      %2698 = vmatprep.subr.mxu0 0.0
      %2699 = vmatpush1.msra.mxu0 0.0
      %2700 = vmatprep.subr.mxu0 0.0
      %2701 = vmatpush1.msra.mxu0 0.0
      %2702 = vmatprep.subr.mxu0 0.0
      %2703 = vmatpush1.msra.mxu0 0.0
      %2704 = vmatprep.subr.mxu0 0.0
      %2705 = vmatpush1.msra.mxu0 0.0
      %2706 = vmatprep.mubr.f32.mxu0 0.0
      %2707 = vmatmul.mubr.f32.gmra.mrb[0].mxu0 %v2616
      %v2708 = vpop.f32.mrb[0].mxu0
      %v2709 = vadd.f32 0.0, %v2708
      %v2710 = vpop.f32.mrb[0].mxu0
      %2711 = vmatprep.mubr.f32.mxu0 0.0
      %2712 = vmatmul.mubr.f32.gmra.mrb[0].mxu0 %v2619
      %v2713 = vpop.f32.mrb[0].mxu0
      %v2714 = vadd.f32 0.0, %v2713
      %v2715 = vpop.f32.mrb[0].mxu0
      %2716 = vmatprep.mubr.f32.mxu0 0.0
      %2717 = vmatmul.mubr.f32.gmra.mrb[0].mxu0 %v2622
      %v2718 = vpop.f32.mrb[0].mxu0
      %v2719 = vadd.f32 0.0, %v2718
      %v2720 = vpop.f32.mrb[0].mxu0
      %2721 = vmatprep.mubr.f32.mxu0 0.0
      %2722 = vmatmul.mubr.f32.gmra.mrb[0].mxu0 %v2625
      %v2723 = vpop.f32.mrb[0].mxu0
      %v2724 = vadd.f32 0.0, %v2723
      %v2725 = vpop.f32.mrb[0].mxu0
      %2726 = vmatprep.mubr.f32.mxu0 0.0
      %2727 = vmatmul.mubr.f32.gmra.mrb[0].mxu0 %v2628
      %v2728 = vpop.f32.mrb[0].mxu0
      %v2729 = vadd.f32 0.0, %v2728
      %v2730 = vpop.f32.mrb[0].mxu0
      %2731 = vmatprep.mubr.f32.mxu0 0.0
      %2732 = vmatmul.mubr.f32.gmra.mrb[0].mxu0 %v2631
      %v2733 = vpop.f32.mrb[0].mxu0
      %v2734 = vadd.f32 0.0, %v2733
      %v2735 = vpop.f32.mrb[0].mxu0
      %2736 = vmatprep.mubr.f32.mxu0 0.0
      %2737 = vmatmul.mubr.f32.gmra.mrb[0].mxu0 %v2634
      %v2738 = vpop.f32.mrb[0].mxu0
      %v2739 = vadd.f32 0.0, %v2738
      %v2740 = vpop.f32.mrb[0].mxu0
      %2741 = vmatprep.mubr.f32.mxu0 0.0
      %2742 = vmatmul.mubr.f32.gmra.mrb[0].mxu0 %v2637
      %v2743 = vpop.f32.mrb[0].mxu0
      %v2744 = vadd.f32 0.0, %v2743
      %v2745 = vpop.f32.mrb[0].mxu0
      %2746 = vdwg.mxu0
      %v2747 = vadd.f32 %v2604, %v2709
      %v2748 = vadd.f32 %v2605, %v2714
      %v2749 = vadd.f32 %v2606, %v2719
      %v2750 = vadd.f32 %v2607, %v2724
      %v2751 = vadd.f32 %v2608, %v2729
      %v2752 = vadd.f32 %v2609, %v2734
      %v2753 = vadd.f32 %v2610, %v2739
      %v2754 = vadd.f32 %v2611, %v2744
      %v2763 = vrot.slane %v566, 1
      %v2764 = vrot.slane %v599, 1
      %v2765 = vsel %vm902, %v2763, %v2764
      %v2766 = vrot.slane %v567, 1
      %v2767 = vrot.slane %v600, 1
      %v2768 = vsel %vm902, %v2766, %v2767
      %v2769 = vrot.slane %v568, 1
      %v2770 = vrot.slane %v601, 1
      %v2771 = vsel %vm902, %v2769, %v2770
      %v2772 = vrot.slane %v569, 1
      %v2773 = vrot.slane %v602, 1
      %v2774 = vsel %vm902, %v2772, %v2773
      %v2775 = vrot.slane %v570, 1
      %v2776 = vrot.slane %v603, 1
      %v2777 = vsel %vm902, %v2775, %v2776
      %v2778 = vrot.slane %v571, 1
      %v2779 = vrot.slane %v604, 1
      %v2780 = vsel %vm902, %v2778, %v2779
      %v2781 = vrot.slane %v572, 1
      %v2782 = vrot.slane %v605, 1
      %v2783 = vsel %vm902, %v2781, %v2782
      %v2784 = vrot.slane %v573, 1
      %v2785 = vrot.slane %v606, 1
      %v2786 = vsel %vm902, %v2784, %v2785
      %s2787 = scalar_lea.vmem %s351, 28
      %v2788 = vld [vmem:[%s2787] sm:$0x3]
      %v2789 = vunpack.c.l.bf16 %v2788
      %v2790 = vsel %vm628, %v2765, 0
      %v2792 = vsel %vm628, %v2768, 0
      %v2794 = vsel %vm628, %v2771, 0
      %v2796 = vsel %vm628, %v2774, 0
      %v2798 = vsel %vm628, %v2777, 0
      %v2800 = vsel %vm628, %v2780, 0
      %v2802 = vsel %vm628, %v2783, 0
      %v2804 = vsel %vm628, %v2786, 0
      %v2807 = vsel %vm653, %v2789, 0
      %2809 = vmatprep.subr.mxu0 0.0
      %2810 = vmatpush1.msra.mxu0 %v2807
      %2811 = vmatprep.subr.mxu0 0.0
      %2812 = vmatpush1.msra.mxu0 0.0
      %2813 = vmatprep.subr.mxu0 0.0
      %2814 = vmatpush1.msra.mxu0 0.0
      %2815 = vmatprep.subr.mxu0 0.0
      %2816 = vmatpush1.msra.mxu0 0.0
      %2817 = vmatprep.subr.mxu0 0.0
      %2818 = vmatpush1.msra.mxu0 0.0
      %2819 = vmatprep.subr.mxu0 0.0
      %2820 = vmatpush1.msra.mxu0 0.0
      %2821 = vmatprep.subr.mxu0 0.0
      %2822 = vmatpush1.msra.mxu0 0.0
      %2823 = vmatprep.subr.mxu0 0.0
      %2824 = vmatpush1.msra.mxu0 0.0
      %2825 = vmatprep.subr.mxu0 0.0
      %2826 = vmatpush1.msra.mxu0 0.0
      %2827 = vmatprep.subr.mxu0 0.0
      %2828 = vmatpush1.msra.mxu0 0.0
      %2829 = vmatprep.subr.mxu0 0.0
      %2830 = vmatpush1.msra.mxu0 0.0
      %2831 = vmatprep.subr.mxu0 0.0
      %2832 = vmatpush1.msra.mxu0 0.0
      %2833 = vmatprep.subr.mxu0 0.0
      %2834 = vmatpush1.msra.mxu0 0.0
      %2835 = vmatprep.subr.mxu0 0.0
      %2836 = vmatpush1.msra.mxu0 0.0
      %2837 = vmatprep.subr.mxu0 0.0
      %2838 = vmatpush1.msra.mxu0 0.0
      %2839 = vmatprep.subr.mxu0 0.0
      %2840 = vmatpush1.msra.mxu0 0.0
      %2841 = vmatprep.subr.mxu0 0.0
      %2842 = vmatpush1.msra.mxu0 0.0
      %2843 = vmatprep.subr.mxu0 0.0
      %2844 = vmatpush1.msra.mxu0 0.0
      %2845 = vmatprep.subr.mxu0 0.0
      %2846 = vmatpush1.msra.mxu0 0.0
      %2847 = vmatprep.subr.mxu0 0.0
      %2848 = vmatpush1.msra.mxu0 0.0
      %2849 = vmatprep.subr.mxu0 0.0
      %2850 = vmatpush1.msra.mxu0 0.0
      %2851 = vmatprep.subr.mxu0 0.0
      %2852 = vmatpush1.msra.mxu0 0.0
      %2853 = vmatprep.subr.mxu0 0.0
      %2854 = vmatpush1.msra.mxu0 0.0
      %2855 = vmatprep.subr.mxu0 0.0
      %2856 = vmatpush1.msra.mxu0 0.0
      %2857 = vmatprep.subr.mxu0 0.0
      %2858 = vmatpush1.msra.mxu0 0.0
      %2859 = vmatprep.subr.mxu0 0.0
      %2860 = vmatpush1.msra.mxu0 0.0
      %2861 = vmatprep.subr.mxu0 0.0
      %2862 = vmatpush1.msra.mxu0 0.0
      %2863 = vmatprep.subr.mxu0 0.0
      %2864 = vmatpush1.msra.mxu0 0.0
      %2865 = vmatprep.subr.mxu0 0.0
      %2866 = vmatpush1.msra.mxu0 0.0
      %2867 = vmatprep.subr.mxu0 0.0
      %2868 = vmatpush1.msra.mxu0 0.0
      %2869 = vmatprep.subr.mxu0 0.0
      %2870 = vmatpush1.msra.mxu0 0.0
      %2871 = vmatprep.subr.mxu0 0.0
      %2872 = vmatpush1.msra.mxu0 0.0
      %2873 = vmatprep.mubr.f32.mxu0 0.0
      %2874 = vmatmul.mubr.f32.gmra.mrb[0].mxu0 %v2790
      %v2875 = vpop.f32.mrb[0].mxu0
      %v2876 = vadd.f32 0.0, %v2875
      %v2877 = vpop.f32.mrb[0].mxu0
      %2878 = vmatprep.mubr.f32.mxu0 0.0
      %2879 = vmatmul.mubr.f32.gmra.mrb[0].mxu0 %v2792
      %v2880 = vpop.f32.mrb[0].mxu0
      %v2881 = vadd.f32 0.0, %v2880
      %v2882 = vpop.f32.mrb[0].mxu0
      %2883 = vmatprep.mubr.f32.mxu0 0.0
      %2884 = vmatmul.mubr.f32.gmra.mrb[0].mxu0 %v2794
      %v2885 = vpop.f32.mrb[0].mxu0
      %v2886 = vadd.f32 0.0, %v2885
      %v2887 = vpop.f32.mrb[0].mxu0
      %2888 = vmatprep.mubr.f32.mxu0 0.0
      %2889 = vmatmul.mubr.f32.gmra.mrb[0].mxu0 %v2796
      %v2890 = vpop.f32.mrb[0].mxu0
      %v2891 = vadd.f32 0.0, %v2890
      %v2892 = vpop.f32.mrb[0].mxu0
      %2893 = vmatprep.mubr.f32.mxu0 0.0
      %2894 = vmatmul.mubr.f32.gmra.mrb[0].mxu0 %v2798
      %v2895 = vpop.f32.mrb[0].mxu0
      %v2896 = vadd.f32 0.0, %v2895
      %v2897 = vpop.f32.mrb[0].mxu0
      %2898 = vmatprep.mubr.f32.mxu0 0.0
      %2899 = vmatmul.mubr.f32.gmra.mrb[0].mxu0 %v2800
      %v2900 = vpop.f32.mrb[0].mxu0
      %v2901 = vadd.f32 0.0, %v2900
      %v2902 = vpop.f32.mrb[0].mxu0
      %2903 = vmatprep.mubr.f32.mxu0 0.0
      %2904 = vmatmul.mubr.f32.gmra.mrb[0].mxu0 %v2802
      %v2905 = vpop.f32.mrb[0].mxu0
      %v2906 = vadd.f32 0.0, %v2905
      %v2907 = vpop.f32.mrb[0].mxu0
      %2908 = vmatprep.mubr.f32.mxu0 0.0
      %2909 = vmatmul.mubr.f32.gmra.mrb[0].mxu0 %v2804
      %v2910 = vpop.f32.mrb[0].mxu0
      %v2911 = vadd.f32 0.0, %v2910
      %v2912 = vpop.f32.mrb[0].mxu0
      %2913 = vdwg.mxu0
      %v2914 = vadd.f32 %v2747, %v2876
      %v2915 = vadd.f32 %v2748, %v2881
      %v2916 = vadd.f32 %v2749, %v2886
      %v2917 = vadd.f32 %v2750, %v2891
      %v2918 = vadd.f32 %v2751, %v2896
      %v2919 = vadd.f32 %v2752, %v2901
      %v2920 = vadd.f32 %v2753, %v2906
      %v2921 = vadd.f32 %v2754, %v2911
      %v2930 = vrot.slane %v583, 1
      %v2931 = vrot.slane %v615, 1
      %v2932 = vsel %vm902, %v2930, %v2931
      %v2933 = vrot.slane %v584, 1
      %v2934 = vrot.slane %v616, 1
      %v2935 = vsel %vm902, %v2933, %v2934
      %v2936 = vrot.slane %v585, 1
      %v2937 = vrot.slane %v617, 1
      %v2938 = vsel %vm902, %v2936, %v2937
      %v2939 = vrot.slane %v586, 1
      %v2940 = vrot.slane %v618, 1
      %v2941 = vsel %vm902, %v2939, %v2940
      %v2942 = vrot.slane %v587, 1
      %v2943 = vrot.slane %v619, 1
      %v2944 = vsel %vm902, %v2942, %v2943
      %v2945 = vrot.slane %v588, 1
      %v2946 = vrot.slane %v620, 1
      %v2947 = vsel %vm902, %v2945, %v2946
      %v2948 = vrot.slane %v589, 1
      %v2949 = vrot.slane %v621, 1
      %v2950 = vsel %vm902, %v2948, %v2949
      %v2951 = vrot.slane %v590, 1
      %v2952 = vrot.slane %v622, 1
      %v2953 = vsel %vm902, %v2951, %v2952
      %s2954 = scalar_lea.vmem %s351, 30
      %v2955 = vld [vmem:[%s2954] sm:$0x3]
      %v2956 = vunpack.c.l.bf16 %v2955
      %v2957 = vsel %vm628, %v2932, 0
      %v2959 = vsel %vm628, %v2935, 0
      %v2961 = vsel %vm628, %v2938, 0
      %v2963 = vsel %vm628, %v2941, 0
      %v2965 = vsel %vm628, %v2944, 0
      %v2967 = vsel %vm628, %v2947, 0
      %v2969 = vsel %vm628, %v2950, 0
      %v2971 = vsel %vm628, %v2953, 0
      %v2974 = vsel %vm653, %v2956, 0
      %2976 = vmatprep.subr.mxu0 0.0
      %2977 = vmatpush1.msra.mxu0 %v2974
      %2978 = vmatprep.subr.mxu0 0.0
      %2979 = vmatpush1.msra.mxu0 0.0
      %2980 = vmatprep.subr.mxu0 0.0
      %2981 = vmatpush1.msra.mxu0 0.0
      %2982 = vmatprep.subr.mxu0 0.0
      %2983 = vmatpush1.msra.mxu0 0.0
      %2984 = vmatprep.subr.mxu0 0.0
      %2985 = vmatpush1.msra.mxu0 0.0
      %2986 = vmatprep.subr.mxu0 0.0
      %2987 = vmatpush1.msra.mxu0 0.0
      %2988 = vmatprep.subr.mxu0 0.0
      %2989 = vmatpush1.msra.mxu0 0.0
      %2990 = vmatprep.subr.mxu0 0.0
      %2991 = vmatpush1.msra.mxu0 0.0
      %2992 = vmatprep.subr.mxu0 0.0
      %2993 = vmatpush1.msra.mxu0 0.0
      %2994 = vmatprep.subr.mxu0 0.0
      %2995 = vmatpush1.msra.mxu0 0.0
      %2996 = vmatprep.subr.mxu0 0.0
      %2997 = vmatpush1.msra.mxu0 0.0
      %2998 = vmatprep.subr.mxu0 0.0
      %2999 = vmatpush1.msra.mxu0 0.0
      %3000 = vmatprep.subr.mxu0 0.0
      %3001 = vmatpush1.msra.mxu0 0.0
      %3002 = vmatprep.subr.mxu0 0.0
      %3003 = vmatpush1.msra.mxu0 0.0
      %3004 = vmatprep.subr.mxu0 0.0
      %3005 = vmatpush1.msra.mxu0 0.0
      %3006 = vmatprep.subr.mxu0 0.0
      %3007 = vmatpush1.msra.mxu0 0.0
      %3008 = vmatprep.subr.mxu0 0.0
      %3009 = vmatpush1.msra.mxu0 0.0
      %3010 = vmatprep.subr.mxu0 0.0
      %3011 = vmatpush1.msra.mxu0 0.0
      %3012 = vmatprep.subr.mxu0 0.0
      %3013 = vmatpush1.msra.mxu0 0.0
      %3014 = vmatprep.subr.mxu0 0.0
      %3015 = vmatpush1.msra.mxu0 0.0
      %3016 = vmatprep.subr.mxu0 0.0
      %3017 = vmatpush1.msra.mxu0 0.0
      %3018 = vmatprep.subr.mxu0 0.0
      %3019 = vmatpush1.msra.mxu0 0.0
      %3020 = vmatprep.subr.mxu0 0.0
      %3021 = vmatpush1.msra.mxu0 0.0
      %3022 = vmatprep.subr.mxu0 0.0
      %3023 = vmatpush1.msra.mxu0 0.0
      %3024 = vmatprep.subr.mxu0 0.0
      %3025 = vmatpush1.msra.mxu0 0.0
      %3026 = vmatprep.subr.mxu0 0.0
      %3027 = vmatpush1.msra.mxu0 0.0
      %3028 = vmatprep.subr.mxu0 0.0
      %3029 = vmatpush1.msra.mxu0 0.0
      %3030 = vmatprep.subr.mxu0 0.0
      %3031 = vmatpush1.msra.mxu0 0.0
      %3032 = vmatprep.subr.mxu0 0.0
      %3033 = vmatpush1.msra.mxu0 0.0
      %3034 = vmatprep.subr.mxu0 0.0
      %3035 = vmatpush1.msra.mxu0 0.0
      %3036 = vmatprep.subr.mxu0 0.0
      %3037 = vmatpush1.msra.mxu0 0.0
      %3038 = vmatprep.subr.mxu0 0.0
      %3039 = vmatpush1.msra.mxu0 0.0
      %3040 = vmatprep.mubr.f32.mxu0 0.0
      %3041 = vmatmul.mubr.f32.gmra.mrb[0].mxu0 %v2957
      %v3042 = vpop.f32.mrb[0].mxu0
      %v3043 = vadd.f32 0.0, %v3042
      %v3044 = vpop.f32.mrb[0].mxu0
      %3045 = vmatprep.mubr.f32.mxu0 0.0
      %3046 = vmatmul.mubr.f32.gmra.mrb[0].mxu0 %v2959
      %v3047 = vpop.f32.mrb[0].mxu0
      %v3048 = vadd.f32 0.0, %v3047
      %v3049 = vpop.f32.mrb[0].mxu0
      %3050 = vmatprep.mubr.f32.mxu0 0.0
      %3051 = vmatmul.mubr.f32.gmra.mrb[0].mxu0 %v2961
      %v3052 = vpop.f32.mrb[0].mxu0
      %v3053 = vadd.f32 0.0, %v3052
      %v3054 = vpop.f32.mrb[0].mxu0
      %3055 = vmatprep.mubr.f32.mxu0 0.0
      %3056 = vmatmul.mubr.f32.gmra.mrb[0].mxu0 %v2963
      %v3057 = vpop.f32.mrb[0].mxu0
      %v3058 = vadd.f32 0.0, %v3057
      %v3059 = vpop.f32.mrb[0].mxu0
      %3060 = vmatprep.mubr.f32.mxu0 0.0
      %3061 = vmatmul.mubr.f32.gmra.mrb[0].mxu0 %v2965
      %v3062 = vpop.f32.mrb[0].mxu0
      %v3063 = vadd.f32 0.0, %v3062
      %v3064 = vpop.f32.mrb[0].mxu0
      %3065 = vmatprep.mubr.f32.mxu0 0.0
      %3066 = vmatmul.mubr.f32.gmra.mrb[0].mxu0 %v2967
      %v3067 = vpop.f32.mrb[0].mxu0
      %v3068 = vadd.f32 0.0, %v3067
      %v3069 = vpop.f32.mrb[0].mxu0
      %3070 = vmatprep.mubr.f32.mxu0 0.0
      %3071 = vmatmul.mubr.f32.gmra.mrb[0].mxu0 %v2969
      %v3072 = vpop.f32.mrb[0].mxu0
      %v3073 = vadd.f32 0.0, %v3072
      %v3074 = vpop.f32.mrb[0].mxu0
      %3075 = vmatprep.mubr.f32.mxu0 0.0
      %3076 = vmatmul.mubr.f32.gmra.mrb[0].mxu0 %v2971
      %v3077 = vpop.f32.mrb[0].mxu0
      %v3078 = vadd.f32 0.0, %v3077
      %v3079 = vpop.f32.mrb[0].mxu0
      %3080 = vdwg.mxu0
      %v3081 = vadd.f32 %v2914, %v3043
      %v3082 = vadd.f32 %v2915, %v3048
      %v3083 = vadd.f32 %v2916, %v3053
      %v3084 = vadd.f32 %v2917, %v3058
      %v3085 = vadd.f32 %v2918, %v3063
      %v3086 = vadd.f32 %v2919, %v3068
      %v3087 = vadd.f32 %v2920, %v3073
      %v3088 = vadd.f32 %v2921, %v3078
      %v3089 = vld [vmem:[%s354] sm:$0x1]
      %v3091 = vlaneseq
      %v3092 = vshrl.u32 %v3091, 7
      %v3093 = vsub.s32 0, %v3092
      %v3094 = vrot.slane %v3089, %v3093
      %v3096 = vadd.f32 %v3081, %v3094
      %v3097 = vadd.f32 %v3082, %v3094
      %v3098 = vadd.f32 %v3083, %v3094
      %v3099 = vadd.f32 %v3084, %v3094
      %v3100 = vadd.f32 %v3085, %v3094
      %v3101 = vadd.f32 %v3086, %v3094
      %v3102 = vadd.f32 %v3087, %v3094
      %v3103 = vadd.f32 %v3088, %v3094
      %vm3104 = vcmp.ge.f32.partialorder %v3096, 0.0
      %vm3105 = vcmp.ge.f32.partialorder %v3097, 0.0
      %vm3106 = vcmp.ge.f32.partialorder %v3098, 0.0
      %vm3107 = vcmp.ge.f32.partialorder %v3099, 0.0
      %vm3108 = vcmp.ge.f32.partialorder %v3100, 0.0
      %vm3109 = vcmp.ge.f32.partialorder %v3101, 0.0
      %vm3110 = vcmp.ge.f32.partialorder %v3102, 0.0
      %vm3111 = vcmp.ge.f32.partialorder %v3103, 0.0
      %v3112 = vmul.f32 %v3096, 0.2
      %v3113 = vmul.f32 %v3097, 0.2
      %v3114 = vmul.f32 %v3098, 0.2
      %v3115 = vmul.f32 %v3099, 0.2
      %v3116 = vmul.f32 %v3100, 0.2
      %v3117 = vmul.f32 %v3101, 0.2
      %v3118 = vmul.f32 %v3102, 0.2
      %v3119 = vmul.f32 %v3103, 0.2
      %v3120 = vsel %vm3104, %v3096, %v3112
      %v3121 = vsel %vm3105, %v3097, %v3113
      %v3122 = vsel %vm3106, %v3098, %v3114
      %v3123 = vsel %vm3107, %v3099, %v3115
      %v3124 = vsel %vm3108, %v3100, %v3116
      %v3125 = vsel %vm3109, %v3101, %v3117
      %v3126 = vsel %vm3110, %v3102, %v3118
      %v3127 = vsel %vm3111, %v3103, %v3119
      %v3128 = vpack.c.bf16 %v3120, %v3120
      %v3129 = vpack.c.bf16 %v3121, %v3121
      %v3130 = vpack.c.bf16 %v3122, %v3122
      %v3131 = vpack.c.bf16 %v3123, %v3123
      %v3132 = vpack.c.bf16 %v3124, %v3124
      %v3133 = vpack.c.bf16 %v3125, %v3125
      %v3134 = vpack.c.bf16 %v3126, %v3126
      %v3135 = vpack.c.bf16 %v3127, %v3127
      %vm3136 = vcmask 60416
      %3137 = vst.msk [vmem:[%s362] sm:$0xf] %vm3136, %v3128
      %3138 = vst.msk [vmem:[%s362 + $0x4] sm:$0xf] %vm3136, %v3129
      %3139 = vst.msk [vmem:[%s362 + $0x8] sm:$0xf] %vm3136, %v3130
      %3140 = vst.msk [vmem:[%s362 + $0xc] sm:$0xf] %vm3136, %v3131
      %3141 = vst.msk [vmem:[%s362 + $0x10] sm:$0xf] %vm3136, %v3132
      %3142 = vst.msk [vmem:[%s362 + $0x14] sm:$0xf] %vm3136, %v3133
      %3143 = vst.msk [vmem:[%s362 + $0x18] sm:$0xf] %vm3136, %v3134
      %3144 = vst.msk [vmem:[%s362 + $0x1c] sm:$0xf] %vm3136, %v3135
      %p3145 = scmp.lt.s32.totalorder %s22, 1
      %s3146 = scalar_select %p3145, %s22, 1
      %p3147 = scmp.lt.s32.totalorder %s21, 0
      %s3148 = scalar_select %p3147, %s21, 0
      %s3149 = smul.addr %s3146, 8
      %s3150 = sadd.s32 %s3148, %s3149
      %s3151 = smul.addr %s3150, 4
      %s3152 = scalar_lea.vmem %s6, %s3151
      // Predicated region
      $region45: #{unet_block_innermost.2} parent=43 // pred_check
        %p3153 = pneg %p205
      $region46: #{unet_block_innermost.2} parent=43 // pred_check_branch
        %3155 = sbr.rel (%p3153) target = $region48
      $region47: #{unet_block_innermost.2} parent=43 // pred_region
        _
      $region48: #{unet_block_innermost.2} parent=43 // pred_fallthru
        _
    $region44: #{unet_block_innermost.2} parent=5 // pred_fallthru
      _
    %p3156 = scmp.le.s32.totalorder 2, %s12
    // Predicated region
    $region49: #{unet_block_innermost.2} parent=5 // pred_check
      %p3157 = pneg %p3156
    $region50: #{unet_block_innermost.2} parent=5 // pred_check_branch
      %3159 = sbr.rel (%p3157) target = $region52
    $region51: #{unet_block_innermost.2} parent=5 // pred_region
      %s3160 = ssub.s32 %s12, 2
      // Predicated region
      $region53: #{unet_block_innermost.2} parent=51 // pred_check
        %p3161 = pneg %p211
      $region54: #{unet_block_innermost.2} parent=51 // pred_check_branch
        %3163 = sbr.rel (%p3161) target = $region56
      $region55: #{unet_block_innermost.2} parent=51 // pred_region
        %p3164 = scmp.lt.s32.totalorder %s24, 1
        %s3165 = scalar_select %p3164, %s24, 1
        %p3166 = scmp.lt.s32.totalorder %s23, 0
        %s3167 = scalar_select %p3166, %s23, 0
        %s3168 = smul.addr %s3165, 8
        %s3169 = sadd.s32 %s3167, %s3168
        %s3170 = smul.addr %s3169, 4
        %s3171 = scalar_lea.vmem %s6, %s3170
      $region56: #{unet_block_innermost.2} parent=51 // pred_fallthru
        _
    $region52: #{unet_block_innermost.2} parent=5 // pred_fallthru
      _
  $region6: #{unet_block_innermost.2} parent=0 // loop_footer
    %s16 = sadd.s32 1, %s12
  $region7: #{unet_block_innermost.2} parent=0 // loop_footer_branch
    %11 = sbr.rel target = $region3
  $region8: #{unet_block_innermost.2} parent=0 // loop_exit
    _

</llo_original>
